<compile_context>
chip_gen: v6e
topology: v6e:2x2x1
jax: 0.10.0
libtpu: 0.0.40
codegen_flags: <defaults>
</compile_context>

<pallas_src>
import jax
import jax.numpy as jnp
from jax.experimental import pallas as pl
from jax.experimental.pallas import tpu as pltpu


TK = 256  # K-tile (reduction axis) for the streamed backbone-stub matmul.


# ----------------------------------------------------------------------------
# Fused kernel:
#   grid = (K_pad // TK,)  -- reduction axis, "arbitrary"
#   step k:   acc[B, 2816] += x[:, k*TK:(k+1)*TK] @ W_stub[k*TK:(k+1)*TK, :]
#   last k:   r = acc[:, :2048] @ W_rfc + b_rfc          (resnet_fc)
#             v = acc[:, 2048:] @ W_vfc + b_vfc          (vit_fc)
#             h = ReLU(concat(r, v))                     (split-W1 matmul)
#             h = ReLU(h @ W1 + b1)
#             o = h @ W2 + b2                            (lane-padded to 128)
# ----------------------------------------------------------------------------
def _fused_kernel(
    x_ref, ws_ref, bs_ref,
    wr_ref, br_ref, wv_ref, bv_ref,
    w1_ref, b1_ref, w2_ref, b2_ref,
    o_ref, acc_ref,
):
    k = pl.program_id(0)

    # Initialize the feature accumulator with the stub bias at the first step.
    @pl.when(k == 0)
    def _():
        acc_ref[...] = jnp.broadcast_to(bs_ref[...], acc_ref.shape)

    # Streamed K-reduction of the concatenated backbone-stub matmul.
    # Weights are stored bf16 (HBM bandwidth); accumulate in f32.
    acc_ref[...] += jnp.dot(
        x_ref[...],
        ws_ref[...].astype(jnp.float32),
        preferred_element_type=jnp.float32,
    )

    # Run the entire HybridViTResNet head on-chip at the last K step.
    @pl.when(k == pl.num_programs(0) - 1)
    def _():
        rf = acc_ref[:, :2048]          # resnet-style features  (B, 2048)
        vc = acc_ref[:, 2048:]          # vit CLS-style features (B, 768)

        r = jnp.dot(rf, wr_ref[...].astype(jnp.float32),
                    preferred_element_type=jnp.float32) + br_ref[...]
        v = jnp.dot(vc, wv_ref[...].astype(jnp.float32),
                    preferred_element_type=jnp.float32) + bv_ref[...]

        # ReLU(concat(r, v)) == concat(ReLU(r), ReLU(v)); split-W1 matmul via
        # static in-kernel views of the full W1 avoids concatenate and any
        # wrapper-side weight slicing/copies.
        r = jnp.maximum(r, 0.0)
        v = jnp.maximum(v, 0.0)
        h = (
            jnp.dot(r, w1_ref[:512, :].astype(jnp.float32),
                    preferred_element_type=jnp.float32)
            + jnp.dot(v, w1_ref[512:, :].astype(jnp.float32),
                      preferred_element_type=jnp.float32)
            + b1_ref[...]
        )
        h = jnp.maximum(h, 0.0)
        o_ref[...] = (
            jnp.dot(h, w2_ref[...].astype(jnp.float32),
                    preferred_element_type=jnp.float32)
            + b2_ref[...]
        )


# ----------------------------------------------------------------------------
# Wrapper
# ----------------------------------------------------------------------------
def hybrid_vit_resnet_forward(x, prep):
    B = x.shape[0]
    num_classes = prep["num_classes"]

    x_flat = x.reshape(B, -1).astype(jnp.float32)
    in_flat = x_flat.shape[1]
    k_pad = prep["W_stub"].shape[0]
    if k_pad != in_flat:                      # zero-pad K to a multiple of TK
        x_flat = jnp.pad(x_flat, ((0, 0), (0, k_pad - in_flat)))
    n_k = k_pad // TK
    c_pad = prep["W2p"].shape[1]

    full = lambda shape: pl.BlockSpec(shape, lambda k, s=shape: (0,) * len(s))

    flops = 2 * B * (k_pad * 2816 + 2048 * 512 + 768 * 512 + 1024 * 256 + 256 * c_pad)
    bytes_accessed = int(
        x_flat.size * 4
        + prep["W_stub"].size * 2 + prep["b_stub"].size * 4
        + prep["W_rfc"].size * 2 + prep["b_rfc"].size * 4
        + prep["W_vfc"].size * 2 + prep["b_vfc"].size * 4
        + prep["W1"].size * 2 + prep["b1"].size * 4
        + prep["W2p"].size * 2 + prep["b2p"].size * 4
        + B * c_pad * 4
    )

    out_padded = pl.pallas_call(
        _fused_kernel,
        out_shape=jax.ShapeDtypeStruct((B, c_pad), jnp.float32),
        grid_spec=pltpu.PrefetchScalarGridSpec(
            num_scalar_prefetch=0,
            grid=(n_k,),
            in_specs=[
                pl.BlockSpec((B, TK), lambda k: (0, k)),      # x K-tile
                pl.BlockSpec((TK, 2816), lambda k: (k, 0)),   # stub weight K-tile
                full((1, 2816)),                              # stub bias
                full((2048, 512)), full((1, 512)),            # resnet_fc
                full((768, 512)), full((1, 512)),             # vit_fc
                full((1024, 256)), full((1, 256)),            # fc[1]
                full((256, c_pad)), full((1, c_pad)),         # fc[3] (lane-padded)
            ],
            out_specs=pl.BlockSpec((B, c_pad), lambda k: (0, 0)),
            scratch_shapes=[pltpu.VMEM((B, 2816), jnp.float32)],
        ),
        compiler_params=pltpu.CompilerParams(
            dimension_semantics=("arbitrary",),       # reduction axis
            vmem_limit_bytes=32 * 1024 * 1024,
        ),
        cost_estimate=pl.CostEstimate(
            flops=flops, transcendentals=0, bytes_accessed=bytes_accessed),
    )(
        x_flat,
        prep["W_stub"], prep["b_stub"],
        prep["W_rfc"], prep["b_rfc"],
        prep["W_vfc"], prep["b_vfc"],
        prep["W1"], prep["b1"],
        prep["W2p"], prep["b2p"],
    )
    return out_padded[:, :num_classes]


# ----------------------------------------------------------------------------
# Parameter construction (deterministic) + one-time kernel-layout prep
# ----------------------------------------------------------------------------
def init_params(key, in_flat, num_classes):
    ks = jax.random.split(key, 12)

    def lin(kw, kb, fan_in, fan_out):
        bound = 1.0 / jnp.sqrt(fan_in)
        w = jax.random.uniform(kw, (fan_in, fan_out), jnp.float32, -bound, bound)
        b = jax.random.uniform(kb, (fan_out,), jnp.float32, -bound, bound)
        return w, b

    p = {}
    # Backbone stubs (stand-ins for the external pretrained resnet / vit).
    p["W_res_stub"], p["b_res_stub"] = lin(ks[0], ks[1], in_flat, 2048)
    p["W_vit_stub"], p["b_vit_stub"] = lin(ks[2], ks[3], in_flat, 768)
    # Actual HybridViTResNet parameters.
    p["W_rfc"], p["b_rfc"] = lin(ks[4], ks[5], 2048, 512)
    p["W_vfc"], p["b_vfc"] = lin(ks[6], ks[7], 768, 512)
    p["W1"], p["b1"] = lin(ks[8], ks[9], 1024, 256)
    p["W2"], p["b2"] = lin(ks[10], ks[11], 256, num_classes)
    return p


def prepare_params(p, in_flat, num_classes):
    """One-time layout prep: concat stub weights, pad, cast weights to bf16."""
    k_pad = ((in_flat + TK - 1) // TK) * TK
    c_pad = ((num_classes + 127) // 128) * 128

    w_stub = jnp.concatenate([p["W_res_stub"], p["W_vit_stub"]], axis=1)  # (in_flat, 2816)
    if k_pad != in_flat:
        w_stub = jnp.pad(w_stub, ((0, k_pad - in_flat), (0, 0)))
    b_stub = jnp.concatenate([p["b_res_stub"], p["b_vit_stub"]])          # (2816,)

    w2p = jnp.pad(p["W2"], ((0, 0), (0, c_pad - num_classes)))
    b2p = jnp.pad(p["b2"], (0, c_pad - num_classes))

    bf16 = lambda w: w.astype(jnp.bfloat16)
    f32row = lambda b: b.reshape(1, -1).astype(jnp.float32)
    return {
        "num_classes": num_classes,
        "W_stub": bf16(w_stub), "b_stub": f32row(b_stub),
        "W_rfc": bf16(p["W_rfc"]), "b_rfc": f32row(p["b_rfc"]),
        "W_vfc": bf16(p["W_vfc"]), "b_vfc": f32row(p["b_vfc"]),
        "W1": bf16(p["W1"]), "b1": f32row(p["b1"]),
        "W2p": bf16(w2p), "b2p": f32row(b2p),
    }


def reference_forward(x, p):
    """Pure-JAX reference with the same numerics (bf16-rounded weights, f32 math)."""
    B = x.shape[0]
    x_flat = x.reshape(B, -1).astype(jnp.float32)
    q = lambda w: w.astype(jnp.bfloat16).astype(jnp.float32)
    rf = x_flat @ q(p["W_res_stub"]) + p["b_res_stub"]
    vc = x_flat @ q(p["W_vit_stub"]) + p["b_vit_stub"]
    r = rf @ q(p["W_rfc"]) + p["b_rfc"]
    v = vc @ q(p["W_vfc"]) + p["b_vfc"]
    h = jnp.maximum(jnp.concatenate([r, v], axis=1), 0.0)
    h = jnp.maximum(h @ q(p["W1"]) + p["b1"], 0.0)
    return h @ q(p["W2"]) + p["b2"]


if __name__ == "__main__":
    key = jax.random.PRNGKey(0)
    k_x, k_p = jax.random.split(key)

    B, C, H, W = 2, 3, 16, 16
    num_classes = 10
    x = jax.random.normal(k_x, (B, C, H, W), dtype=jnp.float32)

    raw = init_params(k_p, C * H * W, num_classes)
    prep = prepare_params(raw, C * H * W, num_classes)

    out = hybrid_vit_resnet_forward(x, prep)
    out = jax.block_until_ready(out)

    ref = reference_forward(x, raw)
    assert out.shape == (B, num_classes)
    assert jnp.allclose(out, ref, atol=1e-2, rtol=1e-2), float(
        jnp.max(jnp.abs(out - ref))
    )

    print("KERNEL_OK")
</pallas_src>

<mosaic_0001>
module attributes {stable_mosaic.version = 11 : i64} {
  func.func @_fused_kernel(%arg0: i32, %arg1: memref<2x256xf32, #tpu.memory_space<vmem>>, %arg2: memref<256x2816xbf16, #tpu.memory_space<vmem>>, %arg3: memref<1x2816xf32, #tpu.memory_space<vmem>>, %arg4: memref<2048x512xbf16, #tpu.memory_space<vmem>>, %arg5: memref<1x512xf32, #tpu.memory_space<vmem>>, %arg6: memref<768x512xbf16, #tpu.memory_space<vmem>>, %arg7: memref<1x512xf32, #tpu.memory_space<vmem>>, %arg8: memref<1024x256xbf16, #tpu.memory_space<vmem>>, %arg9: memref<1x256xf32, #tpu.memory_space<vmem>>, %arg10: memref<256x128xbf16, #tpu.memory_space<vmem>>, %arg11: memref<1x128xf32, #tpu.memory_space<vmem>>, %arg12: memref<2x128xf32, #tpu.memory_space<vmem>>, %arg13: memref<2x2816xf32, #tpu.memory_space<vmem>>) attributes {dimension_semantics = [#tpu.dimension_semantics<arbitrary>], iteration_bounds = array<i64: 3>, scalar_prefetch = 0 : i64, scratch_operands = 1 : i64, tpu.core_type = #tpu.core_type<tc>, window_params = [{transform_indices = @transform_0, window_bounds = array<i64: 2, 256>}, {transform_indices = @transform_1, window_bounds = array<i64: 256, 2816>}, {pipeline_mode = #tpu.pipeline_mode<synchronous>, transform_indices = @transform_2, window_bounds = array<i64: 1, 2816>}, {pipeline_mode = #tpu.pipeline_mode<synchronous>, transform_indices = @transform_3, window_bounds = array<i64: 2048, 512>}, {pipeline_mode = #tpu.pipeline_mode<synchronous>, transform_indices = @transform_4, window_bounds = array<i64: 1, 512>}, {pipeline_mode = #tpu.pipeline_mode<synchronous>, transform_indices = @transform_5, window_bounds = array<i64: 768, 512>}, {pipeline_mode = #tpu.pipeline_mode<synchronous>, transform_indices = @transform_6, window_bounds = array<i64: 1, 512>}, {pipeline_mode = #tpu.pipeline_mode<synchronous>, transform_indices = @transform_7, window_bounds = array<i64: 1024, 256>}, {pipeline_mode = #tpu.pipeline_mode<synchronous>, transform_indices = @transform_8, window_bounds = array<i64: 1, 256>}, {pipeline_mode = #tpu.pipeline_mode<synchronous>, transform_indices = @transform_9, window_bounds = array<i64: 256, 128>}, {pipeline_mode = #tpu.pipeline_mode<synchronous>, transform_indices = @transform_10, window_bounds = array<i64: 1, 128>}, {pipeline_mode = #tpu.pipeline_mode<synchronous>, transform_indices = @transform_11, window_bounds = array<i64: 2, 128>}]} {
    %c0_i32 = arith.constant 0 : i32
    %0 = arith.cmpi eq, %arg0, %c0_i32 : i32
    %1 = arith.extui %0 : i1 to i32
    %c0_i32_0 = arith.constant 0 : i32
    %2 = arith.cmpi ne, %1, %c0_i32_0 : i32
    scf.if %2 {
      %c0_9 = arith.constant 0 : index
      %c0_10 = arith.constant 0 : index
      %13 = vector.load %arg3[%c0_9, %c0_10] : memref<1x2816xf32, #tpu.memory_space<vmem>>, vector<1x2816xf32>
      %14 = vector.shape_cast %13 : vector<1x2816xf32> to vector<1x2816xf32>
      %15 = vector.broadcast %14 : vector<1x2816xf32> to vector<2x2816xf32>
      %c0_11 = arith.constant 0 : index
      %c0_12 = arith.constant 0 : index
      %16 = vector.load %arg13[%c0_11, %c0_12] : memref<2x2816xf32, #tpu.memory_space<vmem>>, vector<2x2816xf32>
      tpu.vector_store %arg13[%c0_11, %c0_12], %15 {strides = array<i32>} : memref<2x2816xf32, #tpu.memory_space<vmem>>, vector<2x2816xf32>,
    } else {
    }
    %c0 = arith.constant 0 : index
    %c0_1 = arith.constant 0 : index
    %3 = vector.load %arg13[%c0, %c0_1] : memref<2x2816xf32, #tpu.memory_space<vmem>>, vector<2x2816xf32>
    %c0_2 = arith.constant 0 : index
    %c0_3 = arith.constant 0 : index
    %4 = vector.load %arg1[%c0_2, %c0_3] : memref<2x256xf32, #tpu.memory_space<vmem>>, vector<2x256xf32>
    %c0_4 = arith.constant 0 : index
    %c0_5 = arith.constant 0 : index
    %5 = vector.load %arg2[%c0_4, %c0_5] : memref<256x2816xbf16, #tpu.memory_space<vmem>>, vector<256x2816xbf16>
    %6 = arith.extf %5 : vector<256x2816xbf16> to vector<256x2816xf32>
    %cst = arith.constant dense<0.000000e+00> : vector<2x2816xf32>
    %7 = tpu.matmul %4, %6, %cst {dimension_numbers = #tpu.dot_dimension_numbers<[1], [0], [0], [1], [0, 0, 1, 1], [], []>} : vector<2x256xf32>, vector<256x2816xf32>, vector<2x2816xf32> -> vector<2x2816xf32>
    %8 = arith.addf %3, %7 : vector<2x2816xf32>
    %c0_6 = arith.constant 0 : index
    %c0_7 = arith.constant 0 : index
    %9 = vector.load %arg13[%c0_6, %c0_7] : memref<2x2816xf32, #tpu.memory_space<vmem>>, vector<2x2816xf32>
    tpu.vector_store %arg13[%c0_6, %c0_7], %8 {strides = array<i32>} : memref<2x2816xf32, #tpu.memory_space<vmem>>, vector<2x2816xf32>,
    %c2_i32 = arith.constant 2 : i32
    %10 = arith.cmpi eq, %arg0, %c2_i32 : i32
    %11 = arith.extui %10 : i1 to i32
    %c0_i32_8 = arith.constant 0 : i32
    %12 = arith.cmpi ne, %11, %c0_i32_8 : i32
    scf.if %12 {
      %c0_9 = arith.constant 0 : index
      %c0_10 = arith.constant 0 : index
      %13 = vector.load %arg13[%c0_9, %c0_10] : memref<2x2816xf32, #tpu.memory_space<vmem>>, vector<2x2048xf32>
      %c0_11 = arith.constant 0 : index
      %c2048 = arith.constant 2048 : index
      %14 = vector.load %arg13[%c0_11, %c2048] : memref<2x2816xf32, #tpu.memory_space<vmem>>, vector<2x768xf32>
      %c0_12 = arith.constant 0 : index
      %c0_13 = arith.constant 0 : index
      %15 = vector.load %arg4[%c0_12, %c0_13] : memref<2048x512xbf16, #tpu.memory_space<vmem>>, vector<2048x512xbf16>
      %16 = arith.extf %15 : vector<2048x512xbf16> to vector<2048x512xf32>
      %cst_14 = arith.constant dense<0.000000e+00> : vector<2x512xf32>
      %17 = tpu.matmul %13, %16, %cst_14 {dimension_numbers = #tpu.dot_dimension_numbers<[1], [0], [0], [1], [0, 0, 1, 1], [], []>} : vector<2x2048xf32>, vector<2048x512xf32>, vector<2x512xf32> -> vector<2x512xf32>
      %c0_15 = arith.constant 0 : index
      %c0_16 = arith.constant 0 : index
      %18 = vector.load %arg5[%c0_15, %c0_16] : memref<1x512xf32, #tpu.memory_space<vmem>>, vector<1x512xf32>
      %19 = vector.broadcast %18 : vector<1x512xf32> to vector<2x512xf32>
      %20 = arith.addf %17, %19 : vector<2x512xf32>
      %c0_17 = arith.constant 0 : index
      %c0_18 = arith.constant 0 : index
      %21 = vector.load %arg6[%c0_17, %c0_18] : memref<768x512xbf16, #tpu.memory_space<vmem>>, vector<768x512xbf16>
      %22 = arith.extf %21 : vector<768x512xbf16> to vector<768x512xf32>
      %cst_19 = arith.constant dense<0.000000e+00> : vector<2x512xf32>
      %23 = tpu.matmul %14, %22, %cst_19 {dimension_numbers = #tpu.dot_dimension_numbers<[1], [0], [0], [1], [0, 0, 1, 1], [], []>} : vector<2x768xf32>, vector<768x512xf32>, vector<2x512xf32> -> vector<2x512xf32>
      %c0_20 = arith.constant 0 : index
      %c0_21 = arith.constant 0 : index
      %24 = vector.load %arg7[%c0_20, %c0_21] : memref<1x512xf32, #tpu.memory_space<vmem>>, vector<1x512xf32>
      %25 = vector.broadcast %24 : vector<1x512xf32> to vector<2x512xf32>
      %26 = arith.addf %23, %25 : vector<2x512xf32>
      %cst_22 = arith.constant 0.000000e+00 : f32
      %27 = vector.broadcast %cst_22 : f32 to vector<2x512xf32>
      %28 = arith.maximumf %20, %27 : vector<2x512xf32>
      %cst_23 = arith.constant 0.000000e+00 : f32
      %29 = vector.broadcast %cst_23 : f32 to vector<2x512xf32>
      %30 = arith.maximumf %26, %29 : vector<2x512xf32>
      %c0_24 = arith.constant 0 : index
      %c0_25 = arith.constant 0 : index
      %31 = vector.load %arg8[%c0_24, %c0_25] : memref<1024x256xbf16, #tpu.memory_space<vmem>>, vector<512x256xbf16>
      %32 = arith.extf %31 : vector<512x256xbf16> to vector<512x256xf32>
      %cst_26 = arith.constant dense<0.000000e+00> : vector<2x256xf32>
      %33 = tpu.matmul %28, %32, %cst_26 {dimension_numbers = #tpu.dot_dimension_numbers<[1], [0], [0], [1], [0, 0, 1, 1], [], []>} : vector<2x512xf32>, vector<512x256xf32>, vector<2x256xf32> -> vector<2x256xf32>
      %c512 = arith.constant 512 : index
      %c0_27 = arith.constant 0 : index
      %34 = vector.load %arg8[%c512, %c0_27] : memref<1024x256xbf16, #tpu.memory_space<vmem>>, vector<512x256xbf16>
      %35 = arith.extf %34 : vector<512x256xbf16> to vector<512x256xf32>
      %cst_28 = arith.constant dense<0.000000e+00> : vector<2x256xf32>
      %36 = tpu.matmul %30, %35, %cst_28 {dimension_numbers = #tpu.dot_dimension_numbers<[1], [0], [0], [1], [0, 0, 1, 1], [], []>} : vector<2x512xf32>, vector<512x256xf32>, vector<2x256xf32> -> vector<2x256xf32>
      %37 = arith.addf %33, %36 : vector<2x256xf32>
      %c0_29 = arith.constant 0 : index
      %c0_30 = arith.constant 0 : index
      %38 = vector.load %arg9[%c0_29, %c0_30] : memref<1x256xf32, #tpu.memory_space<vmem>>, vector<1x256xf32>
      %39 = vector.broadcast %38 : vector<1x256xf32> to vector<2x256xf32>
      %40 = arith.addf %37, %39 : vector<2x256xf32>
      %cst_31 = arith.constant 0.000000e+00 : f32
      %41 = vector.broadcast %cst_31 : f32 to vector<2x256xf32>
      %42 = arith.maximumf %40, %41 : vector<2x256xf32>
      %c0_32 = arith.constant 0 : index
      %c0_33 = arith.constant 0 : index
      %43 = vector.load %arg10[%c0_32, %c0_33] : memref<256x128xbf16, #tpu.memory_space<vmem>>, vector<256x128xbf16>
      %44 = arith.extf %43 : vector<256x128xbf16> to vector<256x128xf32>
      %cst_34 = arith.constant dense<0.000000e+00> : vector<2x128xf32>
      %45 = tpu.matmul %42, %44, %cst_34 {dimension_numbers = #tpu.dot_dimension_numbers<[1], [0], [0], [1], [0, 0, 1, 1], [], []>} : vector<2x256xf32>, vector<256x128xf32>, vector<2x128xf32> -> vector<2x128xf32>
      %c0_35 = arith.constant 0 : index
      %c0_36 = arith.constant 0 : index
      %46 = vector.load %arg11[%c0_35, %c0_36] : memref<1x128xf32, #tpu.memory_space<vmem>>, vector<1x128xf32>
      %47 = vector.broadcast %46 : vector<1x128xf32> to vector<2x128xf32>
      %48 = arith.addf %45, %47 : vector<2x128xf32>
      %c0_37 = arith.constant 0 : index
      %c0_38 = arith.constant 0 : index
      %49 = vector.load %arg12[%c0_37, %c0_38] : memref<2x128xf32, #tpu.memory_space<vmem>>, vector<2x128xf32>
      tpu.vector_store %arg12[%c0_37, %c0_38], %48 {strides = array<i32>} : memref<2x128xf32, #tpu.memory_space<vmem>>, vector<2x128xf32>,
    } else {
    }
    return
  }
  func.func @transform_0(%arg0: i32) -> (i32, i32) {
    %c0_i32 = arith.constant 0 : i32
    %c0_i32_0 = arith.constant 0 : i32
    return %c0_i32, %arg0 : i32, i32
  }
  func.func @transform_1(%arg0: i32) -> (i32, i32) {
    %c0_i32 = arith.constant 0 : i32
    %c0_i32_0 = arith.constant 0 : i32
    return %arg0, %c0_i32 : i32, i32
  }
  func.func @transform_2(%arg0: i32) -> (i32, i32) {
    %c0_i32 = arith.constant 0 : i32
    %c0_i32_0 = arith.constant 0 : i32
    %c0_i32_1 = arith.constant 0 : i32
    return %c0_i32, %c0_i32_0 : i32, i32
  }
  func.func @transform_3(%arg0: i32) -> (i32, i32) {
    %c0_i32 = arith.constant 0 : i32
    %c0_i32_0 = arith.constant 0 : i32
    %c0_i32_1 = arith.constant 0 : i32
    return %c0_i32, %c0_i32_0 : i32, i32
  }
  func.func @transform_4(%arg0: i32) -> (i32, i32) {
    %c0_i32 = arith.constant 0 : i32
    %c0_i32_0 = arith.constant 0 : i32
    %c0_i32_1 = arith.constant 0 : i32
    return %c0_i32, %c0_i32_0 : i32, i32
  }
  func.func @transform_5(%arg0: i32) -> (i32, i32) {
    %c0_i32 = arith.constant 0 : i32
    %c0_i32_0 = arith.constant 0 : i32
    %c0_i32_1 = arith.constant 0 : i32
    return %c0_i32, %c0_i32_0 : i32, i32
  }
  func.func @transform_6(%arg0: i32) -> (i32, i32) {
    %c0_i32 = arith.constant 0 : i32
    %c0_i32_0 = arith.constant 0 : i32
    %c0_i32_1 = arith.constant 0 : i32
    return %c0_i32, %c0_i32_0 : i32, i32
  }
  func.func @transform_7(%arg0: i32) -> (i32, i32) {
    %c0_i32 = arith.constant 0 : i32
    %c0_i32_0 = arith.constant 0 : i32
    %c0_i32_1 = arith.constant 0 : i32
    return %c0_i32, %c0_i32_0 : i32, i32
  }
  func.func @transform_8(%arg0: i32) -> (i32, i32) {
    %c0_i32 = arith.constant 0 : i32
    %c0_i32_0 = arith.constant 0 : i32
    %c0_i32_1 = arith.constant 0 : i32
    return %c0_i32, %c0_i32_0 : i32, i32
  }
  func.func @transform_9(%arg0: i32) -> (i32, i32) {
    %c0_i32 = arith.constant 0 : i32
    %c0_i32_0 = arith.constant 0 : i32
    %c0_i32_1 = arith.constant 0 : i32
    return %c0_i32, %c0_i32_0 : i32, i32
  }
  func.func @transform_10(%arg0: i32) -> (i32, i32) {
    %c0_i32 = arith.constant 0 : i32
    %c0_i32_0 = arith.constant 0 : i32
    %c0_i32_1 = arith.constant 0 : i32
    return %c0_i32, %c0_i32_0 : i32, i32
  }
  func.func @transform_11(%arg0: i32) -> (i32, i32) {
    %c0_i32 = arith.constant 0 : i32
    %c0_i32_0 = arith.constant 0 : i32
    %c0_i32_1 = arith.constant 0 : i32
    return %c0_i32, %c0_i32_0 : i32, i32
  }
}

</mosaic_0001>

<llo_original>
// kernel: tpu_custom_call.1
$region0: #{tpu_custom_call.1}
  #allocation0 [shape = 'u32[]', space=smem, size = 0x4, offset = 0x4, fixed_abs, tag = 'smem constant byte address 0x4 - core index']
  #allocation1 [shape = 'u32[144,128]{1,0:T(1,128)}', space=vmem, size = 0x12000, scoped, tag = 'internal scratch']
  #allocation2 [shape = 'f32[2,2816]{1,0:T(2,128)}', space=vmem, size = 0x5800, scoped, tag = 'scratch operand']
  %s0 = inlined_call_operand.hbm [shape: f32[2,768], index: 0, kind: input, shape index: {}]
  %s1 = inlined_call_operand.hbm [shape: bf16[768,2816], index: 1, kind: input, shape index: {}]
  %s2 = inlined_call_operand.hbm [shape: f32[1,2816], index: 2, kind: input, shape index: {}]
  %s3 = inlined_call_operand.hbm [shape: bf16[2048,512], index: 3, kind: input, shape index: {}]
  %s4 = inlined_call_operand.hbm [shape: f32[1,512], index: 4, kind: input, shape index: {}]
  %s5 = inlined_call_operand.hbm [shape: bf16[768,512], index: 5, kind: input, shape index: {}]
  %s6 = inlined_call_operand.hbm [shape: f32[1,512], index: 6, kind: input, shape index: {}]
  %s7 = inlined_call_operand.hbm [shape: bf16[1024,256], index: 7, kind: input, shape index: {}]
  %s8 = inlined_call_operand.hbm [shape: f32[1,256], index: 8, kind: input, shape index: {}]
  %s9 = inlined_call_operand.hbm [shape: bf16[256,128], index: 9, kind: input, shape index: {}]
  %s10 = inlined_call_operand.hbm [shape: f32[1,128], index: 10, kind: input, shape index: {}]
  %s11 = inlined_call_operand.hbm [shape: f32[2,128], index: 11, kind: output, shape index: {}]
  %s12 = sld [smem:[#allocation0]]
  $region129: #{tpu_custom_call.1} parent=0
    _
  %s14 = ssub.s32 1, %s12
  %s15 = scalar_select 0, %s14, %s12
  $region1: #{tpu_custom_call.1} parent=0
    #allocation3 [shape = 'u8[4096]{0}', space=vmem, size = 0x1000, scoped, tag = 'input window, operand 0']
    #allocation4 [shape = 's32[2]{0}', space=sflag, size = 0x8, scoped, tag = 'scoped memory for tpu_custom_call.1']
    #allocation5 [shape = 's32[2]{0}', space=sflag, size = 0x8, scoped, tag = 'scoped memory for tpu_custom_call.1']
    #allocation6 [shape = 'u8[2883584]{0}', space=vmem, size = 0x2c0000, scoped, tag = 'input window, operand 1']
    #allocation7 [shape = 's32[2]{0}', space=sflag, size = 0x8, scoped, tag = 'scoped memory for tpu_custom_call.1']
    #allocation8 [shape = 'u8[11264]{0}', space=vmem, size = 0x2c00, scoped, tag = 'input window, operand 2, single buffered']
    #allocation9 [shape = 'u8[2097152]{0}', space=vmem, size = 0x200000, scoped, tag = 'input window, operand 3, single buffered']
    #allocation10 [shape = 's32[1]{0}', space=sflag, size = 0x4, scoped, tag = 'scoped memory for tpu_custom_call.1']
    #allocation11 [shape = 'u8[2048]{0}', space=vmem, size = 0x800, scoped, tag = 'input window, operand 4, single buffered']
    #allocation12 [shape = 'u8[786432]{0}', space=vmem, size = 0xc0000, scoped, tag = 'input window, operand 5, single buffered']
    #allocation13 [shape = 's32[1]{0}', space=sflag, size = 0x4, scoped, tag = 'scoped memory for tpu_custom_call.1']
    #allocation14 [shape = 'u8[2048]{0}', space=vmem, size = 0x800, scoped, tag = 'input window, operand 6, single buffered']
    #allocation15 [shape = 'u8[524288]{0}', space=vmem, size = 0x80000, scoped, tag = 'input window, operand 7, single buffered']
    #allocation16 [shape = 's32[1]{0}', space=sflag, size = 0x4, scoped, tag = 'scoped memory for tpu_custom_call.1']
    #allocation17 [shape = 'u8[1024]{0}', space=vmem, size = 0x400, scoped, tag = 'input window, operand 8, single buffered']
    #allocation18 [shape = 'u8[65536]{0}', space=vmem, size = 0x10000, scoped, tag = 'input window, operand 9, single buffered']
    #allocation19 [shape = 's32[1]{0}', space=sflag, size = 0x4, scoped, tag = 'scoped memory for tpu_custom_call.1']
    #allocation20 [shape = 'u8[512]{0}', space=vmem, size = 0x400, scoped, tag = 'input window, operand 10, single buffered']
    #allocation21 [shape = 'u8[1024]{0}', space=vmem, size = 0x400, scoped, tag = 'output window, operand 0, single buffered']
    %16 = vsyncpa [#allocation4], 0
    %s17 = scalar_lea.sflag [#allocation4], 1
    %18 = vsyncpa %s17, 0
    %19 = vsyncpa [#allocation7], 0
    %s20 = scalar_lea.sflag [#allocation7], 1
    %21 = vsyncpa %s20, 0
    %22 = vsyncpa [#allocation10], 0
    %23 = vsyncpa [#allocation13], 0
    %24 = vsyncpa [#allocation16], 0
    %25 = vsyncpa [#allocation19], 0
    %26 = vsyncpa [#allocation5], 0
    loop: start=0, step=1, limit=5
    $region2: #{tpu_custom_call.1} parent=1 // loop_pre_header
      _
    $region3: #{tpu_custom_call.1} parent=1 // loop_header
      %s28 = sphi 0, %s32
      %p29 = scmp.ge.s32.totalorder %s28, 5
      %s38 = sphi 0, %s40
      %s41 = sphi 0, %s38
      %s42 = sphi 0, %s41
      %s58 = sphi 0, %s42
      %s64 = sphi 0, %s66
      %s67 = sphi 0, %s64
      %s68 = sphi 0, %s67
      %s84 = sphi 0, %s68
      %s88 = sphi 0, %s88
      %s90 = sphi 0, %s88
      %s91 = sphi 0, %s90
      %s105 = sphi 0, %s91
      %s109 = sphi 0, %s109
      %s111 = sphi 0, %s109
      %s112 = sphi 0, %s111
      %s126 = sphi 0, %s112
      %s130 = sphi 0, %s130
      %s132 = sphi 0, %s130
      %s133 = sphi 0, %s132
      %s147 = sphi 0, %s133
      %s151 = sphi 0, %s151
      %s153 = sphi 0, %s151
      %s154 = sphi 0, %s153
      %s168 = sphi 0, %s154
      %s172 = sphi 0, %s172
      %s174 = sphi 0, %s172
      %s175 = sphi 0, %s174
      %s189 = sphi 0, %s175
      %s193 = sphi 0, %s193
      %s195 = sphi 0, %s193
      %s196 = sphi 0, %s195
      %s210 = sphi 0, %s196
      %s214 = sphi 0, %s214
      %s216 = sphi 0, %s214
      %s217 = sphi 0, %s216
      %s231 = sphi 0, %s217
      %s235 = sphi 0, %s235
      %s237 = sphi 0, %s235
      %s238 = sphi 0, %s237
      %s252 = sphi 0, %s238
      %s256 = sphi 0, %s256
      %s258 = sphi 0, %s256
      %s259 = sphi 0, %s258
      %s273 = sphi 0, %s259
      %s277 = sphi 0, %s277
      %s279 = sphi 0, %s277
      %s280 = sphi 0, %s279
      %s294 = sphi 0, %s280
    $region4: #{tpu_custom_call.1} parent=1 // loop_header_branch
      %31 = sbr.rel (%p29) target = $region8
    $region5: #{tpu_custom_call.1} parent=1 // loop_body
      %s33 = ssub.s32 %s28, 1
      %s34 = ssub.s32 %s28, 2
      %s35 = sadd.s32 %s28, 1
      %s36 = ssub.s32 %s28, %s35
      %p37 = scmp.eq.s32.totalorder %s36, 0
      %s39 = sadd.s32 %s38, 1
      %s40 = scalar_select %p37, %s38, %s39
      %p43 = pneg %p37
      %p44 = scmp.eq.s32.totalorder %s28, 2
      %p45 = por %p43, %p44
      %p46 = scmp.ne.s32.totalorder %s38, %s41
      %p47 = scmp.eq.s32.totalorder %s28, 0
      %p48 = por %p46, %p47
      %p49 = scmp.ne.s32.totalorder %s38, %s41
      %p50 = scmp.eq.s32.totalorder %s33, 2
      %p51 = por %p49, %p50
      %p52 = scmp.ne.s32.totalorder %s41, %s42
      %p53 = scmp.eq.s32.totalorder %s33, 0
      %p54 = por %p52, %p53
      %p55 = scmp.ne.s32.totalorder %s41, %s42
      %p56 = scmp.eq.s32.totalorder %s34, 2
      %p57 = por %p55, %p56
      %p59 = scmp.ne.s32.totalorder %s42, %s58
      %p60 = scmp.eq.s32.totalorder %s34, 0
      %p61 = por %p59, %p60
      %s62 = ssub.s32 %s28, %s35
      %p63 = scmp.eq.s32.totalorder %s62, 0
      %s65 = sadd.s32 %s64, 1
      %s66 = scalar_select %p63, %s64, %s65
      %p69 = pneg %p63
      %p70 = scmp.eq.s32.totalorder %s28, 2
      %p71 = por %p69, %p70
      %p72 = scmp.ne.s32.totalorder %s64, %s67
      %p73 = scmp.eq.s32.totalorder %s28, 0
      %p74 = por %p72, %p73
      %p75 = scmp.ne.s32.totalorder %s64, %s67
      %p76 = scmp.eq.s32.totalorder %s33, 2
      %p77 = por %p75, %p76
      %p78 = scmp.ne.s32.totalorder %s67, %s68
      %p79 = scmp.eq.s32.totalorder %s33, 0
      %p80 = por %p78, %p79
      %p81 = scmp.ne.s32.totalorder %s67, %s68
      %p82 = scmp.eq.s32.totalorder %s34, 2
      %p83 = por %p81, %p82
      %p85 = scmp.ne.s32.totalorder %s68, %s84
      %p86 = scmp.eq.s32.totalorder %s34, 0
      %p87 = por %p85, %p86
      %s89 = sadd.s32 %s88, 1
      %p92 = scmp.eq.s32.totalorder %s28, 2
      %p93 = scmp.ne.s32.totalorder %s88, %s90
      %p94 = scmp.eq.s32.totalorder %s28, 0
      %p95 = por %p93, %p94
      %p96 = scmp.ne.s32.totalorder %s88, %s90
      %p97 = scmp.eq.s32.totalorder %s33, 2
      %p98 = por %p96, %p97
      %p99 = scmp.ne.s32.totalorder %s90, %s91
      %p100 = scmp.eq.s32.totalorder %s33, 0
      %p101 = por %p99, %p100
      %p102 = scmp.ne.s32.totalorder %s90, %s91
      %p103 = scmp.eq.s32.totalorder %s34, 2
      %p104 = por %p102, %p103
      %p106 = scmp.ne.s32.totalorder %s91, %s105
      %p107 = scmp.eq.s32.totalorder %s34, 0
      %p108 = por %p106, %p107
      %s110 = sadd.s32 %s109, 1
      %p113 = scmp.eq.s32.totalorder %s28, 2
      %p114 = scmp.ne.s32.totalorder %s109, %s111
      %p115 = scmp.eq.s32.totalorder %s28, 0
      %p116 = por %p114, %p115
      %p117 = scmp.ne.s32.totalorder %s109, %s111
      %p118 = scmp.eq.s32.totalorder %s33, 2
      %p119 = por %p117, %p118
      %p120 = scmp.ne.s32.totalorder %s111, %s112
      %p121 = scmp.eq.s32.totalorder %s33, 0
      %p122 = por %p120, %p121
      %p123 = scmp.ne.s32.totalorder %s111, %s112
      %p124 = scmp.eq.s32.totalorder %s34, 2
      %p125 = por %p123, %p124
      %p127 = scmp.ne.s32.totalorder %s112, %s126
      %p128 = scmp.eq.s32.totalorder %s34, 0
      %p129 = por %p127, %p128
      %s131 = sadd.s32 %s130, 1
      %p134 = scmp.eq.s32.totalorder %s28, 2
      %p135 = scmp.ne.s32.totalorder %s130, %s132
      %p136 = scmp.eq.s32.totalorder %s28, 0
      %p137 = por %p135, %p136
      %p138 = scmp.ne.s32.totalorder %s130, %s132
      %p139 = scmp.eq.s32.totalorder %s33, 2
      %p140 = por %p138, %p139
      %p141 = scmp.ne.s32.totalorder %s132, %s133
      %p142 = scmp.eq.s32.totalorder %s33, 0
      %p143 = por %p141, %p142
      %p144 = scmp.ne.s32.totalorder %s132, %s133
      %p145 = scmp.eq.s32.totalorder %s34, 2
      %p146 = por %p144, %p145
      %p148 = scmp.ne.s32.totalorder %s133, %s147
      %p149 = scmp.eq.s32.totalorder %s34, 0
      %p150 = por %p148, %p149
      %s152 = sadd.s32 %s151, 1
      %p155 = scmp.eq.s32.totalorder %s28, 2
      %p156 = scmp.ne.s32.totalorder %s151, %s153
      %p157 = scmp.eq.s32.totalorder %s28, 0
      %p158 = por %p156, %p157
      %p159 = scmp.ne.s32.totalorder %s151, %s153
      %p160 = scmp.eq.s32.totalorder %s33, 2
      %p161 = por %p159, %p160
      %p162 = scmp.ne.s32.totalorder %s153, %s154
      %p163 = scmp.eq.s32.totalorder %s33, 0
      %p164 = por %p162, %p163
      %p165 = scmp.ne.s32.totalorder %s153, %s154
      %p166 = scmp.eq.s32.totalorder %s34, 2
      %p167 = por %p165, %p166
      %p169 = scmp.ne.s32.totalorder %s154, %s168
      %p170 = scmp.eq.s32.totalorder %s34, 0
      %p171 = por %p169, %p170
      %s173 = sadd.s32 %s172, 1
      %p176 = scmp.eq.s32.totalorder %s28, 2
      %p177 = scmp.ne.s32.totalorder %s172, %s174
      %p178 = scmp.eq.s32.totalorder %s28, 0
      %p179 = por %p177, %p178
      %p180 = scmp.ne.s32.totalorder %s172, %s174
      %p181 = scmp.eq.s32.totalorder %s33, 2
      %p182 = por %p180, %p181
      %p183 = scmp.ne.s32.totalorder %s174, %s175
      %p184 = scmp.eq.s32.totalorder %s33, 0
      %p185 = por %p183, %p184
      %p186 = scmp.ne.s32.totalorder %s174, %s175
      %p187 = scmp.eq.s32.totalorder %s34, 2
      %p188 = por %p186, %p187
      %p190 = scmp.ne.s32.totalorder %s175, %s189
      %p191 = scmp.eq.s32.totalorder %s34, 0
      %p192 = por %p190, %p191
      %s194 = sadd.s32 %s193, 1
      %p197 = scmp.eq.s32.totalorder %s28, 2
      %p198 = scmp.ne.s32.totalorder %s193, %s195
      %p199 = scmp.eq.s32.totalorder %s28, 0
      %p200 = por %p198, %p199
      %p201 = scmp.ne.s32.totalorder %s193, %s195
      %p202 = scmp.eq.s32.totalorder %s33, 2
      %p203 = por %p201, %p202
      %p204 = scmp.ne.s32.totalorder %s195, %s196
      %p205 = scmp.eq.s32.totalorder %s33, 0
      %p206 = por %p204, %p205
      %p207 = scmp.ne.s32.totalorder %s195, %s196
      %p208 = scmp.eq.s32.totalorder %s34, 2
      %p209 = por %p207, %p208
      %p211 = scmp.ne.s32.totalorder %s196, %s210
      %p212 = scmp.eq.s32.totalorder %s34, 0
      %p213 = por %p211, %p212
      %s215 = sadd.s32 %s214, 1
      %p218 = scmp.eq.s32.totalorder %s28, 2
      %p219 = scmp.ne.s32.totalorder %s214, %s216
      %p220 = scmp.eq.s32.totalorder %s28, 0
      %p221 = por %p219, %p220
      %p222 = scmp.ne.s32.totalorder %s214, %s216
      %p223 = scmp.eq.s32.totalorder %s33, 2
      %p224 = por %p222, %p223
      %p225 = scmp.ne.s32.totalorder %s216, %s217
      %p226 = scmp.eq.s32.totalorder %s33, 0
      %p227 = por %p225, %p226
      %p228 = scmp.ne.s32.totalorder %s216, %s217
      %p229 = scmp.eq.s32.totalorder %s34, 2
      %p230 = por %p228, %p229
      %p232 = scmp.ne.s32.totalorder %s217, %s231
      %p233 = scmp.eq.s32.totalorder %s34, 0
      %p234 = por %p232, %p233
      %s236 = sadd.s32 %s235, 1
      %p239 = scmp.eq.s32.totalorder %s28, 2
      %p240 = scmp.ne.s32.totalorder %s235, %s237
      %p241 = scmp.eq.s32.totalorder %s28, 0
      %p242 = por %p240, %p241
      %p243 = scmp.ne.s32.totalorder %s235, %s237
      %p244 = scmp.eq.s32.totalorder %s33, 2
      %p245 = por %p243, %p244
      %p246 = scmp.ne.s32.totalorder %s237, %s238
      %p247 = scmp.eq.s32.totalorder %s33, 0
      %p248 = por %p246, %p247
      %p249 = scmp.ne.s32.totalorder %s237, %s238
      %p250 = scmp.eq.s32.totalorder %s34, 2
      %p251 = por %p249, %p250
      %p253 = scmp.ne.s32.totalorder %s238, %s252
      %p254 = scmp.eq.s32.totalorder %s34, 0
      %p255 = por %p253, %p254
      %s257 = sadd.s32 %s256, 1
      %p260 = scmp.eq.s32.totalorder %s28, 2
      %p261 = scmp.ne.s32.totalorder %s256, %s258
      %p262 = scmp.eq.s32.totalorder %s28, 0
      %p263 = por %p261, %p262
      %p264 = scmp.ne.s32.totalorder %s256, %s258
      %p265 = scmp.eq.s32.totalorder %s33, 2
      %p266 = por %p264, %p265
      %p267 = scmp.ne.s32.totalorder %s258, %s259
      %p268 = scmp.eq.s32.totalorder %s33, 0
      %p269 = por %p267, %p268
      %p270 = scmp.ne.s32.totalorder %s258, %s259
      %p271 = scmp.eq.s32.totalorder %s34, 2
      %p272 = por %p270, %p271
      %p274 = scmp.ne.s32.totalorder %s259, %s273
      %p275 = scmp.eq.s32.totalorder %s34, 0
      %p276 = por %p274, %p275
      %s278 = sadd.s32 %s277, 1
      %p281 = scmp.eq.s32.totalorder %s28, 2
      %p282 = scmp.ne.s32.totalorder %s277, %s279
      %p283 = scmp.eq.s32.totalorder %s28, 0
      %p284 = por %p282, %p283
      %p285 = scmp.ne.s32.totalorder %s277, %s279
      %p286 = scmp.eq.s32.totalorder %s33, 2
      %p287 = por %p285, %p286
      %p288 = scmp.ne.s32.totalorder %s279, %s280
      %p289 = scmp.eq.s32.totalorder %s33, 0
      %p290 = por %p288, %p289
      %p291 = scmp.ne.s32.totalorder %s279, %s280
      %p292 = scmp.eq.s32.totalorder %s34, 2
      %p293 = por %p291, %p292
      %p295 = scmp.ne.s32.totalorder %s280, %s294
      %p296 = scmp.eq.s32.totalorder %s34, 0
      %p297 = por %p295, %p296
      %p298 = scmp.le.s32.totalorder 1, %s28
      %p299 = scmp.lt.s32.totalorder %s28, 4
      %p300 = pnand %p298, %p299
      %p301 = pneg %p300
      // Predicated region
      $region9: #{tpu_custom_call.1} parent=5 // pred_check
        _
      $region10: #{tpu_custom_call.1} parent=5 // pred_check_branch
        %303 = sbr.rel (%p300) target = $region12
      $region11: #{tpu_custom_call.1} parent=5 // pred_region
        %s304 = ssub.s32 %s28, 1
        // Predicated region
        $region13: #{tpu_custom_call.1} parent=11 // pred_check
          %p305 = pneg %p101
        $region14: #{tpu_custom_call.1} parent=11 // pred_check_branch
          %307 = sbr.rel (%p305) target = $region16
        $region15: #{tpu_custom_call.1} parent=11 // pred_region
          %s309 = ssub.s32 352, 352
          %310 = vsyncadd [#allocation7], %s309
          %s312 = sshll.u32 [#allocation8], 4
          %s313 = int_to_ptr.vmem [resolvable:$true] %s312
          %315 = dma.hbm_to_vmem [thread:$0]  %s2, 352, %s313, [#allocation7]
        $region16: #{tpu_custom_call.1} parent=11 // pred_fallthru
          _
        // Predicated region
        $region17: #{tpu_custom_call.1} parent=11 // pred_check
          %p316 = pneg %p122
        $region18: #{tpu_custom_call.1} parent=11 // pred_check_branch
          %318 = sbr.rel (%p316) target = $region20
        $region19: #{tpu_custom_call.1} parent=11 // pred_region
          %s320 = ssub.s32 65536, 65536
          %321 = vsyncadd [#allocation10], %s320
          %s322 = sshll.u32 [#allocation9], 4
          %s323 = int_to_ptr.vmem [resolvable:$true] %s322
          %328 = dma.hbm_to_vmem [thread:$0]  %s3, 65536, %s323, [#allocation10], 256, 256, 16
        $region20: #{tpu_custom_call.1} parent=11 // pred_fallthru
          _
        // Predicated region
        $region21: #{tpu_custom_call.1} parent=11 // pred_check
          %p329 = pneg %p143
        $region22: #{tpu_custom_call.1} parent=11 // pred_check_branch
          %331 = sbr.rel (%p329) target = $region24
        $region23: #{tpu_custom_call.1} parent=11 // pred_region
          %s333 = ssub.s32 64, 64
          %334 = vsyncadd [#allocation10], %s333
          %s336 = sshll.u32 [#allocation11], 4
          %s337 = int_to_ptr.vmem [resolvable:$true] %s336
          %339 = dma.hbm_to_vmem [thread:$0]  %s4, 64, %s337, [#allocation10]
        $region24: #{tpu_custom_call.1} parent=11 // pred_fallthru
          _
        // Predicated region
        $region25: #{tpu_custom_call.1} parent=11 // pred_check
          %p340 = pneg %p164
        $region26: #{tpu_custom_call.1} parent=11 // pred_check_branch
          %342 = sbr.rel (%p340) target = $region28
        $region27: #{tpu_custom_call.1} parent=11 // pred_region
          %s344 = ssub.s32 24576, 24576
          %345 = vsyncadd [#allocation13], %s344
          %s346 = sshll.u32 [#allocation12], 4
          %s347 = int_to_ptr.vmem [resolvable:$true] %s346
          %352 = dma.hbm_to_vmem [thread:$0]  %s5, 24576, %s347, [#allocation13], 256, 256, 16
        $region28: #{tpu_custom_call.1} parent=11 // pred_fallthru
          _
        // Predicated region
        $region29: #{tpu_custom_call.1} parent=11 // pred_check
          %p353 = pneg %p185
        $region30: #{tpu_custom_call.1} parent=11 // pred_check_branch
          %355 = sbr.rel (%p353) target = $region32
        $region31: #{tpu_custom_call.1} parent=11 // pred_region
          %s357 = ssub.s32 64, 64
          %358 = vsyncadd [#allocation13], %s357
          %s360 = sshll.u32 [#allocation14], 4
          %s361 = int_to_ptr.vmem [resolvable:$true] %s360
          %363 = dma.hbm_to_vmem [thread:$0]  %s6, 64, %s361, [#allocation13]
        $region32: #{tpu_custom_call.1} parent=11 // pred_fallthru
          _
        // Predicated region
        $region33: #{tpu_custom_call.1} parent=11 // pred_check
          %p364 = pneg %p206
        $region34: #{tpu_custom_call.1} parent=11 // pred_check_branch
          %366 = sbr.rel (%p364) target = $region36
        $region35: #{tpu_custom_call.1} parent=11 // pred_region
          %s368 = ssub.s32 16384, 16384
          %369 = vsyncadd [#allocation16], %s368
          %s370 = sshll.u32 [#allocation15], 4
          %s371 = int_to_ptr.vmem [resolvable:$true] %s370
          %376 = dma.hbm_to_vmem [thread:$0]  %s7, 16384, %s371, [#allocation16], 128, 128, 8
        $region36: #{tpu_custom_call.1} parent=11 // pred_fallthru
          _
        // Predicated region
        $region37: #{tpu_custom_call.1} parent=11 // pred_check
          %p377 = pneg %p227
        $region38: #{tpu_custom_call.1} parent=11 // pred_check_branch
          %379 = sbr.rel (%p377) target = $region40
        $region39: #{tpu_custom_call.1} parent=11 // pred_region
          %s381 = ssub.s32 32, 32
          %382 = vsyncadd [#allocation16], %s381
          %s384 = sshll.u32 [#allocation17], 4
          %s385 = int_to_ptr.vmem [resolvable:$true] %s384
          %387 = dma.hbm_to_vmem [thread:$0]  %s8, 32, %s385, [#allocation16]
        $region40: #{tpu_custom_call.1} parent=11 // pred_fallthru
          _
        // Predicated region
        $region41: #{tpu_custom_call.1} parent=11 // pred_check
          %p388 = pneg %p248
        $region42: #{tpu_custom_call.1} parent=11 // pred_check_branch
          %390 = sbr.rel (%p388) target = $region44
        $region43: #{tpu_custom_call.1} parent=11 // pred_region
          %s392 = ssub.s32 2048, 2048
          %393 = vsyncadd [#allocation19], %s392
          %s394 = sshll.u32 [#allocation18], 4
          %s395 = int_to_ptr.vmem [resolvable:$true] %s394
          %400 = dma.hbm_to_vmem [thread:$0]  %s9, 2048, %s395, [#allocation19], 64, 64, 4
        $region44: #{tpu_custom_call.1} parent=11 // pred_fallthru
          _
        // Predicated region
        $region45: #{tpu_custom_call.1} parent=11 // pred_check
          %p401 = pneg %p269
        $region46: #{tpu_custom_call.1} parent=11 // pred_check_branch
          %403 = sbr.rel (%p401) target = $region48
        $region47: #{tpu_custom_call.1} parent=11 // pred_region
          %s405 = ssub.s32 16, 16
          %406 = vsyncadd [#allocation19], %s405
          %s408 = sshll.u32 [#allocation20], 4
          %s409 = int_to_ptr.vmem [resolvable:$true] %s408
          %411 = dma.hbm_to_vmem [thread:$0]  %s10, 16, %s409, [#allocation19]
        $region48: #{tpu_custom_call.1} parent=11 // pred_fallthru
          _
      $region12: #{tpu_custom_call.1} parent=5 // pred_fallthru
        _
      %p412 = scmp.lt.s32.totalorder %s28, 3
      // Predicated region
      $region49: #{tpu_custom_call.1} parent=5 // pred_check
        %p413 = pneg %p412
      $region50: #{tpu_custom_call.1} parent=5 // pred_check_branch
        %415 = sbr.rel (%p413) target = $region52
      $region51: #{tpu_custom_call.1} parent=5 // pred_region
        // Predicated region
        $region53: #{tpu_custom_call.1} parent=51 // pred_check
          %p416 = pneg %p48
        $region54: #{tpu_custom_call.1} parent=51 // pred_check_branch
          %418 = sbr.rel (%p416) target = $region56
        $region55: #{tpu_custom_call.1} parent=51 // pred_region
          %s419 = sand.u32 %s38, 1
          %s420 = scalar_lea.sflag [#allocation4], %s419
          %s421 = sand.u32 %s38, 1
          %s422 = smul.addr %s421, 4
          %s423 = scalar_lea.vmem [#allocation3], %s422
          %s424 = smul.u32 2, %s28
          %s426 = ssub.s32 64, 64
          %427 = vsyncadd %s420, %s426
          %s428 = smul.addr %s424, 32
          %s429 = scalar_lea.hbm %s0, %s428
          %s431 = sshll.u32 %s423, 4
          %s432 = int_to_ptr.vmem [resolvable:$true] %s431
          %434 = dma.hbm_to_vmem [thread:$0]  %s429, 64, %s432, %s420
        $region56: #{tpu_custom_call.1} parent=51 // pred_fallthru
          _
        // Predicated region
        $region57: #{tpu_custom_call.1} parent=51 // pred_check
          %p435 = pneg %p74
        $region58: #{tpu_custom_call.1} parent=51 // pred_check_branch
          %437 = sbr.rel (%p435) target = $region60
        $region59: #{tpu_custom_call.1} parent=51 // pred_region
          %s438 = sand.u32 %s28, 1
          %s439 = scalar_lea.sflag [#allocation7], %s438
          %s440 = sand.u32 %s64, 1
          %s441 = smul.addr %s440, 2816
          %s442 = scalar_lea.vmem [#allocation6], %s441
          %s443 = smul.u32 32, %s28
          %s445 = ssub.s32 45056, 45056
          %446 = vsyncadd %s439, %s445
          %s447 = smul.addr %s443, 22
          %s448 = smul.addr %s447, 64
          %s449 = scalar_lea.hbm %s1, %s448
          %s450 = sshll.u32 %s442, 4
          %s451 = int_to_ptr.vmem [resolvable:$true] %s450
          %456 = dma.hbm_to_vmem [thread:$0]  %s449, 45056, %s451, %s439, 1408, 1408, 88
        $region60: #{tpu_custom_call.1} parent=51 // pred_fallthru
          _
      $region52: #{tpu_custom_call.1} parent=5 // pred_fallthru
        _
      %p457 = scmp.le.s32.totalorder 1, %s28
      %p458 = scmp.lt.s32.totalorder %s28, 4
      %p459 = pnand %p457, %p458
      %p460 = pneg %p459
      // Predicated region
      $region61: #{tpu_custom_call.1} parent=5 // pred_check
        _
      $region62: #{tpu_custom_call.1} parent=5 // pred_check_branch
        %462 = sbr.rel (%p459) target = $region64
      $region63: #{tpu_custom_call.1} parent=5 // pred_region
        %s463 = ssub.s32 %s28, 1
        %s464 = sand.u32 %s41, 1
        %s465 = scalar_lea.sflag [#allocation4], %s464
        %s466 = sand.u32 %s41, 1
        %s467 = smul.addr %s466, 4
        %s468 = scalar_lea.vmem [#allocation3], %s467
        // Predicated region
        $region65: #{tpu_custom_call.1} parent=63 // pred_check
          %p469 = pneg %p54
        $region66: #{tpu_custom_call.1} parent=63 // pred_check_branch
          %471 = sbr.rel (%p469) target = $region68
        $region67: #{tpu_custom_call.1} parent=63 // pred_region
          %472 = dma.done %s465, 64
        $region68: #{tpu_custom_call.1} parent=63 // pred_fallthru
          _
        %s473 = sand.u32 %s33, 1
        %s474 = scalar_lea.sflag [#allocation7], %s473
        %s475 = sand.u32 %s67, 1
        %s476 = smul.addr %s475, 2816
        %s477 = scalar_lea.vmem [#allocation6], %s476
        // Predicated region
        $region69: #{tpu_custom_call.1} parent=63 // pred_check
          %p478 = pneg %p80
        $region70: #{tpu_custom_call.1} parent=63 // pred_check_branch
          %480 = sbr.rel (%p478) target = $region72
        $region71: #{tpu_custom_call.1} parent=63 // pred_region
          %481 = dma.done %s474, 45056
        $region72: #{tpu_custom_call.1} parent=63 // pred_fallthru
          _
        // Predicated region
        $region73: #{tpu_custom_call.1} parent=63 // pred_check
          %p482 = pneg %p101
        $region74: #{tpu_custom_call.1} parent=63 // pred_check_branch
          %484 = sbr.rel (%p482) target = $region76
        $region75: #{tpu_custom_call.1} parent=63 // pred_region
          %485 = dma.done [#allocation7], 352
        $region76: #{tpu_custom_call.1} parent=63 // pred_fallthru
          _
        // Predicated region
        $region77: #{tpu_custom_call.1} parent=63 // pred_check
          %p486 = pneg %p122
        $region78: #{tpu_custom_call.1} parent=63 // pred_check_branch
          %488 = sbr.rel (%p486) target = $region80
        $region79: #{tpu_custom_call.1} parent=63 // pred_region
          %489 = dma.done [#allocation10], 65536
        $region80: #{tpu_custom_call.1} parent=63 // pred_fallthru
          _
        // Predicated region
        $region81: #{tpu_custom_call.1} parent=63 // pred_check
          %p490 = pneg %p143
        $region82: #{tpu_custom_call.1} parent=63 // pred_check_branch
          %492 = sbr.rel (%p490) target = $region84
        $region83: #{tpu_custom_call.1} parent=63 // pred_region
          %493 = dma.done [#allocation10], 64
        $region84: #{tpu_custom_call.1} parent=63 // pred_fallthru
          _
        // Predicated region
        $region85: #{tpu_custom_call.1} parent=63 // pred_check
          %p494 = pneg %p164
        $region86: #{tpu_custom_call.1} parent=63 // pred_check_branch
          %496 = sbr.rel (%p494) target = $region88
        $region87: #{tpu_custom_call.1} parent=63 // pred_region
          %497 = dma.done [#allocation13], 24576
        $region88: #{tpu_custom_call.1} parent=63 // pred_fallthru
          _
        // Predicated region
        $region89: #{tpu_custom_call.1} parent=63 // pred_check
          %p498 = pneg %p185
        $region90: #{tpu_custom_call.1} parent=63 // pred_check_branch
          %500 = sbr.rel (%p498) target = $region92
        $region91: #{tpu_custom_call.1} parent=63 // pred_region
          %501 = dma.done [#allocation13], 64
        $region92: #{tpu_custom_call.1} parent=63 // pred_fallthru
          _
        // Predicated region
        $region93: #{tpu_custom_call.1} parent=63 // pred_check
          %p502 = pneg %p206
        $region94: #{tpu_custom_call.1} parent=63 // pred_check_branch
          %504 = sbr.rel (%p502) target = $region96
        $region95: #{tpu_custom_call.1} parent=63 // pred_region
          %505 = dma.done [#allocation16], 16384
        $region96: #{tpu_custom_call.1} parent=63 // pred_fallthru
          _
        // Predicated region
        $region97: #{tpu_custom_call.1} parent=63 // pred_check
          %p506 = pneg %p227
        $region98: #{tpu_custom_call.1} parent=63 // pred_check_branch
          %508 = sbr.rel (%p506) target = $region100
        $region99: #{tpu_custom_call.1} parent=63 // pred_region
          %509 = dma.done [#allocation16], 32
        $region100: #{tpu_custom_call.1} parent=63 // pred_fallthru
          _
        // Predicated region
        $region101: #{tpu_custom_call.1} parent=63 // pred_check
          %p510 = pneg %p248
        $region102: #{tpu_custom_call.1} parent=63 // pred_check_branch
          %512 = sbr.rel (%p510) target = $region104
        $region103: #{tpu_custom_call.1} parent=63 // pred_region
          %513 = dma.done [#allocation19], 2048
        $region104: #{tpu_custom_call.1} parent=63 // pred_fallthru
          _
        // Predicated region
        $region105: #{tpu_custom_call.1} parent=63 // pred_check
          %p514 = pneg %p269
        $region106: #{tpu_custom_call.1} parent=63 // pred_check_branch
          %516 = sbr.rel (%p514) target = $region108
        $region107: #{tpu_custom_call.1} parent=63 // pred_region
          %517 = dma.done [#allocation19], 16
        $region108: #{tpu_custom_call.1} parent=63 // pred_fallthru
          _
        %s518 = sand.u32 %s41, 1
        %s519 = scalar_lea.sflag [#allocation4], %s518
        %s520 = sand.u32 %s41, 1
        %s521 = smul.addr %s520, 4
        %s522 = scalar_lea.vmem [#allocation3], %s521
        %p523 = pneg %p54
        %p524 = pneg %p51
        %s525 = sand.u32 %s33, 1
        %s526 = scalar_lea.sflag [#allocation7], %s525
        %s527 = sand.u32 %s67, 1
        %s528 = smul.addr %s527, 2816
        %s529 = scalar_lea.vmem [#allocation6], %s528
        %p530 = pneg %p80
        %p531 = pneg %p77
        %p532 = pneg %p101
        %p533 = pneg %p98
        %p534 = pneg %p122
        %p535 = pneg %p119
        %p536 = pneg %p143
        %p537 = pneg %p140
        %p538 = pneg %p164
        %p539 = pneg %p161
        %p540 = pneg %p185
        %p541 = pneg %p182
        %p542 = pneg %p206
        %p543 = pneg %p203
        %p544 = pneg %p227
        %p545 = pneg %p224
        %p546 = pneg %p248
        %p547 = pneg %p245
        %p548 = pneg %p269
        %p549 = pneg %p266
        %p550 = pneg %p290
        %p551 = pneg %p287
        %s552 = smul.u32 2, %s33
        %s553 = smul.u32 32, %s33
        %p554 = scmp.eq.s32.totalorder %s33, 0
        // Predicated region
        $region109: #{tpu_custom_call.1} parent=63 // pred_check
          %p555 = pneg %p554
        $region110: #{tpu_custom_call.1} parent=63 // pred_check_branch
          %557 = sbr.rel (%p555) target = $region112
        $region111: #{tpu_custom_call.1} parent=63 // pred_region
          %v558 = vld [vmem:[#allocation8] sm:$0xff]
          %v559 = vld [vmem:[#allocation8 + $0x8] sm:$0xff]
          %v560 = vld [vmem:[#allocation8 + $0x10] sm:$0x3f]
          %v564 = vlaneseq
          %v565 = vshrl.u32 %v564, 7
          %v566 = vsub.s32 0, %v565
          %v567 = vrot.slane %v558, %v566
          %v568 = vlaneseq
          %v569 = vshrl.u32 %v568, 7
          %v570 = vsub.s32 1, %v569
          %v571 = vrot.slane %v558, %v570
          %v572 = vlaneseq
          %v573 = vshrl.u32 %v572, 7
          %v574 = vsub.s32 2, %v573
          %v575 = vrot.slane %v558, %v574
          %v576 = vlaneseq
          %v577 = vshrl.u32 %v576, 7
          %v578 = vsub.s32 3, %v577
          %v579 = vrot.slane %v558, %v578
          %v580 = vlaneseq
          %v581 = vshrl.u32 %v580, 7
          %v582 = vsub.s32 4, %v581
          %v583 = vrot.slane %v558, %v582
          %v584 = vlaneseq
          %v585 = vshrl.u32 %v584, 7
          %v586 = vsub.s32 5, %v585
          %v587 = vrot.slane %v558, %v586
          %v588 = vlaneseq
          %v589 = vshrl.u32 %v588, 7
          %v590 = vsub.s32 6, %v589
          %v591 = vrot.slane %v558, %v590
          %v592 = vlaneseq
          %v593 = vshrl.u32 %v592, 7
          %v594 = vsub.s32 7, %v593
          %v595 = vrot.slane %v558, %v594
          %v596 = vlaneseq
          %v597 = vshrl.u32 %v596, 7
          %v598 = vsub.s32 0, %v597
          %v599 = vrot.slane %v559, %v598
          %v600 = vlaneseq
          %v601 = vshrl.u32 %v600, 7
          %v602 = vsub.s32 1, %v601
          %v603 = vrot.slane %v559, %v602
          %v604 = vlaneseq
          %v605 = vshrl.u32 %v604, 7
          %v606 = vsub.s32 2, %v605
          %v607 = vrot.slane %v559, %v606
          %v608 = vlaneseq
          %v609 = vshrl.u32 %v608, 7
          %v610 = vsub.s32 3, %v609
          %v611 = vrot.slane %v559, %v610
          %v612 = vlaneseq
          %v613 = vshrl.u32 %v612, 7
          %v614 = vsub.s32 4, %v613
          %v615 = vrot.slane %v559, %v614
          %v616 = vlaneseq
          %v617 = vshrl.u32 %v616, 7
          %v618 = vsub.s32 5, %v617
          %v619 = vrot.slane %v559, %v618
          %v620 = vlaneseq
          %v621 = vshrl.u32 %v620, 7
          %v622 = vsub.s32 6, %v621
          %v623 = vrot.slane %v559, %v622
          %v624 = vlaneseq
          %v625 = vshrl.u32 %v624, 7
          %v626 = vsub.s32 7, %v625
          %v627 = vrot.slane %v559, %v626
          %v628 = vlaneseq
          %v629 = vshrl.u32 %v628, 7
          %v630 = vsub.s32 0, %v629
          %v631 = vrot.slane %v560, %v630
          %v632 = vlaneseq
          %v633 = vshrl.u32 %v632, 7
          %v634 = vsub.s32 1, %v633
          %v635 = vrot.slane %v560, %v634
          %v636 = vlaneseq
          %v637 = vshrl.u32 %v636, 7
          %v638 = vsub.s32 2, %v637
          %v639 = vrot.slane %v560, %v638
          %v640 = vlaneseq
          %v641 = vshrl.u32 %v640, 7
          %v642 = vsub.s32 3, %v641
          %v643 = vrot.slane %v560, %v642
          %v644 = vlaneseq
          %v645 = vshrl.u32 %v644, 7
          %v646 = vsub.s32 4, %v645
          %v647 = vrot.slane %v560, %v646
          %v648 = vlaneseq
          %v649 = vshrl.u32 %v648, 7
          %v650 = vsub.s32 5, %v649
          %v651 = vrot.slane %v560, %v650
          %v652 = vcombine.low %v567, %v571
          %v653 = vcombine.low %v575, %v579
          %v655 = vunpack.c.l.s4 1983009808
          %v656 = vunpack.c.0.s8 %v655
          %v657 = vlaneseq
          %v658 = vshrl.u32 %v657, 7
          %v659 = vsub.s32 %v656, %v658
          %v660 = vrot.slane %v652, %v659
          %v662 = vunpack.c.l.s4 1983009808
          %v663 = vunpack.c.0.s8 %v662
          %v664 = vlaneseq
          %v665 = vshrl.u32 %v664, 7
          %v666 = vsub.s32 %v663, %v665
          %v667 = vrot.slane %v653, %v666
          %v668 = vcombine.low %v660, %v667
          %v669 = vcombine.low %v583, %v587
          %v670 = vcombine.low %v591, %v595
          %v672 = vunpack.c.l.s4 1983009808
          %v673 = vunpack.c.0.s8 %v672
          %v674 = vlaneseq
          %v675 = vshrl.u32 %v674, 7
          %v676 = vsub.s32 %v673, %v675
          %v677 = vrot.slane %v669, %v676
          %v679 = vunpack.c.l.s4 1983009808
          %v680 = vunpack.c.0.s8 %v679
          %v681 = vlaneseq
          %v682 = vshrl.u32 %v681, 7
          %v683 = vsub.s32 %v680, %v682
          %v684 = vrot.slane %v670, %v683
          %v685 = vcombine.low %v677, %v684
          %v686 = vcombine.low %v599, %v603
          %v687 = vcombine.low %v607, %v611
          %v689 = vunpack.c.l.s4 1983009808
          %v690 = vunpack.c.0.s8 %v689
          %v691 = vlaneseq
          %v692 = vshrl.u32 %v691, 7
          %v693 = vsub.s32 %v690, %v692
          %v694 = vrot.slane %v686, %v693
          %v696 = vunpack.c.l.s4 1983009808
          %v697 = vunpack.c.0.s8 %v696
          %v698 = vlaneseq
          %v699 = vshrl.u32 %v698, 7
          %v700 = vsub.s32 %v697, %v699
          %v701 = vrot.slane %v687, %v700
          %v702 = vcombine.low %v694, %v701
          %v703 = vcombine.low %v615, %v619
          %v704 = vcombine.low %v623, %v627
          %v706 = vunpack.c.l.s4 1983009808
          %v707 = vunpack.c.0.s8 %v706
          %v708 = vlaneseq
          %v709 = vshrl.u32 %v708, 7
          %v710 = vsub.s32 %v707, %v709
          %v711 = vrot.slane %v703, %v710
          %v713 = vunpack.c.l.s4 1983009808
          %v714 = vunpack.c.0.s8 %v713
          %v715 = vlaneseq
          %v716 = vshrl.u32 %v715, 7
          %v717 = vsub.s32 %v714, %v716
          %v718 = vrot.slane %v704, %v717
          %v719 = vcombine.low %v711, %v718
          %v720 = vcombine.low %v631, %v635
          %v721 = vcombine.low %v639, %v643
          %v723 = vunpack.c.l.s4 1983009808
          %v724 = vunpack.c.0.s8 %v723
          %v725 = vlaneseq
          %v726 = vshrl.u32 %v725, 7
          %v727 = vsub.s32 %v724, %v726
          %v728 = vrot.slane %v720, %v727
          %v730 = vunpack.c.l.s4 1983009808
          %v731 = vunpack.c.0.s8 %v730
          %v732 = vlaneseq
          %v733 = vshrl.u32 %v732, 7
          %v734 = vsub.s32 %v731, %v733
          %v735 = vrot.slane %v721, %v734
          %v736 = vcombine.low %v728, %v735
          %v737 = vcombine.low %v647, %v651
          %v739 = vunpack.c.l.s4 1983009808
          %v740 = vunpack.c.0.s8 %v739
          %v741 = vlaneseq
          %v742 = vshrl.u32 %v741, 7
          %v743 = vsub.s32 %v740, %v742
          %v744 = vrot.slane %v737, %v743
          %751 = vst [vmem:[#allocation2] sm:$0xff] %v668
          %752 = vst [vmem:[#allocation2 + $0x8] sm:$0xff] %v685
          %753 = vst [vmem:[#allocation2 + $0x10] sm:$0xff] %v702
          %754 = vst [vmem:[#allocation2 + $0x18] sm:$0xff] %v719
          %755 = vst [vmem:[#allocation2 + $0x20] sm:$0xff] %v736
          %756 = vst [vmem:[#allocation2 + $0x28] sm:$0xf] %v744
        $region112: #{tpu_custom_call.1} parent=63 // pred_fallthru
          _
        %v757 = vld [vmem:[#allocation2] sm:$0xff]
        %v758 = vld [vmem:[#allocation2 + $0x8] sm:$0xff]
        %v759 = vld [vmem:[#allocation2 + $0x10] sm:$0xff]
        %v760 = vld [vmem:[#allocation2 + $0x18] sm:$0xff]
        %v761 = vld [vmem:[#allocation2 + $0x20] sm:$0xff]
        %v762 = vld [vmem:[#allocation2 + $0x28] sm:$0xf]
        %v763 = vld [vmem:[%s468] sm:$0xf]
        %v764 = vld [vmem:[%s477] sm:$0xff]
        %v765 = vld [vmem:[%s477 + $0x8] sm:$0xff]
        %v766 = vld [vmem:[%s477 + $0x10] sm:$0xff]
        %v767 = vld [vmem:[%s477 + $0x18] sm:$0xff]
        %v768 = vld [vmem:[%s477 + $0x20] sm:$0xff]
        %v769 = vld [vmem:[%s477 + $0x28] sm:$0xff]
        %v770 = vld [vmem:[%s477 + $0x30] sm:$0xff]
        %v771 = vld [vmem:[%s477 + $0x38] sm:$0xff]
        %v772 = vld [vmem:[%s477 + $0x40] sm:$0xff]
        %v773 = vld [vmem:[%s477 + $0x48] sm:$0xff]
        %v774 = vld [vmem:[%s477 + $0x50] sm:$0xff]
        %v775 = vld [vmem:[%s477 + $0x58] sm:$0xff]
        %v776 = vld [vmem:[%s477 + $0x60] sm:$0xff]
        %v777 = vld [vmem:[%s477 + $0x68] sm:$0xff]
        %v778 = vld [vmem:[%s477 + $0x70] sm:$0xff]
        %v779 = vld [vmem:[%s477 + $0x78] sm:$0xff]
        %v780 = vld [vmem:[%s477 + $0x80] sm:$0xff]
        %v781 = vld [vmem:[%s477 + $0x88] sm:$0xff]
        %v782 = vld [vmem:[%s477 + $0x90] sm:$0xff]
        %v783 = vld [vmem:[%s477 + $0x98] sm:$0xff]
        %v784 = vld [vmem:[%s477 + $0xa0] sm:$0xff]
        %v785 = vld [vmem:[%s477 + $0xa8] sm:$0xff]
        %v786 = vld [vmem:[%s477 + $0xb0] sm:$0xff]
        %v787 = vld [vmem:[%s477 + $0xb8] sm:$0xff]
        %v788 = vld [vmem:[%s477 + $0xc0] sm:$0xff]
        %v789 = vld [vmem:[%s477 + $0xc8] sm:$0xff]
        %v790 = vld [vmem:[%s477 + $0xd0] sm:$0xff]
        %v791 = vld [vmem:[%s477 + $0xd8] sm:$0xff]
        %v792 = vld [vmem:[%s477 + $0xe0] sm:$0xff]
        %v793 = vld [vmem:[%s477 + $0xe8] sm:$0xff]
        %v794 = vld [vmem:[%s477 + $0xf0] sm:$0xff]
        %v795 = vld [vmem:[%s477 + $0xf8] sm:$0xff]
        %v796 = vld [vmem:[%s477 + $0x100] sm:$0xff]
        %v797 = vld [vmem:[%s477 + $0x108] sm:$0xff]
        %v798 = vld [vmem:[%s477 + $0x110] sm:$0xff]
        %v799 = vld [vmem:[%s477 + $0x118] sm:$0xff]
        %v800 = vld [vmem:[%s477 + $0x120] sm:$0xff]
        %v801 = vld [vmem:[%s477 + $0x128] sm:$0xff]
        %v802 = vld [vmem:[%s477 + $0x130] sm:$0xff]
        %v803 = vld [vmem:[%s477 + $0x138] sm:$0xff]
        %v804 = vld [vmem:[%s477 + $0x140] sm:$0xff]
        %v805 = vld [vmem:[%s477 + $0x148] sm:$0xff]
        %v806 = vld [vmem:[%s477 + $0x150] sm:$0xff]
        %v807 = vld [vmem:[%s477 + $0x158] sm:$0xff]
        %v808 = vld [vmem:[%s477 + $0x160] sm:$0xff]
        %v809 = vld [vmem:[%s477 + $0x168] sm:$0xff]
        %v810 = vld [vmem:[%s477 + $0x170] sm:$0xff]
        %v811 = vld [vmem:[%s477 + $0x178] sm:$0xff]
        %v812 = vld [vmem:[%s477 + $0x180] sm:$0xff]
        %v813 = vld [vmem:[%s477 + $0x188] sm:$0xff]
        %v814 = vld [vmem:[%s477 + $0x190] sm:$0xff]
        %v815 = vld [vmem:[%s477 + $0x198] sm:$0xff]
        %v816 = vld [vmem:[%s477 + $0x1a0] sm:$0xff]
        %v817 = vld [vmem:[%s477 + $0x1a8] sm:$0xff]
        %v818 = vld [vmem:[%s477 + $0x1b0] sm:$0xff]
        %v819 = vld [vmem:[%s477 + $0x1b8] sm:$0xff]
        %v820 = vld [vmem:[%s477 + $0x1c0] sm:$0xff]
        %v821 = vld [vmem:[%s477 + $0x1c8] sm:$0xff]
        %v822 = vld [vmem:[%s477 + $0x1d0] sm:$0xff]
        %v823 = vld [vmem:[%s477 + $0x1d8] sm:$0xff]
        %v824 = vld [vmem:[%s477 + $0x1e0] sm:$0xff]
        %v825 = vld [vmem:[%s477 + $0x1e8] sm:$0xff]
        %v826 = vld [vmem:[%s477 + $0x1f0] sm:$0xff]
        %v827 = vld [vmem:[%s477 + $0x1f8] sm:$0xff]
        %v828 = vld [vmem:[%s477 + $0x200] sm:$0xff]
        %v829 = vld [vmem:[%s477 + $0x208] sm:$0xff]
        %v830 = vld [vmem:[%s477 + $0x210] sm:$0xff]
        %v831 = vld [vmem:[%s477 + $0x218] sm:$0xff]
        %v832 = vld [vmem:[%s477 + $0x220] sm:$0xff]
        %v833 = vld [vmem:[%s477 + $0x228] sm:$0xff]
        %v834 = vld [vmem:[%s477 + $0x230] sm:$0xff]
        %v835 = vld [vmem:[%s477 + $0x238] sm:$0xff]
        %v836 = vld [vmem:[%s477 + $0x240] sm:$0xff]
        %v837 = vld [vmem:[%s477 + $0x248] sm:$0xff]
        %v838 = vld [vmem:[%s477 + $0x250] sm:$0xff]
        %v839 = vld [vmem:[%s477 + $0x258] sm:$0xff]
        %v840 = vld [vmem:[%s477 + $0x260] sm:$0xff]
        %v841 = vld [vmem:[%s477 + $0x268] sm:$0xff]
        %v842 = vld [vmem:[%s477 + $0x270] sm:$0xff]
        %v843 = vld [vmem:[%s477 + $0x278] sm:$0xff]
        %v844 = vld [vmem:[%s477 + $0x280] sm:$0xff]
        %v845 = vld [vmem:[%s477 + $0x288] sm:$0xff]
        %v846 = vld [vmem:[%s477 + $0x290] sm:$0xff]
        %v847 = vld [vmem:[%s477 + $0x298] sm:$0xff]
        %v848 = vld [vmem:[%s477 + $0x2a0] sm:$0xff]
        %v849 = vld [vmem:[%s477 + $0x2a8] sm:$0xff]
        %v850 = vld [vmem:[%s477 + $0x2b0] sm:$0xff]
        %v851 = vld [vmem:[%s477 + $0x2b8] sm:$0xff]
        %v852 = vld [vmem:[%s477 + $0x2c0] sm:$0xff]
        %v853 = vld [vmem:[%s477 + $0x2c8] sm:$0xff]
        %v854 = vld [vmem:[%s477 + $0x2d0] sm:$0xff]
        %v855 = vld [vmem:[%s477 + $0x2d8] sm:$0xff]
        %v856 = vld [vmem:[%s477 + $0x2e0] sm:$0xff]
        %v857 = vld [vmem:[%s477 + $0x2e8] sm:$0xff]
        %v858 = vld [vmem:[%s477 + $0x2f0] sm:$0xff]
        %v859 = vld [vmem:[%s477 + $0x2f8] sm:$0xff]
        %v860 = vld [vmem:[%s477 + $0x300] sm:$0xff]
        %v861 = vld [vmem:[%s477 + $0x308] sm:$0xff]
        %v862 = vld [vmem:[%s477 + $0x310] sm:$0xff]
        %v863 = vld [vmem:[%s477 + $0x318] sm:$0xff]
        %v864 = vld [vmem:[%s477 + $0x320] sm:$0xff]
        %v865 = vld [vmem:[%s477 + $0x328] sm:$0xff]
        %v866 = vld [vmem:[%s477 + $0x330] sm:$0xff]
        %v867 = vld [vmem:[%s477 + $0x338] sm:$0xff]
        %v868 = vld [vmem:[%s477 + $0x340] sm:$0xff]
        %v869 = vld [vmem:[%s477 + $0x348] sm:$0xff]
        %v870 = vld [vmem:[%s477 + $0x350] sm:$0xff]
        %v871 = vld [vmem:[%s477 + $0x358] sm:$0xff]
        %v872 = vld [vmem:[%s477 + $0x360] sm:$0xff]
        %v873 = vld [vmem:[%s477 + $0x368] sm:$0xff]
        %v874 = vld [vmem:[%s477 + $0x370] sm:$0xff]
        %v875 = vld [vmem:[%s477 + $0x378] sm:$0xff]
        %v876 = vld [vmem:[%s477 + $0x380] sm:$0xff]
        %v877 = vld [vmem:[%s477 + $0x388] sm:$0xff]
        %v878 = vld [vmem:[%s477 + $0x390] sm:$0xff]
        %v879 = vld [vmem:[%s477 + $0x398] sm:$0xff]
        %v880 = vld [vmem:[%s477 + $0x3a0] sm:$0xff]
        %v881 = vld [vmem:[%s477 + $0x3a8] sm:$0xff]
        %v882 = vld [vmem:[%s477 + $0x3b0] sm:$0xff]
        %v883 = vld [vmem:[%s477 + $0x3b8] sm:$0xff]
        %v884 = vld [vmem:[%s477 + $0x3c0] sm:$0xff]
        %v885 = vld [vmem:[%s477 + $0x3c8] sm:$0xff]
        %v886 = vld [vmem:[%s477 + $0x3d0] sm:$0xff]
        %v887 = vld [vmem:[%s477 + $0x3d8] sm:$0xff]
        %v888 = vld [vmem:[%s477 + $0x3e0] sm:$0xff]
        %v889 = vld [vmem:[%s477 + $0x3e8] sm:$0xff]
        %v890 = vld [vmem:[%s477 + $0x3f0] sm:$0xff]
        %v891 = vld [vmem:[%s477 + $0x3f8] sm:$0xff]
        %v892 = vld [vmem:[%s477 + $0x400] sm:$0xff]
        %v893 = vld [vmem:[%s477 + $0x408] sm:$0xff]
        %v894 = vld [vmem:[%s477 + $0x410] sm:$0xff]
        %v895 = vld [vmem:[%s477 + $0x418] sm:$0xff]
        %v896 = vld [vmem:[%s477 + $0x420] sm:$0xff]
        %v897 = vld [vmem:[%s477 + $0x428] sm:$0xff]
        %v898 = vld [vmem:[%s477 + $0x430] sm:$0xff]
        %v899 = vld [vmem:[%s477 + $0x438] sm:$0xff]
        %v900 = vld [vmem:[%s477 + $0x440] sm:$0xff]
        %v901 = vld [vmem:[%s477 + $0x448] sm:$0xff]
        %v902 = vld [vmem:[%s477 + $0x450] sm:$0xff]
        %v903 = vld [vmem:[%s477 + $0x458] sm:$0xff]
        %v904 = vld [vmem:[%s477 + $0x460] sm:$0xff]
        %v905 = vld [vmem:[%s477 + $0x468] sm:$0xff]
        %v906 = vld [vmem:[%s477 + $0x470] sm:$0xff]
        %v907 = vld [vmem:[%s477 + $0x478] sm:$0xff]
        %v908 = vld [vmem:[%s477 + $0x480] sm:$0xff]
        %v909 = vld [vmem:[%s477 + $0x488] sm:$0xff]
        %v910 = vld [vmem:[%s477 + $0x490] sm:$0xff]
        %v911 = vld [vmem:[%s477 + $0x498] sm:$0xff]
        %v912 = vld [vmem:[%s477 + $0x4a0] sm:$0xff]
        %v913 = vld [vmem:[%s477 + $0x4a8] sm:$0xff]
        %v914 = vld [vmem:[%s477 + $0x4b0] sm:$0xff]
        %v915 = vld [vmem:[%s477 + $0x4b8] sm:$0xff]
        %v916 = vld [vmem:[%s477 + $0x4c0] sm:$0xff]
        %v917 = vld [vmem:[%s477 + $0x4c8] sm:$0xff]
        %v918 = vld [vmem:[%s477 + $0x4d0] sm:$0xff]
        %v919 = vld [vmem:[%s477 + $0x4d8] sm:$0xff]
        %v920 = vld [vmem:[%s477 + $0x4e0] sm:$0xff]
        %v921 = vld [vmem:[%s477 + $0x4e8] sm:$0xff]
        %v922 = vld [vmem:[%s477 + $0x4f0] sm:$0xff]
        %v923 = vld [vmem:[%s477 + $0x4f8] sm:$0xff]
        %v924 = vld [vmem:[%s477 + $0x500] sm:$0xff]
        %v925 = vld [vmem:[%s477 + $0x508] sm:$0xff]
        %v926 = vld [vmem:[%s477 + $0x510] sm:$0xff]
        %v927 = vld [vmem:[%s477 + $0x518] sm:$0xff]
        %v928 = vld [vmem:[%s477 + $0x520] sm:$0xff]
        %v929 = vld [vmem:[%s477 + $0x528] sm:$0xff]
        %v930 = vld [vmem:[%s477 + $0x530] sm:$0xff]
        %v931 = vld [vmem:[%s477 + $0x538] sm:$0xff]
        %v932 = vld [vmem:[%s477 + $0x540] sm:$0xff]
        %v933 = vld [vmem:[%s477 + $0x548] sm:$0xff]
        %v934 = vld [vmem:[%s477 + $0x550] sm:$0xff]
        %v935 = vld [vmem:[%s477 + $0x558] sm:$0xff]
        %v936 = vld [vmem:[%s477 + $0x560] sm:$0xff]
        %v937 = vld [vmem:[%s477 + $0x568] sm:$0xff]
        %v938 = vld [vmem:[%s477 + $0x570] sm:$0xff]
        %v939 = vld [vmem:[%s477 + $0x578] sm:$0xff]
        %v940 = vld [vmem:[%s477 + $0x580] sm:$0xff]
        %v941 = vld [vmem:[%s477 + $0x588] sm:$0xff]
        %v942 = vld [vmem:[%s477 + $0x590] sm:$0xff]
        %v943 = vld [vmem:[%s477 + $0x598] sm:$0xff]
        %v944 = vld [vmem:[%s477 + $0x5a0] sm:$0xff]
        %v945 = vld [vmem:[%s477 + $0x5a8] sm:$0xff]
        %v946 = vld [vmem:[%s477 + $0x5b0] sm:$0xff]
        %v947 = vld [vmem:[%s477 + $0x5b8] sm:$0xff]
        %v948 = vld [vmem:[%s477 + $0x5c0] sm:$0xff]
        %v949 = vld [vmem:[%s477 + $0x5c8] sm:$0xff]
        %v950 = vld [vmem:[%s477 + $0x5d0] sm:$0xff]
        %v951 = vld [vmem:[%s477 + $0x5d8] sm:$0xff]
        %v952 = vld [vmem:[%s477 + $0x5e0] sm:$0xff]
        %v953 = vld [vmem:[%s477 + $0x5e8] sm:$0xff]
        %v954 = vld [vmem:[%s477 + $0x5f0] sm:$0xff]
        %v955 = vld [vmem:[%s477 + $0x5f8] sm:$0xff]
        %v956 = vld [vmem:[%s477 + $0x600] sm:$0xff]
        %v957 = vld [vmem:[%s477 + $0x608] sm:$0xff]
        %v958 = vld [vmem:[%s477 + $0x610] sm:$0xff]
        %v959 = vld [vmem:[%s477 + $0x618] sm:$0xff]
        %v960 = vld [vmem:[%s477 + $0x620] sm:$0xff]
        %v961 = vld [vmem:[%s477 + $0x628] sm:$0xff]
        %v962 = vld [vmem:[%s477 + $0x630] sm:$0xff]
        %v963 = vld [vmem:[%s477 + $0x638] sm:$0xff]
        %v964 = vld [vmem:[%s477 + $0x640] sm:$0xff]
        %v965 = vld [vmem:[%s477 + $0x648] sm:$0xff]
        %v966 = vld [vmem:[%s477 + $0x650] sm:$0xff]
        %v967 = vld [vmem:[%s477 + $0x658] sm:$0xff]
        %v968 = vld [vmem:[%s477 + $0x660] sm:$0xff]
        %v969 = vld [vmem:[%s477 + $0x668] sm:$0xff]
        %v970 = vld [vmem:[%s477 + $0x670] sm:$0xff]
        %v971 = vld [vmem:[%s477 + $0x678] sm:$0xff]
        %v972 = vld [vmem:[%s477 + $0x680] sm:$0xff]
        %v973 = vld [vmem:[%s477 + $0x688] sm:$0xff]
        %v974 = vld [vmem:[%s477 + $0x690] sm:$0xff]
        %v975 = vld [vmem:[%s477 + $0x698] sm:$0xff]
        %v976 = vld [vmem:[%s477 + $0x6a0] sm:$0xff]
        %v977 = vld [vmem:[%s477 + $0x6a8] sm:$0xff]
        %v978 = vld [vmem:[%s477 + $0x6b0] sm:$0xff]
        %v979 = vld [vmem:[%s477 + $0x6b8] sm:$0xff]
        %v980 = vld [vmem:[%s477 + $0x6c0] sm:$0xff]
        %v981 = vld [vmem:[%s477 + $0x6c8] sm:$0xff]
        %v982 = vld [vmem:[%s477 + $0x6d0] sm:$0xff]
        %v983 = vld [vmem:[%s477 + $0x6d8] sm:$0xff]
        %v984 = vld [vmem:[%s477 + $0x6e0] sm:$0xff]
        %v985 = vld [vmem:[%s477 + $0x6e8] sm:$0xff]
        %v986 = vld [vmem:[%s477 + $0x6f0] sm:$0xff]
        %v987 = vld [vmem:[%s477 + $0x6f8] sm:$0xff]
        %v988 = vld [vmem:[%s477 + $0x700] sm:$0xff]
        %v989 = vld [vmem:[%s477 + $0x708] sm:$0xff]
        %v990 = vld [vmem:[%s477 + $0x710] sm:$0xff]
        %v991 = vld [vmem:[%s477 + $0x718] sm:$0xff]
        %v992 = vld [vmem:[%s477 + $0x720] sm:$0xff]
        %v993 = vld [vmem:[%s477 + $0x728] sm:$0xff]
        %v994 = vld [vmem:[%s477 + $0x730] sm:$0xff]
        %v995 = vld [vmem:[%s477 + $0x738] sm:$0xff]
        %v996 = vld [vmem:[%s477 + $0x740] sm:$0xff]
        %v997 = vld [vmem:[%s477 + $0x748] sm:$0xff]
        %v998 = vld [vmem:[%s477 + $0x750] sm:$0xff]
        %v999 = vld [vmem:[%s477 + $0x758] sm:$0xff]
        %v1000 = vld [vmem:[%s477 + $0x760] sm:$0xff]
        %v1001 = vld [vmem:[%s477 + $0x768] sm:$0xff]
        %v1002 = vld [vmem:[%s477 + $0x770] sm:$0xff]
        %v1003 = vld [vmem:[%s477 + $0x778] sm:$0xff]
        %v1004 = vld [vmem:[%s477 + $0x780] sm:$0xff]
        %v1005 = vld [vmem:[%s477 + $0x788] sm:$0xff]
        %v1006 = vld [vmem:[%s477 + $0x790] sm:$0xff]
        %v1007 = vld [vmem:[%s477 + $0x798] sm:$0xff]
        %v1008 = vld [vmem:[%s477 + $0x7a0] sm:$0xff]
        %v1009 = vld [vmem:[%s477 + $0x7a8] sm:$0xff]
        %v1010 = vld [vmem:[%s477 + $0x7b0] sm:$0xff]
        %v1011 = vld [vmem:[%s477 + $0x7b8] sm:$0xff]
        %v1012 = vld [vmem:[%s477 + $0x7c0] sm:$0xff]
        %v1013 = vld [vmem:[%s477 + $0x7c8] sm:$0xff]
        %v1014 = vld [vmem:[%s477 + $0x7d0] sm:$0xff]
        %v1015 = vld [vmem:[%s477 + $0x7d8] sm:$0xff]
        %v1016 = vld [vmem:[%s477 + $0x7e0] sm:$0xff]
        %v1017 = vld [vmem:[%s477 + $0x7e8] sm:$0xff]
        %v1018 = vld [vmem:[%s477 + $0x7f0] sm:$0xff]
        %v1019 = vld [vmem:[%s477 + $0x7f8] sm:$0xff]
        %v1020 = vld [vmem:[%s477 + $0x800] sm:$0xff]
        %v1021 = vld [vmem:[%s477 + $0x808] sm:$0xff]
        %v1022 = vld [vmem:[%s477 + $0x810] sm:$0xff]
        %v1023 = vld [vmem:[%s477 + $0x818] sm:$0xff]
        %v1024 = vld [vmem:[%s477 + $0x820] sm:$0xff]
        %v1025 = vld [vmem:[%s477 + $0x828] sm:$0xff]
        %v1026 = vld [vmem:[%s477 + $0x830] sm:$0xff]
        %v1027 = vld [vmem:[%s477 + $0x838] sm:$0xff]
        %v1028 = vld [vmem:[%s477 + $0x840] sm:$0xff]
        %v1029 = vld [vmem:[%s477 + $0x848] sm:$0xff]
        %v1030 = vld [vmem:[%s477 + $0x850] sm:$0xff]
        %v1031 = vld [vmem:[%s477 + $0x858] sm:$0xff]
        %v1032 = vld [vmem:[%s477 + $0x860] sm:$0xff]
        %v1033 = vld [vmem:[%s477 + $0x868] sm:$0xff]
        %v1034 = vld [vmem:[%s477 + $0x870] sm:$0xff]
        %v1035 = vld [vmem:[%s477 + $0x878] sm:$0xff]
        %v1036 = vld [vmem:[%s477 + $0x880] sm:$0xff]
        %v1037 = vld [vmem:[%s477 + $0x888] sm:$0xff]
        %v1038 = vld [vmem:[%s477 + $0x890] sm:$0xff]
        %v1039 = vld [vmem:[%s477 + $0x898] sm:$0xff]
        %v1040 = vld [vmem:[%s477 + $0x8a0] sm:$0xff]
        %v1041 = vld [vmem:[%s477 + $0x8a8] sm:$0xff]
        %v1042 = vld [vmem:[%s477 + $0x8b0] sm:$0xff]
        %v1043 = vld [vmem:[%s477 + $0x8b8] sm:$0xff]
        %v1044 = vld [vmem:[%s477 + $0x8c0] sm:$0xff]
        %v1045 = vld [vmem:[%s477 + $0x8c8] sm:$0xff]
        %v1046 = vld [vmem:[%s477 + $0x8d0] sm:$0xff]
        %v1047 = vld [vmem:[%s477 + $0x8d8] sm:$0xff]
        %v1048 = vld [vmem:[%s477 + $0x8e0] sm:$0xff]
        %v1049 = vld [vmem:[%s477 + $0x8e8] sm:$0xff]
        %v1050 = vld [vmem:[%s477 + $0x8f0] sm:$0xff]
        %v1051 = vld [vmem:[%s477 + $0x8f8] sm:$0xff]
        %v1052 = vld [vmem:[%s477 + $0x900] sm:$0xff]
        %v1053 = vld [vmem:[%s477 + $0x908] sm:$0xff]
        %v1054 = vld [vmem:[%s477 + $0x910] sm:$0xff]
        %v1055 = vld [vmem:[%s477 + $0x918] sm:$0xff]
        %v1056 = vld [vmem:[%s477 + $0x920] sm:$0xff]
        %v1057 = vld [vmem:[%s477 + $0x928] sm:$0xff]
        %v1058 = vld [vmem:[%s477 + $0x930] sm:$0xff]
        %v1059 = vld [vmem:[%s477 + $0x938] sm:$0xff]
        %v1060 = vld [vmem:[%s477 + $0x940] sm:$0xff]
        %v1061 = vld [vmem:[%s477 + $0x948] sm:$0xff]
        %v1062 = vld [vmem:[%s477 + $0x950] sm:$0xff]
        %v1063 = vld [vmem:[%s477 + $0x958] sm:$0xff]
        %v1064 = vld [vmem:[%s477 + $0x960] sm:$0xff]
        %v1065 = vld [vmem:[%s477 + $0x968] sm:$0xff]
        %v1066 = vld [vmem:[%s477 + $0x970] sm:$0xff]
        %v1067 = vld [vmem:[%s477 + $0x978] sm:$0xff]
        %v1068 = vld [vmem:[%s477 + $0x980] sm:$0xff]
        %v1069 = vld [vmem:[%s477 + $0x988] sm:$0xff]
        %v1070 = vld [vmem:[%s477 + $0x990] sm:$0xff]
        %v1071 = vld [vmem:[%s477 + $0x998] sm:$0xff]
        %v1072 = vld [vmem:[%s477 + $0x9a0] sm:$0xff]
        %v1073 = vld [vmem:[%s477 + $0x9a8] sm:$0xff]
        %v1074 = vld [vmem:[%s477 + $0x9b0] sm:$0xff]
        %v1075 = vld [vmem:[%s477 + $0x9b8] sm:$0xff]
        %v1076 = vld [vmem:[%s477 + $0x9c0] sm:$0xff]
        %v1077 = vld [vmem:[%s477 + $0x9c8] sm:$0xff]
        %v1078 = vld [vmem:[%s477 + $0x9d0] sm:$0xff]
        %v1079 = vld [vmem:[%s477 + $0x9d8] sm:$0xff]
        %v1080 = vld [vmem:[%s477 + $0x9e0] sm:$0xff]
        %v1081 = vld [vmem:[%s477 + $0x9e8] sm:$0xff]
        %v1082 = vld [vmem:[%s477 + $0x9f0] sm:$0xff]
        %v1083 = vld [vmem:[%s477 + $0x9f8] sm:$0xff]
        %v1084 = vld [vmem:[%s477 + $0xa00] sm:$0xff]
        %v1085 = vld [vmem:[%s477 + $0xa08] sm:$0xff]
        %v1086 = vld [vmem:[%s477 + $0xa10] sm:$0xff]
        %v1087 = vld [vmem:[%s477 + $0xa18] sm:$0xff]
        %v1088 = vld [vmem:[%s477 + $0xa20] sm:$0xff]
        %v1089 = vld [vmem:[%s477 + $0xa28] sm:$0xff]
        %v1090 = vld [vmem:[%s477 + $0xa30] sm:$0xff]
        %v1091 = vld [vmem:[%s477 + $0xa38] sm:$0xff]
        %v1092 = vld [vmem:[%s477 + $0xa40] sm:$0xff]
        %v1093 = vld [vmem:[%s477 + $0xa48] sm:$0xff]
        %v1094 = vld [vmem:[%s477 + $0xa50] sm:$0xff]
        %v1095 = vld [vmem:[%s477 + $0xa58] sm:$0xff]
        %v1096 = vld [vmem:[%s477 + $0xa60] sm:$0xff]
        %v1097 = vld [vmem:[%s477 + $0xa68] sm:$0xff]
        %v1098 = vld [vmem:[%s477 + $0xa70] sm:$0xff]
        %v1099 = vld [vmem:[%s477 + $0xa78] sm:$0xff]
        %v1100 = vld [vmem:[%s477 + $0xa80] sm:$0xff]
        %v1101 = vld [vmem:[%s477 + $0xa88] sm:$0xff]
        %v1102 = vld [vmem:[%s477 + $0xa90] sm:$0xff]
        %v1103 = vld [vmem:[%s477 + $0xa98] sm:$0xff]
        %v1104 = vld [vmem:[%s477 + $0xaa0] sm:$0xff]
        %v1105 = vld [vmem:[%s477 + $0xaa8] sm:$0xff]
        %v1106 = vld [vmem:[%s477 + $0xab0] sm:$0xff]
        %v1107 = vld [vmem:[%s477 + $0xab8] sm:$0xff]
        %v1108 = vld [vmem:[%s477 + $0xac0] sm:$0xff]
        %v1109 = vld [vmem:[%s477 + $0xac8] sm:$0xff]
        %v1110 = vld [vmem:[%s477 + $0xad0] sm:$0xff]
        %v1111 = vld [vmem:[%s477 + $0xad8] sm:$0xff]
        %v1112 = vld [vmem:[%s477 + $0xae0] sm:$0xff]
        %v1113 = vld [vmem:[%s477 + $0xae8] sm:$0xff]
        %v1114 = vld [vmem:[%s477 + $0xaf0] sm:$0xff]
        %v1115 = vld [vmem:[%s477 + $0xaf8] sm:$0xff]
        %v1116 = vunpack.c.l.bf16 %v764
        %v1117 = vunpack.c.h.bf16 %v764
        %v1118 = vunpack.c.l.bf16 %v765
        %v1119 = vunpack.c.h.bf16 %v765
        %v1120 = vunpack.c.l.bf16 %v766
        %v1121 = vunpack.c.h.bf16 %v766
        %v1122 = vunpack.c.l.bf16 %v767
        %v1123 = vunpack.c.h.bf16 %v767
        %v1124 = vunpack.c.l.bf16 %v768
        %v1125 = vunpack.c.h.bf16 %v768
        %v1126 = vunpack.c.l.bf16 %v769
        %v1127 = vunpack.c.h.bf16 %v769
        %v1128 = vunpack.c.l.bf16 %v770
        %v1129 = vunpack.c.h.bf16 %v770
        %v1130 = vunpack.c.l.bf16 %v771
        %v1131 = vunpack.c.h.bf16 %v771
        %v1132 = vunpack.c.l.bf16 %v772
        %v1133 = vunpack.c.h.bf16 %v772
        %v1134 = vunpack.c.l.bf16 %v773
        %v1135 = vunpack.c.h.bf16 %v773
        %v1136 = vunpack.c.l.bf16 %v774
        %v1137 = vunpack.c.h.bf16 %v774
        %v1138 = vunpack.c.l.bf16 %v775
        %v1139 = vunpack.c.h.bf16 %v775
        %v1140 = vunpack.c.l.bf16 %v776
        %v1141 = vunpack.c.h.bf16 %v776
        %v1142 = vunpack.c.l.bf16 %v777
        %v1143 = vunpack.c.h.bf16 %v777
        %v1144 = vunpack.c.l.bf16 %v778
        %v1145 = vunpack.c.h.bf16 %v778
        %v1146 = vunpack.c.l.bf16 %v779
        %v1147 = vunpack.c.h.bf16 %v779
        %v1148 = vunpack.c.l.bf16 %v780
        %v1149 = vunpack.c.h.bf16 %v780
        %v1150 = vunpack.c.l.bf16 %v781
        %v1151 = vunpack.c.h.bf16 %v781
        %v1152 = vunpack.c.l.bf16 %v782
        %v1153 = vunpack.c.h.bf16 %v782
        %v1154 = vunpack.c.l.bf16 %v783
        %v1155 = vunpack.c.h.bf16 %v783
        %v1156 = vunpack.c.l.bf16 %v784
        %v1157 = vunpack.c.h.bf16 %v784
        %v1158 = vunpack.c.l.bf16 %v785
        %v1159 = vunpack.c.h.bf16 %v785
        %v1160 = vunpack.c.l.bf16 %v786
        %v1161 = vunpack.c.h.bf16 %v786
        %v1162 = vunpack.c.l.bf16 %v787
        %v1163 = vunpack.c.h.bf16 %v787
        %v1164 = vunpack.c.l.bf16 %v788
        %v1165 = vunpack.c.h.bf16 %v788
        %v1166 = vunpack.c.l.bf16 %v789
        %v1167 = vunpack.c.h.bf16 %v789
        %v1168 = vunpack.c.l.bf16 %v790
        %v1169 = vunpack.c.h.bf16 %v790
        %v1170 = vunpack.c.l.bf16 %v791
        %v1171 = vunpack.c.h.bf16 %v791
        %v1172 = vunpack.c.l.bf16 %v792
        %v1173 = vunpack.c.h.bf16 %v792
        %v1174 = vunpack.c.l.bf16 %v793
        %v1175 = vunpack.c.h.bf16 %v793
        %v1176 = vunpack.c.l.bf16 %v794
        %v1177 = vunpack.c.h.bf16 %v794
        %v1178 = vunpack.c.l.bf16 %v795
        %v1179 = vunpack.c.h.bf16 %v795
        %v1180 = vunpack.c.l.bf16 %v796
        %v1181 = vunpack.c.h.bf16 %v796
        %v1182 = vunpack.c.l.bf16 %v797
        %v1183 = vunpack.c.h.bf16 %v797
        %v1184 = vunpack.c.l.bf16 %v798
        %v1185 = vunpack.c.h.bf16 %v798
        %v1186 = vunpack.c.l.bf16 %v799
        %v1187 = vunpack.c.h.bf16 %v799
        %v1188 = vunpack.c.l.bf16 %v800
        %v1189 = vunpack.c.h.bf16 %v800
        %v1190 = vunpack.c.l.bf16 %v801
        %v1191 = vunpack.c.h.bf16 %v801
        %v1192 = vunpack.c.l.bf16 %v802
        %v1193 = vunpack.c.h.bf16 %v802
        %v1194 = vunpack.c.l.bf16 %v803
        %v1195 = vunpack.c.h.bf16 %v803
        %v1196 = vunpack.c.l.bf16 %v804
        %v1197 = vunpack.c.h.bf16 %v804
        %v1198 = vunpack.c.l.bf16 %v805
        %v1199 = vunpack.c.h.bf16 %v805
        %v1200 = vunpack.c.l.bf16 %v806
        %v1201 = vunpack.c.h.bf16 %v806
        %v1202 = vunpack.c.l.bf16 %v807
        %v1203 = vunpack.c.h.bf16 %v807
        %v1204 = vunpack.c.l.bf16 %v808
        %v1205 = vunpack.c.h.bf16 %v808
        %v1206 = vunpack.c.l.bf16 %v809
        %v1207 = vunpack.c.h.bf16 %v809
        %v1208 = vunpack.c.l.bf16 %v810
        %v1209 = vunpack.c.h.bf16 %v810
        %v1210 = vunpack.c.l.bf16 %v811
        %v1211 = vunpack.c.h.bf16 %v811
        %v1212 = vunpack.c.l.bf16 %v812
        %v1213 = vunpack.c.h.bf16 %v812
        %v1214 = vunpack.c.l.bf16 %v813
        %v1215 = vunpack.c.h.bf16 %v813
        %v1216 = vunpack.c.l.bf16 %v814
        %v1217 = vunpack.c.h.bf16 %v814
        %v1218 = vunpack.c.l.bf16 %v815
        %v1219 = vunpack.c.h.bf16 %v815
        %v1220 = vunpack.c.l.bf16 %v816
        %v1221 = vunpack.c.h.bf16 %v816
        %v1222 = vunpack.c.l.bf16 %v817
        %v1223 = vunpack.c.h.bf16 %v817
        %v1224 = vunpack.c.l.bf16 %v818
        %v1225 = vunpack.c.h.bf16 %v818
        %v1226 = vunpack.c.l.bf16 %v819
        %v1227 = vunpack.c.h.bf16 %v819
        %v1228 = vunpack.c.l.bf16 %v820
        %v1229 = vunpack.c.h.bf16 %v820
        %v1230 = vunpack.c.l.bf16 %v821
        %v1231 = vunpack.c.h.bf16 %v821
        %v1232 = vunpack.c.l.bf16 %v822
        %v1233 = vunpack.c.h.bf16 %v822
        %v1234 = vunpack.c.l.bf16 %v823
        %v1235 = vunpack.c.h.bf16 %v823
        %v1236 = vunpack.c.l.bf16 %v824
        %v1237 = vunpack.c.h.bf16 %v824
        %v1238 = vunpack.c.l.bf16 %v825
        %v1239 = vunpack.c.h.bf16 %v825
        %v1240 = vunpack.c.l.bf16 %v826
        %v1241 = vunpack.c.h.bf16 %v826
        %v1242 = vunpack.c.l.bf16 %v827
        %v1243 = vunpack.c.h.bf16 %v827
        %v1244 = vunpack.c.l.bf16 %v828
        %v1245 = vunpack.c.h.bf16 %v828
        %v1246 = vunpack.c.l.bf16 %v829
        %v1247 = vunpack.c.h.bf16 %v829
        %v1248 = vunpack.c.l.bf16 %v830
        %v1249 = vunpack.c.h.bf16 %v830
        %v1250 = vunpack.c.l.bf16 %v831
        %v1251 = vunpack.c.h.bf16 %v831
        %v1252 = vunpack.c.l.bf16 %v832
        %v1253 = vunpack.c.h.bf16 %v832
        %v1254 = vunpack.c.l.bf16 %v833
        %v1255 = vunpack.c.h.bf16 %v833
        %v1256 = vunpack.c.l.bf16 %v834
        %v1257 = vunpack.c.h.bf16 %v834
        %v1258 = vunpack.c.l.bf16 %v835
        %v1259 = vunpack.c.h.bf16 %v835
        %v1260 = vunpack.c.l.bf16 %v836
        %v1261 = vunpack.c.h.bf16 %v836
        %v1262 = vunpack.c.l.bf16 %v837
        %v1263 = vunpack.c.h.bf16 %v837
        %v1264 = vunpack.c.l.bf16 %v838
        %v1265 = vunpack.c.h.bf16 %v838
        %v1266 = vunpack.c.l.bf16 %v839
        %v1267 = vunpack.c.h.bf16 %v839
        %v1268 = vunpack.c.l.bf16 %v840
        %v1269 = vunpack.c.h.bf16 %v840
        %v1270 = vunpack.c.l.bf16 %v841
        %v1271 = vunpack.c.h.bf16 %v841
        %v1272 = vunpack.c.l.bf16 %v842
        %v1273 = vunpack.c.h.bf16 %v842
        %v1274 = vunpack.c.l.bf16 %v843
        %v1275 = vunpack.c.h.bf16 %v843
        %v1276 = vunpack.c.l.bf16 %v844
        %v1277 = vunpack.c.h.bf16 %v844
        %v1278 = vunpack.c.l.bf16 %v845
        %v1279 = vunpack.c.h.bf16 %v845
        %v1280 = vunpack.c.l.bf16 %v846
        %v1281 = vunpack.c.h.bf16 %v846
        %v1282 = vunpack.c.l.bf16 %v847
        %v1283 = vunpack.c.h.bf16 %v847
        %v1284 = vunpack.c.l.bf16 %v848
        %v1285 = vunpack.c.h.bf16 %v848
        %v1286 = vunpack.c.l.bf16 %v849
        %v1287 = vunpack.c.h.bf16 %v849
        %v1288 = vunpack.c.l.bf16 %v850
        %v1289 = vunpack.c.h.bf16 %v850
        %v1290 = vunpack.c.l.bf16 %v851
        %v1291 = vunpack.c.h.bf16 %v851
        %v1292 = vunpack.c.l.bf16 %v852
        %v1293 = vunpack.c.h.bf16 %v852
        %v1294 = vunpack.c.l.bf16 %v853
        %v1295 = vunpack.c.h.bf16 %v853
        %v1296 = vunpack.c.l.bf16 %v854
        %v1297 = vunpack.c.h.bf16 %v854
        %v1298 = vunpack.c.l.bf16 %v855
        %v1299 = vunpack.c.h.bf16 %v855
        %v1300 = vunpack.c.l.bf16 %v856
        %v1301 = vunpack.c.h.bf16 %v856
        %v1302 = vunpack.c.l.bf16 %v857
        %v1303 = vunpack.c.h.bf16 %v857
        %v1304 = vunpack.c.l.bf16 %v858
        %v1305 = vunpack.c.h.bf16 %v858
        %v1306 = vunpack.c.l.bf16 %v859
        %v1307 = vunpack.c.h.bf16 %v859
        %v1308 = vunpack.c.l.bf16 %v860
        %v1309 = vunpack.c.h.bf16 %v860
        %v1310 = vunpack.c.l.bf16 %v861
        %v1311 = vunpack.c.h.bf16 %v861
        %v1312 = vunpack.c.l.bf16 %v862
        %v1313 = vunpack.c.h.bf16 %v862
        %v1314 = vunpack.c.l.bf16 %v863
        %v1315 = vunpack.c.h.bf16 %v863
        %v1316 = vunpack.c.l.bf16 %v864
        %v1317 = vunpack.c.h.bf16 %v864
        %v1318 = vunpack.c.l.bf16 %v865
        %v1319 = vunpack.c.h.bf16 %v865
        %v1320 = vunpack.c.l.bf16 %v866
        %v1321 = vunpack.c.h.bf16 %v866
        %v1322 = vunpack.c.l.bf16 %v867
        %v1323 = vunpack.c.h.bf16 %v867
        %v1324 = vunpack.c.l.bf16 %v868
        %v1325 = vunpack.c.h.bf16 %v868
        %v1326 = vunpack.c.l.bf16 %v869
        %v1327 = vunpack.c.h.bf16 %v869
        %v1328 = vunpack.c.l.bf16 %v870
        %v1329 = vunpack.c.h.bf16 %v870
        %v1330 = vunpack.c.l.bf16 %v871
        %v1331 = vunpack.c.h.bf16 %v871
        %v1332 = vunpack.c.l.bf16 %v872
        %v1333 = vunpack.c.h.bf16 %v872
        %v1334 = vunpack.c.l.bf16 %v873
        %v1335 = vunpack.c.h.bf16 %v873
        %v1336 = vunpack.c.l.bf16 %v874
        %v1337 = vunpack.c.h.bf16 %v874
        %v1338 = vunpack.c.l.bf16 %v875
        %v1339 = vunpack.c.h.bf16 %v875
        %v1340 = vunpack.c.l.bf16 %v876
        %v1341 = vunpack.c.h.bf16 %v876
        %v1342 = vunpack.c.l.bf16 %v877
        %v1343 = vunpack.c.h.bf16 %v877
        %v1344 = vunpack.c.l.bf16 %v878
        %v1345 = vunpack.c.h.bf16 %v878
        %v1346 = vunpack.c.l.bf16 %v879
        %v1347 = vunpack.c.h.bf16 %v879
        %v1348 = vunpack.c.l.bf16 %v880
        %v1349 = vunpack.c.h.bf16 %v880
        %v1350 = vunpack.c.l.bf16 %v881
        %v1351 = vunpack.c.h.bf16 %v881
        %v1352 = vunpack.c.l.bf16 %v882
        %v1353 = vunpack.c.h.bf16 %v882
        %v1354 = vunpack.c.l.bf16 %v883
        %v1355 = vunpack.c.h.bf16 %v883
        %v1356 = vunpack.c.l.bf16 %v884
        %v1357 = vunpack.c.h.bf16 %v884
        %v1358 = vunpack.c.l.bf16 %v885
        %v1359 = vunpack.c.h.bf16 %v885
        %v1360 = vunpack.c.l.bf16 %v886
        %v1361 = vunpack.c.h.bf16 %v886
        %v1362 = vunpack.c.l.bf16 %v887
        %v1363 = vunpack.c.h.bf16 %v887
        %v1364 = vunpack.c.l.bf16 %v888
        %v1365 = vunpack.c.h.bf16 %v888
        %v1366 = vunpack.c.l.bf16 %v889
        %v1367 = vunpack.c.h.bf16 %v889
        %v1368 = vunpack.c.l.bf16 %v890
        %v1369 = vunpack.c.h.bf16 %v890
        %v1370 = vunpack.c.l.bf16 %v891
        %v1371 = vunpack.c.h.bf16 %v891
        %v1372 = vunpack.c.l.bf16 %v892
        %v1373 = vunpack.c.h.bf16 %v892
        %v1374 = vunpack.c.l.bf16 %v893
        %v1375 = vunpack.c.h.bf16 %v893
        %v1376 = vunpack.c.l.bf16 %v894
        %v1377 = vunpack.c.h.bf16 %v894
        %v1378 = vunpack.c.l.bf16 %v895
        %v1379 = vunpack.c.h.bf16 %v895
        %v1380 = vunpack.c.l.bf16 %v896
        %v1381 = vunpack.c.h.bf16 %v896
        %v1382 = vunpack.c.l.bf16 %v897
        %v1383 = vunpack.c.h.bf16 %v897
        %v1384 = vunpack.c.l.bf16 %v898
        %v1385 = vunpack.c.h.bf16 %v898
        %v1386 = vunpack.c.l.bf16 %v899
        %v1387 = vunpack.c.h.bf16 %v899
        %v1388 = vunpack.c.l.bf16 %v900
        %v1389 = vunpack.c.h.bf16 %v900
        %v1390 = vunpack.c.l.bf16 %v901
        %v1391 = vunpack.c.h.bf16 %v901
        %v1392 = vunpack.c.l.bf16 %v902
        %v1393 = vunpack.c.h.bf16 %v902
        %v1394 = vunpack.c.l.bf16 %v903
        %v1395 = vunpack.c.h.bf16 %v903
        %v1396 = vunpack.c.l.bf16 %v904
        %v1397 = vunpack.c.h.bf16 %v904
        %v1398 = vunpack.c.l.bf16 %v905
        %v1399 = vunpack.c.h.bf16 %v905
        %v1400 = vunpack.c.l.bf16 %v906
        %v1401 = vunpack.c.h.bf16 %v906
        %v1402 = vunpack.c.l.bf16 %v907
        %v1403 = vunpack.c.h.bf16 %v907
        %v1404 = vunpack.c.l.bf16 %v908
        %v1405 = vunpack.c.h.bf16 %v908
        %v1406 = vunpack.c.l.bf16 %v909
        %v1407 = vunpack.c.h.bf16 %v909
        %v1408 = vunpack.c.l.bf16 %v910
        %v1409 = vunpack.c.h.bf16 %v910
        %v1410 = vunpack.c.l.bf16 %v911
        %v1411 = vunpack.c.h.bf16 %v911
        %v1412 = vunpack.c.l.bf16 %v912
        %v1413 = vunpack.c.h.bf16 %v912
        %v1414 = vunpack.c.l.bf16 %v913
        %v1415 = vunpack.c.h.bf16 %v913
        %v1416 = vunpack.c.l.bf16 %v914
        %v1417 = vunpack.c.h.bf16 %v914
        %v1418 = vunpack.c.l.bf16 %v915
        %v1419 = vunpack.c.h.bf16 %v915
        %v1420 = vunpack.c.l.bf16 %v916
        %v1421 = vunpack.c.h.bf16 %v916
        %v1422 = vunpack.c.l.bf16 %v917
        %v1423 = vunpack.c.h.bf16 %v917
        %v1424 = vunpack.c.l.bf16 %v918
        %v1425 = vunpack.c.h.bf16 %v918
        %v1426 = vunpack.c.l.bf16 %v919
        %v1427 = vunpack.c.h.bf16 %v919
        %v1428 = vunpack.c.l.bf16 %v920
        %v1429 = vunpack.c.h.bf16 %v920
        %v1430 = vunpack.c.l.bf16 %v921
        %v1431 = vunpack.c.h.bf16 %v921
        %v1432 = vunpack.c.l.bf16 %v922
        %v1433 = vunpack.c.h.bf16 %v922
        %v1434 = vunpack.c.l.bf16 %v923
        %v1435 = vunpack.c.h.bf16 %v923
        %v1436 = vunpack.c.l.bf16 %v924
        %v1437 = vunpack.c.h.bf16 %v924
        %v1438 = vunpack.c.l.bf16 %v925
        %v1439 = vunpack.c.h.bf16 %v925
        %v1440 = vunpack.c.l.bf16 %v926
        %v1441 = vunpack.c.h.bf16 %v926
        %v1442 = vunpack.c.l.bf16 %v927
        %v1443 = vunpack.c.h.bf16 %v927
        %v1444 = vunpack.c.l.bf16 %v928
        %v1445 = vunpack.c.h.bf16 %v928
        %v1446 = vunpack.c.l.bf16 %v929
        %v1447 = vunpack.c.h.bf16 %v929
        %v1448 = vunpack.c.l.bf16 %v930
        %v1449 = vunpack.c.h.bf16 %v930
        %v1450 = vunpack.c.l.bf16 %v931
        %v1451 = vunpack.c.h.bf16 %v931
        %v1452 = vunpack.c.l.bf16 %v932
        %v1453 = vunpack.c.h.bf16 %v932
        %v1454 = vunpack.c.l.bf16 %v933
        %v1455 = vunpack.c.h.bf16 %v933
        %v1456 = vunpack.c.l.bf16 %v934
        %v1457 = vunpack.c.h.bf16 %v934
        %v1458 = vunpack.c.l.bf16 %v935
        %v1459 = vunpack.c.h.bf16 %v935
        %v1460 = vunpack.c.l.bf16 %v936
        %v1461 = vunpack.c.h.bf16 %v936
        %v1462 = vunpack.c.l.bf16 %v937
        %v1463 = vunpack.c.h.bf16 %v937
        %v1464 = vunpack.c.l.bf16 %v938
        %v1465 = vunpack.c.h.bf16 %v938
        %v1466 = vunpack.c.l.bf16 %v939
        %v1467 = vunpack.c.h.bf16 %v939
        %v1468 = vunpack.c.l.bf16 %v940
        %v1469 = vunpack.c.h.bf16 %v940
        %v1470 = vunpack.c.l.bf16 %v941
        %v1471 = vunpack.c.h.bf16 %v941
        %v1472 = vunpack.c.l.bf16 %v942
        %v1473 = vunpack.c.h.bf16 %v942
        %v1474 = vunpack.c.l.bf16 %v943
        %v1475 = vunpack.c.h.bf16 %v943
        %v1476 = vunpack.c.l.bf16 %v944
        %v1477 = vunpack.c.h.bf16 %v944
        %v1478 = vunpack.c.l.bf16 %v945
        %v1479 = vunpack.c.h.bf16 %v945
        %v1480 = vunpack.c.l.bf16 %v946
        %v1481 = vunpack.c.h.bf16 %v946
        %v1482 = vunpack.c.l.bf16 %v947
        %v1483 = vunpack.c.h.bf16 %v947
        %v1484 = vunpack.c.l.bf16 %v948
        %v1485 = vunpack.c.h.bf16 %v948
        %v1486 = vunpack.c.l.bf16 %v949
        %v1487 = vunpack.c.h.bf16 %v949
        %v1488 = vunpack.c.l.bf16 %v950
        %v1489 = vunpack.c.h.bf16 %v950
        %v1490 = vunpack.c.l.bf16 %v951
        %v1491 = vunpack.c.h.bf16 %v951
        %v1492 = vunpack.c.l.bf16 %v952
        %v1493 = vunpack.c.h.bf16 %v952
        %v1494 = vunpack.c.l.bf16 %v953
        %v1495 = vunpack.c.h.bf16 %v953
        %v1496 = vunpack.c.l.bf16 %v954
        %v1497 = vunpack.c.h.bf16 %v954
        %v1498 = vunpack.c.l.bf16 %v955
        %v1499 = vunpack.c.h.bf16 %v955
        %v1500 = vunpack.c.l.bf16 %v956
        %v1501 = vunpack.c.h.bf16 %v956
        %v1502 = vunpack.c.l.bf16 %v957
        %v1503 = vunpack.c.h.bf16 %v957
        %v1504 = vunpack.c.l.bf16 %v958
        %v1505 = vunpack.c.h.bf16 %v958
        %v1506 = vunpack.c.l.bf16 %v959
        %v1507 = vunpack.c.h.bf16 %v959
        %v1508 = vunpack.c.l.bf16 %v960
        %v1509 = vunpack.c.h.bf16 %v960
        %v1510 = vunpack.c.l.bf16 %v961
        %v1511 = vunpack.c.h.bf16 %v961
        %v1512 = vunpack.c.l.bf16 %v962
        %v1513 = vunpack.c.h.bf16 %v962
        %v1514 = vunpack.c.l.bf16 %v963
        %v1515 = vunpack.c.h.bf16 %v963
        %v1516 = vunpack.c.l.bf16 %v964
        %v1517 = vunpack.c.h.bf16 %v964
        %v1518 = vunpack.c.l.bf16 %v965
        %v1519 = vunpack.c.h.bf16 %v965
        %v1520 = vunpack.c.l.bf16 %v966
        %v1521 = vunpack.c.h.bf16 %v966
        %v1522 = vunpack.c.l.bf16 %v967
        %v1523 = vunpack.c.h.bf16 %v967
        %v1524 = vunpack.c.l.bf16 %v968
        %v1525 = vunpack.c.h.bf16 %v968
        %v1526 = vunpack.c.l.bf16 %v969
        %v1527 = vunpack.c.h.bf16 %v969
        %v1528 = vunpack.c.l.bf16 %v970
        %v1529 = vunpack.c.h.bf16 %v970
        %v1530 = vunpack.c.l.bf16 %v971
        %v1531 = vunpack.c.h.bf16 %v971
        %v1532 = vunpack.c.l.bf16 %v972
        %v1533 = vunpack.c.h.bf16 %v972
        %v1534 = vunpack.c.l.bf16 %v973
        %v1535 = vunpack.c.h.bf16 %v973
        %v1536 = vunpack.c.l.bf16 %v974
        %v1537 = vunpack.c.h.bf16 %v974
        %v1538 = vunpack.c.l.bf16 %v975
        %v1539 = vunpack.c.h.bf16 %v975
        %v1540 = vunpack.c.l.bf16 %v976
        %v1541 = vunpack.c.h.bf16 %v976
        %v1542 = vunpack.c.l.bf16 %v977
        %v1543 = vunpack.c.h.bf16 %v977
        %v1544 = vunpack.c.l.bf16 %v978
        %v1545 = vunpack.c.h.bf16 %v978
        %v1546 = vunpack.c.l.bf16 %v979
        %v1547 = vunpack.c.h.bf16 %v979
        %v1548 = vunpack.c.l.bf16 %v980
        %v1549 = vunpack.c.h.bf16 %v980
        %v1550 = vunpack.c.l.bf16 %v981
        %v1551 = vunpack.c.h.bf16 %v981
        %v1552 = vunpack.c.l.bf16 %v982
        %v1553 = vunpack.c.h.bf16 %v982
        %v1554 = vunpack.c.l.bf16 %v983
        %v1555 = vunpack.c.h.bf16 %v983
        %v1556 = vunpack.c.l.bf16 %v984
        %v1557 = vunpack.c.h.bf16 %v984
        %v1558 = vunpack.c.l.bf16 %v985
        %v1559 = vunpack.c.h.bf16 %v985
        %v1560 = vunpack.c.l.bf16 %v986
        %v1561 = vunpack.c.h.bf16 %v986
        %v1562 = vunpack.c.l.bf16 %v987
        %v1563 = vunpack.c.h.bf16 %v987
        %v1564 = vunpack.c.l.bf16 %v988
        %v1565 = vunpack.c.h.bf16 %v988
        %v1566 = vunpack.c.l.bf16 %v989
        %v1567 = vunpack.c.h.bf16 %v989
        %v1568 = vunpack.c.l.bf16 %v990
        %v1569 = vunpack.c.h.bf16 %v990
        %v1570 = vunpack.c.l.bf16 %v991
        %v1571 = vunpack.c.h.bf16 %v991
        %v1572 = vunpack.c.l.bf16 %v992
        %v1573 = vunpack.c.h.bf16 %v992
        %v1574 = vunpack.c.l.bf16 %v993
        %v1575 = vunpack.c.h.bf16 %v993
        %v1576 = vunpack.c.l.bf16 %v994
        %v1577 = vunpack.c.h.bf16 %v994
        %v1578 = vunpack.c.l.bf16 %v995
        %v1579 = vunpack.c.h.bf16 %v995
        %v1580 = vunpack.c.l.bf16 %v996
        %v1581 = vunpack.c.h.bf16 %v996
        %v1582 = vunpack.c.l.bf16 %v997
        %v1583 = vunpack.c.h.bf16 %v997
        %v1584 = vunpack.c.l.bf16 %v998
        %v1585 = vunpack.c.h.bf16 %v998
        %v1586 = vunpack.c.l.bf16 %v999
        %v1587 = vunpack.c.h.bf16 %v999
        %v1588 = vunpack.c.l.bf16 %v1000
        %v1589 = vunpack.c.h.bf16 %v1000
        %v1590 = vunpack.c.l.bf16 %v1001
        %v1591 = vunpack.c.h.bf16 %v1001
        %v1592 = vunpack.c.l.bf16 %v1002
        %v1593 = vunpack.c.h.bf16 %v1002
        %v1594 = vunpack.c.l.bf16 %v1003
        %v1595 = vunpack.c.h.bf16 %v1003
        %v1596 = vunpack.c.l.bf16 %v1004
        %v1597 = vunpack.c.h.bf16 %v1004
        %v1598 = vunpack.c.l.bf16 %v1005
        %v1599 = vunpack.c.h.bf16 %v1005
        %v1600 = vunpack.c.l.bf16 %v1006
        %v1601 = vunpack.c.h.bf16 %v1006
        %v1602 = vunpack.c.l.bf16 %v1007
        %v1603 = vunpack.c.h.bf16 %v1007
        %v1604 = vunpack.c.l.bf16 %v1008
        %v1605 = vunpack.c.h.bf16 %v1008
        %v1606 = vunpack.c.l.bf16 %v1009
        %v1607 = vunpack.c.h.bf16 %v1009
        %v1608 = vunpack.c.l.bf16 %v1010
        %v1609 = vunpack.c.h.bf16 %v1010
        %v1610 = vunpack.c.l.bf16 %v1011
        %v1611 = vunpack.c.h.bf16 %v1011
        %v1612 = vunpack.c.l.bf16 %v1012
        %v1613 = vunpack.c.h.bf16 %v1012
        %v1614 = vunpack.c.l.bf16 %v1013
        %v1615 = vunpack.c.h.bf16 %v1013
        %v1616 = vunpack.c.l.bf16 %v1014
        %v1617 = vunpack.c.h.bf16 %v1014
        %v1618 = vunpack.c.l.bf16 %v1015
        %v1619 = vunpack.c.h.bf16 %v1015
        %v1620 = vunpack.c.l.bf16 %v1016
        %v1621 = vunpack.c.h.bf16 %v1016
        %v1622 = vunpack.c.l.bf16 %v1017
        %v1623 = vunpack.c.h.bf16 %v1017
        %v1624 = vunpack.c.l.bf16 %v1018
        %v1625 = vunpack.c.h.bf16 %v1018
        %v1626 = vunpack.c.l.bf16 %v1019
        %v1627 = vunpack.c.h.bf16 %v1019
        %v1628 = vunpack.c.l.bf16 %v1020
        %v1629 = vunpack.c.h.bf16 %v1020
        %v1630 = vunpack.c.l.bf16 %v1021
        %v1631 = vunpack.c.h.bf16 %v1021
        %v1632 = vunpack.c.l.bf16 %v1022
        %v1633 = vunpack.c.h.bf16 %v1022
        %v1634 = vunpack.c.l.bf16 %v1023
        %v1635 = vunpack.c.h.bf16 %v1023
        %v1636 = vunpack.c.l.bf16 %v1024
        %v1637 = vunpack.c.h.bf16 %v1024
        %v1638 = vunpack.c.l.bf16 %v1025
        %v1639 = vunpack.c.h.bf16 %v1025
        %v1640 = vunpack.c.l.bf16 %v1026
        %v1641 = vunpack.c.h.bf16 %v1026
        %v1642 = vunpack.c.l.bf16 %v1027
        %v1643 = vunpack.c.h.bf16 %v1027
        %v1644 = vunpack.c.l.bf16 %v1028
        %v1645 = vunpack.c.h.bf16 %v1028
        %v1646 = vunpack.c.l.bf16 %v1029
        %v1647 = vunpack.c.h.bf16 %v1029
        %v1648 = vunpack.c.l.bf16 %v1030
        %v1649 = vunpack.c.h.bf16 %v1030
        %v1650 = vunpack.c.l.bf16 %v1031
        %v1651 = vunpack.c.h.bf16 %v1031
        %v1652 = vunpack.c.l.bf16 %v1032
        %v1653 = vunpack.c.h.bf16 %v1032
        %v1654 = vunpack.c.l.bf16 %v1033
        %v1655 = vunpack.c.h.bf16 %v1033
        %v1656 = vunpack.c.l.bf16 %v1034
        %v1657 = vunpack.c.h.bf16 %v1034
        %v1658 = vunpack.c.l.bf16 %v1035
        %v1659 = vunpack.c.h.bf16 %v1035
        %v1660 = vunpack.c.l.bf16 %v1036
        %v1661 = vunpack.c.h.bf16 %v1036
        %v1662 = vunpack.c.l.bf16 %v1037
        %v1663 = vunpack.c.h.bf16 %v1037
        %v1664 = vunpack.c.l.bf16 %v1038
        %v1665 = vunpack.c.h.bf16 %v1038
        %v1666 = vunpack.c.l.bf16 %v1039
        %v1667 = vunpack.c.h.bf16 %v1039
        %v1668 = vunpack.c.l.bf16 %v1040
        %v1669 = vunpack.c.h.bf16 %v1040
        %v1670 = vunpack.c.l.bf16 %v1041
        %v1671 = vunpack.c.h.bf16 %v1041
        %v1672 = vunpack.c.l.bf16 %v1042
        %v1673 = vunpack.c.h.bf16 %v1042
        %v1674 = vunpack.c.l.bf16 %v1043
        %v1675 = vunpack.c.h.bf16 %v1043
        %v1676 = vunpack.c.l.bf16 %v1044
        %v1677 = vunpack.c.h.bf16 %v1044
        %v1678 = vunpack.c.l.bf16 %v1045
        %v1679 = vunpack.c.h.bf16 %v1045
        %v1680 = vunpack.c.l.bf16 %v1046
        %v1681 = vunpack.c.h.bf16 %v1046
        %v1682 = vunpack.c.l.bf16 %v1047
        %v1683 = vunpack.c.h.bf16 %v1047
        %v1684 = vunpack.c.l.bf16 %v1048
        %v1685 = vunpack.c.h.bf16 %v1048
        %v1686 = vunpack.c.l.bf16 %v1049
        %v1687 = vunpack.c.h.bf16 %v1049
        %v1688 = vunpack.c.l.bf16 %v1050
        %v1689 = vunpack.c.h.bf16 %v1050
        %v1690 = vunpack.c.l.bf16 %v1051
        %v1691 = vunpack.c.h.bf16 %v1051
        %v1692 = vunpack.c.l.bf16 %v1052
        %v1693 = vunpack.c.h.bf16 %v1052
        %v1694 = vunpack.c.l.bf16 %v1053
        %v1695 = vunpack.c.h.bf16 %v1053
        %v1696 = vunpack.c.l.bf16 %v1054
        %v1697 = vunpack.c.h.bf16 %v1054
        %v1698 = vunpack.c.l.bf16 %v1055
        %v1699 = vunpack.c.h.bf16 %v1055
        %v1700 = vunpack.c.l.bf16 %v1056
        %v1701 = vunpack.c.h.bf16 %v1056
        %v1702 = vunpack.c.l.bf16 %v1057
        %v1703 = vunpack.c.h.bf16 %v1057
        %v1704 = vunpack.c.l.bf16 %v1058
        %v1705 = vunpack.c.h.bf16 %v1058
        %v1706 = vunpack.c.l.bf16 %v1059
        %v1707 = vunpack.c.h.bf16 %v1059
        %v1708 = vunpack.c.l.bf16 %v1060
        %v1709 = vunpack.c.h.bf16 %v1060
        %v1710 = vunpack.c.l.bf16 %v1061
        %v1711 = vunpack.c.h.bf16 %v1061
        %v1712 = vunpack.c.l.bf16 %v1062
        %v1713 = vunpack.c.h.bf16 %v1062
        %v1714 = vunpack.c.l.bf16 %v1063
        %v1715 = vunpack.c.h.bf16 %v1063
        %v1716 = vunpack.c.l.bf16 %v1064
        %v1717 = vunpack.c.h.bf16 %v1064
        %v1718 = vunpack.c.l.bf16 %v1065
        %v1719 = vunpack.c.h.bf16 %v1065
        %v1720 = vunpack.c.l.bf16 %v1066
        %v1721 = vunpack.c.h.bf16 %v1066
        %v1722 = vunpack.c.l.bf16 %v1067
        %v1723 = vunpack.c.h.bf16 %v1067
        %v1724 = vunpack.c.l.bf16 %v1068
        %v1725 = vunpack.c.h.bf16 %v1068
        %v1726 = vunpack.c.l.bf16 %v1069
        %v1727 = vunpack.c.h.bf16 %v1069
        %v1728 = vunpack.c.l.bf16 %v1070
        %v1729 = vunpack.c.h.bf16 %v1070
        %v1730 = vunpack.c.l.bf16 %v1071
        %v1731 = vunpack.c.h.bf16 %v1071
        %v1732 = vunpack.c.l.bf16 %v1072
        %v1733 = vunpack.c.h.bf16 %v1072
        %v1734 = vunpack.c.l.bf16 %v1073
        %v1735 = vunpack.c.h.bf16 %v1073
        %v1736 = vunpack.c.l.bf16 %v1074
        %v1737 = vunpack.c.h.bf16 %v1074
        %v1738 = vunpack.c.l.bf16 %v1075
        %v1739 = vunpack.c.h.bf16 %v1075
        %v1740 = vunpack.c.l.bf16 %v1076
        %v1741 = vunpack.c.h.bf16 %v1076
        %v1742 = vunpack.c.l.bf16 %v1077
        %v1743 = vunpack.c.h.bf16 %v1077
        %v1744 = vunpack.c.l.bf16 %v1078
        %v1745 = vunpack.c.h.bf16 %v1078
        %v1746 = vunpack.c.l.bf16 %v1079
        %v1747 = vunpack.c.h.bf16 %v1079
        %v1748 = vunpack.c.l.bf16 %v1080
        %v1749 = vunpack.c.h.bf16 %v1080
        %v1750 = vunpack.c.l.bf16 %v1081
        %v1751 = vunpack.c.h.bf16 %v1081
        %v1752 = vunpack.c.l.bf16 %v1082
        %v1753 = vunpack.c.h.bf16 %v1082
        %v1754 = vunpack.c.l.bf16 %v1083
        %v1755 = vunpack.c.h.bf16 %v1083
        %v1756 = vunpack.c.l.bf16 %v1084
        %v1757 = vunpack.c.h.bf16 %v1084
        %v1758 = vunpack.c.l.bf16 %v1085
        %v1759 = vunpack.c.h.bf16 %v1085
        %v1760 = vunpack.c.l.bf16 %v1086
        %v1761 = vunpack.c.h.bf16 %v1086
        %v1762 = vunpack.c.l.bf16 %v1087
        %v1763 = vunpack.c.h.bf16 %v1087
        %v1764 = vunpack.c.l.bf16 %v1088
        %v1765 = vunpack.c.h.bf16 %v1088
        %v1766 = vunpack.c.l.bf16 %v1089
        %v1767 = vunpack.c.h.bf16 %v1089
        %v1768 = vunpack.c.l.bf16 %v1090
        %v1769 = vunpack.c.h.bf16 %v1090
        %v1770 = vunpack.c.l.bf16 %v1091
        %v1771 = vunpack.c.h.bf16 %v1091
        %v1772 = vunpack.c.l.bf16 %v1092
        %v1773 = vunpack.c.h.bf16 %v1092
        %v1774 = vunpack.c.l.bf16 %v1093
        %v1775 = vunpack.c.h.bf16 %v1093
        %v1776 = vunpack.c.l.bf16 %v1094
        %v1777 = vunpack.c.h.bf16 %v1094
        %v1778 = vunpack.c.l.bf16 %v1095
        %v1779 = vunpack.c.h.bf16 %v1095
        %v1780 = vunpack.c.l.bf16 %v1096
        %v1781 = vunpack.c.h.bf16 %v1096
        %v1782 = vunpack.c.l.bf16 %v1097
        %v1783 = vunpack.c.h.bf16 %v1097
        %v1784 = vunpack.c.l.bf16 %v1098
        %v1785 = vunpack.c.h.bf16 %v1098
        %v1786 = vunpack.c.l.bf16 %v1099
        %v1787 = vunpack.c.h.bf16 %v1099
        %v1788 = vunpack.c.l.bf16 %v1100
        %v1789 = vunpack.c.h.bf16 %v1100
        %v1790 = vunpack.c.l.bf16 %v1101
        %v1791 = vunpack.c.h.bf16 %v1101
        %v1792 = vunpack.c.l.bf16 %v1102
        %v1793 = vunpack.c.h.bf16 %v1102
        %v1794 = vunpack.c.l.bf16 %v1103
        %v1795 = vunpack.c.h.bf16 %v1103
        %v1796 = vunpack.c.l.bf16 %v1104
        %v1797 = vunpack.c.h.bf16 %v1104
        %v1798 = vunpack.c.l.bf16 %v1105
        %v1799 = vunpack.c.h.bf16 %v1105
        %v1800 = vunpack.c.l.bf16 %v1106
        %v1801 = vunpack.c.h.bf16 %v1106
        %v1802 = vunpack.c.l.bf16 %v1107
        %v1803 = vunpack.c.h.bf16 %v1107
        %v1804 = vunpack.c.l.bf16 %v1108
        %v1805 = vunpack.c.h.bf16 %v1108
        %v1806 = vunpack.c.l.bf16 %v1109
        %v1807 = vunpack.c.h.bf16 %v1109
        %v1808 = vunpack.c.l.bf16 %v1110
        %v1809 = vunpack.c.h.bf16 %v1110
        %v1810 = vunpack.c.l.bf16 %v1111
        %v1811 = vunpack.c.h.bf16 %v1111
        %v1812 = vunpack.c.l.bf16 %v1112
        %v1813 = vunpack.c.h.bf16 %v1112
        %v1814 = vunpack.c.l.bf16 %v1113
        %v1815 = vunpack.c.h.bf16 %v1113
        %v1816 = vunpack.c.l.bf16 %v1114
        %v1817 = vunpack.c.h.bf16 %v1114
        %v1818 = vunpack.c.l.bf16 %v1115
        %v1819 = vunpack.c.h.bf16 %v1115
        %v1822 = vunpack.c.l.s4 1983009808
        %v1823 = vunpack.c.0.s8 %v1822
        %v1824 = vlaneseq
        %v1825 = vshrl.u32 %v1824, 7
        %v1826 = vsub.s32 %v1823, %v1825
        %v1827 = vrot.slane %v763, %v1826
        %v1828 = vcombine.high %v1827, %v1827
        %1831 = vmatprep.subr.mxu0 %v1447
        %1832 = vmatpush1.msra.mxu0 %v1446
        %1833 = vmatprep.subr.mxu0 %v1425
        %1834 = vmatpush1.msra.mxu0 %v1424
        %1835 = vmatprep.subr.mxu0 %v1403
        %1836 = vmatpush1.msra.mxu0 %v1402
        %1837 = vmatprep.subr.mxu0 %v1381
        %1838 = vmatpush1.msra.mxu0 %v1380
        %1839 = vmatprep.subr.mxu0 %v1359
        %1840 = vmatpush1.msra.mxu0 %v1358
        %1841 = vmatprep.subr.mxu0 %v1337
        %1842 = vmatpush1.msra.mxu0 %v1336
        %1843 = vmatprep.subr.mxu0 %v1315
        %1844 = vmatpush1.msra.mxu0 %v1314
        %1845 = vmatprep.subr.mxu0 %v1293
        %1846 = vmatpush1.msra.mxu0 %v1292
        %1847 = vmatprep.subr.mxu0 %v1271
        %1848 = vmatpush1.msra.mxu0 %v1270
        %1849 = vmatprep.subr.mxu0 %v1249
        %1850 = vmatpush1.msra.mxu0 %v1248
        %1851 = vmatprep.subr.mxu0 %v1227
        %1852 = vmatpush1.msra.mxu0 %v1226
        %1853 = vmatprep.subr.mxu0 %v1205
        %1854 = vmatpush1.msra.mxu0 %v1204
        %1855 = vmatprep.subr.mxu0 %v1183
        %1856 = vmatpush1.msra.mxu0 %v1182
        %1857 = vmatprep.subr.mxu0 %v1161
        %1858 = vmatpush1.msra.mxu0 %v1160
        %1859 = vmatprep.subr.mxu0 %v1139
        %1860 = vmatpush1.msra.mxu0 %v1138
        %1861 = vmatprep.subr.mxu0 %v1117
        %1862 = vmatpush1.msra.mxu0 %v1116
        %1863 = vmatprep.subr.mxu0 %v1799
        %1864 = vmatpush2.msra.mxu0 %v1798
        %1865 = vmatprep.subr.mxu0 %v1777
        %1866 = vmatpush2.msra.mxu0 %v1776
        %1867 = vmatprep.subr.mxu0 %v1755
        %1868 = vmatpush2.msra.mxu0 %v1754
        %1869 = vmatprep.subr.mxu0 %v1733
        %1870 = vmatpush2.msra.mxu0 %v1732
        %1871 = vmatprep.subr.mxu0 %v1711
        %1872 = vmatpush2.msra.mxu0 %v1710
        %1873 = vmatprep.subr.mxu0 %v1689
        %1874 = vmatpush2.msra.mxu0 %v1688
        %1875 = vmatprep.subr.mxu0 %v1667
        %1876 = vmatpush2.msra.mxu0 %v1666
        %1877 = vmatprep.subr.mxu0 %v1645
        %1878 = vmatpush2.msra.mxu0 %v1644
        %1879 = vmatprep.subr.mxu0 %v1623
        %1880 = vmatpush2.msra.mxu0 %v1622
        %1881 = vmatprep.subr.mxu0 %v1601
        %1882 = vmatpush2.msra.mxu0 %v1600
        %1883 = vmatprep.subr.mxu0 %v1579
        %1884 = vmatpush2.msra.mxu0 %v1578
        %1885 = vmatprep.subr.mxu0 %v1557
        %1886 = vmatpush2.msra.mxu0 %v1556
        %1887 = vmatprep.subr.mxu0 %v1535
        %1888 = vmatpush2.msra.mxu0 %v1534
        %1889 = vmatprep.subr.mxu0 %v1513
        %1890 = vmatpush2.msra.mxu0 %v1512
        %1891 = vmatprep.subr.mxu0 %v1491
        %1892 = vmatpush2.msra.mxu0 %v1490
        %1893 = vmatprep.subr.mxu0 %v1469
        %1894 = vmatpush2.msra.mxu0 %v1468
        %1895 = vmatprep.mubr.f32.mxu0 %v1828
        %1896 = vmatmul.mubr.f32.gmra.mxu0 %v1827
        %v1897 = vpop.f32.mrf.mxu0
        %v1898 = vadd.f32 0.0, %v1897
        %v1899 = vpop.f32.mrf.mxu0
        %v1900 = vadd.f32 0.0, %v1899
        %1901 = vdwg.mxu0
        %1902 = vmatprep.subr.mxu0 %v1449
        %1903 = vmatpush1.msra.mxu0 %v1448
        %1904 = vmatprep.subr.mxu0 %v1427
        %1905 = vmatpush1.msra.mxu0 %v1426
        %1906 = vmatprep.subr.mxu0 %v1405
        %1907 = vmatpush1.msra.mxu0 %v1404
        %1908 = vmatprep.subr.mxu0 %v1383
        %1909 = vmatpush1.msra.mxu0 %v1382
        %1910 = vmatprep.subr.mxu0 %v1361
        %1911 = vmatpush1.msra.mxu0 %v1360
        %1912 = vmatprep.subr.mxu0 %v1339
        %1913 = vmatpush1.msra.mxu0 %v1338
        %1914 = vmatprep.subr.mxu0 %v1317
        %1915 = vmatpush1.msra.mxu0 %v1316
        %1916 = vmatprep.subr.mxu0 %v1295
        %1917 = vmatpush1.msra.mxu0 %v1294
        %1918 = vmatprep.subr.mxu0 %v1273
        %1919 = vmatpush1.msra.mxu0 %v1272
        %1920 = vmatprep.subr.mxu0 %v1251
        %1921 = vmatpush1.msra.mxu0 %v1250
        %1922 = vmatprep.subr.mxu0 %v1229
        %1923 = vmatpush1.msra.mxu0 %v1228
        %1924 = vmatprep.subr.mxu0 %v1207
        %1925 = vmatpush1.msra.mxu0 %v1206
        %1926 = vmatprep.subr.mxu0 %v1185
        %1927 = vmatpush1.msra.mxu0 %v1184
        %1928 = vmatprep.subr.mxu0 %v1163
        %1929 = vmatpush1.msra.mxu0 %v1162
        %1930 = vmatprep.subr.mxu0 %v1141
        %1931 = vmatpush1.msra.mxu0 %v1140
        %1932 = vmatprep.subr.mxu0 %v1119
        %1933 = vmatpush1.msra.mxu0 %v1118
        %1934 = vmatprep.subr.mxu0 %v1801
        %1935 = vmatpush2.msra.mxu0 %v1800
        %1936 = vmatprep.subr.mxu0 %v1779
        %1937 = vmatpush2.msra.mxu0 %v1778
        %1938 = vmatprep.subr.mxu0 %v1757
        %1939 = vmatpush2.msra.mxu0 %v1756
        %1940 = vmatprep.subr.mxu0 %v1735
        %1941 = vmatpush2.msra.mxu0 %v1734
        %1942 = vmatprep.subr.mxu0 %v1713
        %1943 = vmatpush2.msra.mxu0 %v1712
        %1944 = vmatprep.subr.mxu0 %v1691
        %1945 = vmatpush2.msra.mxu0 %v1690
        %1946 = vmatprep.subr.mxu0 %v1669
        %1947 = vmatpush2.msra.mxu0 %v1668
        %1948 = vmatprep.subr.mxu0 %v1647
        %1949 = vmatpush2.msra.mxu0 %v1646
        %1950 = vmatprep.subr.mxu0 %v1625
        %1951 = vmatpush2.msra.mxu0 %v1624
        %1952 = vmatprep.subr.mxu0 %v1603
        %1953 = vmatpush2.msra.mxu0 %v1602
        %1954 = vmatprep.subr.mxu0 %v1581
        %1955 = vmatpush2.msra.mxu0 %v1580
        %1956 = vmatprep.subr.mxu0 %v1559
        %1957 = vmatpush2.msra.mxu0 %v1558
        %1958 = vmatprep.subr.mxu0 %v1537
        %1959 = vmatpush2.msra.mxu0 %v1536
        %1960 = vmatprep.subr.mxu0 %v1515
        %1961 = vmatpush2.msra.mxu0 %v1514
        %1962 = vmatprep.subr.mxu0 %v1493
        %1963 = vmatpush2.msra.mxu0 %v1492
        %1964 = vmatprep.subr.mxu0 %v1471
        %1965 = vmatpush2.msra.mxu0 %v1470
        %1966 = vmatprep.mubr.f32.mxu0 %v1828
        %1967 = vmatmul.mubr.f32.gmra.mxu0 %v1827
        %v1968 = vpop.f32.mrf.mxu0
        %v1969 = vadd.f32 0.0, %v1968
        %v1970 = vpop.f32.mrf.mxu0
        %v1971 = vadd.f32 0.0, %v1970
        %1972 = vdwg.mxu0
        %1973 = vmatprep.subr.mxu0 %v1451
        %1974 = vmatpush1.msra.mxu0 %v1450
        %1975 = vmatprep.subr.mxu0 %v1429
        %1976 = vmatpush1.msra.mxu0 %v1428
        %1977 = vmatprep.subr.mxu0 %v1407
        %1978 = vmatpush1.msra.mxu0 %v1406
        %1979 = vmatprep.subr.mxu0 %v1385
        %1980 = vmatpush1.msra.mxu0 %v1384
        %1981 = vmatprep.subr.mxu0 %v1363
        %1982 = vmatpush1.msra.mxu0 %v1362
        %1983 = vmatprep.subr.mxu0 %v1341
        %1984 = vmatpush1.msra.mxu0 %v1340
        %1985 = vmatprep.subr.mxu0 %v1319
        %1986 = vmatpush1.msra.mxu0 %v1318
        %1987 = vmatprep.subr.mxu0 %v1297
        %1988 = vmatpush1.msra.mxu0 %v1296
        %1989 = vmatprep.subr.mxu0 %v1275
        %1990 = vmatpush1.msra.mxu0 %v1274
        %1991 = vmatprep.subr.mxu0 %v1253
        %1992 = vmatpush1.msra.mxu0 %v1252
        %1993 = vmatprep.subr.mxu0 %v1231
        %1994 = vmatpush1.msra.mxu0 %v1230
        %1995 = vmatprep.subr.mxu0 %v1209
        %1996 = vmatpush1.msra.mxu0 %v1208
        %1997 = vmatprep.subr.mxu0 %v1187
        %1998 = vmatpush1.msra.mxu0 %v1186
        %1999 = vmatprep.subr.mxu0 %v1165
        %2000 = vmatpush1.msra.mxu0 %v1164
        %2001 = vmatprep.subr.mxu0 %v1143
        %2002 = vmatpush1.msra.mxu0 %v1142
        %2003 = vmatprep.subr.mxu0 %v1121
        %2004 = vmatpush1.msra.mxu0 %v1120
        %2005 = vmatprep.subr.mxu0 %v1803
        %2006 = vmatpush2.msra.mxu0 %v1802
        %2007 = vmatprep.subr.mxu0 %v1781
        %2008 = vmatpush2.msra.mxu0 %v1780
        %2009 = vmatprep.subr.mxu0 %v1759
        %2010 = vmatpush2.msra.mxu0 %v1758
        %2011 = vmatprep.subr.mxu0 %v1737
        %2012 = vmatpush2.msra.mxu0 %v1736
        %2013 = vmatprep.subr.mxu0 %v1715
        %2014 = vmatpush2.msra.mxu0 %v1714
        %2015 = vmatprep.subr.mxu0 %v1693
        %2016 = vmatpush2.msra.mxu0 %v1692
        %2017 = vmatprep.subr.mxu0 %v1671
        %2018 = vmatpush2.msra.mxu0 %v1670
        %2019 = vmatprep.subr.mxu0 %v1649
        %2020 = vmatpush2.msra.mxu0 %v1648
        %2021 = vmatprep.subr.mxu0 %v1627
        %2022 = vmatpush2.msra.mxu0 %v1626
        %2023 = vmatprep.subr.mxu0 %v1605
        %2024 = vmatpush2.msra.mxu0 %v1604
        %2025 = vmatprep.subr.mxu0 %v1583
        %2026 = vmatpush2.msra.mxu0 %v1582
        %2027 = vmatprep.subr.mxu0 %v1561
        %2028 = vmatpush2.msra.mxu0 %v1560
        %2029 = vmatprep.subr.mxu0 %v1539
        %2030 = vmatpush2.msra.mxu0 %v1538
        %2031 = vmatprep.subr.mxu0 %v1517
        %2032 = vmatpush2.msra.mxu0 %v1516
        %2033 = vmatprep.subr.mxu0 %v1495
        %2034 = vmatpush2.msra.mxu0 %v1494
        %2035 = vmatprep.subr.mxu0 %v1473
        %2036 = vmatpush2.msra.mxu0 %v1472
        %2037 = vmatprep.mubr.f32.mxu0 %v1828
        %2038 = vmatmul.mubr.f32.gmra.mxu0 %v1827
        %v2039 = vpop.f32.mrf.mxu0
        %v2040 = vadd.f32 0.0, %v2039
        %v2041 = vpop.f32.mrf.mxu0
        %v2042 = vadd.f32 0.0, %v2041
        %2043 = vdwg.mxu0
        %2044 = vmatprep.subr.mxu0 %v1453
        %2045 = vmatpush1.msra.mxu0 %v1452
        %2046 = vmatprep.subr.mxu0 %v1431
        %2047 = vmatpush1.msra.mxu0 %v1430
        %2048 = vmatprep.subr.mxu0 %v1409
        %2049 = vmatpush1.msra.mxu0 %v1408
        %2050 = vmatprep.subr.mxu0 %v1387
        %2051 = vmatpush1.msra.mxu0 %v1386
        %2052 = vmatprep.subr.mxu0 %v1365
        %2053 = vmatpush1.msra.mxu0 %v1364
        %2054 = vmatprep.subr.mxu0 %v1343
        %2055 = vmatpush1.msra.mxu0 %v1342
        %2056 = vmatprep.subr.mxu0 %v1321
        %2057 = vmatpush1.msra.mxu0 %v1320
        %2058 = vmatprep.subr.mxu0 %v1299
        %2059 = vmatpush1.msra.mxu0 %v1298
        %2060 = vmatprep.subr.mxu0 %v1277
        %2061 = vmatpush1.msra.mxu0 %v1276
        %2062 = vmatprep.subr.mxu0 %v1255
        %2063 = vmatpush1.msra.mxu0 %v1254
        %2064 = vmatprep.subr.mxu0 %v1233
        %2065 = vmatpush1.msra.mxu0 %v1232
        %2066 = vmatprep.subr.mxu0 %v1211
        %2067 = vmatpush1.msra.mxu0 %v1210
        %2068 = vmatprep.subr.mxu0 %v1189
        %2069 = vmatpush1.msra.mxu0 %v1188
        %2070 = vmatprep.subr.mxu0 %v1167
        %2071 = vmatpush1.msra.mxu0 %v1166
        %2072 = vmatprep.subr.mxu0 %v1145
        %2073 = vmatpush1.msra.mxu0 %v1144
        %2074 = vmatprep.subr.mxu0 %v1123
        %2075 = vmatpush1.msra.mxu0 %v1122
        %2076 = vmatprep.subr.mxu0 %v1805
        %2077 = vmatpush2.msra.mxu0 %v1804
        %2078 = vmatprep.subr.mxu0 %v1783
        %2079 = vmatpush2.msra.mxu0 %v1782
        %2080 = vmatprep.subr.mxu0 %v1761
        %2081 = vmatpush2.msra.mxu0 %v1760
        %2082 = vmatprep.subr.mxu0 %v1739
        %2083 = vmatpush2.msra.mxu0 %v1738
        %2084 = vmatprep.subr.mxu0 %v1717
        %2085 = vmatpush2.msra.mxu0 %v1716
        %2086 = vmatprep.subr.mxu0 %v1695
        %2087 = vmatpush2.msra.mxu0 %v1694
        %2088 = vmatprep.subr.mxu0 %v1673
        %2089 = vmatpush2.msra.mxu0 %v1672
        %2090 = vmatprep.subr.mxu0 %v1651
        %2091 = vmatpush2.msra.mxu0 %v1650
        %2092 = vmatprep.subr.mxu0 %v1629
        %2093 = vmatpush2.msra.mxu0 %v1628
        %2094 = vmatprep.subr.mxu0 %v1607
        %2095 = vmatpush2.msra.mxu0 %v1606
        %2096 = vmatprep.subr.mxu0 %v1585
        %2097 = vmatpush2.msra.mxu0 %v1584
        %2098 = vmatprep.subr.mxu0 %v1563
        %2099 = vmatpush2.msra.mxu0 %v1562
        %2100 = vmatprep.subr.mxu0 %v1541
        %2101 = vmatpush2.msra.mxu0 %v1540
        %2102 = vmatprep.subr.mxu0 %v1519
        %2103 = vmatpush2.msra.mxu0 %v1518
        %2104 = vmatprep.subr.mxu0 %v1497
        %2105 = vmatpush2.msra.mxu0 %v1496
        %2106 = vmatprep.subr.mxu0 %v1475
        %2107 = vmatpush2.msra.mxu0 %v1474
        %2108 = vmatprep.mubr.f32.mxu0 %v1828
        %2109 = vmatmul.mubr.f32.gmra.mxu0 %v1827
        %v2110 = vpop.f32.mrf.mxu0
        %v2111 = vadd.f32 0.0, %v2110
        %v2112 = vpop.f32.mrf.mxu0
        %v2113 = vadd.f32 0.0, %v2112
        %2114 = vdwg.mxu0
        %2115 = vmatprep.subr.mxu0 %v1455
        %2116 = vmatpush1.msra.mxu0 %v1454
        %2117 = vmatprep.subr.mxu0 %v1433
        %2118 = vmatpush1.msra.mxu0 %v1432
        %2119 = vmatprep.subr.mxu0 %v1411
        %2120 = vmatpush1.msra.mxu0 %v1410
        %2121 = vmatprep.subr.mxu0 %v1389
        %2122 = vmatpush1.msra.mxu0 %v1388
        %2123 = vmatprep.subr.mxu0 %v1367
        %2124 = vmatpush1.msra.mxu0 %v1366
        %2125 = vmatprep.subr.mxu0 %v1345
        %2126 = vmatpush1.msra.mxu0 %v1344
        %2127 = vmatprep.subr.mxu0 %v1323
        %2128 = vmatpush1.msra.mxu0 %v1322
        %2129 = vmatprep.subr.mxu0 %v1301
        %2130 = vmatpush1.msra.mxu0 %v1300
        %2131 = vmatprep.subr.mxu0 %v1279
        %2132 = vmatpush1.msra.mxu0 %v1278
        %2133 = vmatprep.subr.mxu0 %v1257
        %2134 = vmatpush1.msra.mxu0 %v1256
        %2135 = vmatprep.subr.mxu0 %v1235
        %2136 = vmatpush1.msra.mxu0 %v1234
        %2137 = vmatprep.subr.mxu0 %v1213
        %2138 = vmatpush1.msra.mxu0 %v1212
        %2139 = vmatprep.subr.mxu0 %v1191
        %2140 = vmatpush1.msra.mxu0 %v1190
        %2141 = vmatprep.subr.mxu0 %v1169
        %2142 = vmatpush1.msra.mxu0 %v1168
        %2143 = vmatprep.subr.mxu0 %v1147
        %2144 = vmatpush1.msra.mxu0 %v1146
        %2145 = vmatprep.subr.mxu0 %v1125
        %2146 = vmatpush1.msra.mxu0 %v1124
        %2147 = vmatprep.subr.mxu0 %v1807
        %2148 = vmatpush2.msra.mxu0 %v1806
        %2149 = vmatprep.subr.mxu0 %v1785
        %2150 = vmatpush2.msra.mxu0 %v1784
        %2151 = vmatprep.subr.mxu0 %v1763
        %2152 = vmatpush2.msra.mxu0 %v1762
        %2153 = vmatprep.subr.mxu0 %v1741
        %2154 = vmatpush2.msra.mxu0 %v1740
        %2155 = vmatprep.subr.mxu0 %v1719
        %2156 = vmatpush2.msra.mxu0 %v1718
        %2157 = vmatprep.subr.mxu0 %v1697
        %2158 = vmatpush2.msra.mxu0 %v1696
        %2159 = vmatprep.subr.mxu0 %v1675
        %2160 = vmatpush2.msra.mxu0 %v1674
        %2161 = vmatprep.subr.mxu0 %v1653
        %2162 = vmatpush2.msra.mxu0 %v1652
        %2163 = vmatprep.subr.mxu0 %v1631
        %2164 = vmatpush2.msra.mxu0 %v1630
        %2165 = vmatprep.subr.mxu0 %v1609
        %2166 = vmatpush2.msra.mxu0 %v1608
        %2167 = vmatprep.subr.mxu0 %v1587
        %2168 = vmatpush2.msra.mxu0 %v1586
        %2169 = vmatprep.subr.mxu0 %v1565
        %2170 = vmatpush2.msra.mxu0 %v1564
        %2171 = vmatprep.subr.mxu0 %v1543
        %2172 = vmatpush2.msra.mxu0 %v1542
        %2173 = vmatprep.subr.mxu0 %v1521
        %2174 = vmatpush2.msra.mxu0 %v1520
        %2175 = vmatprep.subr.mxu0 %v1499
        %2176 = vmatpush2.msra.mxu0 %v1498
        %2177 = vmatprep.subr.mxu0 %v1477
        %2178 = vmatpush2.msra.mxu0 %v1476
        %2179 = vmatprep.mubr.f32.mxu0 %v1828
        %2180 = vmatmul.mubr.f32.gmra.mxu0 %v1827
        %v2181 = vpop.f32.mrf.mxu0
        %v2182 = vadd.f32 0.0, %v2181
        %v2183 = vpop.f32.mrf.mxu0
        %v2184 = vadd.f32 0.0, %v2183
        %2185 = vdwg.mxu0
        %2186 = vmatprep.subr.mxu0 %v1457
        %2187 = vmatpush1.msra.mxu0 %v1456
        %2188 = vmatprep.subr.mxu0 %v1435
        %2189 = vmatpush1.msra.mxu0 %v1434
        %2190 = vmatprep.subr.mxu0 %v1413
        %2191 = vmatpush1.msra.mxu0 %v1412
        %2192 = vmatprep.subr.mxu0 %v1391
        %2193 = vmatpush1.msra.mxu0 %v1390
        %2194 = vmatprep.subr.mxu0 %v1369
        %2195 = vmatpush1.msra.mxu0 %v1368
        %2196 = vmatprep.subr.mxu0 %v1347
        %2197 = vmatpush1.msra.mxu0 %v1346
        %2198 = vmatprep.subr.mxu0 %v1325
        %2199 = vmatpush1.msra.mxu0 %v1324
        %2200 = vmatprep.subr.mxu0 %v1303
        %2201 = vmatpush1.msra.mxu0 %v1302
        %2202 = vmatprep.subr.mxu0 %v1281
        %2203 = vmatpush1.msra.mxu0 %v1280
        %2204 = vmatprep.subr.mxu0 %v1259
        %2205 = vmatpush1.msra.mxu0 %v1258
        %2206 = vmatprep.subr.mxu0 %v1237
        %2207 = vmatpush1.msra.mxu0 %v1236
        %2208 = vmatprep.subr.mxu0 %v1215
        %2209 = vmatpush1.msra.mxu0 %v1214
        %2210 = vmatprep.subr.mxu0 %v1193
        %2211 = vmatpush1.msra.mxu0 %v1192
        %2212 = vmatprep.subr.mxu0 %v1171
        %2213 = vmatpush1.msra.mxu0 %v1170
        %2214 = vmatprep.subr.mxu0 %v1149
        %2215 = vmatpush1.msra.mxu0 %v1148
        %2216 = vmatprep.subr.mxu0 %v1127
        %2217 = vmatpush1.msra.mxu0 %v1126
        %2218 = vmatprep.subr.mxu0 %v1809
        %2219 = vmatpush2.msra.mxu0 %v1808
        %2220 = vmatprep.subr.mxu0 %v1787
        %2221 = vmatpush2.msra.mxu0 %v1786
        %2222 = vmatprep.subr.mxu0 %v1765
        %2223 = vmatpush2.msra.mxu0 %v1764
        %2224 = vmatprep.subr.mxu0 %v1743
        %2225 = vmatpush2.msra.mxu0 %v1742
        %2226 = vmatprep.subr.mxu0 %v1721
        %2227 = vmatpush2.msra.mxu0 %v1720
        %2228 = vmatprep.subr.mxu0 %v1699
        %2229 = vmatpush2.msra.mxu0 %v1698
        %2230 = vmatprep.subr.mxu0 %v1677
        %2231 = vmatpush2.msra.mxu0 %v1676
        %2232 = vmatprep.subr.mxu0 %v1655
        %2233 = vmatpush2.msra.mxu0 %v1654
        %2234 = vmatprep.subr.mxu0 %v1633
        %2235 = vmatpush2.msra.mxu0 %v1632
        %2236 = vmatprep.subr.mxu0 %v1611
        %2237 = vmatpush2.msra.mxu0 %v1610
        %2238 = vmatprep.subr.mxu0 %v1589
        %2239 = vmatpush2.msra.mxu0 %v1588
        %2240 = vmatprep.subr.mxu0 %v1567
        %2241 = vmatpush2.msra.mxu0 %v1566
        %2242 = vmatprep.subr.mxu0 %v1545
        %2243 = vmatpush2.msra.mxu0 %v1544
        %2244 = vmatprep.subr.mxu0 %v1523
        %2245 = vmatpush2.msra.mxu0 %v1522
        %2246 = vmatprep.subr.mxu0 %v1501
        %2247 = vmatpush2.msra.mxu0 %v1500
        %2248 = vmatprep.subr.mxu0 %v1479
        %2249 = vmatpush2.msra.mxu0 %v1478
        %2250 = vmatprep.mubr.f32.mxu0 %v1828
        %2251 = vmatmul.mubr.f32.gmra.mxu0 %v1827
        %v2252 = vpop.f32.mrf.mxu0
        %v2253 = vadd.f32 0.0, %v2252
        %v2254 = vpop.f32.mrf.mxu0
        %v2255 = vadd.f32 0.0, %v2254
        %2256 = vdwg.mxu0
        %2257 = vmatprep.subr.mxu0 %v1459
        %2258 = vmatpush1.msra.mxu0 %v1458
        %2259 = vmatprep.subr.mxu0 %v1437
        %2260 = vmatpush1.msra.mxu0 %v1436
        %2261 = vmatprep.subr.mxu0 %v1415
        %2262 = vmatpush1.msra.mxu0 %v1414
        %2263 = vmatprep.subr.mxu0 %v1393
        %2264 = vmatpush1.msra.mxu0 %v1392
        %2265 = vmatprep.subr.mxu0 %v1371
        %2266 = vmatpush1.msra.mxu0 %v1370
        %2267 = vmatprep.subr.mxu0 %v1349
        %2268 = vmatpush1.msra.mxu0 %v1348
        %2269 = vmatprep.subr.mxu0 %v1327
        %2270 = vmatpush1.msra.mxu0 %v1326
        %2271 = vmatprep.subr.mxu0 %v1305
        %2272 = vmatpush1.msra.mxu0 %v1304
        %2273 = vmatprep.subr.mxu0 %v1283
        %2274 = vmatpush1.msra.mxu0 %v1282
        %2275 = vmatprep.subr.mxu0 %v1261
        %2276 = vmatpush1.msra.mxu0 %v1260
        %2277 = vmatprep.subr.mxu0 %v1239
        %2278 = vmatpush1.msra.mxu0 %v1238
        %2279 = vmatprep.subr.mxu0 %v1217
        %2280 = vmatpush1.msra.mxu0 %v1216
        %2281 = vmatprep.subr.mxu0 %v1195
        %2282 = vmatpush1.msra.mxu0 %v1194
        %2283 = vmatprep.subr.mxu0 %v1173
        %2284 = vmatpush1.msra.mxu0 %v1172
        %2285 = vmatprep.subr.mxu0 %v1151
        %2286 = vmatpush1.msra.mxu0 %v1150
        %2287 = vmatprep.subr.mxu0 %v1129
        %2288 = vmatpush1.msra.mxu0 %v1128
        %2289 = vmatprep.subr.mxu0 %v1811
        %2290 = vmatpush2.msra.mxu0 %v1810
        %2291 = vmatprep.subr.mxu0 %v1789
        %2292 = vmatpush2.msra.mxu0 %v1788
        %2293 = vmatprep.subr.mxu0 %v1767
        %2294 = vmatpush2.msra.mxu0 %v1766
        %2295 = vmatprep.subr.mxu0 %v1745
        %2296 = vmatpush2.msra.mxu0 %v1744
        %2297 = vmatprep.subr.mxu0 %v1723
        %2298 = vmatpush2.msra.mxu0 %v1722
        %2299 = vmatprep.subr.mxu0 %v1701
        %2300 = vmatpush2.msra.mxu0 %v1700
        %2301 = vmatprep.subr.mxu0 %v1679
        %2302 = vmatpush2.msra.mxu0 %v1678
        %2303 = vmatprep.subr.mxu0 %v1657
        %2304 = vmatpush2.msra.mxu0 %v1656
        %2305 = vmatprep.subr.mxu0 %v1635
        %2306 = vmatpush2.msra.mxu0 %v1634
        %2307 = vmatprep.subr.mxu0 %v1613
        %2308 = vmatpush2.msra.mxu0 %v1612
        %2309 = vmatprep.subr.mxu0 %v1591
        %2310 = vmatpush2.msra.mxu0 %v1590
        %2311 = vmatprep.subr.mxu0 %v1569
        %2312 = vmatpush2.msra.mxu0 %v1568
        %2313 = vmatprep.subr.mxu0 %v1547
        %2314 = vmatpush2.msra.mxu0 %v1546
        %2315 = vmatprep.subr.mxu0 %v1525
        %2316 = vmatpush2.msra.mxu0 %v1524
        %2317 = vmatprep.subr.mxu0 %v1503
        %2318 = vmatpush2.msra.mxu0 %v1502
        %2319 = vmatprep.subr.mxu0 %v1481
        %2320 = vmatpush2.msra.mxu0 %v1480
        %2321 = vmatprep.mubr.f32.mxu0 %v1828
        %2322 = vmatmul.mubr.f32.gmra.mxu0 %v1827
        %v2323 = vpop.f32.mrf.mxu0
        %v2324 = vadd.f32 0.0, %v2323
        %v2325 = vpop.f32.mrf.mxu0
        %v2326 = vadd.f32 0.0, %v2325
        %2327 = vdwg.mxu0
        %2328 = vmatprep.subr.mxu0 %v1461
        %2329 = vmatpush1.msra.mxu0 %v1460
        %2330 = vmatprep.subr.mxu0 %v1439
        %2331 = vmatpush1.msra.mxu0 %v1438
        %2332 = vmatprep.subr.mxu0 %v1417
        %2333 = vmatpush1.msra.mxu0 %v1416
        %2334 = vmatprep.subr.mxu0 %v1395
        %2335 = vmatpush1.msra.mxu0 %v1394
        %2336 = vmatprep.subr.mxu0 %v1373
        %2337 = vmatpush1.msra.mxu0 %v1372
        %2338 = vmatprep.subr.mxu0 %v1351
        %2339 = vmatpush1.msra.mxu0 %v1350
        %2340 = vmatprep.subr.mxu0 %v1329
        %2341 = vmatpush1.msra.mxu0 %v1328
        %2342 = vmatprep.subr.mxu0 %v1307
        %2343 = vmatpush1.msra.mxu0 %v1306
        %2344 = vmatprep.subr.mxu0 %v1285
        %2345 = vmatpush1.msra.mxu0 %v1284
        %2346 = vmatprep.subr.mxu0 %v1263
        %2347 = vmatpush1.msra.mxu0 %v1262
        %2348 = vmatprep.subr.mxu0 %v1241
        %2349 = vmatpush1.msra.mxu0 %v1240
        %2350 = vmatprep.subr.mxu0 %v1219
        %2351 = vmatpush1.msra.mxu0 %v1218
        %2352 = vmatprep.subr.mxu0 %v1197
        %2353 = vmatpush1.msra.mxu0 %v1196
        %2354 = vmatprep.subr.mxu0 %v1175
        %2355 = vmatpush1.msra.mxu0 %v1174
        %2356 = vmatprep.subr.mxu0 %v1153
        %2357 = vmatpush1.msra.mxu0 %v1152
        %2358 = vmatprep.subr.mxu0 %v1131
        %2359 = vmatpush1.msra.mxu0 %v1130
        %2360 = vmatprep.subr.mxu0 %v1813
        %2361 = vmatpush2.msra.mxu0 %v1812
        %2362 = vmatprep.subr.mxu0 %v1791
        %2363 = vmatpush2.msra.mxu0 %v1790
        %2364 = vmatprep.subr.mxu0 %v1769
        %2365 = vmatpush2.msra.mxu0 %v1768
        %2366 = vmatprep.subr.mxu0 %v1747
        %2367 = vmatpush2.msra.mxu0 %v1746
        %2368 = vmatprep.subr.mxu0 %v1725
        %2369 = vmatpush2.msra.mxu0 %v1724
        %2370 = vmatprep.subr.mxu0 %v1703
        %2371 = vmatpush2.msra.mxu0 %v1702
        %2372 = vmatprep.subr.mxu0 %v1681
        %2373 = vmatpush2.msra.mxu0 %v1680
        %2374 = vmatprep.subr.mxu0 %v1659
        %2375 = vmatpush2.msra.mxu0 %v1658
        %2376 = vmatprep.subr.mxu0 %v1637
        %2377 = vmatpush2.msra.mxu0 %v1636
        %2378 = vmatprep.subr.mxu0 %v1615
        %2379 = vmatpush2.msra.mxu0 %v1614
        %2380 = vmatprep.subr.mxu0 %v1593
        %2381 = vmatpush2.msra.mxu0 %v1592
        %2382 = vmatprep.subr.mxu0 %v1571
        %2383 = vmatpush2.msra.mxu0 %v1570
        %2384 = vmatprep.subr.mxu0 %v1549
        %2385 = vmatpush2.msra.mxu0 %v1548
        %2386 = vmatprep.subr.mxu0 %v1527
        %2387 = vmatpush2.msra.mxu0 %v1526
        %2388 = vmatprep.subr.mxu0 %v1505
        %2389 = vmatpush2.msra.mxu0 %v1504
        %2390 = vmatprep.subr.mxu0 %v1483
        %2391 = vmatpush2.msra.mxu0 %v1482
        %2392 = vmatprep.mubr.f32.mxu0 %v1828
        %2393 = vmatmul.mubr.f32.gmra.mxu0 %v1827
        %v2394 = vpop.f32.mrf.mxu0
        %v2395 = vadd.f32 0.0, %v2394
        %v2396 = vpop.f32.mrf.mxu0
        %v2397 = vadd.f32 0.0, %v2396
        %2398 = vdwg.mxu0
        %2399 = vmatprep.subr.mxu0 %v1463
        %2400 = vmatpush1.msra.mxu0 %v1462
        %2401 = vmatprep.subr.mxu0 %v1441
        %2402 = vmatpush1.msra.mxu0 %v1440
        %2403 = vmatprep.subr.mxu0 %v1419
        %2404 = vmatpush1.msra.mxu0 %v1418
        %2405 = vmatprep.subr.mxu0 %v1397
        %2406 = vmatpush1.msra.mxu0 %v1396
        %2407 = vmatprep.subr.mxu0 %v1375
        %2408 = vmatpush1.msra.mxu0 %v1374
        %2409 = vmatprep.subr.mxu0 %v1353
        %2410 = vmatpush1.msra.mxu0 %v1352
        %2411 = vmatprep.subr.mxu0 %v1331
        %2412 = vmatpush1.msra.mxu0 %v1330
        %2413 = vmatprep.subr.mxu0 %v1309
        %2414 = vmatpush1.msra.mxu0 %v1308
        %2415 = vmatprep.subr.mxu0 %v1287
        %2416 = vmatpush1.msra.mxu0 %v1286
        %2417 = vmatprep.subr.mxu0 %v1265
        %2418 = vmatpush1.msra.mxu0 %v1264
        %2419 = vmatprep.subr.mxu0 %v1243
        %2420 = vmatpush1.msra.mxu0 %v1242
        %2421 = vmatprep.subr.mxu0 %v1221
        %2422 = vmatpush1.msra.mxu0 %v1220
        %2423 = vmatprep.subr.mxu0 %v1199
        %2424 = vmatpush1.msra.mxu0 %v1198
        %2425 = vmatprep.subr.mxu0 %v1177
        %2426 = vmatpush1.msra.mxu0 %v1176
        %2427 = vmatprep.subr.mxu0 %v1155
        %2428 = vmatpush1.msra.mxu0 %v1154
        %2429 = vmatprep.subr.mxu0 %v1133
        %2430 = vmatpush1.msra.mxu0 %v1132
        %2431 = vmatprep.subr.mxu0 %v1815
        %2432 = vmatpush2.msra.mxu0 %v1814
        %2433 = vmatprep.subr.mxu0 %v1793
        %2434 = vmatpush2.msra.mxu0 %v1792
        %2435 = vmatprep.subr.mxu0 %v1771
        %2436 = vmatpush2.msra.mxu0 %v1770
        %2437 = vmatprep.subr.mxu0 %v1749
        %2438 = vmatpush2.msra.mxu0 %v1748
        %2439 = vmatprep.subr.mxu0 %v1727
        %2440 = vmatpush2.msra.mxu0 %v1726
        %2441 = vmatprep.subr.mxu0 %v1705
        %2442 = vmatpush2.msra.mxu0 %v1704
        %2443 = vmatprep.subr.mxu0 %v1683
        %2444 = vmatpush2.msra.mxu0 %v1682
        %2445 = vmatprep.subr.mxu0 %v1661
        %2446 = vmatpush2.msra.mxu0 %v1660
        %2447 = vmatprep.subr.mxu0 %v1639
        %2448 = vmatpush2.msra.mxu0 %v1638
        %2449 = vmatprep.subr.mxu0 %v1617
        %2450 = vmatpush2.msra.mxu0 %v1616
        %2451 = vmatprep.subr.mxu0 %v1595
        %2452 = vmatpush2.msra.mxu0 %v1594
        %2453 = vmatprep.subr.mxu0 %v1573
        %2454 = vmatpush2.msra.mxu0 %v1572
        %2455 = vmatprep.subr.mxu0 %v1551
        %2456 = vmatpush2.msra.mxu0 %v1550
        %2457 = vmatprep.subr.mxu0 %v1529
        %2458 = vmatpush2.msra.mxu0 %v1528
        %2459 = vmatprep.subr.mxu0 %v1507
        %2460 = vmatpush2.msra.mxu0 %v1506
        %2461 = vmatprep.subr.mxu0 %v1485
        %2462 = vmatpush2.msra.mxu0 %v1484
        %2463 = vmatprep.mubr.f32.mxu0 %v1828
        %2464 = vmatmul.mubr.f32.gmra.mxu0 %v1827
        %v2465 = vpop.f32.mrf.mxu0
        %v2466 = vadd.f32 0.0, %v2465
        %v2467 = vpop.f32.mrf.mxu0
        %v2468 = vadd.f32 0.0, %v2467
        %2469 = vdwg.mxu0
        %2470 = vmatprep.subr.mxu0 %v1465
        %2471 = vmatpush1.msra.mxu0 %v1464
        %2472 = vmatprep.subr.mxu0 %v1443
        %2473 = vmatpush1.msra.mxu0 %v1442
        %2474 = vmatprep.subr.mxu0 %v1421
        %2475 = vmatpush1.msra.mxu0 %v1420
        %2476 = vmatprep.subr.mxu0 %v1399
        %2477 = vmatpush1.msra.mxu0 %v1398
        %2478 = vmatprep.subr.mxu0 %v1377
        %2479 = vmatpush1.msra.mxu0 %v1376
        %2480 = vmatprep.subr.mxu0 %v1355
        %2481 = vmatpush1.msra.mxu0 %v1354
        %2482 = vmatprep.subr.mxu0 %v1333
        %2483 = vmatpush1.msra.mxu0 %v1332
        %2484 = vmatprep.subr.mxu0 %v1311
        %2485 = vmatpush1.msra.mxu0 %v1310
        %2486 = vmatprep.subr.mxu0 %v1289
        %2487 = vmatpush1.msra.mxu0 %v1288
        %2488 = vmatprep.subr.mxu0 %v1267
        %2489 = vmatpush1.msra.mxu0 %v1266
        %2490 = vmatprep.subr.mxu0 %v1245
        %2491 = vmatpush1.msra.mxu0 %v1244
        %2492 = vmatprep.subr.mxu0 %v1223
        %2493 = vmatpush1.msra.mxu0 %v1222
        %2494 = vmatprep.subr.mxu0 %v1201
        %2495 = vmatpush1.msra.mxu0 %v1200
        %2496 = vmatprep.subr.mxu0 %v1179
        %2497 = vmatpush1.msra.mxu0 %v1178
        %2498 = vmatprep.subr.mxu0 %v1157
        %2499 = vmatpush1.msra.mxu0 %v1156
        %2500 = vmatprep.subr.mxu0 %v1135
        %2501 = vmatpush1.msra.mxu0 %v1134
        %2502 = vmatprep.subr.mxu0 %v1817
        %2503 = vmatpush2.msra.mxu0 %v1816
        %2504 = vmatprep.subr.mxu0 %v1795
        %2505 = vmatpush2.msra.mxu0 %v1794
        %2506 = vmatprep.subr.mxu0 %v1773
        %2507 = vmatpush2.msra.mxu0 %v1772
        %2508 = vmatprep.subr.mxu0 %v1751
        %2509 = vmatpush2.msra.mxu0 %v1750
        %2510 = vmatprep.subr.mxu0 %v1729
        %2511 = vmatpush2.msra.mxu0 %v1728
        %2512 = vmatprep.subr.mxu0 %v1707
        %2513 = vmatpush2.msra.mxu0 %v1706
        %2514 = vmatprep.subr.mxu0 %v1685
        %2515 = vmatpush2.msra.mxu0 %v1684
        %2516 = vmatprep.subr.mxu0 %v1663
        %2517 = vmatpush2.msra.mxu0 %v1662
        %2518 = vmatprep.subr.mxu0 %v1641
        %2519 = vmatpush2.msra.mxu0 %v1640
        %2520 = vmatprep.subr.mxu0 %v1619
        %2521 = vmatpush2.msra.mxu0 %v1618
        %2522 = vmatprep.subr.mxu0 %v1597
        %2523 = vmatpush2.msra.mxu0 %v1596
        %2524 = vmatprep.subr.mxu0 %v1575
        %2525 = vmatpush2.msra.mxu0 %v1574
        %2526 = vmatprep.subr.mxu0 %v1553
        %2527 = vmatpush2.msra.mxu0 %v1552
        %2528 = vmatprep.subr.mxu0 %v1531
        %2529 = vmatpush2.msra.mxu0 %v1530
        %2530 = vmatprep.subr.mxu0 %v1509
        %2531 = vmatpush2.msra.mxu0 %v1508
        %2532 = vmatprep.subr.mxu0 %v1487
        %2533 = vmatpush2.msra.mxu0 %v1486
        %2534 = vmatprep.mubr.f32.mxu0 %v1828
        %2535 = vmatmul.mubr.f32.gmra.mxu0 %v1827
        %v2536 = vpop.f32.mrf.mxu0
        %v2537 = vadd.f32 0.0, %v2536
        %v2538 = vpop.f32.mrf.mxu0
        %v2539 = vadd.f32 0.0, %v2538
        %2540 = vdwg.mxu0
        %2541 = vmatprep.subr.mxu0 %v1467
        %2542 = vmatpush1.msra.mxu0 %v1466
        %2543 = vmatprep.subr.mxu0 %v1445
        %2544 = vmatpush1.msra.mxu0 %v1444
        %2545 = vmatprep.subr.mxu0 %v1423
        %2546 = vmatpush1.msra.mxu0 %v1422
        %2547 = vmatprep.subr.mxu0 %v1401
        %2548 = vmatpush1.msra.mxu0 %v1400
        %2549 = vmatprep.subr.mxu0 %v1379
        %2550 = vmatpush1.msra.mxu0 %v1378
        %2551 = vmatprep.subr.mxu0 %v1357
        %2552 = vmatpush1.msra.mxu0 %v1356
        %2553 = vmatprep.subr.mxu0 %v1335
        %2554 = vmatpush1.msra.mxu0 %v1334
        %2555 = vmatprep.subr.mxu0 %v1313
        %2556 = vmatpush1.msra.mxu0 %v1312
        %2557 = vmatprep.subr.mxu0 %v1291
        %2558 = vmatpush1.msra.mxu0 %v1290
        %2559 = vmatprep.subr.mxu0 %v1269
        %2560 = vmatpush1.msra.mxu0 %v1268
        %2561 = vmatprep.subr.mxu0 %v1247
        %2562 = vmatpush1.msra.mxu0 %v1246
        %2563 = vmatprep.subr.mxu0 %v1225
        %2564 = vmatpush1.msra.mxu0 %v1224
        %2565 = vmatprep.subr.mxu0 %v1203
        %2566 = vmatpush1.msra.mxu0 %v1202
        %2567 = vmatprep.subr.mxu0 %v1181
        %2568 = vmatpush1.msra.mxu0 %v1180
        %2569 = vmatprep.subr.mxu0 %v1159
        %2570 = vmatpush1.msra.mxu0 %v1158
        %2571 = vmatprep.subr.mxu0 %v1137
        %2572 = vmatpush1.msra.mxu0 %v1136
        %2573 = vmatprep.subr.mxu0 %v1819
        %2574 = vmatpush2.msra.mxu0 %v1818
        %2575 = vmatprep.subr.mxu0 %v1797
        %2576 = vmatpush2.msra.mxu0 %v1796
        %2577 = vmatprep.subr.mxu0 %v1775
        %2578 = vmatpush2.msra.mxu0 %v1774
        %2579 = vmatprep.subr.mxu0 %v1753
        %2580 = vmatpush2.msra.mxu0 %v1752
        %2581 = vmatprep.subr.mxu0 %v1731
        %2582 = vmatpush2.msra.mxu0 %v1730
        %2583 = vmatprep.subr.mxu0 %v1709
        %2584 = vmatpush2.msra.mxu0 %v1708
        %2585 = vmatprep.subr.mxu0 %v1687
        %2586 = vmatpush2.msra.mxu0 %v1686
        %2587 = vmatprep.subr.mxu0 %v1665
        %2588 = vmatpush2.msra.mxu0 %v1664
        %2589 = vmatprep.subr.mxu0 %v1643
        %2590 = vmatpush2.msra.mxu0 %v1642
        %2591 = vmatprep.subr.mxu0 %v1621
        %2592 = vmatpush2.msra.mxu0 %v1620
        %2593 = vmatprep.subr.mxu0 %v1599
        %2594 = vmatpush2.msra.mxu0 %v1598
        %2595 = vmatprep.subr.mxu0 %v1577
        %2596 = vmatpush2.msra.mxu0 %v1576
        %2597 = vmatprep.subr.mxu0 %v1555
        %2598 = vmatpush2.msra.mxu0 %v1554
        %2599 = vmatprep.subr.mxu0 %v1533
        %2600 = vmatpush2.msra.mxu0 %v1532
        %2601 = vmatprep.subr.mxu0 %v1511
        %2602 = vmatpush2.msra.mxu0 %v1510
        %2603 = vmatprep.subr.mxu0 %v1489
        %2604 = vmatpush2.msra.mxu0 %v1488
        %2605 = vmatprep.mubr.f32.mxu0 %v1828
        %2606 = vmatmul.mubr.f32.gmra.mxu0 %v1827
        %v2607 = vpop.f32.mrf.mxu0
        %v2608 = vadd.f32 0.0, %v2607
        %v2609 = vpop.f32.mrf.mxu0
        %v2610 = vadd.f32 0.0, %v2609
        %2611 = vdwg.mxu0
        %v2634 = vcombine.low %v1898, %v1900
        %v2635 = vcombine.low %v1969, %v1971
        %v2637 = vunpack.c.l.s4 1983009808
        %v2638 = vunpack.c.0.s8 %v2637
        %v2639 = vlaneseq
        %v2640 = vshrl.u32 %v2639, 7
        %v2641 = vsub.s32 %v2638, %v2640
        %v2642 = vrot.slane %v2634, %v2641
        %v2644 = vunpack.c.l.s4 1983009808
        %v2645 = vunpack.c.0.s8 %v2644
        %v2646 = vlaneseq
        %v2647 = vshrl.u32 %v2646, 7
        %v2648 = vsub.s32 %v2645, %v2647
        %v2649 = vrot.slane %v2635, %v2648
        %v2650 = vcombine.low %v2642, %v2649
        %v2651 = vcombine.low %v2040, %v2042
        %v2652 = vcombine.low %v2111, %v2113
        %v2654 = vunpack.c.l.s4 1983009808
        %v2655 = vunpack.c.0.s8 %v2654
        %v2656 = vlaneseq
        %v2657 = vshrl.u32 %v2656, 7
        %v2658 = vsub.s32 %v2655, %v2657
        %v2659 = vrot.slane %v2651, %v2658
        %v2661 = vunpack.c.l.s4 1983009808
        %v2662 = vunpack.c.0.s8 %v2661
        %v2663 = vlaneseq
        %v2664 = vshrl.u32 %v2663, 7
        %v2665 = vsub.s32 %v2662, %v2664
        %v2666 = vrot.slane %v2652, %v2665
        %v2667 = vcombine.low %v2659, %v2666
        %v2668 = vcombine.low %v2182, %v2184
        %v2669 = vcombine.low %v2253, %v2255
        %v2671 = vunpack.c.l.s4 1983009808
        %v2672 = vunpack.c.0.s8 %v2671
        %v2673 = vlaneseq
        %v2674 = vshrl.u32 %v2673, 7
        %v2675 = vsub.s32 %v2672, %v2674
        %v2676 = vrot.slane %v2668, %v2675
        %v2678 = vunpack.c.l.s4 1983009808
        %v2679 = vunpack.c.0.s8 %v2678
        %v2680 = vlaneseq
        %v2681 = vshrl.u32 %v2680, 7
        %v2682 = vsub.s32 %v2679, %v2681
        %v2683 = vrot.slane %v2669, %v2682
        %v2684 = vcombine.low %v2676, %v2683
        %v2685 = vcombine.low %v2324, %v2326
        %v2686 = vcombine.low %v2395, %v2397
        %v2688 = vunpack.c.l.s4 1983009808
        %v2689 = vunpack.c.0.s8 %v2688
        %v2690 = vlaneseq
        %v2691 = vshrl.u32 %v2690, 7
        %v2692 = vsub.s32 %v2689, %v2691
        %v2693 = vrot.slane %v2685, %v2692
        %v2695 = vunpack.c.l.s4 1983009808
        %v2696 = vunpack.c.0.s8 %v2695
        %v2697 = vlaneseq
        %v2698 = vshrl.u32 %v2697, 7
        %v2699 = vsub.s32 %v2696, %v2698
        %v2700 = vrot.slane %v2686, %v2699
        %v2701 = vcombine.low %v2693, %v2700
        %v2702 = vcombine.low %v2466, %v2468
        %v2703 = vcombine.low %v2537, %v2539
        %v2705 = vunpack.c.l.s4 1983009808
        %v2706 = vunpack.c.0.s8 %v2705
        %v2707 = vlaneseq
        %v2708 = vshrl.u32 %v2707, 7
        %v2709 = vsub.s32 %v2706, %v2708
        %v2710 = vrot.slane %v2702, %v2709
        %v2712 = vunpack.c.l.s4 1983009808
        %v2713 = vunpack.c.0.s8 %v2712
        %v2714 = vlaneseq
        %v2715 = vshrl.u32 %v2714, 7
        %v2716 = vsub.s32 %v2713, %v2715
        %v2717 = vrot.slane %v2703, %v2716
        %v2718 = vcombine.low %v2710, %v2717
        %v2719 = vcombine.low %v2608, %v2610
        %v2721 = vunpack.c.l.s4 1983009808
        %v2722 = vunpack.c.0.s8 %v2721
        %v2723 = vlaneseq
        %v2724 = vshrl.u32 %v2723, 7
        %v2725 = vsub.s32 %v2722, %v2724
        %v2726 = vrot.slane %v2719, %v2725
        %v2733 = vadd.f32 %v757, %v2650
        %v2734 = vadd.f32 %v758, %v2667
        %v2735 = vadd.f32 %v759, %v2684
        %v2736 = vadd.f32 %v760, %v2701
        %v2737 = vadd.f32 %v761, %v2718
        %v2738 = vadd.f32 %v762, %v2726
        %2739 = vst [vmem:[#allocation2] sm:$0xff] %v2733
        %2740 = vst [vmem:[#allocation2 + $0x8] sm:$0xff] %v2734
        %2741 = vst [vmem:[#allocation2 + $0x10] sm:$0xff] %v2735
        %2742 = vst [vmem:[#allocation2 + $0x18] sm:$0xff] %v2736
        %2743 = vst [vmem:[#allocation2 + $0x20] sm:$0xff] %v2737
        %2744 = vst [vmem:[#allocation2 + $0x28] sm:$0xf] %v2738
        %p2745 = scmp.eq.s32.totalorder %s33, 2
        // Predicated region
        $region113: #{tpu_custom_call.1} parent=63 // pred_check
          %p2746 = pneg %p2745
        $region114: #{tpu_custom_call.1} parent=63 // pred_check_branch
          %2748 = sbr.rel (%p2746) target = $region116
        $region115: #{tpu_custom_call.1} parent=63 // pred_region
          %v2749 = vld [vmem:[#allocation2] sm:$0xff]
          %v2750 = vld [vmem:[#allocation2 + $0x8] sm:$0xff]
          %v2751 = vld [vmem:[#allocation2 + $0x10] sm:$0xff]
          %v2752 = vld [vmem:[#allocation2 + $0x18] sm:$0xff]
          %v2753 = vld [vmem:[#allocation2 + $0x20] sm:$0xff]
          %v2754 = vld [vmem:[#allocation2 + $0x28] sm:$0xf]
          %v2755 = vld [vmem:[#allocation9] sm:$0xff]
          %v2756 = vld [vmem:[#allocation9 + $0x8] sm:$0xff]
          %v2757 = vld [vmem:[#allocation9 + $0x10] sm:$0xff]
          %v2758 = vld [vmem:[#allocation9 + $0x18] sm:$0xff]
          %v2759 = vld [vmem:[#allocation9 + $0x20] sm:$0xff]
          %v2760 = vld [vmem:[#allocation9 + $0x28] sm:$0xff]
          %v2761 = vld [vmem:[#allocation9 + $0x30] sm:$0xff]
          %v2762 = vld [vmem:[#allocation9 + $0x38] sm:$0xff]
          %v2763 = vld [vmem:[#allocation9 + $0x40] sm:$0xff]
          %v2764 = vld [vmem:[#allocation9 + $0x48] sm:$0xff]
          %v2765 = vld [vmem:[#allocation9 + $0x50] sm:$0xff]
          %v2766 = vld [vmem:[#allocation9 + $0x58] sm:$0xff]
          %v2767 = vld [vmem:[#allocation9 + $0x60] sm:$0xff]
          %v2768 = vld [vmem:[#allocation9 + $0x68] sm:$0xff]
          %v2769 = vld [vmem:[#allocation9 + $0x70] sm:$0xff]
          %v2770 = vld [vmem:[#allocation9 + $0x78] sm:$0xff]
          %v2771 = vld [vmem:[#allocation9 + $0x80] sm:$0xff]
          %v2772 = vld [vmem:[#allocation9 + $0x88] sm:$0xff]
          %v2773 = vld [vmem:[#allocation9 + $0x90] sm:$0xff]
          %v2774 = vld [vmem:[#allocation9 + $0x98] sm:$0xff]
          %v2775 = vld [vmem:[#allocation9 + $0xa0] sm:$0xff]
          %v2776 = vld [vmem:[#allocation9 + $0xa8] sm:$0xff]
          %v2777 = vld [vmem:[#allocation9 + $0xb0] sm:$0xff]
          %v2778 = vld [vmem:[#allocation9 + $0xb8] sm:$0xff]
          %v2779 = vld [vmem:[#allocation9 + $0xc0] sm:$0xff]
          %v2780 = vld [vmem:[#allocation9 + $0xc8] sm:$0xff]
          %v2781 = vld [vmem:[#allocation9 + $0xd0] sm:$0xff]
          %v2782 = vld [vmem:[#allocation9 + $0xd8] sm:$0xff]
          %v2783 = vld [vmem:[#allocation9 + $0xe0] sm:$0xff]
          %v2784 = vld [vmem:[#allocation9 + $0xe8] sm:$0xff]
          %v2785 = vld [vmem:[#allocation9 + $0xf0] sm:$0xff]
          %v2786 = vld [vmem:[#allocation9 + $0xf8] sm:$0xff]
          %v2787 = vld [vmem:[#allocation9 + $0x100] sm:$0xff]
          %v2788 = vld [vmem:[#allocation9 + $0x108] sm:$0xff]
          %v2789 = vld [vmem:[#allocation9 + $0x110] sm:$0xff]
          %v2790 = vld [vmem:[#allocation9 + $0x118] sm:$0xff]
          %v2791 = vld [vmem:[#allocation9 + $0x120] sm:$0xff]
          %v2792 = vld [vmem:[#allocation9 + $0x128] sm:$0xff]
          %v2793 = vld [vmem:[#allocation9 + $0x130] sm:$0xff]
          %v2794 = vld [vmem:[#allocation9 + $0x138] sm:$0xff]
          %v2795 = vld [vmem:[#allocation9 + $0x140] sm:$0xff]
          %v2796 = vld [vmem:[#allocation9 + $0x148] sm:$0xff]
          %v2797 = vld [vmem:[#allocation9 + $0x150] sm:$0xff]
          %v2798 = vld [vmem:[#allocation9 + $0x158] sm:$0xff]
          %v2799 = vld [vmem:[#allocation9 + $0x160] sm:$0xff]
          %v2800 = vld [vmem:[#allocation9 + $0x168] sm:$0xff]
          %v2801 = vld [vmem:[#allocation9 + $0x170] sm:$0xff]
          %v2802 = vld [vmem:[#allocation9 + $0x178] sm:$0xff]
          %v2803 = vld [vmem:[#allocation9 + $0x180] sm:$0xff]
          %v2804 = vld [vmem:[#allocation9 + $0x188] sm:$0xff]
          %v2805 = vld [vmem:[#allocation9 + $0x190] sm:$0xff]
          %v2806 = vld [vmem:[#allocation9 + $0x198] sm:$0xff]
          %v2807 = vld [vmem:[#allocation9 + $0x1a0] sm:$0xff]
          %v2808 = vld [vmem:[#allocation9 + $0x1a8] sm:$0xff]
          %v2809 = vld [vmem:[#allocation9 + $0x1b0] sm:$0xff]
          %v2810 = vld [vmem:[#allocation9 + $0x1b8] sm:$0xff]
          %v2811 = vld [vmem:[#allocation9 + $0x1c0] sm:$0xff]
          %v2812 = vld [vmem:[#allocation9 + $0x1c8] sm:$0xff]
          %v2813 = vld [vmem:[#allocation9 + $0x1d0] sm:$0xff]
          %v2814 = vld [vmem:[#allocation9 + $0x1d8] sm:$0xff]
          %v2815 = vld [vmem:[#allocation9 + $0x1e0] sm:$0xff]
          %v2816 = vld [vmem:[#allocation9 + $0x1e8] sm:$0xff]
          %v2817 = vld [vmem:[#allocation9 + $0x1f0] sm:$0xff]
          %v2818 = vld [vmem:[#allocation9 + $0x1f8] sm:$0xff]
          %v2819 = vld [vmem:[#allocation9 + $0x200] sm:$0xff]
          %v2820 = vld [vmem:[#allocation9 + $0x208] sm:$0xff]
          %v2821 = vld [vmem:[#allocation9 + $0x210] sm:$0xff]
          %v2822 = vld [vmem:[#allocation9 + $0x218] sm:$0xff]
          %v2823 = vld [vmem:[#allocation9 + $0x220] sm:$0xff]
          %v2824 = vld [vmem:[#allocation9 + $0x228] sm:$0xff]
          %v2825 = vld [vmem:[#allocation9 + $0x230] sm:$0xff]
          %v2826 = vld [vmem:[#allocation9 + $0x238] sm:$0xff]
          %v2827 = vld [vmem:[#allocation9 + $0x240] sm:$0xff]
          %v2828 = vld [vmem:[#allocation9 + $0x248] sm:$0xff]
          %v2829 = vld [vmem:[#allocation9 + $0x250] sm:$0xff]
          %v2830 = vld [vmem:[#allocation9 + $0x258] sm:$0xff]
          %v2831 = vld [vmem:[#allocation9 + $0x260] sm:$0xff]
          %v2832 = vld [vmem:[#allocation9 + $0x268] sm:$0xff]
          %v2833 = vld [vmem:[#allocation9 + $0x270] sm:$0xff]
          %v2834 = vld [vmem:[#allocation9 + $0x278] sm:$0xff]
          %v2835 = vld [vmem:[#allocation9 + $0x280] sm:$0xff]
          %v2836 = vld [vmem:[#allocation9 + $0x288] sm:$0xff]
          %v2837 = vld [vmem:[#allocation9 + $0x290] sm:$0xff]
          %v2838 = vld [vmem:[#allocation9 + $0x298] sm:$0xff]
          %v2839 = vld [vmem:[#allocation9 + $0x2a0] sm:$0xff]
          %v2840 = vld [vmem:[#allocation9 + $0x2a8] sm:$0xff]
          %v2841 = vld [vmem:[#allocation9 + $0x2b0] sm:$0xff]
          %v2842 = vld [vmem:[#allocation9 + $0x2b8] sm:$0xff]
          %v2843 = vld [vmem:[#allocation9 + $0x2c0] sm:$0xff]
          %v2844 = vld [vmem:[#allocation9 + $0x2c8] sm:$0xff]
          %v2845 = vld [vmem:[#allocation9 + $0x2d0] sm:$0xff]
          %v2846 = vld [vmem:[#allocation9 + $0x2d8] sm:$0xff]
          %v2847 = vld [vmem:[#allocation9 + $0x2e0] sm:$0xff]
          %v2848 = vld [vmem:[#allocation9 + $0x2e8] sm:$0xff]
          %v2849 = vld [vmem:[#allocation9 + $0x2f0] sm:$0xff]
          %v2850 = vld [vmem:[#allocation9 + $0x2f8] sm:$0xff]
          %v2851 = vld [vmem:[#allocation9 + $0x300] sm:$0xff]
          %v2852 = vld [vmem:[#allocation9 + $0x308] sm:$0xff]
          %v2853 = vld [vmem:[#allocation9 + $0x310] sm:$0xff]
          %v2854 = vld [vmem:[#allocation9 + $0x318] sm:$0xff]
          %v2855 = vld [vmem:[#allocation9 + $0x320] sm:$0xff]
          %v2856 = vld [vmem:[#allocation9 + $0x328] sm:$0xff]
          %v2857 = vld [vmem:[#allocation9 + $0x330] sm:$0xff]
          %v2858 = vld [vmem:[#allocation9 + $0x338] sm:$0xff]
          %v2859 = vld [vmem:[#allocation9 + $0x340] sm:$0xff]
          %v2860 = vld [vmem:[#allocation9 + $0x348] sm:$0xff]
          %v2861 = vld [vmem:[#allocation9 + $0x350] sm:$0xff]
          %v2862 = vld [vmem:[#allocation9 + $0x358] sm:$0xff]
          %v2863 = vld [vmem:[#allocation9 + $0x360] sm:$0xff]
          %v2864 = vld [vmem:[#allocation9 + $0x368] sm:$0xff]
          %v2865 = vld [vmem:[#allocation9 + $0x370] sm:$0xff]
          %v2866 = vld [vmem:[#allocation9 + $0x378] sm:$0xff]
          %v2867 = vld [vmem:[#allocation9 + $0x380] sm:$0xff]
          %v2868 = vld [vmem:[#allocation9 + $0x388] sm:$0xff]
          %v2869 = vld [vmem:[#allocation9 + $0x390] sm:$0xff]
          %v2870 = vld [vmem:[#allocation9 + $0x398] sm:$0xff]
          %v2871 = vld [vmem:[#allocation9 + $0x3a0] sm:$0xff]
          %v2872 = vld [vmem:[#allocation9 + $0x3a8] sm:$0xff]
          %v2873 = vld [vmem:[#allocation9 + $0x3b0] sm:$0xff]
          %v2874 = vld [vmem:[#allocation9 + $0x3b8] sm:$0xff]
          %v2875 = vld [vmem:[#allocation9 + $0x3c0] sm:$0xff]
          %v2876 = vld [vmem:[#allocation9 + $0x3c8] sm:$0xff]
          %v2877 = vld [vmem:[#allocation9 + $0x3d0] sm:$0xff]
          %v2878 = vld [vmem:[#allocation9 + $0x3d8] sm:$0xff]
          %v2879 = vld [vmem:[#allocation9 + $0x3e0] sm:$0xff]
          %v2880 = vld [vmem:[#allocation9 + $0x3e8] sm:$0xff]
          %v2881 = vld [vmem:[#allocation9 + $0x3f0] sm:$0xff]
          %v2882 = vld [vmem:[#allocation9 + $0x3f8] sm:$0xff]
          %v2883 = vld [vmem:[#allocation9 + $0x400] sm:$0xff]
          %v2884 = vld [vmem:[#allocation9 + $0x408] sm:$0xff]
          %v2885 = vld [vmem:[#allocation9 + $0x410] sm:$0xff]
          %v2886 = vld [vmem:[#allocation9 + $0x418] sm:$0xff]
          %v2887 = vld [vmem:[#allocation9 + $0x420] sm:$0xff]
          %v2888 = vld [vmem:[#allocation9 + $0x428] sm:$0xff]
          %v2889 = vld [vmem:[#allocation9 + $0x430] sm:$0xff]
          %v2890 = vld [vmem:[#allocation9 + $0x438] sm:$0xff]
          %v2891 = vld [vmem:[#allocation9 + $0x440] sm:$0xff]
          %v2892 = vld [vmem:[#allocation9 + $0x448] sm:$0xff]
          %v2893 = vld [vmem:[#allocation9 + $0x450] sm:$0xff]
          %v2894 = vld [vmem:[#allocation9 + $0x458] sm:$0xff]
          %v2895 = vld [vmem:[#allocation9 + $0x460] sm:$0xff]
          %v2896 = vld [vmem:[#allocation9 + $0x468] sm:$0xff]
          %v2897 = vld [vmem:[#allocation9 + $0x470] sm:$0xff]
          %v2898 = vld [vmem:[#allocation9 + $0x478] sm:$0xff]
          %v2899 = vld [vmem:[#allocation9 + $0x480] sm:$0xff]
          %v2900 = vld [vmem:[#allocation9 + $0x488] sm:$0xff]
          %v2901 = vld [vmem:[#allocation9 + $0x490] sm:$0xff]
          %v2902 = vld [vmem:[#allocation9 + $0x498] sm:$0xff]
          %v2903 = vld [vmem:[#allocation9 + $0x4a0] sm:$0xff]
          %v2904 = vld [vmem:[#allocation9 + $0x4a8] sm:$0xff]
          %v2905 = vld [vmem:[#allocation9 + $0x4b0] sm:$0xff]
          %v2906 = vld [vmem:[#allocation9 + $0x4b8] sm:$0xff]
          %v2907 = vld [vmem:[#allocation9 + $0x4c0] sm:$0xff]
          %v2908 = vld [vmem:[#allocation9 + $0x4c8] sm:$0xff]
          %v2909 = vld [vmem:[#allocation9 + $0x4d0] sm:$0xff]
          %v2910 = vld [vmem:[#allocation9 + $0x4d8] sm:$0xff]
          %v2911 = vld [vmem:[#allocation9 + $0x4e0] sm:$0xff]
          %v2912 = vld [vmem:[#allocation9 + $0x4e8] sm:$0xff]
          %v2913 = vld [vmem:[#allocation9 + $0x4f0] sm:$0xff]
          %v2914 = vld [vmem:[#allocation9 + $0x4f8] sm:$0xff]
          %v2915 = vld [vmem:[#allocation9 + $0x500] sm:$0xff]
          %v2916 = vld [vmem:[#allocation9 + $0x508] sm:$0xff]
          %v2917 = vld [vmem:[#allocation9 + $0x510] sm:$0xff]
          %v2918 = vld [vmem:[#allocation9 + $0x518] sm:$0xff]
          %v2919 = vld [vmem:[#allocation9 + $0x520] sm:$0xff]
          %v2920 = vld [vmem:[#allocation9 + $0x528] sm:$0xff]
          %v2921 = vld [vmem:[#allocation9 + $0x530] sm:$0xff]
          %v2922 = vld [vmem:[#allocation9 + $0x538] sm:$0xff]
          %v2923 = vld [vmem:[#allocation9 + $0x540] sm:$0xff]
          %v2924 = vld [vmem:[#allocation9 + $0x548] sm:$0xff]
          %v2925 = vld [vmem:[#allocation9 + $0x550] sm:$0xff]
          %v2926 = vld [vmem:[#allocation9 + $0x558] sm:$0xff]
          %v2927 = vld [vmem:[#allocation9 + $0x560] sm:$0xff]
          %v2928 = vld [vmem:[#allocation9 + $0x568] sm:$0xff]
          %v2929 = vld [vmem:[#allocation9 + $0x570] sm:$0xff]
          %v2930 = vld [vmem:[#allocation9 + $0x578] sm:$0xff]
          %v2931 = vld [vmem:[#allocation9 + $0x580] sm:$0xff]
          %v2932 = vld [vmem:[#allocation9 + $0x588] sm:$0xff]
          %v2933 = vld [vmem:[#allocation9 + $0x590] sm:$0xff]
          %v2934 = vld [vmem:[#allocation9 + $0x598] sm:$0xff]
          %v2935 = vld [vmem:[#allocation9 + $0x5a0] sm:$0xff]
          %v2936 = vld [vmem:[#allocation9 + $0x5a8] sm:$0xff]
          %v2937 = vld [vmem:[#allocation9 + $0x5b0] sm:$0xff]
          %v2938 = vld [vmem:[#allocation9 + $0x5b8] sm:$0xff]
          %v2939 = vld [vmem:[#allocation9 + $0x5c0] sm:$0xff]
          %v2940 = vld [vmem:[#allocation9 + $0x5c8] sm:$0xff]
          %v2941 = vld [vmem:[#allocation9 + $0x5d0] sm:$0xff]
          %v2942 = vld [vmem:[#allocation9 + $0x5d8] sm:$0xff]
          %v2943 = vld [vmem:[#allocation9 + $0x5e0] sm:$0xff]
          %v2944 = vld [vmem:[#allocation9 + $0x5e8] sm:$0xff]
          %v2945 = vld [vmem:[#allocation9 + $0x5f0] sm:$0xff]
          %v2946 = vld [vmem:[#allocation9 + $0x5f8] sm:$0xff]
          %v2947 = vld [vmem:[#allocation9 + $0x600] sm:$0xff]
          %v2948 = vld [vmem:[#allocation9 + $0x608] sm:$0xff]
          %v2949 = vld [vmem:[#allocation9 + $0x610] sm:$0xff]
          %v2950 = vld [vmem:[#allocation9 + $0x618] sm:$0xff]
          %v2951 = vld [vmem:[#allocation9 + $0x620] sm:$0xff]
          %v2952 = vld [vmem:[#allocation9 + $0x628] sm:$0xff]
          %v2953 = vld [vmem:[#allocation9 + $0x630] sm:$0xff]
          %v2954 = vld [vmem:[#allocation9 + $0x638] sm:$0xff]
          %v2955 = vld [vmem:[#allocation9 + $0x640] sm:$0xff]
          %v2956 = vld [vmem:[#allocation9 + $0x648] sm:$0xff]
          %v2957 = vld [vmem:[#allocation9 + $0x650] sm:$0xff]
          %v2958 = vld [vmem:[#allocation9 + $0x658] sm:$0xff]
          %v2959 = vld [vmem:[#allocation9 + $0x660] sm:$0xff]
          %v2960 = vld [vmem:[#allocation9 + $0x668] sm:$0xff]
          %v2961 = vld [vmem:[#allocation9 + $0x670] sm:$0xff]
          %v2962 = vld [vmem:[#allocation9 + $0x678] sm:$0xff]
          %v2963 = vld [vmem:[#allocation9 + $0x680] sm:$0xff]
          %v2964 = vld [vmem:[#allocation9 + $0x688] sm:$0xff]
          %v2965 = vld [vmem:[#allocation9 + $0x690] sm:$0xff]
          %v2966 = vld [vmem:[#allocation9 + $0x698] sm:$0xff]
          %v2967 = vld [vmem:[#allocation9 + $0x6a0] sm:$0xff]
          %v2968 = vld [vmem:[#allocation9 + $0x6a8] sm:$0xff]
          %v2969 = vld [vmem:[#allocation9 + $0x6b0] sm:$0xff]
          %v2970 = vld [vmem:[#allocation9 + $0x6b8] sm:$0xff]
          %v2971 = vld [vmem:[#allocation9 + $0x6c0] sm:$0xff]
          %v2972 = vld [vmem:[#allocation9 + $0x6c8] sm:$0xff]
          %v2973 = vld [vmem:[#allocation9 + $0x6d0] sm:$0xff]
          %v2974 = vld [vmem:[#allocation9 + $0x6d8] sm:$0xff]
          %v2975 = vld [vmem:[#allocation9 + $0x6e0] sm:$0xff]
          %v2976 = vld [vmem:[#allocation9 + $0x6e8] sm:$0xff]
          %v2977 = vld [vmem:[#allocation9 + $0x6f0] sm:$0xff]
          %v2978 = vld [vmem:[#allocation9 + $0x6f8] sm:$0xff]
          %v2979 = vld [vmem:[#allocation9 + $0x700] sm:$0xff]
          %v2980 = vld [vmem:[#allocation9 + $0x708] sm:$0xff]
          %v2981 = vld [vmem:[#allocation9 + $0x710] sm:$0xff]
          %v2982 = vld [vmem:[#allocation9 + $0x718] sm:$0xff]
          %v2983 = vld [vmem:[#allocation9 + $0x720] sm:$0xff]
          %v2984 = vld [vmem:[#allocation9 + $0x728] sm:$0xff]
          %v2985 = vld [vmem:[#allocation9 + $0x730] sm:$0xff]
          %v2986 = vld [vmem:[#allocation9 + $0x738] sm:$0xff]
          %v2987 = vld [vmem:[#allocation9 + $0x740] sm:$0xff]
          %v2988 = vld [vmem:[#allocation9 + $0x748] sm:$0xff]
          %v2989 = vld [vmem:[#allocation9 + $0x750] sm:$0xff]
          %v2990 = vld [vmem:[#allocation9 + $0x758] sm:$0xff]
          %v2991 = vld [vmem:[#allocation9 + $0x760] sm:$0xff]
          %v2992 = vld [vmem:[#allocation9 + $0x768] sm:$0xff]
          %v2993 = vld [vmem:[#allocation9 + $0x770] sm:$0xff]
          %v2994 = vld [vmem:[#allocation9 + $0x778] sm:$0xff]
          %v2995 = vld [vmem:[#allocation9 + $0x780] sm:$0xff]
          %v2996 = vld [vmem:[#allocation9 + $0x788] sm:$0xff]
          %v2997 = vld [vmem:[#allocation9 + $0x790] sm:$0xff]
          %v2998 = vld [vmem:[#allocation9 + $0x798] sm:$0xff]
          %v2999 = vld [vmem:[#allocation9 + $0x7a0] sm:$0xff]
          %v3000 = vld [vmem:[#allocation9 + $0x7a8] sm:$0xff]
          %v3001 = vld [vmem:[#allocation9 + $0x7b0] sm:$0xff]
          %v3002 = vld [vmem:[#allocation9 + $0x7b8] sm:$0xff]
          %v3003 = vld [vmem:[#allocation9 + $0x7c0] sm:$0xff]
          %v3004 = vld [vmem:[#allocation9 + $0x7c8] sm:$0xff]
          %v3005 = vld [vmem:[#allocation9 + $0x7d0] sm:$0xff]
          %v3006 = vld [vmem:[#allocation9 + $0x7d8] sm:$0xff]
          %v3007 = vld [vmem:[#allocation9 + $0x7e0] sm:$0xff]
          %v3008 = vld [vmem:[#allocation9 + $0x7e8] sm:$0xff]
          %v3009 = vld [vmem:[#allocation9 + $0x7f0] sm:$0xff]
          %v3010 = vld [vmem:[#allocation9 + $0x7f8] sm:$0xff]
          %v3011 = vld [vmem:[#allocation9 + $0x800] sm:$0xff]
          %v3012 = vld [vmem:[#allocation9 + $0x808] sm:$0xff]
          %v3013 = vld [vmem:[#allocation9 + $0x810] sm:$0xff]
          %v3014 = vld [vmem:[#allocation9 + $0x818] sm:$0xff]
          %v3015 = vld [vmem:[#allocation9 + $0x820] sm:$0xff]
          %v3016 = vld [vmem:[#allocation9 + $0x828] sm:$0xff]
          %v3017 = vld [vmem:[#allocation9 + $0x830] sm:$0xff]
          %v3018 = vld [vmem:[#allocation9 + $0x838] sm:$0xff]
          %v3019 = vld [vmem:[#allocation9 + $0x840] sm:$0xff]
          %v3020 = vld [vmem:[#allocation9 + $0x848] sm:$0xff]
          %v3021 = vld [vmem:[#allocation9 + $0x850] sm:$0xff]
          %v3022 = vld [vmem:[#allocation9 + $0x858] sm:$0xff]
          %v3023 = vld [vmem:[#allocation9 + $0x860] sm:$0xff]
          %v3024 = vld [vmem:[#allocation9 + $0x868] sm:$0xff]
          %v3025 = vld [vmem:[#allocation9 + $0x870] sm:$0xff]
          %v3026 = vld [vmem:[#allocation9 + $0x878] sm:$0xff]
          %v3027 = vld [vmem:[#allocation9 + $0x880] sm:$0xff]
          %v3028 = vld [vmem:[#allocation9 + $0x888] sm:$0xff]
          %v3029 = vld [vmem:[#allocation9 + $0x890] sm:$0xff]
          %v3030 = vld [vmem:[#allocation9 + $0x898] sm:$0xff]
          %v3031 = vld [vmem:[#allocation9 + $0x8a0] sm:$0xff]
          %v3032 = vld [vmem:[#allocation9 + $0x8a8] sm:$0xff]
          %v3033 = vld [vmem:[#allocation9 + $0x8b0] sm:$0xff]
          %v3034 = vld [vmem:[#allocation9 + $0x8b8] sm:$0xff]
          %v3035 = vld [vmem:[#allocation9 + $0x8c0] sm:$0xff]
          %v3036 = vld [vmem:[#allocation9 + $0x8c8] sm:$0xff]
          %v3037 = vld [vmem:[#allocation9 + $0x8d0] sm:$0xff]
          %v3038 = vld [vmem:[#allocation9 + $0x8d8] sm:$0xff]
          %v3039 = vld [vmem:[#allocation9 + $0x8e0] sm:$0xff]
          %v3040 = vld [vmem:[#allocation9 + $0x8e8] sm:$0xff]
          %v3041 = vld [vmem:[#allocation9 + $0x8f0] sm:$0xff]
          %v3042 = vld [vmem:[#allocation9 + $0x8f8] sm:$0xff]
          %v3043 = vld [vmem:[#allocation9 + $0x900] sm:$0xff]
          %v3044 = vld [vmem:[#allocation9 + $0x908] sm:$0xff]
          %v3045 = vld [vmem:[#allocation9 + $0x910] sm:$0xff]
          %v3046 = vld [vmem:[#allocation9 + $0x918] sm:$0xff]
          %v3047 = vld [vmem:[#allocation9 + $0x920] sm:$0xff]
          %v3048 = vld [vmem:[#allocation9 + $0x928] sm:$0xff]
          %v3049 = vld [vmem:[#allocation9 + $0x930] sm:$0xff]
          %v3050 = vld [vmem:[#allocation9 + $0x938] sm:$0xff]
          %v3051 = vld [vmem:[#allocation9 + $0x940] sm:$0xff]
          %v3052 = vld [vmem:[#allocation9 + $0x948] sm:$0xff]
          %v3053 = vld [vmem:[#allocation9 + $0x950] sm:$0xff]
          %v3054 = vld [vmem:[#allocation9 + $0x958] sm:$0xff]
          %v3055 = vld [vmem:[#allocation9 + $0x960] sm:$0xff]
          %v3056 = vld [vmem:[#allocation9 + $0x968] sm:$0xff]
          %v3057 = vld [vmem:[#allocation9 + $0x970] sm:$0xff]
          %v3058 = vld [vmem:[#allocation9 + $0x978] sm:$0xff]
          %v3059 = vld [vmem:[#allocation9 + $0x980] sm:$0xff]
          %v3060 = vld [vmem:[#allocation9 + $0x988] sm:$0xff]
          %v3061 = vld [vmem:[#allocation9 + $0x990] sm:$0xff]
          %v3062 = vld [vmem:[#allocation9 + $0x998] sm:$0xff]
          %v3063 = vld [vmem:[#allocation9 + $0x9a0] sm:$0xff]
          %v3064 = vld [vmem:[#allocation9 + $0x9a8] sm:$0xff]
          %v3065 = vld [vmem:[#allocation9 + $0x9b0] sm:$0xff]
          %v3066 = vld [vmem:[#allocation9 + $0x9b8] sm:$0xff]
          %v3067 = vld [vmem:[#allocation9 + $0x9c0] sm:$0xff]
          %v3068 = vld [vmem:[#allocation9 + $0x9c8] sm:$0xff]
          %v3069 = vld [vmem:[#allocation9 + $0x9d0] sm:$0xff]
          %v3070 = vld [vmem:[#allocation9 + $0x9d8] sm:$0xff]
          %v3071 = vld [vmem:[#allocation9 + $0x9e0] sm:$0xff]
          %v3072 = vld [vmem:[#allocation9 + $0x9e8] sm:$0xff]
          %v3073 = vld [vmem:[#allocation9 + $0x9f0] sm:$0xff]
          %v3074 = vld [vmem:[#allocation9 + $0x9f8] sm:$0xff]
          %v3075 = vld [vmem:[#allocation9 + $0xa00] sm:$0xff]
          %v3076 = vld [vmem:[#allocation9 + $0xa08] sm:$0xff]
          %v3077 = vld [vmem:[#allocation9 + $0xa10] sm:$0xff]
          %v3078 = vld [vmem:[#allocation9 + $0xa18] sm:$0xff]
          %v3079 = vld [vmem:[#allocation9 + $0xa20] sm:$0xff]
          %v3080 = vld [vmem:[#allocation9 + $0xa28] sm:$0xff]
          %v3081 = vld [vmem:[#allocation9 + $0xa30] sm:$0xff]
          %v3082 = vld [vmem:[#allocation9 + $0xa38] sm:$0xff]
          %v3083 = vld [vmem:[#allocation9 + $0xa40] sm:$0xff]
          %v3084 = vld [vmem:[#allocation9 + $0xa48] sm:$0xff]
          %v3085 = vld [vmem:[#allocation9 + $0xa50] sm:$0xff]
          %v3086 = vld [vmem:[#allocation9 + $0xa58] sm:$0xff]
          %v3087 = vld [vmem:[#allocation9 + $0xa60] sm:$0xff]
          %v3088 = vld [vmem:[#allocation9 + $0xa68] sm:$0xff]
          %v3089 = vld [vmem:[#allocation9 + $0xa70] sm:$0xff]
          %v3090 = vld [vmem:[#allocation9 + $0xa78] sm:$0xff]
          %v3091 = vld [vmem:[#allocation9 + $0xa80] sm:$0xff]
          %v3092 = vld [vmem:[#allocation9 + $0xa88] sm:$0xff]
          %v3093 = vld [vmem:[#allocation9 + $0xa90] sm:$0xff]
          %v3094 = vld [vmem:[#allocation9 + $0xa98] sm:$0xff]
          %v3095 = vld [vmem:[#allocation9 + $0xaa0] sm:$0xff]
          %v3096 = vld [vmem:[#allocation9 + $0xaa8] sm:$0xff]
          %v3097 = vld [vmem:[#allocation9 + $0xab0] sm:$0xff]
          %v3098 = vld [vmem:[#allocation9 + $0xab8] sm:$0xff]
          %v3099 = vld [vmem:[#allocation9 + $0xac0] sm:$0xff]
          %v3100 = vld [vmem:[#allocation9 + $0xac8] sm:$0xff]
          %v3101 = vld [vmem:[#allocation9 + $0xad0] sm:$0xff]
          %v3102 = vld [vmem:[#allocation9 + $0xad8] sm:$0xff]
          %v3103 = vld [vmem:[#allocation9 + $0xae0] sm:$0xff]
          %v3104 = vld [vmem:[#allocation9 + $0xae8] sm:$0xff]
          %v3105 = vld [vmem:[#allocation9 + $0xaf0] sm:$0xff]
          %v3106 = vld [vmem:[#allocation9 + $0xaf8] sm:$0xff]
          %v3107 = vld [vmem:[#allocation9 + $0xb00] sm:$0xff]
          %v3108 = vld [vmem:[#allocation9 + $0xb08] sm:$0xff]
          %v3109 = vld [vmem:[#allocation9 + $0xb10] sm:$0xff]
          %v3110 = vld [vmem:[#allocation9 + $0xb18] sm:$0xff]
          %v3111 = vld [vmem:[#allocation9 + $0xb20] sm:$0xff]
          %v3112 = vld [vmem:[#allocation9 + $0xb28] sm:$0xff]
          %v3113 = vld [vmem:[#allocation9 + $0xb30] sm:$0xff]
          %v3114 = vld [vmem:[#allocation9 + $0xb38] sm:$0xff]
          %v3115 = vld [vmem:[#allocation9 + $0xb40] sm:$0xff]
          %v3116 = vld [vmem:[#allocation9 + $0xb48] sm:$0xff]
          %v3117 = vld [vmem:[#allocation9 + $0xb50] sm:$0xff]
          %v3118 = vld [vmem:[#allocation9 + $0xb58] sm:$0xff]
          %v3119 = vld [vmem:[#allocation9 + $0xb60] sm:$0xff]
          %v3120 = vld [vmem:[#allocation9 + $0xb68] sm:$0xff]
          %v3121 = vld [vmem:[#allocation9 + $0xb70] sm:$0xff]
          %v3122 = vld [vmem:[#allocation9 + $0xb78] sm:$0xff]
          %v3123 = vld [vmem:[#allocation9 + $0xb80] sm:$0xff]
          %v3124 = vld [vmem:[#allocation9 + $0xb88] sm:$0xff]
          %v3125 = vld [vmem:[#allocation9 + $0xb90] sm:$0xff]
          %v3126 = vld [vmem:[#allocation9 + $0xb98] sm:$0xff]
          %v3127 = vld [vmem:[#allocation9 + $0xba0] sm:$0xff]
          %v3128 = vld [vmem:[#allocation9 + $0xba8] sm:$0xff]
          %v3129 = vld [vmem:[#allocation9 + $0xbb0] sm:$0xff]
          %v3130 = vld [vmem:[#allocation9 + $0xbb8] sm:$0xff]
          %v3131 = vld [vmem:[#allocation9 + $0xbc0] sm:$0xff]
          %v3132 = vld [vmem:[#allocation9 + $0xbc8] sm:$0xff]
          %v3133 = vld [vmem:[#allocation9 + $0xbd0] sm:$0xff]
          %v3134 = vld [vmem:[#allocation9 + $0xbd8] sm:$0xff]
          %v3135 = vld [vmem:[#allocation9 + $0xbe0] sm:$0xff]
          %v3136 = vld [vmem:[#allocation9 + $0xbe8] sm:$0xff]
          %v3137 = vld [vmem:[#allocation9 + $0xbf0] sm:$0xff]
          %v3138 = vld [vmem:[#allocation9 + $0xbf8] sm:$0xff]
          %v3139 = vld [vmem:[#allocation9 + $0xc00] sm:$0xff]
          %v3140 = vld [vmem:[#allocation9 + $0xc08] sm:$0xff]
          %v3141 = vld [vmem:[#allocation9 + $0xc10] sm:$0xff]
          %v3142 = vld [vmem:[#allocation9 + $0xc18] sm:$0xff]
          %v3143 = vld [vmem:[#allocation9 + $0xc20] sm:$0xff]
          %v3144 = vld [vmem:[#allocation9 + $0xc28] sm:$0xff]
          %v3145 = vld [vmem:[#allocation9 + $0xc30] sm:$0xff]
          %v3146 = vld [vmem:[#allocation9 + $0xc38] sm:$0xff]
          %v3147 = vld [vmem:[#allocation9 + $0xc40] sm:$0xff]
          %v3148 = vld [vmem:[#allocation9 + $0xc48] sm:$0xff]
          %v3149 = vld [vmem:[#allocation9 + $0xc50] sm:$0xff]
          %v3150 = vld [vmem:[#allocation9 + $0xc58] sm:$0xff]
          %v3151 = vld [vmem:[#allocation9 + $0xc60] sm:$0xff]
          %v3152 = vld [vmem:[#allocation9 + $0xc68] sm:$0xff]
          %v3153 = vld [vmem:[#allocation9 + $0xc70] sm:$0xff]
          %v3154 = vld [vmem:[#allocation9 + $0xc78] sm:$0xff]
          %v3155 = vld [vmem:[#allocation9 + $0xc80] sm:$0xff]
          %v3156 = vld [vmem:[#allocation9 + $0xc88] sm:$0xff]
          %v3157 = vld [vmem:[#allocation9 + $0xc90] sm:$0xff]
          %v3158 = vld [vmem:[#allocation9 + $0xc98] sm:$0xff]
          %v3159 = vld [vmem:[#allocation9 + $0xca0] sm:$0xff]
          %v3160 = vld [vmem:[#allocation9 + $0xca8] sm:$0xff]
          %v3161 = vld [vmem:[#allocation9 + $0xcb0] sm:$0xff]
          %v3162 = vld [vmem:[#allocation9 + $0xcb8] sm:$0xff]
          %v3163 = vld [vmem:[#allocation9 + $0xcc0] sm:$0xff]
          %v3164 = vld [vmem:[#allocation9 + $0xcc8] sm:$0xff]
          %v3165 = vld [vmem:[#allocation9 + $0xcd0] sm:$0xff]
          %v3166 = vld [vmem:[#allocation9 + $0xcd8] sm:$0xff]
          %v3167 = vld [vmem:[#allocation9 + $0xce0] sm:$0xff]
          %v3168 = vld [vmem:[#allocation9 + $0xce8] sm:$0xff]
          %v3169 = vld [vmem:[#allocation9 + $0xcf0] sm:$0xff]
          %v3170 = vld [vmem:[#allocation9 + $0xcf8] sm:$0xff]
          %v3171 = vld [vmem:[#allocation9 + $0xd00] sm:$0xff]
          %v3172 = vld [vmem:[#allocation9 + $0xd08] sm:$0xff]
          %v3173 = vld [vmem:[#allocation9 + $0xd10] sm:$0xff]
          %v3174 = vld [vmem:[#allocation9 + $0xd18] sm:$0xff]
          %v3175 = vld [vmem:[#allocation9 + $0xd20] sm:$0xff]
          %v3176 = vld [vmem:[#allocation9 + $0xd28] sm:$0xff]
          %v3177 = vld [vmem:[#allocation9 + $0xd30] sm:$0xff]
          %v3178 = vld [vmem:[#allocation9 + $0xd38] sm:$0xff]
          %v3179 = vld [vmem:[#allocation9 + $0xd40] sm:$0xff]
          %v3180 = vld [vmem:[#allocation9 + $0xd48] sm:$0xff]
          %v3181 = vld [vmem:[#allocation9 + $0xd50] sm:$0xff]
          %v3182 = vld [vmem:[#allocation9 + $0xd58] sm:$0xff]
          %v3183 = vld [vmem:[#allocation9 + $0xd60] sm:$0xff]
          %v3184 = vld [vmem:[#allocation9 + $0xd68] sm:$0xff]
          %v3185 = vld [vmem:[#allocation9 + $0xd70] sm:$0xff]
          %v3186 = vld [vmem:[#allocation9 + $0xd78] sm:$0xff]
          %v3187 = vld [vmem:[#allocation9 + $0xd80] sm:$0xff]
          %v3188 = vld [vmem:[#allocation9 + $0xd88] sm:$0xff]
          %v3189 = vld [vmem:[#allocation9 + $0xd90] sm:$0xff]
          %v3190 = vld [vmem:[#allocation9 + $0xd98] sm:$0xff]
          %v3191 = vld [vmem:[#allocation9 + $0xda0] sm:$0xff]
          %v3192 = vld [vmem:[#allocation9 + $0xda8] sm:$0xff]
          %v3193 = vld [vmem:[#allocation9 + $0xdb0] sm:$0xff]
          %v3194 = vld [vmem:[#allocation9 + $0xdb8] sm:$0xff]
          %v3195 = vld [vmem:[#allocation9 + $0xdc0] sm:$0xff]
          %v3196 = vld [vmem:[#allocation9 + $0xdc8] sm:$0xff]
          %v3197 = vld [vmem:[#allocation9 + $0xdd0] sm:$0xff]
          %v3198 = vld [vmem:[#allocation9 + $0xdd8] sm:$0xff]
          %v3199 = vld [vmem:[#allocation9 + $0xde0] sm:$0xff]
          %v3200 = vld [vmem:[#allocation9 + $0xde8] sm:$0xff]
          %v3201 = vld [vmem:[#allocation9 + $0xdf0] sm:$0xff]
          %v3202 = vld [vmem:[#allocation9 + $0xdf8] sm:$0xff]
          %v3203 = vld [vmem:[#allocation9 + $0xe00] sm:$0xff]
          %v3204 = vld [vmem:[#allocation9 + $0xe08] sm:$0xff]
          %v3205 = vld [vmem:[#allocation9 + $0xe10] sm:$0xff]
          %v3206 = vld [vmem:[#allocation9 + $0xe18] sm:$0xff]
          %v3207 = vld [vmem:[#allocation9 + $0xe20] sm:$0xff]
          %v3208 = vld [vmem:[#allocation9 + $0xe28] sm:$0xff]
          %v3209 = vld [vmem:[#allocation9 + $0xe30] sm:$0xff]
          %v3210 = vld [vmem:[#allocation9 + $0xe38] sm:$0xff]
          %v3211 = vld [vmem:[#allocation9 + $0xe40] sm:$0xff]
          %v3212 = vld [vmem:[#allocation9 + $0xe48] sm:$0xff]
          %v3213 = vld [vmem:[#allocation9 + $0xe50] sm:$0xff]
          %v3214 = vld [vmem:[#allocation9 + $0xe58] sm:$0xff]
          %v3215 = vld [vmem:[#allocation9 + $0xe60] sm:$0xff]
          %v3216 = vld [vmem:[#allocation9 + $0xe68] sm:$0xff]
          %v3217 = vld [vmem:[#allocation9 + $0xe70] sm:$0xff]
          %v3218 = vld [vmem:[#allocation9 + $0xe78] sm:$0xff]
          %v3219 = vld [vmem:[#allocation9 + $0xe80] sm:$0xff]
          %v3220 = vld [vmem:[#allocation9 + $0xe88] sm:$0xff]
          %v3221 = vld [vmem:[#allocation9 + $0xe90] sm:$0xff]
          %v3222 = vld [vmem:[#allocation9 + $0xe98] sm:$0xff]
          %v3223 = vld [vmem:[#allocation9 + $0xea0] sm:$0xff]
          %v3224 = vld [vmem:[#allocation9 + $0xea8] sm:$0xff]
          %v3225 = vld [vmem:[#allocation9 + $0xeb0] sm:$0xff]
          %v3226 = vld [vmem:[#allocation9 + $0xeb8] sm:$0xff]
          %v3227 = vld [vmem:[#allocation9 + $0xec0] sm:$0xff]
          %v3228 = vld [vmem:[#allocation9 + $0xec8] sm:$0xff]
          %v3229 = vld [vmem:[#allocation9 + $0xed0] sm:$0xff]
          %v3230 = vld [vmem:[#allocation9 + $0xed8] sm:$0xff]
          %v3231 = vld [vmem:[#allocation9 + $0xee0] sm:$0xff]
          %v3232 = vld [vmem:[#allocation9 + $0xee8] sm:$0xff]
          %v3233 = vld [vmem:[#allocation9 + $0xef0] sm:$0xff]
          %v3234 = vld [vmem:[#allocation9 + $0xef8] sm:$0xff]
          %v3235 = vld [vmem:[#allocation9 + $0xf00] sm:$0xff]
          %v3236 = vld [vmem:[#allocation9 + $0xf08] sm:$0xff]
          %v3237 = vld [vmem:[#allocation9 + $0xf10] sm:$0xff]
          %v3238 = vld [vmem:[#allocation9 + $0xf18] sm:$0xff]
          %v3239 = vld [vmem:[#allocation9 + $0xf20] sm:$0xff]
          %v3240 = vld [vmem:[#allocation9 + $0xf28] sm:$0xff]
          %v3241 = vld [vmem:[#allocation9 + $0xf30] sm:$0xff]
          %v3242 = vld [vmem:[#allocation9 + $0xf38] sm:$0xff]
          %v3243 = vld [vmem:[#allocation9 + $0xf40] sm:$0xff]
          %v3244 = vld [vmem:[#allocation9 + $0xf48] sm:$0xff]
          %v3245 = vld [vmem:[#allocation9 + $0xf50] sm:$0xff]
          %v3246 = vld [vmem:[#allocation9 + $0xf58] sm:$0xff]
          %v3247 = vld [vmem:[#allocation9 + $0xf60] sm:$0xff]
          %v3248 = vld [vmem:[#allocation9 + $0xf68] sm:$0xff]
          %v3249 = vld [vmem:[#allocation9 + $0xf70] sm:$0xff]
          %v3250 = vld [vmem:[#allocation9 + $0xf78] sm:$0xff]
          %v3251 = vld [vmem:[#allocation9 + $0xf80] sm:$0xff]
          %v3252 = vld [vmem:[#allocation9 + $0xf88] sm:$0xff]
          %v3253 = vld [vmem:[#allocation9 + $0xf90] sm:$0xff]
          %v3254 = vld [vmem:[#allocation9 + $0xf98] sm:$0xff]
          %v3255 = vld [vmem:[#allocation9 + $0xfa0] sm:$0xff]
          %v3256 = vld [vmem:[#allocation9 + $0xfa8] sm:$0xff]
          %v3257 = vld [vmem:[#allocation9 + $0xfb0] sm:$0xff]
          %v3258 = vld [vmem:[#allocation9 + $0xfb8] sm:$0xff]
          %v3259 = vld [vmem:[#allocation9 + $0xfc0] sm:$0xff]
          %v3260 = vld [vmem:[#allocation9 + $0xfc8] sm:$0xff]
          %v3261 = vld [vmem:[#allocation9 + $0xfd0] sm:$0xff]
          %v3262 = vld [vmem:[#allocation9 + $0xfd8] sm:$0xff]
          %v3263 = vld [vmem:[#allocation9 + $0xfe0] sm:$0xff]
          %v3264 = vld [vmem:[#allocation9 + $0xfe8] sm:$0xff]
          %v3265 = vld [vmem:[#allocation9 + $0xff0] sm:$0xff]
          %v3266 = vld [vmem:[#allocation9 + $0xff8] sm:$0xff]
          %v3267 = vunpack.c.l.bf16 %v2755
          %v3268 = vunpack.c.h.bf16 %v2755
          %v3269 = vunpack.c.l.bf16 %v2756
          %v3270 = vunpack.c.h.bf16 %v2756
          %v3271 = vunpack.c.l.bf16 %v2757
          %v3272 = vunpack.c.h.bf16 %v2757
          %v3273 = vunpack.c.l.bf16 %v2758
          %v3274 = vunpack.c.h.bf16 %v2758
          %v3275 = vunpack.c.l.bf16 %v2759
          %v3276 = vunpack.c.h.bf16 %v2759
          %v3277 = vunpack.c.l.bf16 %v2760
          %v3278 = vunpack.c.h.bf16 %v2760
          %v3279 = vunpack.c.l.bf16 %v2761
          %v3280 = vunpack.c.h.bf16 %v2761
          %v3281 = vunpack.c.l.bf16 %v2762
          %v3282 = vunpack.c.h.bf16 %v2762
          %v3283 = vunpack.c.l.bf16 %v2763
          %v3284 = vunpack.c.h.bf16 %v2763
          %v3285 = vunpack.c.l.bf16 %v2764
          %v3286 = vunpack.c.h.bf16 %v2764
          %v3287 = vunpack.c.l.bf16 %v2765
          %v3288 = vunpack.c.h.bf16 %v2765
          %v3289 = vunpack.c.l.bf16 %v2766
          %v3290 = vunpack.c.h.bf16 %v2766
          %v3291 = vunpack.c.l.bf16 %v2767
          %v3292 = vunpack.c.h.bf16 %v2767
          %v3293 = vunpack.c.l.bf16 %v2768
          %v3294 = vunpack.c.h.bf16 %v2768
          %v3295 = vunpack.c.l.bf16 %v2769
          %v3296 = vunpack.c.h.bf16 %v2769
          %v3297 = vunpack.c.l.bf16 %v2770
          %v3298 = vunpack.c.h.bf16 %v2770
          %v3299 = vunpack.c.l.bf16 %v2771
          %v3300 = vunpack.c.h.bf16 %v2771
          %v3301 = vunpack.c.l.bf16 %v2772
          %v3302 = vunpack.c.h.bf16 %v2772
          %v3303 = vunpack.c.l.bf16 %v2773
          %v3304 = vunpack.c.h.bf16 %v2773
          %v3305 = vunpack.c.l.bf16 %v2774
          %v3306 = vunpack.c.h.bf16 %v2774
          %v3307 = vunpack.c.l.bf16 %v2775
          %v3308 = vunpack.c.h.bf16 %v2775
          %v3309 = vunpack.c.l.bf16 %v2776
          %v3310 = vunpack.c.h.bf16 %v2776
          %v3311 = vunpack.c.l.bf16 %v2777
          %v3312 = vunpack.c.h.bf16 %v2777
          %v3313 = vunpack.c.l.bf16 %v2778
          %v3314 = vunpack.c.h.bf16 %v2778
          %v3315 = vunpack.c.l.bf16 %v2779
          %v3316 = vunpack.c.h.bf16 %v2779
          %v3317 = vunpack.c.l.bf16 %v2780
          %v3318 = vunpack.c.h.bf16 %v2780
          %v3319 = vunpack.c.l.bf16 %v2781
          %v3320 = vunpack.c.h.bf16 %v2781
          %v3321 = vunpack.c.l.bf16 %v2782
          %v3322 = vunpack.c.h.bf16 %v2782
          %v3323 = vunpack.c.l.bf16 %v2783
          %v3324 = vunpack.c.h.bf16 %v2783
          %v3325 = vunpack.c.l.bf16 %v2784
          %v3326 = vunpack.c.h.bf16 %v2784
          %v3327 = vunpack.c.l.bf16 %v2785
          %v3328 = vunpack.c.h.bf16 %v2785
          %v3329 = vunpack.c.l.bf16 %v2786
          %v3330 = vunpack.c.h.bf16 %v2786
          %v3331 = vunpack.c.l.bf16 %v2787
          %v3332 = vunpack.c.h.bf16 %v2787
          %v3333 = vunpack.c.l.bf16 %v2788
          %v3334 = vunpack.c.h.bf16 %v2788
          %v3335 = vunpack.c.l.bf16 %v2789
          %v3336 = vunpack.c.h.bf16 %v2789
          %v3337 = vunpack.c.l.bf16 %v2790
          %v3338 = vunpack.c.h.bf16 %v2790
          %v3339 = vunpack.c.l.bf16 %v2791
          %v3340 = vunpack.c.h.bf16 %v2791
          %v3341 = vunpack.c.l.bf16 %v2792
          %v3342 = vunpack.c.h.bf16 %v2792
          %v3343 = vunpack.c.l.bf16 %v2793
          %v3344 = vunpack.c.h.bf16 %v2793
          %v3345 = vunpack.c.l.bf16 %v2794
          %v3346 = vunpack.c.h.bf16 %v2794
          %v3347 = vunpack.c.l.bf16 %v2795
          %v3348 = vunpack.c.h.bf16 %v2795
          %v3349 = vunpack.c.l.bf16 %v2796
          %v3350 = vunpack.c.h.bf16 %v2796
          %v3351 = vunpack.c.l.bf16 %v2797
          %v3352 = vunpack.c.h.bf16 %v2797
          %v3353 = vunpack.c.l.bf16 %v2798
          %v3354 = vunpack.c.h.bf16 %v2798
          %v3355 = vunpack.c.l.bf16 %v2799
          %v3356 = vunpack.c.h.bf16 %v2799
          %v3357 = vunpack.c.l.bf16 %v2800
          %v3358 = vunpack.c.h.bf16 %v2800
          %v3359 = vunpack.c.l.bf16 %v2801
          %v3360 = vunpack.c.h.bf16 %v2801
          %v3361 = vunpack.c.l.bf16 %v2802
          %v3362 = vunpack.c.h.bf16 %v2802
          %v3363 = vunpack.c.l.bf16 %v2803
          %v3364 = vunpack.c.h.bf16 %v2803
          %v3365 = vunpack.c.l.bf16 %v2804
          %v3366 = vunpack.c.h.bf16 %v2804
          %v3367 = vunpack.c.l.bf16 %v2805
          %v3368 = vunpack.c.h.bf16 %v2805
          %v3369 = vunpack.c.l.bf16 %v2806
          %v3370 = vunpack.c.h.bf16 %v2806
          %v3371 = vunpack.c.l.bf16 %v2807
          %v3372 = vunpack.c.h.bf16 %v2807
          %v3373 = vunpack.c.l.bf16 %v2808
          %v3374 = vunpack.c.h.bf16 %v2808
          %v3375 = vunpack.c.l.bf16 %v2809
          %v3376 = vunpack.c.h.bf16 %v2809
          %v3377 = vunpack.c.l.bf16 %v2810
          %v3378 = vunpack.c.h.bf16 %v2810
          %v3379 = vunpack.c.l.bf16 %v2811
          %v3380 = vunpack.c.h.bf16 %v2811
          %v3381 = vunpack.c.l.bf16 %v2812
          %v3382 = vunpack.c.h.bf16 %v2812
          %v3383 = vunpack.c.l.bf16 %v2813
          %v3384 = vunpack.c.h.bf16 %v2813
          %v3385 = vunpack.c.l.bf16 %v2814
          %v3386 = vunpack.c.h.bf16 %v2814
          %v3387 = vunpack.c.l.bf16 %v2815
          %v3388 = vunpack.c.h.bf16 %v2815
          %v3389 = vunpack.c.l.bf16 %v2816
          %v3390 = vunpack.c.h.bf16 %v2816
          %v3391 = vunpack.c.l.bf16 %v2817
          %v3392 = vunpack.c.h.bf16 %v2817
          %v3393 = vunpack.c.l.bf16 %v2818
          %v3394 = vunpack.c.h.bf16 %v2818
          %v3395 = vunpack.c.l.bf16 %v2819
          %v3396 = vunpack.c.h.bf16 %v2819
          %v3397 = vunpack.c.l.bf16 %v2820
          %v3398 = vunpack.c.h.bf16 %v2820
          %v3399 = vunpack.c.l.bf16 %v2821
          %v3400 = vunpack.c.h.bf16 %v2821
          %v3401 = vunpack.c.l.bf16 %v2822
          %v3402 = vunpack.c.h.bf16 %v2822
          %v3403 = vunpack.c.l.bf16 %v2823
          %v3404 = vunpack.c.h.bf16 %v2823
          %v3405 = vunpack.c.l.bf16 %v2824
          %v3406 = vunpack.c.h.bf16 %v2824
          %v3407 = vunpack.c.l.bf16 %v2825
          %v3408 = vunpack.c.h.bf16 %v2825
          %v3409 = vunpack.c.l.bf16 %v2826
          %v3410 = vunpack.c.h.bf16 %v2826
          %v3411 = vunpack.c.l.bf16 %v2827
          %v3412 = vunpack.c.h.bf16 %v2827
          %v3413 = vunpack.c.l.bf16 %v2828
          %v3414 = vunpack.c.h.bf16 %v2828
          %v3415 = vunpack.c.l.bf16 %v2829
          %v3416 = vunpack.c.h.bf16 %v2829
          %v3417 = vunpack.c.l.bf16 %v2830
          %v3418 = vunpack.c.h.bf16 %v2830
          %v3419 = vunpack.c.l.bf16 %v2831
          %v3420 = vunpack.c.h.bf16 %v2831
          %v3421 = vunpack.c.l.bf16 %v2832
          %v3422 = vunpack.c.h.bf16 %v2832
          %v3423 = vunpack.c.l.bf16 %v2833
          %v3424 = vunpack.c.h.bf16 %v2833
          %v3425 = vunpack.c.l.bf16 %v2834
          %v3426 = vunpack.c.h.bf16 %v2834
          %v3427 = vunpack.c.l.bf16 %v2835
          %v3428 = vunpack.c.h.bf16 %v2835
          %v3429 = vunpack.c.l.bf16 %v2836
          %v3430 = vunpack.c.h.bf16 %v2836
          %v3431 = vunpack.c.l.bf16 %v2837
          %v3432 = vunpack.c.h.bf16 %v2837
          %v3433 = vunpack.c.l.bf16 %v2838
          %v3434 = vunpack.c.h.bf16 %v2838
          %v3435 = vunpack.c.l.bf16 %v2839
          %v3436 = vunpack.c.h.bf16 %v2839
          %v3437 = vunpack.c.l.bf16 %v2840
          %v3438 = vunpack.c.h.bf16 %v2840
          %v3439 = vunpack.c.l.bf16 %v2841
          %v3440 = vunpack.c.h.bf16 %v2841
          %v3441 = vunpack.c.l.bf16 %v2842
          %v3442 = vunpack.c.h.bf16 %v2842
          %v3443 = vunpack.c.l.bf16 %v2843
          %v3444 = vunpack.c.h.bf16 %v2843
          %v3445 = vunpack.c.l.bf16 %v2844
          %v3446 = vunpack.c.h.bf16 %v2844
          %v3447 = vunpack.c.l.bf16 %v2845
          %v3448 = vunpack.c.h.bf16 %v2845
          %v3449 = vunpack.c.l.bf16 %v2846
          %v3450 = vunpack.c.h.bf16 %v2846
          %v3451 = vunpack.c.l.bf16 %v2847
          %v3452 = vunpack.c.h.bf16 %v2847
          %v3453 = vunpack.c.l.bf16 %v2848
          %v3454 = vunpack.c.h.bf16 %v2848
          %v3455 = vunpack.c.l.bf16 %v2849
          %v3456 = vunpack.c.h.bf16 %v2849
          %v3457 = vunpack.c.l.bf16 %v2850
          %v3458 = vunpack.c.h.bf16 %v2850
          %v3459 = vunpack.c.l.bf16 %v2851
          %v3460 = vunpack.c.h.bf16 %v2851
          %v3461 = vunpack.c.l.bf16 %v2852
          %v3462 = vunpack.c.h.bf16 %v2852
          %v3463 = vunpack.c.l.bf16 %v2853
          %v3464 = vunpack.c.h.bf16 %v2853
          %v3465 = vunpack.c.l.bf16 %v2854
          %v3466 = vunpack.c.h.bf16 %v2854
          %v3467 = vunpack.c.l.bf16 %v2855
          %v3468 = vunpack.c.h.bf16 %v2855
          %v3469 = vunpack.c.l.bf16 %v2856
          %v3470 = vunpack.c.h.bf16 %v2856
          %v3471 = vunpack.c.l.bf16 %v2857
          %v3472 = vunpack.c.h.bf16 %v2857
          %v3473 = vunpack.c.l.bf16 %v2858
          %v3474 = vunpack.c.h.bf16 %v2858
          %v3475 = vunpack.c.l.bf16 %v2859
          %v3476 = vunpack.c.h.bf16 %v2859
          %v3477 = vunpack.c.l.bf16 %v2860
          %v3478 = vunpack.c.h.bf16 %v2860
          %v3479 = vunpack.c.l.bf16 %v2861
          %v3480 = vunpack.c.h.bf16 %v2861
          %v3481 = vunpack.c.l.bf16 %v2862
          %v3482 = vunpack.c.h.bf16 %v2862
          %v3483 = vunpack.c.l.bf16 %v2863
          %v3484 = vunpack.c.h.bf16 %v2863
          %v3485 = vunpack.c.l.bf16 %v2864
          %v3486 = vunpack.c.h.bf16 %v2864
          %v3487 = vunpack.c.l.bf16 %v2865
          %v3488 = vunpack.c.h.bf16 %v2865
          %v3489 = vunpack.c.l.bf16 %v2866
          %v3490 = vunpack.c.h.bf16 %v2866
          %v3491 = vunpack.c.l.bf16 %v2867
          %v3492 = vunpack.c.h.bf16 %v2867
          %v3493 = vunpack.c.l.bf16 %v2868
          %v3494 = vunpack.c.h.bf16 %v2868
          %v3495 = vunpack.c.l.bf16 %v2869
          %v3496 = vunpack.c.h.bf16 %v2869
          %v3497 = vunpack.c.l.bf16 %v2870
          %v3498 = vunpack.c.h.bf16 %v2870
          %v3499 = vunpack.c.l.bf16 %v2871
          %v3500 = vunpack.c.h.bf16 %v2871
          %v3501 = vunpack.c.l.bf16 %v2872
          %v3502 = vunpack.c.h.bf16 %v2872
          %v3503 = vunpack.c.l.bf16 %v2873
          %v3504 = vunpack.c.h.bf16 %v2873
          %v3505 = vunpack.c.l.bf16 %v2874
          %v3506 = vunpack.c.h.bf16 %v2874
          %v3507 = vunpack.c.l.bf16 %v2875
          %v3508 = vunpack.c.h.bf16 %v2875
          %v3509 = vunpack.c.l.bf16 %v2876
          %v3510 = vunpack.c.h.bf16 %v2876
          %v3511 = vunpack.c.l.bf16 %v2877
          %v3512 = vunpack.c.h.bf16 %v2877
          %v3513 = vunpack.c.l.bf16 %v2878
          %v3514 = vunpack.c.h.bf16 %v2878
          %v3515 = vunpack.c.l.bf16 %v2879
          %v3516 = vunpack.c.h.bf16 %v2879
          %v3517 = vunpack.c.l.bf16 %v2880
          %v3518 = vunpack.c.h.bf16 %v2880
          %v3519 = vunpack.c.l.bf16 %v2881
          %v3520 = vunpack.c.h.bf16 %v2881
          %v3521 = vunpack.c.l.bf16 %v2882
          %v3522 = vunpack.c.h.bf16 %v2882
          %v3523 = vunpack.c.l.bf16 %v2883
          %v3524 = vunpack.c.h.bf16 %v2883
          %v3525 = vunpack.c.l.bf16 %v2884
          %v3526 = vunpack.c.h.bf16 %v2884
          %v3527 = vunpack.c.l.bf16 %v2885
          %v3528 = vunpack.c.h.bf16 %v2885
          %v3529 = vunpack.c.l.bf16 %v2886
          %v3530 = vunpack.c.h.bf16 %v2886
          %v3531 = vunpack.c.l.bf16 %v2887
          %v3532 = vunpack.c.h.bf16 %v2887
          %v3533 = vunpack.c.l.bf16 %v2888
          %v3534 = vunpack.c.h.bf16 %v2888
          %v3535 = vunpack.c.l.bf16 %v2889
          %v3536 = vunpack.c.h.bf16 %v2889
          %v3537 = vunpack.c.l.bf16 %v2890
          %v3538 = vunpack.c.h.bf16 %v2890
          %v3539 = vunpack.c.l.bf16 %v2891
          %v3540 = vunpack.c.h.bf16 %v2891
          %v3541 = vunpack.c.l.bf16 %v2892
          %v3542 = vunpack.c.h.bf16 %v2892
          %v3543 = vunpack.c.l.bf16 %v2893
          %v3544 = vunpack.c.h.bf16 %v2893
          %v3545 = vunpack.c.l.bf16 %v2894
          %v3546 = vunpack.c.h.bf16 %v2894
          %v3547 = vunpack.c.l.bf16 %v2895
          %v3548 = vunpack.c.h.bf16 %v2895
          %v3549 = vunpack.c.l.bf16 %v2896
          %v3550 = vunpack.c.h.bf16 %v2896
          %v3551 = vunpack.c.l.bf16 %v2897
          %v3552 = vunpack.c.h.bf16 %v2897
          %v3553 = vunpack.c.l.bf16 %v2898
          %v3554 = vunpack.c.h.bf16 %v2898
          %v3555 = vunpack.c.l.bf16 %v2899
          %v3556 = vunpack.c.h.bf16 %v2899
          %v3557 = vunpack.c.l.bf16 %v2900
          %v3558 = vunpack.c.h.bf16 %v2900
          %v3559 = vunpack.c.l.bf16 %v2901
          %v3560 = vunpack.c.h.bf16 %v2901
          %v3561 = vunpack.c.l.bf16 %v2902
          %v3562 = vunpack.c.h.bf16 %v2902
          %v3563 = vunpack.c.l.bf16 %v2903
          %v3564 = vunpack.c.h.bf16 %v2903
          %v3565 = vunpack.c.l.bf16 %v2904
          %v3566 = vunpack.c.h.bf16 %v2904
          %v3567 = vunpack.c.l.bf16 %v2905
          %v3568 = vunpack.c.h.bf16 %v2905
          %v3569 = vunpack.c.l.bf16 %v2906
          %v3570 = vunpack.c.h.bf16 %v2906
          %v3571 = vunpack.c.l.bf16 %v2907
          %v3572 = vunpack.c.h.bf16 %v2907
          %v3573 = vunpack.c.l.bf16 %v2908
          %v3574 = vunpack.c.h.bf16 %v2908
          %v3575 = vunpack.c.l.bf16 %v2909
          %v3576 = vunpack.c.h.bf16 %v2909
          %v3577 = vunpack.c.l.bf16 %v2910
          %v3578 = vunpack.c.h.bf16 %v2910
          %v3579 = vunpack.c.l.bf16 %v2911
          %v3580 = vunpack.c.h.bf16 %v2911
          %v3581 = vunpack.c.l.bf16 %v2912
          %v3582 = vunpack.c.h.bf16 %v2912
          %v3583 = vunpack.c.l.bf16 %v2913
          %v3584 = vunpack.c.h.bf16 %v2913
          %v3585 = vunpack.c.l.bf16 %v2914
          %v3586 = vunpack.c.h.bf16 %v2914
          %v3587 = vunpack.c.l.bf16 %v2915
          %v3588 = vunpack.c.h.bf16 %v2915
          %v3589 = vunpack.c.l.bf16 %v2916
          %v3590 = vunpack.c.h.bf16 %v2916
          %v3591 = vunpack.c.l.bf16 %v2917
          %v3592 = vunpack.c.h.bf16 %v2917
          %v3593 = vunpack.c.l.bf16 %v2918
          %v3594 = vunpack.c.h.bf16 %v2918
          %v3595 = vunpack.c.l.bf16 %v2919
          %v3596 = vunpack.c.h.bf16 %v2919
          %v3597 = vunpack.c.l.bf16 %v2920
          %v3598 = vunpack.c.h.bf16 %v2920
          %v3599 = vunpack.c.l.bf16 %v2921
          %v3600 = vunpack.c.h.bf16 %v2921
          %v3601 = vunpack.c.l.bf16 %v2922
          %v3602 = vunpack.c.h.bf16 %v2922
          %v3603 = vunpack.c.l.bf16 %v2923
          %v3604 = vunpack.c.h.bf16 %v2923
          %v3605 = vunpack.c.l.bf16 %v2924
          %v3606 = vunpack.c.h.bf16 %v2924
          %v3607 = vunpack.c.l.bf16 %v2925
          %v3608 = vunpack.c.h.bf16 %v2925
          %v3609 = vunpack.c.l.bf16 %v2926
          %v3610 = vunpack.c.h.bf16 %v2926
          %v3611 = vunpack.c.l.bf16 %v2927
          %v3612 = vunpack.c.h.bf16 %v2927
          %v3613 = vunpack.c.l.bf16 %v2928
          %v3614 = vunpack.c.h.bf16 %v2928
          %v3615 = vunpack.c.l.bf16 %v2929
          %v3616 = vunpack.c.h.bf16 %v2929
          %v3617 = vunpack.c.l.bf16 %v2930
          %v3618 = vunpack.c.h.bf16 %v2930
          %v3619 = vunpack.c.l.bf16 %v2931
          %v3620 = vunpack.c.h.bf16 %v2931
          %v3621 = vunpack.c.l.bf16 %v2932
          %v3622 = vunpack.c.h.bf16 %v2932
          %v3623 = vunpack.c.l.bf16 %v2933
          %v3624 = vunpack.c.h.bf16 %v2933
          %v3625 = vunpack.c.l.bf16 %v2934
          %v3626 = vunpack.c.h.bf16 %v2934
          %v3627 = vunpack.c.l.bf16 %v2935
          %v3628 = vunpack.c.h.bf16 %v2935
          %v3629 = vunpack.c.l.bf16 %v2936
          %v3630 = vunpack.c.h.bf16 %v2936
          %v3631 = vunpack.c.l.bf16 %v2937
          %v3632 = vunpack.c.h.bf16 %v2937
          %v3633 = vunpack.c.l.bf16 %v2938
          %v3634 = vunpack.c.h.bf16 %v2938
          %v3635 = vunpack.c.l.bf16 %v2939
          %v3636 = vunpack.c.h.bf16 %v2939
          %v3637 = vunpack.c.l.bf16 %v2940
          %v3638 = vunpack.c.h.bf16 %v2940
          %v3639 = vunpack.c.l.bf16 %v2941
          %v3640 = vunpack.c.h.bf16 %v2941
          %v3641 = vunpack.c.l.bf16 %v2942
          %v3642 = vunpack.c.h.bf16 %v2942
          %v3643 = vunpack.c.l.bf16 %v2943
          %v3644 = vunpack.c.h.bf16 %v2943
          %v3645 = vunpack.c.l.bf16 %v2944
          %v3646 = vunpack.c.h.bf16 %v2944
          %v3647 = vunpack.c.l.bf16 %v2945
          %v3648 = vunpack.c.h.bf16 %v2945
          %v3649 = vunpack.c.l.bf16 %v2946
          %v3650 = vunpack.c.h.bf16 %v2946
          %v3651 = vunpack.c.l.bf16 %v2947
          %v3652 = vunpack.c.h.bf16 %v2947
          %v3653 = vunpack.c.l.bf16 %v2948
          %v3654 = vunpack.c.h.bf16 %v2948
          %v3655 = vunpack.c.l.bf16 %v2949
          %v3656 = vunpack.c.h.bf16 %v2949
          %v3657 = vunpack.c.l.bf16 %v2950
          %v3658 = vunpack.c.h.bf16 %v2950
          %v3659 = vunpack.c.l.bf16 %v2951
          %v3660 = vunpack.c.h.bf16 %v2951
          %v3661 = vunpack.c.l.bf16 %v2952
          %v3662 = vunpack.c.h.bf16 %v2952
          %v3663 = vunpack.c.l.bf16 %v2953
          %v3664 = vunpack.c.h.bf16 %v2953
          %v3665 = vunpack.c.l.bf16 %v2954
          %v3666 = vunpack.c.h.bf16 %v2954
          %v3667 = vunpack.c.l.bf16 %v2955
          %v3668 = vunpack.c.h.bf16 %v2955
          %v3669 = vunpack.c.l.bf16 %v2956
          %v3670 = vunpack.c.h.bf16 %v2956
          %v3671 = vunpack.c.l.bf16 %v2957
          %v3672 = vunpack.c.h.bf16 %v2957
          %v3673 = vunpack.c.l.bf16 %v2958
          %v3674 = vunpack.c.h.bf16 %v2958
          %v3675 = vunpack.c.l.bf16 %v2959
          %v3676 = vunpack.c.h.bf16 %v2959
          %v3677 = vunpack.c.l.bf16 %v2960
          %v3678 = vunpack.c.h.bf16 %v2960
          %v3679 = vunpack.c.l.bf16 %v2961
          %v3680 = vunpack.c.h.bf16 %v2961
          %v3681 = vunpack.c.l.bf16 %v2962
          %v3682 = vunpack.c.h.bf16 %v2962
          %v3683 = vunpack.c.l.bf16 %v2963
          %v3684 = vunpack.c.h.bf16 %v2963
          %v3685 = vunpack.c.l.bf16 %v2964
          %v3686 = vunpack.c.h.bf16 %v2964
          %v3687 = vunpack.c.l.bf16 %v2965
          %v3688 = vunpack.c.h.bf16 %v2965
          %v3689 = vunpack.c.l.bf16 %v2966
          %v3690 = vunpack.c.h.bf16 %v2966
          %v3691 = vunpack.c.l.bf16 %v2967
          %v3692 = vunpack.c.h.bf16 %v2967
          %v3693 = vunpack.c.l.bf16 %v2968
          %v3694 = vunpack.c.h.bf16 %v2968
          %v3695 = vunpack.c.l.bf16 %v2969
          %v3696 = vunpack.c.h.bf16 %v2969
          %v3697 = vunpack.c.l.bf16 %v2970
          %v3698 = vunpack.c.h.bf16 %v2970
          %v3699 = vunpack.c.l.bf16 %v2971
          %v3700 = vunpack.c.h.bf16 %v2971
          %v3701 = vunpack.c.l.bf16 %v2972
          %v3702 = vunpack.c.h.bf16 %v2972
          %v3703 = vunpack.c.l.bf16 %v2973
          %v3704 = vunpack.c.h.bf16 %v2973
          %v3705 = vunpack.c.l.bf16 %v2974
          %v3706 = vunpack.c.h.bf16 %v2974
          %v3707 = vunpack.c.l.bf16 %v2975
          %v3708 = vunpack.c.h.bf16 %v2975
          %v3709 = vunpack.c.l.bf16 %v2976
          %v3710 = vunpack.c.h.bf16 %v2976
          %v3711 = vunpack.c.l.bf16 %v2977
          %v3712 = vunpack.c.h.bf16 %v2977
          %v3713 = vunpack.c.l.bf16 %v2978
          %v3714 = vunpack.c.h.bf16 %v2978
          %v3715 = vunpack.c.l.bf16 %v2979
          %v3716 = vunpack.c.h.bf16 %v2979
          %v3717 = vunpack.c.l.bf16 %v2980
          %v3718 = vunpack.c.h.bf16 %v2980
          %v3719 = vunpack.c.l.bf16 %v2981
          %v3720 = vunpack.c.h.bf16 %v2981
          %v3721 = vunpack.c.l.bf16 %v2982
          %v3722 = vunpack.c.h.bf16 %v2982
          %v3723 = vunpack.c.l.bf16 %v2983
          %v3724 = vunpack.c.h.bf16 %v2983
          %v3725 = vunpack.c.l.bf16 %v2984
          %v3726 = vunpack.c.h.bf16 %v2984
          %v3727 = vunpack.c.l.bf16 %v2985
          %v3728 = vunpack.c.h.bf16 %v2985
          %v3729 = vunpack.c.l.bf16 %v2986
          %v3730 = vunpack.c.h.bf16 %v2986
          %v3731 = vunpack.c.l.bf16 %v2987
          %v3732 = vunpack.c.h.bf16 %v2987
          %v3733 = vunpack.c.l.bf16 %v2988
          %v3734 = vunpack.c.h.bf16 %v2988
          %v3735 = vunpack.c.l.bf16 %v2989
          %v3736 = vunpack.c.h.bf16 %v2989
          %v3737 = vunpack.c.l.bf16 %v2990
          %v3738 = vunpack.c.h.bf16 %v2990
          %v3739 = vunpack.c.l.bf16 %v2991
          %v3740 = vunpack.c.h.bf16 %v2991
          %v3741 = vunpack.c.l.bf16 %v2992
          %v3742 = vunpack.c.h.bf16 %v2992
          %v3743 = vunpack.c.l.bf16 %v2993
          %v3744 = vunpack.c.h.bf16 %v2993
          %v3745 = vunpack.c.l.bf16 %v2994
          %v3746 = vunpack.c.h.bf16 %v2994
          %v3747 = vunpack.c.l.bf16 %v2995
          %v3748 = vunpack.c.h.bf16 %v2995
          %v3749 = vunpack.c.l.bf16 %v2996
          %v3750 = vunpack.c.h.bf16 %v2996
          %v3751 = vunpack.c.l.bf16 %v2997
          %v3752 = vunpack.c.h.bf16 %v2997
          %v3753 = vunpack.c.l.bf16 %v2998
          %v3754 = vunpack.c.h.bf16 %v2998
          %v3755 = vunpack.c.l.bf16 %v2999
          %v3756 = vunpack.c.h.bf16 %v2999
          %v3757 = vunpack.c.l.bf16 %v3000
          %v3758 = vunpack.c.h.bf16 %v3000
          %v3759 = vunpack.c.l.bf16 %v3001
          %v3760 = vunpack.c.h.bf16 %v3001
          %v3761 = vunpack.c.l.bf16 %v3002
          %v3762 = vunpack.c.h.bf16 %v3002
          %v3763 = vunpack.c.l.bf16 %v3003
          %v3764 = vunpack.c.h.bf16 %v3003
          %v3765 = vunpack.c.l.bf16 %v3004
          %v3766 = vunpack.c.h.bf16 %v3004
          %v3767 = vunpack.c.l.bf16 %v3005
          %v3768 = vunpack.c.h.bf16 %v3005
          %v3769 = vunpack.c.l.bf16 %v3006
          %v3770 = vunpack.c.h.bf16 %v3006
          %v3771 = vunpack.c.l.bf16 %v3007
          %v3772 = vunpack.c.h.bf16 %v3007
          %v3773 = vunpack.c.l.bf16 %v3008
          %v3774 = vunpack.c.h.bf16 %v3008
          %v3775 = vunpack.c.l.bf16 %v3009
          %v3776 = vunpack.c.h.bf16 %v3009
          %v3777 = vunpack.c.l.bf16 %v3010
          %v3778 = vunpack.c.h.bf16 %v3010
          %v3779 = vunpack.c.l.bf16 %v3011
          %v3780 = vunpack.c.h.bf16 %v3011
          %v3781 = vunpack.c.l.bf16 %v3012
          %v3782 = vunpack.c.h.bf16 %v3012
          %v3783 = vunpack.c.l.bf16 %v3013
          %v3784 = vunpack.c.h.bf16 %v3013
          %v3785 = vunpack.c.l.bf16 %v3014
          %v3786 = vunpack.c.h.bf16 %v3014
          %v3787 = vunpack.c.l.bf16 %v3015
          %v3788 = vunpack.c.h.bf16 %v3015
          %v3789 = vunpack.c.l.bf16 %v3016
          %v3790 = vunpack.c.h.bf16 %v3016
          %v3791 = vunpack.c.l.bf16 %v3017
          %v3792 = vunpack.c.h.bf16 %v3017
          %v3793 = vunpack.c.l.bf16 %v3018
          %v3794 = vunpack.c.h.bf16 %v3018
          %v3795 = vunpack.c.l.bf16 %v3019
          %v3796 = vunpack.c.h.bf16 %v3019
          %v3797 = vunpack.c.l.bf16 %v3020
          %v3798 = vunpack.c.h.bf16 %v3020
          %v3799 = vunpack.c.l.bf16 %v3021
          %v3800 = vunpack.c.h.bf16 %v3021
          %v3801 = vunpack.c.l.bf16 %v3022
          %v3802 = vunpack.c.h.bf16 %v3022
          %v3803 = vunpack.c.l.bf16 %v3023
          %v3804 = vunpack.c.h.bf16 %v3023
          %v3805 = vunpack.c.l.bf16 %v3024
          %v3806 = vunpack.c.h.bf16 %v3024
          %v3807 = vunpack.c.l.bf16 %v3025
          %v3808 = vunpack.c.h.bf16 %v3025
          %v3809 = vunpack.c.l.bf16 %v3026
          %v3810 = vunpack.c.h.bf16 %v3026
          %v3811 = vunpack.c.l.bf16 %v3027
          %v3812 = vunpack.c.h.bf16 %v3027
          %v3813 = vunpack.c.l.bf16 %v3028
          %v3814 = vunpack.c.h.bf16 %v3028
          %v3815 = vunpack.c.l.bf16 %v3029
          %v3816 = vunpack.c.h.bf16 %v3029
          %v3817 = vunpack.c.l.bf16 %v3030
          %v3818 = vunpack.c.h.bf16 %v3030
          %v3819 = vunpack.c.l.bf16 %v3031
          %v3820 = vunpack.c.h.bf16 %v3031
          %v3821 = vunpack.c.l.bf16 %v3032
          %v3822 = vunpack.c.h.bf16 %v3032
          %v3823 = vunpack.c.l.bf16 %v3033
          %v3824 = vunpack.c.h.bf16 %v3033
          %v3825 = vunpack.c.l.bf16 %v3034
          %v3826 = vunpack.c.h.bf16 %v3034
          %v3827 = vunpack.c.l.bf16 %v3035
          %v3828 = vunpack.c.h.bf16 %v3035
          %v3829 = vunpack.c.l.bf16 %v3036
          %v3830 = vunpack.c.h.bf16 %v3036
          %v3831 = vunpack.c.l.bf16 %v3037
          %v3832 = vunpack.c.h.bf16 %v3037
          %v3833 = vunpack.c.l.bf16 %v3038
          %v3834 = vunpack.c.h.bf16 %v3038
          %v3835 = vunpack.c.l.bf16 %v3039
          %v3836 = vunpack.c.h.bf16 %v3039
          %v3837 = vunpack.c.l.bf16 %v3040
          %v3838 = vunpack.c.h.bf16 %v3040
          %v3839 = vunpack.c.l.bf16 %v3041
          %v3840 = vunpack.c.h.bf16 %v3041
          %v3841 = vunpack.c.l.bf16 %v3042
          %v3842 = vunpack.c.h.bf16 %v3042
          %v3843 = vunpack.c.l.bf16 %v3043
          %v3844 = vunpack.c.h.bf16 %v3043
          %v3845 = vunpack.c.l.bf16 %v3044
          %v3846 = vunpack.c.h.bf16 %v3044
          %v3847 = vunpack.c.l.bf16 %v3045
          %v3848 = vunpack.c.h.bf16 %v3045
          %v3849 = vunpack.c.l.bf16 %v3046
          %v3850 = vunpack.c.h.bf16 %v3046
          %v3851 = vunpack.c.l.bf16 %v3047
          %v3852 = vunpack.c.h.bf16 %v3047
          %v3853 = vunpack.c.l.bf16 %v3048
          %v3854 = vunpack.c.h.bf16 %v3048
          %v3855 = vunpack.c.l.bf16 %v3049
          %v3856 = vunpack.c.h.bf16 %v3049
          %v3857 = vunpack.c.l.bf16 %v3050
          %v3858 = vunpack.c.h.bf16 %v3050
          %v3859 = vunpack.c.l.bf16 %v3051
          %v3860 = vunpack.c.h.bf16 %v3051
          %v3861 = vunpack.c.l.bf16 %v3052
          %v3862 = vunpack.c.h.bf16 %v3052
          %v3863 = vunpack.c.l.bf16 %v3053
          %v3864 = vunpack.c.h.bf16 %v3053
          %v3865 = vunpack.c.l.bf16 %v3054
          %v3866 = vunpack.c.h.bf16 %v3054
          %v3867 = vunpack.c.l.bf16 %v3055
          %v3868 = vunpack.c.h.bf16 %v3055
          %v3869 = vunpack.c.l.bf16 %v3056
          %v3870 = vunpack.c.h.bf16 %v3056
          %v3871 = vunpack.c.l.bf16 %v3057
          %v3872 = vunpack.c.h.bf16 %v3057
          %v3873 = vunpack.c.l.bf16 %v3058
          %v3874 = vunpack.c.h.bf16 %v3058
          %v3875 = vunpack.c.l.bf16 %v3059
          %v3876 = vunpack.c.h.bf16 %v3059
          %v3877 = vunpack.c.l.bf16 %v3060
          %v3878 = vunpack.c.h.bf16 %v3060
          %v3879 = vunpack.c.l.bf16 %v3061
          %v3880 = vunpack.c.h.bf16 %v3061
          %v3881 = vunpack.c.l.bf16 %v3062
          %v3882 = vunpack.c.h.bf16 %v3062
          %v3883 = vunpack.c.l.bf16 %v3063
          %v3884 = vunpack.c.h.bf16 %v3063
          %v3885 = vunpack.c.l.bf16 %v3064
          %v3886 = vunpack.c.h.bf16 %v3064
          %v3887 = vunpack.c.l.bf16 %v3065
          %v3888 = vunpack.c.h.bf16 %v3065
          %v3889 = vunpack.c.l.bf16 %v3066
          %v3890 = vunpack.c.h.bf16 %v3066
          %v3891 = vunpack.c.l.bf16 %v3067
          %v3892 = vunpack.c.h.bf16 %v3067
          %v3893 = vunpack.c.l.bf16 %v3068
          %v3894 = vunpack.c.h.bf16 %v3068
          %v3895 = vunpack.c.l.bf16 %v3069
          %v3896 = vunpack.c.h.bf16 %v3069
          %v3897 = vunpack.c.l.bf16 %v3070
          %v3898 = vunpack.c.h.bf16 %v3070
          %v3899 = vunpack.c.l.bf16 %v3071
          %v3900 = vunpack.c.h.bf16 %v3071
          %v3901 = vunpack.c.l.bf16 %v3072
          %v3902 = vunpack.c.h.bf16 %v3072
          %v3903 = vunpack.c.l.bf16 %v3073
          %v3904 = vunpack.c.h.bf16 %v3073
          %v3905 = vunpack.c.l.bf16 %v3074
          %v3906 = vunpack.c.h.bf16 %v3074
          %v3907 = vunpack.c.l.bf16 %v3075
          %v3908 = vunpack.c.h.bf16 %v3075
          %v3909 = vunpack.c.l.bf16 %v3076
          %v3910 = vunpack.c.h.bf16 %v3076
          %v3911 = vunpack.c.l.bf16 %v3077
          %v3912 = vunpack.c.h.bf16 %v3077
          %v3913 = vunpack.c.l.bf16 %v3078
          %v3914 = vunpack.c.h.bf16 %v3078
          %v3915 = vunpack.c.l.bf16 %v3079
          %v3916 = vunpack.c.h.bf16 %v3079
          %v3917 = vunpack.c.l.bf16 %v3080
          %v3918 = vunpack.c.h.bf16 %v3080
          %v3919 = vunpack.c.l.bf16 %v3081
          %v3920 = vunpack.c.h.bf16 %v3081
          %v3921 = vunpack.c.l.bf16 %v3082
          %v3922 = vunpack.c.h.bf16 %v3082
          %v3923 = vunpack.c.l.bf16 %v3083
          %v3924 = vunpack.c.h.bf16 %v3083
          %v3925 = vunpack.c.l.bf16 %v3084
          %v3926 = vunpack.c.h.bf16 %v3084
          %v3927 = vunpack.c.l.bf16 %v3085
          %v3928 = vunpack.c.h.bf16 %v3085
          %v3929 = vunpack.c.l.bf16 %v3086
          %v3930 = vunpack.c.h.bf16 %v3086
          %v3931 = vunpack.c.l.bf16 %v3087
          %v3932 = vunpack.c.h.bf16 %v3087
          %v3933 = vunpack.c.l.bf16 %v3088
          %v3934 = vunpack.c.h.bf16 %v3088
          %v3935 = vunpack.c.l.bf16 %v3089
          %v3936 = vunpack.c.h.bf16 %v3089
          %v3937 = vunpack.c.l.bf16 %v3090
          %v3938 = vunpack.c.h.bf16 %v3090
          %v3939 = vunpack.c.l.bf16 %v3091
          %v3940 = vunpack.c.h.bf16 %v3091
          %v3941 = vunpack.c.l.bf16 %v3092
          %v3942 = vunpack.c.h.bf16 %v3092
          %v3943 = vunpack.c.l.bf16 %v3093
          %v3944 = vunpack.c.h.bf16 %v3093
          %v3945 = vunpack.c.l.bf16 %v3094
          %v3946 = vunpack.c.h.bf16 %v3094
          %v3947 = vunpack.c.l.bf16 %v3095
          %v3948 = vunpack.c.h.bf16 %v3095
          %v3949 = vunpack.c.l.bf16 %v3096
          %v3950 = vunpack.c.h.bf16 %v3096
          %v3951 = vunpack.c.l.bf16 %v3097
          %v3952 = vunpack.c.h.bf16 %v3097
          %v3953 = vunpack.c.l.bf16 %v3098
          %v3954 = vunpack.c.h.bf16 %v3098
          %v3955 = vunpack.c.l.bf16 %v3099
          %v3956 = vunpack.c.h.bf16 %v3099
          %v3957 = vunpack.c.l.bf16 %v3100
          %v3958 = vunpack.c.h.bf16 %v3100
          %v3959 = vunpack.c.l.bf16 %v3101
          %v3960 = vunpack.c.h.bf16 %v3101
          %v3961 = vunpack.c.l.bf16 %v3102
          %v3962 = vunpack.c.h.bf16 %v3102
          %v3963 = vunpack.c.l.bf16 %v3103
          %v3964 = vunpack.c.h.bf16 %v3103
          %v3965 = vunpack.c.l.bf16 %v3104
          %v3966 = vunpack.c.h.bf16 %v3104
          %v3967 = vunpack.c.l.bf16 %v3105
          %v3968 = vunpack.c.h.bf16 %v3105
          %v3969 = vunpack.c.l.bf16 %v3106
          %v3970 = vunpack.c.h.bf16 %v3106
          %v3971 = vunpack.c.l.bf16 %v3107
          %v3972 = vunpack.c.h.bf16 %v3107
          %v3973 = vunpack.c.l.bf16 %v3108
          %v3974 = vunpack.c.h.bf16 %v3108
          %v3975 = vunpack.c.l.bf16 %v3109
          %v3976 = vunpack.c.h.bf16 %v3109
          %v3977 = vunpack.c.l.bf16 %v3110
          %v3978 = vunpack.c.h.bf16 %v3110
          %v3979 = vunpack.c.l.bf16 %v3111
          %v3980 = vunpack.c.h.bf16 %v3111
          %v3981 = vunpack.c.l.bf16 %v3112
          %v3982 = vunpack.c.h.bf16 %v3112
          %v3983 = vunpack.c.l.bf16 %v3113
          %v3984 = vunpack.c.h.bf16 %v3113
          %v3985 = vunpack.c.l.bf16 %v3114
          %v3986 = vunpack.c.h.bf16 %v3114
          %v3987 = vunpack.c.l.bf16 %v3115
          %v3988 = vunpack.c.h.bf16 %v3115
          %v3989 = vunpack.c.l.bf16 %v3116
          %v3990 = vunpack.c.h.bf16 %v3116
          %v3991 = vunpack.c.l.bf16 %v3117
          %v3992 = vunpack.c.h.bf16 %v3117
          %v3993 = vunpack.c.l.bf16 %v3118
          %v3994 = vunpack.c.h.bf16 %v3118
          %v3995 = vunpack.c.l.bf16 %v3119
          %v3996 = vunpack.c.h.bf16 %v3119
          %v3997 = vunpack.c.l.bf16 %v3120
          %v3998 = vunpack.c.h.bf16 %v3120
          %v3999 = vunpack.c.l.bf16 %v3121
          %v4000 = vunpack.c.h.bf16 %v3121
          %v4001 = vunpack.c.l.bf16 %v3122
          %v4002 = vunpack.c.h.bf16 %v3122
          %v4003 = vunpack.c.l.bf16 %v3123
          %v4004 = vunpack.c.h.bf16 %v3123
          %v4005 = vunpack.c.l.bf16 %v3124
          %v4006 = vunpack.c.h.bf16 %v3124
          %v4007 = vunpack.c.l.bf16 %v3125
          %v4008 = vunpack.c.h.bf16 %v3125
          %v4009 = vunpack.c.l.bf16 %v3126
          %v4010 = vunpack.c.h.bf16 %v3126
          %v4011 = vunpack.c.l.bf16 %v3127
          %v4012 = vunpack.c.h.bf16 %v3127
          %v4013 = vunpack.c.l.bf16 %v3128
          %v4014 = vunpack.c.h.bf16 %v3128
          %v4015 = vunpack.c.l.bf16 %v3129
          %v4016 = vunpack.c.h.bf16 %v3129
          %v4017 = vunpack.c.l.bf16 %v3130
          %v4018 = vunpack.c.h.bf16 %v3130
          %v4019 = vunpack.c.l.bf16 %v3131
          %v4020 = vunpack.c.h.bf16 %v3131
          %v4021 = vunpack.c.l.bf16 %v3132
          %v4022 = vunpack.c.h.bf16 %v3132
          %v4023 = vunpack.c.l.bf16 %v3133
          %v4024 = vunpack.c.h.bf16 %v3133
          %v4025 = vunpack.c.l.bf16 %v3134
          %v4026 = vunpack.c.h.bf16 %v3134
          %v4027 = vunpack.c.l.bf16 %v3135
          %v4028 = vunpack.c.h.bf16 %v3135
          %v4029 = vunpack.c.l.bf16 %v3136
          %v4030 = vunpack.c.h.bf16 %v3136
          %v4031 = vunpack.c.l.bf16 %v3137
          %v4032 = vunpack.c.h.bf16 %v3137
          %v4033 = vunpack.c.l.bf16 %v3138
          %v4034 = vunpack.c.h.bf16 %v3138
          %v4035 = vunpack.c.l.bf16 %v3139
          %v4036 = vunpack.c.h.bf16 %v3139
          %v4037 = vunpack.c.l.bf16 %v3140
          %v4038 = vunpack.c.h.bf16 %v3140
          %v4039 = vunpack.c.l.bf16 %v3141
          %v4040 = vunpack.c.h.bf16 %v3141
          %v4041 = vunpack.c.l.bf16 %v3142
          %v4042 = vunpack.c.h.bf16 %v3142
          %v4043 = vunpack.c.l.bf16 %v3143
          %v4044 = vunpack.c.h.bf16 %v3143
          %v4045 = vunpack.c.l.bf16 %v3144
          %v4046 = vunpack.c.h.bf16 %v3144
          %v4047 = vunpack.c.l.bf16 %v3145
          %v4048 = vunpack.c.h.bf16 %v3145
          %v4049 = vunpack.c.l.bf16 %v3146
          %v4050 = vunpack.c.h.bf16 %v3146
          %v4051 = vunpack.c.l.bf16 %v3147
          %v4052 = vunpack.c.h.bf16 %v3147
          %v4053 = vunpack.c.l.bf16 %v3148
          %v4054 = vunpack.c.h.bf16 %v3148
          %v4055 = vunpack.c.l.bf16 %v3149
          %v4056 = vunpack.c.h.bf16 %v3149
          %v4057 = vunpack.c.l.bf16 %v3150
          %v4058 = vunpack.c.h.bf16 %v3150
          %v4059 = vunpack.c.l.bf16 %v3151
          %v4060 = vunpack.c.h.bf16 %v3151
          %v4061 = vunpack.c.l.bf16 %v3152
          %v4062 = vunpack.c.h.bf16 %v3152
          %v4063 = vunpack.c.l.bf16 %v3153
          %v4064 = vunpack.c.h.bf16 %v3153
          %v4065 = vunpack.c.l.bf16 %v3154
          %v4066 = vunpack.c.h.bf16 %v3154
          %v4067 = vunpack.c.l.bf16 %v3155
          %v4068 = vunpack.c.h.bf16 %v3155
          %v4069 = vunpack.c.l.bf16 %v3156
          %v4070 = vunpack.c.h.bf16 %v3156
          %v4071 = vunpack.c.l.bf16 %v3157
          %v4072 = vunpack.c.h.bf16 %v3157
          %v4073 = vunpack.c.l.bf16 %v3158
          %v4074 = vunpack.c.h.bf16 %v3158
          %v4075 = vunpack.c.l.bf16 %v3159
          %v4076 = vunpack.c.h.bf16 %v3159
          %v4077 = vunpack.c.l.bf16 %v3160
          %v4078 = vunpack.c.h.bf16 %v3160
          %v4079 = vunpack.c.l.bf16 %v3161
          %v4080 = vunpack.c.h.bf16 %v3161
          %v4081 = vunpack.c.l.bf16 %v3162
          %v4082 = vunpack.c.h.bf16 %v3162
          %v4083 = vunpack.c.l.bf16 %v3163
          %v4084 = vunpack.c.h.bf16 %v3163
          %v4085 = vunpack.c.l.bf16 %v3164
          %v4086 = vunpack.c.h.bf16 %v3164
          %v4087 = vunpack.c.l.bf16 %v3165
          %v4088 = vunpack.c.h.bf16 %v3165
          %v4089 = vunpack.c.l.bf16 %v3166
          %v4090 = vunpack.c.h.bf16 %v3166
          %v4091 = vunpack.c.l.bf16 %v3167
          %v4092 = vunpack.c.h.bf16 %v3167
          %v4093 = vunpack.c.l.bf16 %v3168
          %v4094 = vunpack.c.h.bf16 %v3168
          %v4095 = vunpack.c.l.bf16 %v3169
          %v4096 = vunpack.c.h.bf16 %v3169
          %v4097 = vunpack.c.l.bf16 %v3170
          %v4098 = vunpack.c.h.bf16 %v3170
          %v4099 = vunpack.c.l.bf16 %v3171
          %v4100 = vunpack.c.h.bf16 %v3171
          %v4101 = vunpack.c.l.bf16 %v3172
          %v4102 = vunpack.c.h.bf16 %v3172
          %v4103 = vunpack.c.l.bf16 %v3173
          %v4104 = vunpack.c.h.bf16 %v3173
          %v4105 = vunpack.c.l.bf16 %v3174
          %v4106 = vunpack.c.h.bf16 %v3174
          %v4107 = vunpack.c.l.bf16 %v3175
          %v4108 = vunpack.c.h.bf16 %v3175
          %v4109 = vunpack.c.l.bf16 %v3176
          %v4110 = vunpack.c.h.bf16 %v3176
          %v4111 = vunpack.c.l.bf16 %v3177
          %v4112 = vunpack.c.h.bf16 %v3177
          %v4113 = vunpack.c.l.bf16 %v3178
          %v4114 = vunpack.c.h.bf16 %v3178
          %v4115 = vunpack.c.l.bf16 %v3179
          %v4116 = vunpack.c.h.bf16 %v3179
          %v4117 = vunpack.c.l.bf16 %v3180
          %v4118 = vunpack.c.h.bf16 %v3180
          %v4119 = vunpack.c.l.bf16 %v3181
          %v4120 = vunpack.c.h.bf16 %v3181
          %v4121 = vunpack.c.l.bf16 %v3182
          %v4122 = vunpack.c.h.bf16 %v3182
          %v4123 = vunpack.c.l.bf16 %v3183
          %v4124 = vunpack.c.h.bf16 %v3183
          %v4125 = vunpack.c.l.bf16 %v3184
          %v4126 = vunpack.c.h.bf16 %v3184
          %v4127 = vunpack.c.l.bf16 %v3185
          %v4128 = vunpack.c.h.bf16 %v3185
          %v4129 = vunpack.c.l.bf16 %v3186
          %v4130 = vunpack.c.h.bf16 %v3186
          %v4131 = vunpack.c.l.bf16 %v3187
          %v4132 = vunpack.c.h.bf16 %v3187
          %v4133 = vunpack.c.l.bf16 %v3188
          %v4134 = vunpack.c.h.bf16 %v3188
          %v4135 = vunpack.c.l.bf16 %v3189
          %v4136 = vunpack.c.h.bf16 %v3189
          %v4137 = vunpack.c.l.bf16 %v3190
          %v4138 = vunpack.c.h.bf16 %v3190
          %v4139 = vunpack.c.l.bf16 %v3191
          %v4140 = vunpack.c.h.bf16 %v3191
          %v4141 = vunpack.c.l.bf16 %v3192
          %v4142 = vunpack.c.h.bf16 %v3192
          %v4143 = vunpack.c.l.bf16 %v3193
          %v4144 = vunpack.c.h.bf16 %v3193
          %v4145 = vunpack.c.l.bf16 %v3194
          %v4146 = vunpack.c.h.bf16 %v3194
          %v4147 = vunpack.c.l.bf16 %v3195
          %v4148 = vunpack.c.h.bf16 %v3195
          %v4149 = vunpack.c.l.bf16 %v3196
          %v4150 = vunpack.c.h.bf16 %v3196
          %v4151 = vunpack.c.l.bf16 %v3197
          %v4152 = vunpack.c.h.bf16 %v3197
          %v4153 = vunpack.c.l.bf16 %v3198
          %v4154 = vunpack.c.h.bf16 %v3198
          %v4155 = vunpack.c.l.bf16 %v3199
          %v4156 = vunpack.c.h.bf16 %v3199
          %v4157 = vunpack.c.l.bf16 %v3200
          %v4158 = vunpack.c.h.bf16 %v3200
          %v4159 = vunpack.c.l.bf16 %v3201
          %v4160 = vunpack.c.h.bf16 %v3201
          %v4161 = vunpack.c.l.bf16 %v3202
          %v4162 = vunpack.c.h.bf16 %v3202
          %v4163 = vunpack.c.l.bf16 %v3203
          %v4164 = vunpack.c.h.bf16 %v3203
          %v4165 = vunpack.c.l.bf16 %v3204
          %v4166 = vunpack.c.h.bf16 %v3204
          %v4167 = vunpack.c.l.bf16 %v3205
          %v4168 = vunpack.c.h.bf16 %v3205
          %v4169 = vunpack.c.l.bf16 %v3206
          %v4170 = vunpack.c.h.bf16 %v3206
          %v4171 = vunpack.c.l.bf16 %v3207
          %v4172 = vunpack.c.h.bf16 %v3207
          %v4173 = vunpack.c.l.bf16 %v3208
          %v4174 = vunpack.c.h.bf16 %v3208
          %v4175 = vunpack.c.l.bf16 %v3209
          %v4176 = vunpack.c.h.bf16 %v3209
          %v4177 = vunpack.c.l.bf16 %v3210
          %v4178 = vunpack.c.h.bf16 %v3210
          %v4179 = vunpack.c.l.bf16 %v3211
          %v4180 = vunpack.c.h.bf16 %v3211
          %v4181 = vunpack.c.l.bf16 %v3212
          %v4182 = vunpack.c.h.bf16 %v3212
          %v4183 = vunpack.c.l.bf16 %v3213
          %v4184 = vunpack.c.h.bf16 %v3213
          %v4185 = vunpack.c.l.bf16 %v3214
          %v4186 = vunpack.c.h.bf16 %v3214
          %v4187 = vunpack.c.l.bf16 %v3215
          %v4188 = vunpack.c.h.bf16 %v3215
          %v4189 = vunpack.c.l.bf16 %v3216
          %v4190 = vunpack.c.h.bf16 %v3216
          %v4191 = vunpack.c.l.bf16 %v3217
          %v4192 = vunpack.c.h.bf16 %v3217
          %v4193 = vunpack.c.l.bf16 %v3218
          %v4194 = vunpack.c.h.bf16 %v3218
          %v4195 = vunpack.c.l.bf16 %v3219
          %v4196 = vunpack.c.h.bf16 %v3219
          %v4197 = vunpack.c.l.bf16 %v3220
          %v4198 = vunpack.c.h.bf16 %v3220
          %v4199 = vunpack.c.l.bf16 %v3221
          %v4200 = vunpack.c.h.bf16 %v3221
          %v4201 = vunpack.c.l.bf16 %v3222
          %v4202 = vunpack.c.h.bf16 %v3222
          %v4203 = vunpack.c.l.bf16 %v3223
          %v4204 = vunpack.c.h.bf16 %v3223
          %v4205 = vunpack.c.l.bf16 %v3224
          %v4206 = vunpack.c.h.bf16 %v3224
          %v4207 = vunpack.c.l.bf16 %v3225
          %v4208 = vunpack.c.h.bf16 %v3225
          %v4209 = vunpack.c.l.bf16 %v3226
          %v4210 = vunpack.c.h.bf16 %v3226
          %v4211 = vunpack.c.l.bf16 %v3227
          %v4212 = vunpack.c.h.bf16 %v3227
          %v4213 = vunpack.c.l.bf16 %v3228
          %v4214 = vunpack.c.h.bf16 %v3228
          %v4215 = vunpack.c.l.bf16 %v3229
          %v4216 = vunpack.c.h.bf16 %v3229
          %v4217 = vunpack.c.l.bf16 %v3230
          %v4218 = vunpack.c.h.bf16 %v3230
          %v4219 = vunpack.c.l.bf16 %v3231
          %v4220 = vunpack.c.h.bf16 %v3231
          %v4221 = vunpack.c.l.bf16 %v3232
          %v4222 = vunpack.c.h.bf16 %v3232
          %v4223 = vunpack.c.l.bf16 %v3233
          %v4224 = vunpack.c.h.bf16 %v3233
          %v4225 = vunpack.c.l.bf16 %v3234
          %v4226 = vunpack.c.h.bf16 %v3234
          %v4227 = vunpack.c.l.bf16 %v3235
          %v4228 = vunpack.c.h.bf16 %v3235
          %v4229 = vunpack.c.l.bf16 %v3236
          %v4230 = vunpack.c.h.bf16 %v3236
          %v4231 = vunpack.c.l.bf16 %v3237
          %v4232 = vunpack.c.h.bf16 %v3237
          %v4233 = vunpack.c.l.bf16 %v3238
          %v4234 = vunpack.c.h.bf16 %v3238
          %v4235 = vunpack.c.l.bf16 %v3239
          %v4236 = vunpack.c.h.bf16 %v3239
          %v4237 = vunpack.c.l.bf16 %v3240
          %v4238 = vunpack.c.h.bf16 %v3240
          %v4239 = vunpack.c.l.bf16 %v3241
          %v4240 = vunpack.c.h.bf16 %v3241
          %v4241 = vunpack.c.l.bf16 %v3242
          %v4242 = vunpack.c.h.bf16 %v3242
          %v4243 = vunpack.c.l.bf16 %v3243
          %v4244 = vunpack.c.h.bf16 %v3243
          %v4245 = vunpack.c.l.bf16 %v3244
          %v4246 = vunpack.c.h.bf16 %v3244
          %v4247 = vunpack.c.l.bf16 %v3245
          %v4248 = vunpack.c.h.bf16 %v3245
          %v4249 = vunpack.c.l.bf16 %v3246
          %v4250 = vunpack.c.h.bf16 %v3246
          %v4251 = vunpack.c.l.bf16 %v3247
          %v4252 = vunpack.c.h.bf16 %v3247
          %v4253 = vunpack.c.l.bf16 %v3248
          %v4254 = vunpack.c.h.bf16 %v3248
          %v4255 = vunpack.c.l.bf16 %v3249
          %v4256 = vunpack.c.h.bf16 %v3249
          %v4257 = vunpack.c.l.bf16 %v3250
          %v4258 = vunpack.c.h.bf16 %v3250
          %v4259 = vunpack.c.l.bf16 %v3251
          %v4260 = vunpack.c.h.bf16 %v3251
          %v4261 = vunpack.c.l.bf16 %v3252
          %v4262 = vunpack.c.h.bf16 %v3252
          %v4263 = vunpack.c.l.bf16 %v3253
          %v4264 = vunpack.c.h.bf16 %v3253
          %v4265 = vunpack.c.l.bf16 %v3254
          %v4266 = vunpack.c.h.bf16 %v3254
          %v4267 = vunpack.c.l.bf16 %v3255
          %v4268 = vunpack.c.h.bf16 %v3255
          %v4269 = vunpack.c.l.bf16 %v3256
          %v4270 = vunpack.c.h.bf16 %v3256
          %v4271 = vunpack.c.l.bf16 %v3257
          %v4272 = vunpack.c.h.bf16 %v3257
          %v4273 = vunpack.c.l.bf16 %v3258
          %v4274 = vunpack.c.h.bf16 %v3258
          %v4275 = vunpack.c.l.bf16 %v3259
          %v4276 = vunpack.c.h.bf16 %v3259
          %v4277 = vunpack.c.l.bf16 %v3260
          %v4278 = vunpack.c.h.bf16 %v3260
          %v4279 = vunpack.c.l.bf16 %v3261
          %v4280 = vunpack.c.h.bf16 %v3261
          %v4281 = vunpack.c.l.bf16 %v3262
          %v4282 = vunpack.c.h.bf16 %v3262
          %v4283 = vunpack.c.l.bf16 %v3263
          %v4284 = vunpack.c.h.bf16 %v3263
          %v4285 = vunpack.c.l.bf16 %v3264
          %v4286 = vunpack.c.h.bf16 %v3264
          %v4287 = vunpack.c.l.bf16 %v3265
          %v4288 = vunpack.c.h.bf16 %v3265
          %v4289 = vunpack.c.l.bf16 %v3266
          %v4290 = vunpack.c.h.bf16 %v3266
          %v4291 = vld [vmem:[#allocation11] sm:$0xf]
          %v4293 = vlaneseq
          %v4294 = vshrl.u32 %v4293, 7
          %v4295 = vsub.s32 0, %v4294
          %v4296 = vrot.slane %v4291, %v4295
          %v4297 = vlaneseq
          %v4298 = vshrl.u32 %v4297, 7
          %v4299 = vsub.s32 1, %v4298
          %v4300 = vrot.slane %v4291, %v4299
          %v4301 = vlaneseq
          %v4302 = vshrl.u32 %v4301, 7
          %v4303 = vsub.s32 2, %v4302
          %v4304 = vrot.slane %v4291, %v4303
          %v4305 = vlaneseq
          %v4306 = vshrl.u32 %v4305, 7
          %v4307 = vsub.s32 3, %v4306
          %v4308 = vrot.slane %v4291, %v4307
          %v4317 = vcombine.high %v2749, %v2749
          %v4319 = vunpack.c.l.s4 1983009808
          %v4320 = vunpack.c.0.s8 %v4319
          %v4321 = vlaneseq
          %v4322 = vshrl.u32 %v4321, 7
          %v4323 = vsub.s32 %v4320, %v4322
          %v4324 = vrot.slane %v2749, %v4323
          %v4326 = vunpack.c.l.s4 1983009808
          %v4327 = vunpack.c.0.s8 %v4326
          %v4328 = vlaneseq
          %v4329 = vshrl.u32 %v4328, 7
          %v4330 = vsub.s32 %v4327, %v4329
          %v4331 = vrot.slane %v4317, %v4330
          %v4332 = vcombine.high %v4324, %v4324
          %v4333 = vcombine.high %v4331, %v4331
          %v4334 = vcombine.high %v2750, %v2750
          %v4336 = vunpack.c.l.s4 1983009808
          %v4337 = vunpack.c.0.s8 %v4336
          %v4338 = vlaneseq
          %v4339 = vshrl.u32 %v4338, 7
          %v4340 = vsub.s32 %v4337, %v4339
          %v4341 = vrot.slane %v2750, %v4340
          %v4343 = vunpack.c.l.s4 1983009808
          %v4344 = vunpack.c.0.s8 %v4343
          %v4345 = vlaneseq
          %v4346 = vshrl.u32 %v4345, 7
          %v4347 = vsub.s32 %v4344, %v4346
          %v4348 = vrot.slane %v4334, %v4347
          %v4349 = vcombine.high %v4341, %v4341
          %v4350 = vcombine.high %v4348, %v4348
          %v4351 = vcombine.high %v2751, %v2751
          %v4353 = vunpack.c.l.s4 1983009808
          %v4354 = vunpack.c.0.s8 %v4353
          %v4355 = vlaneseq
          %v4356 = vshrl.u32 %v4355, 7
          %v4357 = vsub.s32 %v4354, %v4356
          %v4358 = vrot.slane %v2751, %v4357
          %v4360 = vunpack.c.l.s4 1983009808
          %v4361 = vunpack.c.0.s8 %v4360
          %v4362 = vlaneseq
          %v4363 = vshrl.u32 %v4362, 7
          %v4364 = vsub.s32 %v4361, %v4363
          %v4365 = vrot.slane %v4351, %v4364
          %v4366 = vcombine.high %v4358, %v4358
          %v4367 = vcombine.high %v4365, %v4365
          %v4368 = vcombine.high %v2752, %v2752
          %v4370 = vunpack.c.l.s4 1983009808
          %v4371 = vunpack.c.0.s8 %v4370
          %v4372 = vlaneseq
          %v4373 = vshrl.u32 %v4372, 7
          %v4374 = vsub.s32 %v4371, %v4373
          %v4375 = vrot.slane %v2752, %v4374
          %v4377 = vunpack.c.l.s4 1983009808
          %v4378 = vunpack.c.0.s8 %v4377
          %v4379 = vlaneseq
          %v4380 = vshrl.u32 %v4379, 7
          %v4381 = vsub.s32 %v4378, %v4380
          %v4382 = vrot.slane %v4368, %v4381
          %v4383 = vcombine.high %v4375, %v4375
          %v4384 = vcombine.high %v4382, %v4382
          %4401 = vmatprep.subr.mxu0 %v3328
          %4402 = vmatpush1.msra.mxu0 %v3327
          %4403 = vmatprep.subr.mxu0 %v3324
          %4404 = vmatpush1.msra.mxu0 %v3323
          %4405 = vmatprep.subr.mxu0 %v3320
          %4406 = vmatpush1.msra.mxu0 %v3319
          %4407 = vmatprep.subr.mxu0 %v3316
          %4408 = vmatpush1.msra.mxu0 %v3315
          %4409 = vmatprep.subr.mxu0 %v3312
          %4410 = vmatpush1.msra.mxu0 %v3311
          %4411 = vmatprep.subr.mxu0 %v3308
          %4412 = vmatpush1.msra.mxu0 %v3307
          %4413 = vmatprep.subr.mxu0 %v3304
          %4414 = vmatpush1.msra.mxu0 %v3303
          %4415 = vmatprep.subr.mxu0 %v3300
          %4416 = vmatpush1.msra.mxu0 %v3299
          %4417 = vmatprep.subr.mxu0 %v3296
          %4418 = vmatpush1.msra.mxu0 %v3295
          %4419 = vmatprep.subr.mxu0 %v3292
          %4420 = vmatpush1.msra.mxu0 %v3291
          %4421 = vmatprep.subr.mxu0 %v3288
          %4422 = vmatpush1.msra.mxu0 %v3287
          %4423 = vmatprep.subr.mxu0 %v3284
          %4424 = vmatpush1.msra.mxu0 %v3283
          %4425 = vmatprep.subr.mxu0 %v3280
          %4426 = vmatpush1.msra.mxu0 %v3279
          %4427 = vmatprep.subr.mxu0 %v3276
          %4428 = vmatpush1.msra.mxu0 %v3275
          %4429 = vmatprep.subr.mxu0 %v3272
          %4430 = vmatpush1.msra.mxu0 %v3271
          %4431 = vmatprep.subr.mxu0 %v3268
          %4432 = vmatpush1.msra.mxu0 %v3267
          %4433 = vmatprep.subr.mxu0 %v3392
          %4434 = vmatpush2.msra.mxu0 %v3391
          %4435 = vmatprep.subr.mxu0 %v3388
          %4436 = vmatpush2.msra.mxu0 %v3387
          %4437 = vmatprep.subr.mxu0 %v3384
          %4438 = vmatpush2.msra.mxu0 %v3383
          %4439 = vmatprep.subr.mxu0 %v3380
          %4440 = vmatpush2.msra.mxu0 %v3379
          %4441 = vmatprep.subr.mxu0 %v3376
          %4442 = vmatpush2.msra.mxu0 %v3375
          %4443 = vmatprep.subr.mxu0 %v3372
          %4444 = vmatpush2.msra.mxu0 %v3371
          %4445 = vmatprep.subr.mxu0 %v3368
          %4446 = vmatpush2.msra.mxu0 %v3367
          %4447 = vmatprep.subr.mxu0 %v3364
          %4448 = vmatpush2.msra.mxu0 %v3363
          %4449 = vmatprep.subr.mxu0 %v3360
          %4450 = vmatpush2.msra.mxu0 %v3359
          %4451 = vmatprep.subr.mxu0 %v3356
          %4452 = vmatpush2.msra.mxu0 %v3355
          %4453 = vmatprep.subr.mxu0 %v3352
          %4454 = vmatpush2.msra.mxu0 %v3351
          %4455 = vmatprep.subr.mxu0 %v3348
          %4456 = vmatpush2.msra.mxu0 %v3347
          %4457 = vmatprep.subr.mxu0 %v3344
          %4458 = vmatpush2.msra.mxu0 %v3343
          %4459 = vmatprep.subr.mxu0 %v3340
          %4460 = vmatpush2.msra.mxu0 %v3339
          %4461 = vmatprep.subr.mxu0 %v3336
          %4462 = vmatpush2.msra.mxu0 %v3335
          %4463 = vmatprep.subr.mxu0 %v3332
          %4464 = vmatpush2.msra.mxu0 %v3331
          %4465 = vmatprep.mubr.f32.mxu0 %v4332
          %4466 = vmatmul.mubr.f32.gmra.mxu0 %v4324
          %v4467 = vpop.f32.mrf.mxu0
          %v4468 = vadd.f32 %v4296, %v4467
          %v4469 = vpop.f32.mrf.mxu0
          %v4470 = vadd.f32 %v4300, %v4469
          %4471 = vdwg.mxu0
          %4472 = vmatprep.subr.mxu0 %v3456
          %4473 = vmatpush1.msra.mxu0 %v3455
          %4474 = vmatprep.subr.mxu0 %v3452
          %4475 = vmatpush1.msra.mxu0 %v3451
          %4476 = vmatprep.subr.mxu0 %v3448
          %4477 = vmatpush1.msra.mxu0 %v3447
          %4478 = vmatprep.subr.mxu0 %v3444
          %4479 = vmatpush1.msra.mxu0 %v3443
          %4480 = vmatprep.subr.mxu0 %v3440
          %4481 = vmatpush1.msra.mxu0 %v3439
          %4482 = vmatprep.subr.mxu0 %v3436
          %4483 = vmatpush1.msra.mxu0 %v3435
          %4484 = vmatprep.subr.mxu0 %v3432
          %4485 = vmatpush1.msra.mxu0 %v3431
          %4486 = vmatprep.subr.mxu0 %v3428
          %4487 = vmatpush1.msra.mxu0 %v3427
          %4488 = vmatprep.subr.mxu0 %v3424
          %4489 = vmatpush1.msra.mxu0 %v3423
          %4490 = vmatprep.subr.mxu0 %v3420
          %4491 = vmatpush1.msra.mxu0 %v3419
          %4492 = vmatprep.subr.mxu0 %v3416
          %4493 = vmatpush1.msra.mxu0 %v3415
          %4494 = vmatprep.subr.mxu0 %v3412
          %4495 = vmatpush1.msra.mxu0 %v3411
          %4496 = vmatprep.subr.mxu0 %v3408
          %4497 = vmatpush1.msra.mxu0 %v3407
          %4498 = vmatprep.subr.mxu0 %v3404
          %4499 = vmatpush1.msra.mxu0 %v3403
          %4500 = vmatprep.subr.mxu0 %v3400
          %4501 = vmatpush1.msra.mxu0 %v3399
          %4502 = vmatprep.subr.mxu0 %v3396
          %4503 = vmatpush1.msra.mxu0 %v3395
          %4504 = vmatprep.subr.mxu0 %v3520
          %4505 = vmatpush2.msra.mxu0 %v3519
          %4506 = vmatprep.subr.mxu0 %v3516
          %4507 = vmatpush2.msra.mxu0 %v3515
          %4508 = vmatprep.subr.mxu0 %v3512
          %4509 = vmatpush2.msra.mxu0 %v3511
          %4510 = vmatprep.subr.mxu0 %v3508
          %4511 = vmatpush2.msra.mxu0 %v3507
          %4512 = vmatprep.subr.mxu0 %v3504
          %4513 = vmatpush2.msra.mxu0 %v3503
          %4514 = vmatprep.subr.mxu0 %v3500
          %4515 = vmatpush2.msra.mxu0 %v3499
          %4516 = vmatprep.subr.mxu0 %v3496
          %4517 = vmatpush2.msra.mxu0 %v3495
          %4518 = vmatprep.subr.mxu0 %v3492
          %4519 = vmatpush2.msra.mxu0 %v3491
          %4520 = vmatprep.subr.mxu0 %v3488
          %4521 = vmatpush2.msra.mxu0 %v3487
          %4522 = vmatprep.subr.mxu0 %v3484
          %4523 = vmatpush2.msra.mxu0 %v3483
          %4524 = vmatprep.subr.mxu0 %v3480
          %4525 = vmatpush2.msra.mxu0 %v3479
          %4526 = vmatprep.subr.mxu0 %v3476
          %4527 = vmatpush2.msra.mxu0 %v3475
          %4528 = vmatprep.subr.mxu0 %v3472
          %4529 = vmatpush2.msra.mxu0 %v3471
          %4530 = vmatprep.subr.mxu0 %v3468
          %4531 = vmatpush2.msra.mxu0 %v3467
          %4532 = vmatprep.subr.mxu0 %v3464
          %4533 = vmatpush2.msra.mxu0 %v3463
          %4534 = vmatprep.subr.mxu0 %v3460
          %4535 = vmatpush2.msra.mxu0 %v3459
          %4536 = vmatprep.mubr.f32.mxu0 %v4333
          %4537 = vmatmul.mubr.f32.gmra.mxu0 %v4331
          %v4538 = vpop.f32.mrf.mxu0
          %v4539 = vadd.f32 %v4468, %v4538
          %v4540 = vpop.f32.mrf.mxu0
          %v4541 = vadd.f32 %v4470, %v4540
          %4542 = vdwg.mxu0
          %4543 = vmatprep.subr.mxu0 %v3584
          %4544 = vmatpush1.msra.mxu0 %v3583
          %4545 = vmatprep.subr.mxu0 %v3580
          %4546 = vmatpush1.msra.mxu0 %v3579
          %4547 = vmatprep.subr.mxu0 %v3576
          %4548 = vmatpush1.msra.mxu0 %v3575
          %4549 = vmatprep.subr.mxu0 %v3572
          %4550 = vmatpush1.msra.mxu0 %v3571
          %4551 = vmatprep.subr.mxu0 %v3568
          %4552 = vmatpush1.msra.mxu0 %v3567
          %4553 = vmatprep.subr.mxu0 %v3564
          %4554 = vmatpush1.msra.mxu0 %v3563
          %4555 = vmatprep.subr.mxu0 %v3560
          %4556 = vmatpush1.msra.mxu0 %v3559
          %4557 = vmatprep.subr.mxu0 %v3556
          %4558 = vmatpush1.msra.mxu0 %v3555
          %4559 = vmatprep.subr.mxu0 %v3552
          %4560 = vmatpush1.msra.mxu0 %v3551
          %4561 = vmatprep.subr.mxu0 %v3548
          %4562 = vmatpush1.msra.mxu0 %v3547
          %4563 = vmatprep.subr.mxu0 %v3544
          %4564 = vmatpush1.msra.mxu0 %v3543
          %4565 = vmatprep.subr.mxu0 %v3540
          %4566 = vmatpush1.msra.mxu0 %v3539
          %4567 = vmatprep.subr.mxu0 %v3536
          %4568 = vmatpush1.msra.mxu0 %v3535
          %4569 = vmatprep.subr.mxu0 %v3532
          %4570 = vmatpush1.msra.mxu0 %v3531
          %4571 = vmatprep.subr.mxu0 %v3528
          %4572 = vmatpush1.msra.mxu0 %v3527
          %4573 = vmatprep.subr.mxu0 %v3524
          %4574 = vmatpush1.msra.mxu0 %v3523
          %4575 = vmatprep.subr.mxu0 %v3648
          %4576 = vmatpush2.msra.mxu0 %v3647
          %4577 = vmatprep.subr.mxu0 %v3644
          %4578 = vmatpush2.msra.mxu0 %v3643
          %4579 = vmatprep.subr.mxu0 %v3640
          %4580 = vmatpush2.msra.mxu0 %v3639
          %4581 = vmatprep.subr.mxu0 %v3636
          %4582 = vmatpush2.msra.mxu0 %v3635
          %4583 = vmatprep.subr.mxu0 %v3632
          %4584 = vmatpush2.msra.mxu0 %v3631
          %4585 = vmatprep.subr.mxu0 %v3628
          %4586 = vmatpush2.msra.mxu0 %v3627
          %4587 = vmatprep.subr.mxu0 %v3624
          %4588 = vmatpush2.msra.mxu0 %v3623
          %4589 = vmatprep.subr.mxu0 %v3620
          %4590 = vmatpush2.msra.mxu0 %v3619
          %4591 = vmatprep.subr.mxu0 %v3616
          %4592 = vmatpush2.msra.mxu0 %v3615
          %4593 = vmatprep.subr.mxu0 %v3612
          %4594 = vmatpush2.msra.mxu0 %v3611
          %4595 = vmatprep.subr.mxu0 %v3608
          %4596 = vmatpush2.msra.mxu0 %v3607
          %4597 = vmatprep.subr.mxu0 %v3604
          %4598 = vmatpush2.msra.mxu0 %v3603
          %4599 = vmatprep.subr.mxu0 %v3600
          %4600 = vmatpush2.msra.mxu0 %v3599
          %4601 = vmatprep.subr.mxu0 %v3596
          %4602 = vmatpush2.msra.mxu0 %v3595
          %4603 = vmatprep.subr.mxu0 %v3592
          %4604 = vmatpush2.msra.mxu0 %v3591
          %4605 = vmatprep.subr.mxu0 %v3588
          %4606 = vmatpush2.msra.mxu0 %v3587
          %4607 = vmatprep.mubr.f32.mxu0 %v4349
          %4608 = vmatmul.mubr.f32.gmra.mxu0 %v4341
          %v4609 = vpop.f32.mrf.mxu0
          %v4610 = vadd.f32 %v4539, %v4609
          %v4611 = vpop.f32.mrf.mxu0
          %v4612 = vadd.f32 %v4541, %v4611
          %4613 = vdwg.mxu0
          %4614 = vmatprep.subr.mxu0 %v3712
          %4615 = vmatpush1.msra.mxu0 %v3711
          %4616 = vmatprep.subr.mxu0 %v3708
          %4617 = vmatpush1.msra.mxu0 %v3707
          %4618 = vmatprep.subr.mxu0 %v3704
          %4619 = vmatpush1.msra.mxu0 %v3703
          %4620 = vmatprep.subr.mxu0 %v3700
          %4621 = vmatpush1.msra.mxu0 %v3699
          %4622 = vmatprep.subr.mxu0 %v3696
          %4623 = vmatpush1.msra.mxu0 %v3695
          %4624 = vmatprep.subr.mxu0 %v3692
          %4625 = vmatpush1.msra.mxu0 %v3691
          %4626 = vmatprep.subr.mxu0 %v3688
          %4627 = vmatpush1.msra.mxu0 %v3687
          %4628 = vmatprep.subr.mxu0 %v3684
          %4629 = vmatpush1.msra.mxu0 %v3683
          %4630 = vmatprep.subr.mxu0 %v3680
          %4631 = vmatpush1.msra.mxu0 %v3679
          %4632 = vmatprep.subr.mxu0 %v3676
          %4633 = vmatpush1.msra.mxu0 %v3675
          %4634 = vmatprep.subr.mxu0 %v3672
          %4635 = vmatpush1.msra.mxu0 %v3671
          %4636 = vmatprep.subr.mxu0 %v3668
          %4637 = vmatpush1.msra.mxu0 %v3667
          %4638 = vmatprep.subr.mxu0 %v3664
          %4639 = vmatpush1.msra.mxu0 %v3663
          %4640 = vmatprep.subr.mxu0 %v3660
          %4641 = vmatpush1.msra.mxu0 %v3659
          %4642 = vmatprep.subr.mxu0 %v3656
          %4643 = vmatpush1.msra.mxu0 %v3655
          %4644 = vmatprep.subr.mxu0 %v3652
          %4645 = vmatpush1.msra.mxu0 %v3651
          %4646 = vmatprep.subr.mxu0 %v3776
          %4647 = vmatpush2.msra.mxu0 %v3775
          %4648 = vmatprep.subr.mxu0 %v3772
          %4649 = vmatpush2.msra.mxu0 %v3771
          %4650 = vmatprep.subr.mxu0 %v3768
          %4651 = vmatpush2.msra.mxu0 %v3767
          %4652 = vmatprep.subr.mxu0 %v3764
          %4653 = vmatpush2.msra.mxu0 %v3763
          %4654 = vmatprep.subr.mxu0 %v3760
          %4655 = vmatpush2.msra.mxu0 %v3759
          %4656 = vmatprep.subr.mxu0 %v3756
          %4657 = vmatpush2.msra.mxu0 %v3755
          %4658 = vmatprep.subr.mxu0 %v3752
          %4659 = vmatpush2.msra.mxu0 %v3751
          %4660 = vmatprep.subr.mxu0 %v3748
          %4661 = vmatpush2.msra.mxu0 %v3747
          %4662 = vmatprep.subr.mxu0 %v3744
          %4663 = vmatpush2.msra.mxu0 %v3743
          %4664 = vmatprep.subr.mxu0 %v3740
          %4665 = vmatpush2.msra.mxu0 %v3739
          %4666 = vmatprep.subr.mxu0 %v3736
          %4667 = vmatpush2.msra.mxu0 %v3735
          %4668 = vmatprep.subr.mxu0 %v3732
          %4669 = vmatpush2.msra.mxu0 %v3731
          %4670 = vmatprep.subr.mxu0 %v3728
          %4671 = vmatpush2.msra.mxu0 %v3727
          %4672 = vmatprep.subr.mxu0 %v3724
          %4673 = vmatpush2.msra.mxu0 %v3723
          %4674 = vmatprep.subr.mxu0 %v3720
          %4675 = vmatpush2.msra.mxu0 %v3719
          %4676 = vmatprep.subr.mxu0 %v3716
          %4677 = vmatpush2.msra.mxu0 %v3715
          %4678 = vmatprep.mubr.f32.mxu0 %v4350
          %4679 = vmatmul.mubr.f32.gmra.mxu0 %v4348
          %v4680 = vpop.f32.mrf.mxu0
          %v4681 = vadd.f32 %v4610, %v4680
          %v4682 = vpop.f32.mrf.mxu0
          %v4683 = vadd.f32 %v4612, %v4682
          %4684 = vdwg.mxu0
          %4685 = vmatprep.subr.mxu0 %v3840
          %4686 = vmatpush1.msra.mxu0 %v3839
          %4687 = vmatprep.subr.mxu0 %v3836
          %4688 = vmatpush1.msra.mxu0 %v3835
          %4689 = vmatprep.subr.mxu0 %v3832
          %4690 = vmatpush1.msra.mxu0 %v3831
          %4691 = vmatprep.subr.mxu0 %v3828
          %4692 = vmatpush1.msra.mxu0 %v3827
          %4693 = vmatprep.subr.mxu0 %v3824
          %4694 = vmatpush1.msra.mxu0 %v3823
          %4695 = vmatprep.subr.mxu0 %v3820
          %4696 = vmatpush1.msra.mxu0 %v3819
          %4697 = vmatprep.subr.mxu0 %v3816
          %4698 = vmatpush1.msra.mxu0 %v3815
          %4699 = vmatprep.subr.mxu0 %v3812
          %4700 = vmatpush1.msra.mxu0 %v3811
          %4701 = vmatprep.subr.mxu0 %v3808
          %4702 = vmatpush1.msra.mxu0 %v3807
          %4703 = vmatprep.subr.mxu0 %v3804
          %4704 = vmatpush1.msra.mxu0 %v3803
          %4705 = vmatprep.subr.mxu0 %v3800
          %4706 = vmatpush1.msra.mxu0 %v3799
          %4707 = vmatprep.subr.mxu0 %v3796
          %4708 = vmatpush1.msra.mxu0 %v3795
          %4709 = vmatprep.subr.mxu0 %v3792
          %4710 = vmatpush1.msra.mxu0 %v3791
          %4711 = vmatprep.subr.mxu0 %v3788
          %4712 = vmatpush1.msra.mxu0 %v3787
          %4713 = vmatprep.subr.mxu0 %v3784
          %4714 = vmatpush1.msra.mxu0 %v3783
          %4715 = vmatprep.subr.mxu0 %v3780
          %4716 = vmatpush1.msra.mxu0 %v3779
          %4717 = vmatprep.subr.mxu0 %v3904
          %4718 = vmatpush2.msra.mxu0 %v3903
          %4719 = vmatprep.subr.mxu0 %v3900
          %4720 = vmatpush2.msra.mxu0 %v3899
          %4721 = vmatprep.subr.mxu0 %v3896
          %4722 = vmatpush2.msra.mxu0 %v3895
          %4723 = vmatprep.subr.mxu0 %v3892
          %4724 = vmatpush2.msra.mxu0 %v3891
          %4725 = vmatprep.subr.mxu0 %v3888
          %4726 = vmatpush2.msra.mxu0 %v3887
          %4727 = vmatprep.subr.mxu0 %v3884
          %4728 = vmatpush2.msra.mxu0 %v3883
          %4729 = vmatprep.subr.mxu0 %v3880
          %4730 = vmatpush2.msra.mxu0 %v3879
          %4731 = vmatprep.subr.mxu0 %v3876
          %4732 = vmatpush2.msra.mxu0 %v3875
          %4733 = vmatprep.subr.mxu0 %v3872
          %4734 = vmatpush2.msra.mxu0 %v3871
          %4735 = vmatprep.subr.mxu0 %v3868
          %4736 = vmatpush2.msra.mxu0 %v3867
          %4737 = vmatprep.subr.mxu0 %v3864
          %4738 = vmatpush2.msra.mxu0 %v3863
          %4739 = vmatprep.subr.mxu0 %v3860
          %4740 = vmatpush2.msra.mxu0 %v3859
          %4741 = vmatprep.subr.mxu0 %v3856
          %4742 = vmatpush2.msra.mxu0 %v3855
          %4743 = vmatprep.subr.mxu0 %v3852
          %4744 = vmatpush2.msra.mxu0 %v3851
          %4745 = vmatprep.subr.mxu0 %v3848
          %4746 = vmatpush2.msra.mxu0 %v3847
          %4747 = vmatprep.subr.mxu0 %v3844
          %4748 = vmatpush2.msra.mxu0 %v3843
          %4749 = vmatprep.mubr.f32.mxu0 %v4366
          %4750 = vmatmul.mubr.f32.gmra.mxu0 %v4358
          %v4751 = vpop.f32.mrf.mxu0
          %v4752 = vadd.f32 %v4681, %v4751
          %v4753 = vpop.f32.mrf.mxu0
          %v4754 = vadd.f32 %v4683, %v4753
          %4755 = vdwg.mxu0
          %4756 = vmatprep.subr.mxu0 %v3968
          %4757 = vmatpush1.msra.mxu0 %v3967
          %4758 = vmatprep.subr.mxu0 %v3964
          %4759 = vmatpush1.msra.mxu0 %v3963
          %4760 = vmatprep.subr.mxu0 %v3960
          %4761 = vmatpush1.msra.mxu0 %v3959
          %4762 = vmatprep.subr.mxu0 %v3956
          %4763 = vmatpush1.msra.mxu0 %v3955
          %4764 = vmatprep.subr.mxu0 %v3952
          %4765 = vmatpush1.msra.mxu0 %v3951
          %4766 = vmatprep.subr.mxu0 %v3948
          %4767 = vmatpush1.msra.mxu0 %v3947
          %4768 = vmatprep.subr.mxu0 %v3944
          %4769 = vmatpush1.msra.mxu0 %v3943
          %4770 = vmatprep.subr.mxu0 %v3940
          %4771 = vmatpush1.msra.mxu0 %v3939
          %4772 = vmatprep.subr.mxu0 %v3936
          %4773 = vmatpush1.msra.mxu0 %v3935
          %4774 = vmatprep.subr.mxu0 %v3932
          %4775 = vmatpush1.msra.mxu0 %v3931
          %4776 = vmatprep.subr.mxu0 %v3928
          %4777 = vmatpush1.msra.mxu0 %v3927
          %4778 = vmatprep.subr.mxu0 %v3924
          %4779 = vmatpush1.msra.mxu0 %v3923
          %4780 = vmatprep.subr.mxu0 %v3920
          %4781 = vmatpush1.msra.mxu0 %v3919
          %4782 = vmatprep.subr.mxu0 %v3916
          %4783 = vmatpush1.msra.mxu0 %v3915
          %4784 = vmatprep.subr.mxu0 %v3912
          %4785 = vmatpush1.msra.mxu0 %v3911
          %4786 = vmatprep.subr.mxu0 %v3908
          %4787 = vmatpush1.msra.mxu0 %v3907
          %4788 = vmatprep.subr.mxu0 %v4032
          %4789 = vmatpush2.msra.mxu0 %v4031
          %4790 = vmatprep.subr.mxu0 %v4028
          %4791 = vmatpush2.msra.mxu0 %v4027
          %4792 = vmatprep.subr.mxu0 %v4024
          %4793 = vmatpush2.msra.mxu0 %v4023
          %4794 = vmatprep.subr.mxu0 %v4020
          %4795 = vmatpush2.msra.mxu0 %v4019
          %4796 = vmatprep.subr.mxu0 %v4016
          %4797 = vmatpush2.msra.mxu0 %v4015
          %4798 = vmatprep.subr.mxu0 %v4012
          %4799 = vmatpush2.msra.mxu0 %v4011
          %4800 = vmatprep.subr.mxu0 %v4008
          %4801 = vmatpush2.msra.mxu0 %v4007
          %4802 = vmatprep.subr.mxu0 %v4004
          %4803 = vmatpush2.msra.mxu0 %v4003
          %4804 = vmatprep.subr.mxu0 %v4000
          %4805 = vmatpush2.msra.mxu0 %v3999
          %4806 = vmatprep.subr.mxu0 %v3996
          %4807 = vmatpush2.msra.mxu0 %v3995
          %4808 = vmatprep.subr.mxu0 %v3992
          %4809 = vmatpush2.msra.mxu0 %v3991
          %4810 = vmatprep.subr.mxu0 %v3988
          %4811 = vmatpush2.msra.mxu0 %v3987
          %4812 = vmatprep.subr.mxu0 %v3984
          %4813 = vmatpush2.msra.mxu0 %v3983
          %4814 = vmatprep.subr.mxu0 %v3980
          %4815 = vmatpush2.msra.mxu0 %v3979
          %4816 = vmatprep.subr.mxu0 %v3976
          %4817 = vmatpush2.msra.mxu0 %v3975
          %4818 = vmatprep.subr.mxu0 %v3972
          %4819 = vmatpush2.msra.mxu0 %v3971
          %4820 = vmatprep.mubr.f32.mxu0 %v4367
          %4821 = vmatmul.mubr.f32.gmra.mxu0 %v4365
          %v4822 = vpop.f32.mrf.mxu0
          %v4823 = vadd.f32 %v4752, %v4822
          %v4824 = vpop.f32.mrf.mxu0
          %v4825 = vadd.f32 %v4754, %v4824
          %4826 = vdwg.mxu0
          %4827 = vmatprep.subr.mxu0 %v4096
          %4828 = vmatpush1.msra.mxu0 %v4095
          %4829 = vmatprep.subr.mxu0 %v4092
          %4830 = vmatpush1.msra.mxu0 %v4091
          %4831 = vmatprep.subr.mxu0 %v4088
          %4832 = vmatpush1.msra.mxu0 %v4087
          %4833 = vmatprep.subr.mxu0 %v4084
          %4834 = vmatpush1.msra.mxu0 %v4083
          %4835 = vmatprep.subr.mxu0 %v4080
          %4836 = vmatpush1.msra.mxu0 %v4079
          %4837 = vmatprep.subr.mxu0 %v4076
          %4838 = vmatpush1.msra.mxu0 %v4075
          %4839 = vmatprep.subr.mxu0 %v4072
          %4840 = vmatpush1.msra.mxu0 %v4071
          %4841 = vmatprep.subr.mxu0 %v4068
          %4842 = vmatpush1.msra.mxu0 %v4067
          %4843 = vmatprep.subr.mxu0 %v4064
          %4844 = vmatpush1.msra.mxu0 %v4063
          %4845 = vmatprep.subr.mxu0 %v4060
          %4846 = vmatpush1.msra.mxu0 %v4059
          %4847 = vmatprep.subr.mxu0 %v4056
          %4848 = vmatpush1.msra.mxu0 %v4055
          %4849 = vmatprep.subr.mxu0 %v4052
          %4850 = vmatpush1.msra.mxu0 %v4051
          %4851 = vmatprep.subr.mxu0 %v4048
          %4852 = vmatpush1.msra.mxu0 %v4047
          %4853 = vmatprep.subr.mxu0 %v4044
          %4854 = vmatpush1.msra.mxu0 %v4043
          %4855 = vmatprep.subr.mxu0 %v4040
          %4856 = vmatpush1.msra.mxu0 %v4039
          %4857 = vmatprep.subr.mxu0 %v4036
          %4858 = vmatpush1.msra.mxu0 %v4035
          %4859 = vmatprep.subr.mxu0 %v4160
          %4860 = vmatpush2.msra.mxu0 %v4159
          %4861 = vmatprep.subr.mxu0 %v4156
          %4862 = vmatpush2.msra.mxu0 %v4155
          %4863 = vmatprep.subr.mxu0 %v4152
          %4864 = vmatpush2.msra.mxu0 %v4151
          %4865 = vmatprep.subr.mxu0 %v4148
          %4866 = vmatpush2.msra.mxu0 %v4147
          %4867 = vmatprep.subr.mxu0 %v4144
          %4868 = vmatpush2.msra.mxu0 %v4143
          %4869 = vmatprep.subr.mxu0 %v4140
          %4870 = vmatpush2.msra.mxu0 %v4139
          %4871 = vmatprep.subr.mxu0 %v4136
          %4872 = vmatpush2.msra.mxu0 %v4135
          %4873 = vmatprep.subr.mxu0 %v4132
          %4874 = vmatpush2.msra.mxu0 %v4131
          %4875 = vmatprep.subr.mxu0 %v4128
          %4876 = vmatpush2.msra.mxu0 %v4127
          %4877 = vmatprep.subr.mxu0 %v4124
          %4878 = vmatpush2.msra.mxu0 %v4123
          %4879 = vmatprep.subr.mxu0 %v4120
          %4880 = vmatpush2.msra.mxu0 %v4119
          %4881 = vmatprep.subr.mxu0 %v4116
          %4882 = vmatpush2.msra.mxu0 %v4115
          %4883 = vmatprep.subr.mxu0 %v4112
          %4884 = vmatpush2.msra.mxu0 %v4111
          %4885 = vmatprep.subr.mxu0 %v4108
          %4886 = vmatpush2.msra.mxu0 %v4107
          %4887 = vmatprep.subr.mxu0 %v4104
          %4888 = vmatpush2.msra.mxu0 %v4103
          %4889 = vmatprep.subr.mxu0 %v4100
          %4890 = vmatpush2.msra.mxu0 %v4099
          %4891 = vmatprep.mubr.f32.mxu0 %v4383
          %4892 = vmatmul.mubr.f32.gmra.mxu0 %v4375
          %v4893 = vpop.f32.mrf.mxu0
          %v4894 = vadd.f32 %v4823, %v4893
          %v4895 = vpop.f32.mrf.mxu0
          %v4896 = vadd.f32 %v4825, %v4895
          %4897 = vdwg.mxu0
          %4898 = vmatprep.subr.mxu0 %v4224
          %4899 = vmatpush1.msra.mxu0 %v4223
          %4900 = vmatprep.subr.mxu0 %v4220
          %4901 = vmatpush1.msra.mxu0 %v4219
          %4902 = vmatprep.subr.mxu0 %v4216
          %4903 = vmatpush1.msra.mxu0 %v4215
          %4904 = vmatprep.subr.mxu0 %v4212
          %4905 = vmatpush1.msra.mxu0 %v4211
          %4906 = vmatprep.subr.mxu0 %v4208
          %4907 = vmatpush1.msra.mxu0 %v4207
          %4908 = vmatprep.subr.mxu0 %v4204
          %4909 = vmatpush1.msra.mxu0 %v4203
          %4910 = vmatprep.subr.mxu0 %v4200
          %4911 = vmatpush1.msra.mxu0 %v4199
          %4912 = vmatprep.subr.mxu0 %v4196
          %4913 = vmatpush1.msra.mxu0 %v4195
          %4914 = vmatprep.subr.mxu0 %v4192
          %4915 = vmatpush1.msra.mxu0 %v4191
          %4916 = vmatprep.subr.mxu0 %v4188
          %4917 = vmatpush1.msra.mxu0 %v4187
          %4918 = vmatprep.subr.mxu0 %v4184
          %4919 = vmatpush1.msra.mxu0 %v4183
          %4920 = vmatprep.subr.mxu0 %v4180
          %4921 = vmatpush1.msra.mxu0 %v4179
          %4922 = vmatprep.subr.mxu0 %v4176
          %4923 = vmatpush1.msra.mxu0 %v4175
          %4924 = vmatprep.subr.mxu0 %v4172
          %4925 = vmatpush1.msra.mxu0 %v4171
          %4926 = vmatprep.subr.mxu0 %v4168
          %4927 = vmatpush1.msra.mxu0 %v4167
          %4928 = vmatprep.subr.mxu0 %v4164
          %4929 = vmatpush1.msra.mxu0 %v4163
          %4930 = vmatprep.subr.mxu0 %v4288
          %4931 = vmatpush2.msra.mxu0 %v4287
          %4932 = vmatprep.subr.mxu0 %v4284
          %4933 = vmatpush2.msra.mxu0 %v4283
          %4934 = vmatprep.subr.mxu0 %v4280
          %4935 = vmatpush2.msra.mxu0 %v4279
          %4936 = vmatprep.subr.mxu0 %v4276
          %4937 = vmatpush2.msra.mxu0 %v4275
          %4938 = vmatprep.subr.mxu0 %v4272
          %4939 = vmatpush2.msra.mxu0 %v4271
          %4940 = vmatprep.subr.mxu0 %v4268
          %4941 = vmatpush2.msra.mxu0 %v4267
          %4942 = vmatprep.subr.mxu0 %v4264
          %4943 = vmatpush2.msra.mxu0 %v4263
          %4944 = vmatprep.subr.mxu0 %v4260
          %4945 = vmatpush2.msra.mxu0 %v4259
          %4946 = vmatprep.subr.mxu0 %v4256
          %4947 = vmatpush2.msra.mxu0 %v4255
          %4948 = vmatprep.subr.mxu0 %v4252
          %4949 = vmatpush2.msra.mxu0 %v4251
          %4950 = vmatprep.subr.mxu0 %v4248
          %4951 = vmatpush2.msra.mxu0 %v4247
          %4952 = vmatprep.subr.mxu0 %v4244
          %4953 = vmatpush2.msra.mxu0 %v4243
          %4954 = vmatprep.subr.mxu0 %v4240
          %4955 = vmatpush2.msra.mxu0 %v4239
          %4956 = vmatprep.subr.mxu0 %v4236
          %4957 = vmatpush2.msra.mxu0 %v4235
          %4958 = vmatprep.subr.mxu0 %v4232
          %4959 = vmatpush2.msra.mxu0 %v4231
          %4960 = vmatprep.subr.mxu0 %v4228
          %4961 = vmatpush2.msra.mxu0 %v4227
          %4962 = vmatprep.mubr.f32.mxu0 %v4384
          %4963 = vmatmul.mubr.f32.gmra.mxu0 %v4382
          %v4964 = vpop.f32.mrf.mxu0
          %v4965 = vadd.f32 %v4894, %v4964
          %v4966 = vpop.f32.mrf.mxu0
          %v4967 = vadd.f32 %v4896, %v4966
          %4968 = vdwg.mxu0
          %4969 = vmatprep.subr.mxu0 %v3330
          %4970 = vmatpush1.msra.mxu0 %v3329
          %4971 = vmatprep.subr.mxu0 %v3326
          %4972 = vmatpush1.msra.mxu0 %v3325
          %4973 = vmatprep.subr.mxu0 %v3322
          %4974 = vmatpush1.msra.mxu0 %v3321
          %4975 = vmatprep.subr.mxu0 %v3318
          %4976 = vmatpush1.msra.mxu0 %v3317
          %4977 = vmatprep.subr.mxu0 %v3314
          %4978 = vmatpush1.msra.mxu0 %v3313
          %4979 = vmatprep.subr.mxu0 %v3310
          %4980 = vmatpush1.msra.mxu0 %v3309
          %4981 = vmatprep.subr.mxu0 %v3306
          %4982 = vmatpush1.msra.mxu0 %v3305
          %4983 = vmatprep.subr.mxu0 %v3302
          %4984 = vmatpush1.msra.mxu0 %v3301
          %4985 = vmatprep.subr.mxu0 %v3298
          %4986 = vmatpush1.msra.mxu0 %v3297
          %4987 = vmatprep.subr.mxu0 %v3294
          %4988 = vmatpush1.msra.mxu0 %v3293
          %4989 = vmatprep.subr.mxu0 %v3290
          %4990 = vmatpush1.msra.mxu0 %v3289
          %4991 = vmatprep.subr.mxu0 %v3286
          %4992 = vmatpush1.msra.mxu0 %v3285
          %4993 = vmatprep.subr.mxu0 %v3282
          %4994 = vmatpush1.msra.mxu0 %v3281
          %4995 = vmatprep.subr.mxu0 %v3278
          %4996 = vmatpush1.msra.mxu0 %v3277
          %4997 = vmatprep.subr.mxu0 %v3274
          %4998 = vmatpush1.msra.mxu0 %v3273
          %4999 = vmatprep.subr.mxu0 %v3270
          %5000 = vmatpush1.msra.mxu0 %v3269
          %5001 = vmatprep.subr.mxu0 %v3394
          %5002 = vmatpush2.msra.mxu0 %v3393
          %5003 = vmatprep.subr.mxu0 %v3390
          %5004 = vmatpush2.msra.mxu0 %v3389
          %5005 = vmatprep.subr.mxu0 %v3386
          %5006 = vmatpush2.msra.mxu0 %v3385
          %5007 = vmatprep.subr.mxu0 %v3382
          %5008 = vmatpush2.msra.mxu0 %v3381
          %5009 = vmatprep.subr.mxu0 %v3378
          %5010 = vmatpush2.msra.mxu0 %v3377
          %5011 = vmatprep.subr.mxu0 %v3374
          %5012 = vmatpush2.msra.mxu0 %v3373
          %5013 = vmatprep.subr.mxu0 %v3370
          %5014 = vmatpush2.msra.mxu0 %v3369
          %5015 = vmatprep.subr.mxu0 %v3366
          %5016 = vmatpush2.msra.mxu0 %v3365
          %5017 = vmatprep.subr.mxu0 %v3362
          %5018 = vmatpush2.msra.mxu0 %v3361
          %5019 = vmatprep.subr.mxu0 %v3358
          %5020 = vmatpush2.msra.mxu0 %v3357
          %5021 = vmatprep.subr.mxu0 %v3354
          %5022 = vmatpush2.msra.mxu0 %v3353
          %5023 = vmatprep.subr.mxu0 %v3350
          %5024 = vmatpush2.msra.mxu0 %v3349
          %5025 = vmatprep.subr.mxu0 %v3346
          %5026 = vmatpush2.msra.mxu0 %v3345
          %5027 = vmatprep.subr.mxu0 %v3342
          %5028 = vmatpush2.msra.mxu0 %v3341
          %5029 = vmatprep.subr.mxu0 %v3338
          %5030 = vmatpush2.msra.mxu0 %v3337
          %5031 = vmatprep.subr.mxu0 %v3334
          %5032 = vmatpush2.msra.mxu0 %v3333
          %5033 = vmatprep.mubr.f32.mxu0 %v4332
          %5034 = vmatmul.mubr.f32.gmra.mxu0 %v4324
          %v5035 = vpop.f32.mrf.mxu0
          %v5036 = vadd.f32 %v4304, %v5035
          %v5037 = vpop.f32.mrf.mxu0
          %v5038 = vadd.f32 %v4308, %v5037
          %5039 = vdwg.mxu0
          %5040 = vmatprep.subr.mxu0 %v3458
          %5041 = vmatpush1.msra.mxu0 %v3457
          %5042 = vmatprep.subr.mxu0 %v3454
          %5043 = vmatpush1.msra.mxu0 %v3453
          %5044 = vmatprep.subr.mxu0 %v3450
          %5045 = vmatpush1.msra.mxu0 %v3449
          %5046 = vmatprep.subr.mxu0 %v3446
          %5047 = vmatpush1.msra.mxu0 %v3445
          %5048 = vmatprep.subr.mxu0 %v3442
          %5049 = vmatpush1.msra.mxu0 %v3441
          %5050 = vmatprep.subr.mxu0 %v3438
          %5051 = vmatpush1.msra.mxu0 %v3437
          %5052 = vmatprep.subr.mxu0 %v3434
          %5053 = vmatpush1.msra.mxu0 %v3433
          %5054 = vmatprep.subr.mxu0 %v3430
          %5055 = vmatpush1.msra.mxu0 %v3429
          %5056 = vmatprep.subr.mxu0 %v3426
          %5057 = vmatpush1.msra.mxu0 %v3425
          %5058 = vmatprep.subr.mxu0 %v3422
          %5059 = vmatpush1.msra.mxu0 %v3421
          %5060 = vmatprep.subr.mxu0 %v3418
          %5061 = vmatpush1.msra.mxu0 %v3417
          %5062 = vmatprep.subr.mxu0 %v3414
          %5063 = vmatpush1.msra.mxu0 %v3413
          %5064 = vmatprep.subr.mxu0 %v3410
          %5065 = vmatpush1.msra.mxu0 %v3409
          %5066 = vmatprep.subr.mxu0 %v3406
          %5067 = vmatpush1.msra.mxu0 %v3405
          %5068 = vmatprep.subr.mxu0 %v3402
          %5069 = vmatpush1.msra.mxu0 %v3401
          %5070 = vmatprep.subr.mxu0 %v3398
          %5071 = vmatpush1.msra.mxu0 %v3397
          %5072 = vmatprep.subr.mxu0 %v3522
          %5073 = vmatpush2.msra.mxu0 %v3521
          %5074 = vmatprep.subr.mxu0 %v3518
          %5075 = vmatpush2.msra.mxu0 %v3517
          %5076 = vmatprep.subr.mxu0 %v3514
          %5077 = vmatpush2.msra.mxu0 %v3513
          %5078 = vmatprep.subr.mxu0 %v3510
          %5079 = vmatpush2.msra.mxu0 %v3509
          %5080 = vmatprep.subr.mxu0 %v3506
          %5081 = vmatpush2.msra.mxu0 %v3505
          %5082 = vmatprep.subr.mxu0 %v3502
          %5083 = vmatpush2.msra.mxu0 %v3501
          %5084 = vmatprep.subr.mxu0 %v3498
          %5085 = vmatpush2.msra.mxu0 %v3497
          %5086 = vmatprep.subr.mxu0 %v3494
          %5087 = vmatpush2.msra.mxu0 %v3493
          %5088 = vmatprep.subr.mxu0 %v3490
          %5089 = vmatpush2.msra.mxu0 %v3489
          %5090 = vmatprep.subr.mxu0 %v3486
          %5091 = vmatpush2.msra.mxu0 %v3485
          %5092 = vmatprep.subr.mxu0 %v3482
          %5093 = vmatpush2.msra.mxu0 %v3481
          %5094 = vmatprep.subr.mxu0 %v3478
          %5095 = vmatpush2.msra.mxu0 %v3477
          %5096 = vmatprep.subr.mxu0 %v3474
          %5097 = vmatpush2.msra.mxu0 %v3473
          %5098 = vmatprep.subr.mxu0 %v3470
          %5099 = vmatpush2.msra.mxu0 %v3469
          %5100 = vmatprep.subr.mxu0 %v3466
          %5101 = vmatpush2.msra.mxu0 %v3465
          %5102 = vmatprep.subr.mxu0 %v3462
          %5103 = vmatpush2.msra.mxu0 %v3461
          %5104 = vmatprep.mubr.f32.mxu0 %v4333
          %5105 = vmatmul.mubr.f32.gmra.mxu0 %v4331
          %v5106 = vpop.f32.mrf.mxu0
          %v5107 = vadd.f32 %v5036, %v5106
          %v5108 = vpop.f32.mrf.mxu0
          %v5109 = vadd.f32 %v5038, %v5108
          %5110 = vdwg.mxu0
          %5111 = vmatprep.subr.mxu0 %v3586
          %5112 = vmatpush1.msra.mxu0 %v3585
          %5113 = vmatprep.subr.mxu0 %v3582
          %5114 = vmatpush1.msra.mxu0 %v3581
          %5115 = vmatprep.subr.mxu0 %v3578
          %5116 = vmatpush1.msra.mxu0 %v3577
          %5117 = vmatprep.subr.mxu0 %v3574
          %5118 = vmatpush1.msra.mxu0 %v3573
          %5119 = vmatprep.subr.mxu0 %v3570
          %5120 = vmatpush1.msra.mxu0 %v3569
          %5121 = vmatprep.subr.mxu0 %v3566
          %5122 = vmatpush1.msra.mxu0 %v3565
          %5123 = vmatprep.subr.mxu0 %v3562
          %5124 = vmatpush1.msra.mxu0 %v3561
          %5125 = vmatprep.subr.mxu0 %v3558
          %5126 = vmatpush1.msra.mxu0 %v3557
          %5127 = vmatprep.subr.mxu0 %v3554
          %5128 = vmatpush1.msra.mxu0 %v3553
          %5129 = vmatprep.subr.mxu0 %v3550
          %5130 = vmatpush1.msra.mxu0 %v3549
          %5131 = vmatprep.subr.mxu0 %v3546
          %5132 = vmatpush1.msra.mxu0 %v3545
          %5133 = vmatprep.subr.mxu0 %v3542
          %5134 = vmatpush1.msra.mxu0 %v3541
          %5135 = vmatprep.subr.mxu0 %v3538
          %5136 = vmatpush1.msra.mxu0 %v3537
          %5137 = vmatprep.subr.mxu0 %v3534
          %5138 = vmatpush1.msra.mxu0 %v3533
          %5139 = vmatprep.subr.mxu0 %v3530
          %5140 = vmatpush1.msra.mxu0 %v3529
          %5141 = vmatprep.subr.mxu0 %v3526
          %5142 = vmatpush1.msra.mxu0 %v3525
          %5143 = vmatprep.subr.mxu0 %v3650
          %5144 = vmatpush2.msra.mxu0 %v3649
          %5145 = vmatprep.subr.mxu0 %v3646
          %5146 = vmatpush2.msra.mxu0 %v3645
          %5147 = vmatprep.subr.mxu0 %v3642
          %5148 = vmatpush2.msra.mxu0 %v3641
          %5149 = vmatprep.subr.mxu0 %v3638
          %5150 = vmatpush2.msra.mxu0 %v3637
          %5151 = vmatprep.subr.mxu0 %v3634
          %5152 = vmatpush2.msra.mxu0 %v3633
          %5153 = vmatprep.subr.mxu0 %v3630
          %5154 = vmatpush2.msra.mxu0 %v3629
          %5155 = vmatprep.subr.mxu0 %v3626
          %5156 = vmatpush2.msra.mxu0 %v3625
          %5157 = vmatprep.subr.mxu0 %v3622
          %5158 = vmatpush2.msra.mxu0 %v3621
          %5159 = vmatprep.subr.mxu0 %v3618
          %5160 = vmatpush2.msra.mxu0 %v3617
          %5161 = vmatprep.subr.mxu0 %v3614
          %5162 = vmatpush2.msra.mxu0 %v3613
          %5163 = vmatprep.subr.mxu0 %v3610
          %5164 = vmatpush2.msra.mxu0 %v3609
          %5165 = vmatprep.subr.mxu0 %v3606
          %5166 = vmatpush2.msra.mxu0 %v3605
          %5167 = vmatprep.subr.mxu0 %v3602
          %5168 = vmatpush2.msra.mxu0 %v3601
          %5169 = vmatprep.subr.mxu0 %v3598
          %5170 = vmatpush2.msra.mxu0 %v3597
          %5171 = vmatprep.subr.mxu0 %v3594
          %5172 = vmatpush2.msra.mxu0 %v3593
          %5173 = vmatprep.subr.mxu0 %v3590
          %5174 = vmatpush2.msra.mxu0 %v3589
          %5175 = vmatprep.mubr.f32.mxu0 %v4349
          %5176 = vmatmul.mubr.f32.gmra.mxu0 %v4341
          %v5177 = vpop.f32.mrf.mxu0
          %v5178 = vadd.f32 %v5107, %v5177
          %v5179 = vpop.f32.mrf.mxu0
          %v5180 = vadd.f32 %v5109, %v5179
          %5181 = vdwg.mxu0
          %5182 = vmatprep.subr.mxu0 %v3714
          %5183 = vmatpush1.msra.mxu0 %v3713
          %5184 = vmatprep.subr.mxu0 %v3710
          %5185 = vmatpush1.msra.mxu0 %v3709
          %5186 = vmatprep.subr.mxu0 %v3706
          %5187 = vmatpush1.msra.mxu0 %v3705
          %5188 = vmatprep.subr.mxu0 %v3702
          %5189 = vmatpush1.msra.mxu0 %v3701
          %5190 = vmatprep.subr.mxu0 %v3698
          %5191 = vmatpush1.msra.mxu0 %v3697
          %5192 = vmatprep.subr.mxu0 %v3694
          %5193 = vmatpush1.msra.mxu0 %v3693
          %5194 = vmatprep.subr.mxu0 %v3690
          %5195 = vmatpush1.msra.mxu0 %v3689
          %5196 = vmatprep.subr.mxu0 %v3686
          %5197 = vmatpush1.msra.mxu0 %v3685
          %5198 = vmatprep.subr.mxu0 %v3682
          %5199 = vmatpush1.msra.mxu0 %v3681
          %5200 = vmatprep.subr.mxu0 %v3678
          %5201 = vmatpush1.msra.mxu0 %v3677
          %5202 = vmatprep.subr.mxu0 %v3674
          %5203 = vmatpush1.msra.mxu0 %v3673
          %5204 = vmatprep.subr.mxu0 %v3670
          %5205 = vmatpush1.msra.mxu0 %v3669
          %5206 = vmatprep.subr.mxu0 %v3666
          %5207 = vmatpush1.msra.mxu0 %v3665
          %5208 = vmatprep.subr.mxu0 %v3662
          %5209 = vmatpush1.msra.mxu0 %v3661
          %5210 = vmatprep.subr.mxu0 %v3658
          %5211 = vmatpush1.msra.mxu0 %v3657
          %5212 = vmatprep.subr.mxu0 %v3654
          %5213 = vmatpush1.msra.mxu0 %v3653
          %5214 = vmatprep.subr.mxu0 %v3778
          %5215 = vmatpush2.msra.mxu0 %v3777
          %5216 = vmatprep.subr.mxu0 %v3774
          %5217 = vmatpush2.msra.mxu0 %v3773
          %5218 = vmatprep.subr.mxu0 %v3770
          %5219 = vmatpush2.msra.mxu0 %v3769
          %5220 = vmatprep.subr.mxu0 %v3766
          %5221 = vmatpush2.msra.mxu0 %v3765
          %5222 = vmatprep.subr.mxu0 %v3762
          %5223 = vmatpush2.msra.mxu0 %v3761
          %5224 = vmatprep.subr.mxu0 %v3758
          %5225 = vmatpush2.msra.mxu0 %v3757
          %5226 = vmatprep.subr.mxu0 %v3754
          %5227 = vmatpush2.msra.mxu0 %v3753
          %5228 = vmatprep.subr.mxu0 %v3750
          %5229 = vmatpush2.msra.mxu0 %v3749
          %5230 = vmatprep.subr.mxu0 %v3746
          %5231 = vmatpush2.msra.mxu0 %v3745
          %5232 = vmatprep.subr.mxu0 %v3742
          %5233 = vmatpush2.msra.mxu0 %v3741
          %5234 = vmatprep.subr.mxu0 %v3738
          %5235 = vmatpush2.msra.mxu0 %v3737
          %5236 = vmatprep.subr.mxu0 %v3734
          %5237 = vmatpush2.msra.mxu0 %v3733
          %5238 = vmatprep.subr.mxu0 %v3730
          %5239 = vmatpush2.msra.mxu0 %v3729
          %5240 = vmatprep.subr.mxu0 %v3726
          %5241 = vmatpush2.msra.mxu0 %v3725
          %5242 = vmatprep.subr.mxu0 %v3722
          %5243 = vmatpush2.msra.mxu0 %v3721
          %5244 = vmatprep.subr.mxu0 %v3718
          %5245 = vmatpush2.msra.mxu0 %v3717
          %5246 = vmatprep.mubr.f32.mxu0 %v4350
          %5247 = vmatmul.mubr.f32.gmra.mxu0 %v4348
          %v5248 = vpop.f32.mrf.mxu0
          %v5249 = vadd.f32 %v5178, %v5248
          %v5250 = vpop.f32.mrf.mxu0
          %v5251 = vadd.f32 %v5180, %v5250
          %5252 = vdwg.mxu0
          %5253 = vmatprep.subr.mxu0 %v3842
          %5254 = vmatpush1.msra.mxu0 %v3841
          %5255 = vmatprep.subr.mxu0 %v3838
          %5256 = vmatpush1.msra.mxu0 %v3837
          %5257 = vmatprep.subr.mxu0 %v3834
          %5258 = vmatpush1.msra.mxu0 %v3833
          %5259 = vmatprep.subr.mxu0 %v3830
          %5260 = vmatpush1.msra.mxu0 %v3829
          %5261 = vmatprep.subr.mxu0 %v3826
          %5262 = vmatpush1.msra.mxu0 %v3825
          %5263 = vmatprep.subr.mxu0 %v3822
          %5264 = vmatpush1.msra.mxu0 %v3821
          %5265 = vmatprep.subr.mxu0 %v3818
          %5266 = vmatpush1.msra.mxu0 %v3817
          %5267 = vmatprep.subr.mxu0 %v3814
          %5268 = vmatpush1.msra.mxu0 %v3813
          %5269 = vmatprep.subr.mxu0 %v3810
          %5270 = vmatpush1.msra.mxu0 %v3809
          %5271 = vmatprep.subr.mxu0 %v3806
          %5272 = vmatpush1.msra.mxu0 %v3805
          %5273 = vmatprep.subr.mxu0 %v3802
          %5274 = vmatpush1.msra.mxu0 %v3801
          %5275 = vmatprep.subr.mxu0 %v3798
          %5276 = vmatpush1.msra.mxu0 %v3797
          %5277 = vmatprep.subr.mxu0 %v3794
          %5278 = vmatpush1.msra.mxu0 %v3793
          %5279 = vmatprep.subr.mxu0 %v3790
          %5280 = vmatpush1.msra.mxu0 %v3789
          %5281 = vmatprep.subr.mxu0 %v3786
          %5282 = vmatpush1.msra.mxu0 %v3785
          %5283 = vmatprep.subr.mxu0 %v3782
          %5284 = vmatpush1.msra.mxu0 %v3781
          %5285 = vmatprep.subr.mxu0 %v3906
          %5286 = vmatpush2.msra.mxu0 %v3905
          %5287 = vmatprep.subr.mxu0 %v3902
          %5288 = vmatpush2.msra.mxu0 %v3901
          %5289 = vmatprep.subr.mxu0 %v3898
          %5290 = vmatpush2.msra.mxu0 %v3897
          %5291 = vmatprep.subr.mxu0 %v3894
          %5292 = vmatpush2.msra.mxu0 %v3893
          %5293 = vmatprep.subr.mxu0 %v3890
          %5294 = vmatpush2.msra.mxu0 %v3889
          %5295 = vmatprep.subr.mxu0 %v3886
          %5296 = vmatpush2.msra.mxu0 %v3885
          %5297 = vmatprep.subr.mxu0 %v3882
          %5298 = vmatpush2.msra.mxu0 %v3881
          %5299 = vmatprep.subr.mxu0 %v3878
          %5300 = vmatpush2.msra.mxu0 %v3877
          %5301 = vmatprep.subr.mxu0 %v3874
          %5302 = vmatpush2.msra.mxu0 %v3873
          %5303 = vmatprep.subr.mxu0 %v3870
          %5304 = vmatpush2.msra.mxu0 %v3869
          %5305 = vmatprep.subr.mxu0 %v3866
          %5306 = vmatpush2.msra.mxu0 %v3865
          %5307 = vmatprep.subr.mxu0 %v3862
          %5308 = vmatpush2.msra.mxu0 %v3861
          %5309 = vmatprep.subr.mxu0 %v3858
          %5310 = vmatpush2.msra.mxu0 %v3857
          %5311 = vmatprep.subr.mxu0 %v3854
          %5312 = vmatpush2.msra.mxu0 %v3853
          %5313 = vmatprep.subr.mxu0 %v3850
          %5314 = vmatpush2.msra.mxu0 %v3849
          %5315 = vmatprep.subr.mxu0 %v3846
          %5316 = vmatpush2.msra.mxu0 %v3845
          %5317 = vmatprep.mubr.f32.mxu0 %v4366
          %5318 = vmatmul.mubr.f32.gmra.mxu0 %v4358
          %v5319 = vpop.f32.mrf.mxu0
          %v5320 = vadd.f32 %v5249, %v5319
          %v5321 = vpop.f32.mrf.mxu0
          %v5322 = vadd.f32 %v5251, %v5321
          %5323 = vdwg.mxu0
          %5324 = vmatprep.subr.mxu0 %v3970
          %5325 = vmatpush1.msra.mxu0 %v3969
          %5326 = vmatprep.subr.mxu0 %v3966
          %5327 = vmatpush1.msra.mxu0 %v3965
          %5328 = vmatprep.subr.mxu0 %v3962
          %5329 = vmatpush1.msra.mxu0 %v3961
          %5330 = vmatprep.subr.mxu0 %v3958
          %5331 = vmatpush1.msra.mxu0 %v3957
          %5332 = vmatprep.subr.mxu0 %v3954
          %5333 = vmatpush1.msra.mxu0 %v3953
          %5334 = vmatprep.subr.mxu0 %v3950
          %5335 = vmatpush1.msra.mxu0 %v3949
          %5336 = vmatprep.subr.mxu0 %v3946
          %5337 = vmatpush1.msra.mxu0 %v3945
          %5338 = vmatprep.subr.mxu0 %v3942
          %5339 = vmatpush1.msra.mxu0 %v3941
          %5340 = vmatprep.subr.mxu0 %v3938
          %5341 = vmatpush1.msra.mxu0 %v3937
          %5342 = vmatprep.subr.mxu0 %v3934
          %5343 = vmatpush1.msra.mxu0 %v3933
          %5344 = vmatprep.subr.mxu0 %v3930
          %5345 = vmatpush1.msra.mxu0 %v3929
          %5346 = vmatprep.subr.mxu0 %v3926
          %5347 = vmatpush1.msra.mxu0 %v3925
          %5348 = vmatprep.subr.mxu0 %v3922
          %5349 = vmatpush1.msra.mxu0 %v3921
          %5350 = vmatprep.subr.mxu0 %v3918
          %5351 = vmatpush1.msra.mxu0 %v3917
          %5352 = vmatprep.subr.mxu0 %v3914
          %5353 = vmatpush1.msra.mxu0 %v3913
          %5354 = vmatprep.subr.mxu0 %v3910
          %5355 = vmatpush1.msra.mxu0 %v3909
          %5356 = vmatprep.subr.mxu0 %v4034
          %5357 = vmatpush2.msra.mxu0 %v4033
          %5358 = vmatprep.subr.mxu0 %v4030
          %5359 = vmatpush2.msra.mxu0 %v4029
          %5360 = vmatprep.subr.mxu0 %v4026
          %5361 = vmatpush2.msra.mxu0 %v4025
          %5362 = vmatprep.subr.mxu0 %v4022
          %5363 = vmatpush2.msra.mxu0 %v4021
          %5364 = vmatprep.subr.mxu0 %v4018
          %5365 = vmatpush2.msra.mxu0 %v4017
          %5366 = vmatprep.subr.mxu0 %v4014
          %5367 = vmatpush2.msra.mxu0 %v4013
          %5368 = vmatprep.subr.mxu0 %v4010
          %5369 = vmatpush2.msra.mxu0 %v4009
          %5370 = vmatprep.subr.mxu0 %v4006
          %5371 = vmatpush2.msra.mxu0 %v4005
          %5372 = vmatprep.subr.mxu0 %v4002
          %5373 = vmatpush2.msra.mxu0 %v4001
          %5374 = vmatprep.subr.mxu0 %v3998
          %5375 = vmatpush2.msra.mxu0 %v3997
          %5376 = vmatprep.subr.mxu0 %v3994
          %5377 = vmatpush2.msra.mxu0 %v3993
          %5378 = vmatprep.subr.mxu0 %v3990
          %5379 = vmatpush2.msra.mxu0 %v3989
          %5380 = vmatprep.subr.mxu0 %v3986
          %5381 = vmatpush2.msra.mxu0 %v3985
          %5382 = vmatprep.subr.mxu0 %v3982
          %5383 = vmatpush2.msra.mxu0 %v3981
          %5384 = vmatprep.subr.mxu0 %v3978
          %5385 = vmatpush2.msra.mxu0 %v3977
          %5386 = vmatprep.subr.mxu0 %v3974
          %5387 = vmatpush2.msra.mxu0 %v3973
          %5388 = vmatprep.mubr.f32.mxu0 %v4367
          %5389 = vmatmul.mubr.f32.gmra.mxu0 %v4365
          %v5390 = vpop.f32.mrf.mxu0
          %v5391 = vadd.f32 %v5320, %v5390
          %v5392 = vpop.f32.mrf.mxu0
          %v5393 = vadd.f32 %v5322, %v5392
          %5394 = vdwg.mxu0
          %5395 = vmatprep.subr.mxu0 %v4098
          %5396 = vmatpush1.msra.mxu0 %v4097
          %5397 = vmatprep.subr.mxu0 %v4094
          %5398 = vmatpush1.msra.mxu0 %v4093
          %5399 = vmatprep.subr.mxu0 %v4090
          %5400 = vmatpush1.msra.mxu0 %v4089
          %5401 = vmatprep.subr.mxu0 %v4086
          %5402 = vmatpush1.msra.mxu0 %v4085
          %5403 = vmatprep.subr.mxu0 %v4082
          %5404 = vmatpush1.msra.mxu0 %v4081
          %5405 = vmatprep.subr.mxu0 %v4078
          %5406 = vmatpush1.msra.mxu0 %v4077
          %5407 = vmatprep.subr.mxu0 %v4074
          %5408 = vmatpush1.msra.mxu0 %v4073
          %5409 = vmatprep.subr.mxu0 %v4070
          %5410 = vmatpush1.msra.mxu0 %v4069
          %5411 = vmatprep.subr.mxu0 %v4066
          %5412 = vmatpush1.msra.mxu0 %v4065
          %5413 = vmatprep.subr.mxu0 %v4062
          %5414 = vmatpush1.msra.mxu0 %v4061
          %5415 = vmatprep.subr.mxu0 %v4058
          %5416 = vmatpush1.msra.mxu0 %v4057
          %5417 = vmatprep.subr.mxu0 %v4054
          %5418 = vmatpush1.msra.mxu0 %v4053
          %5419 = vmatprep.subr.mxu0 %v4050
          %5420 = vmatpush1.msra.mxu0 %v4049
          %5421 = vmatprep.subr.mxu0 %v4046
          %5422 = vmatpush1.msra.mxu0 %v4045
          %5423 = vmatprep.subr.mxu0 %v4042
          %5424 = vmatpush1.msra.mxu0 %v4041
          %5425 = vmatprep.subr.mxu0 %v4038
          %5426 = vmatpush1.msra.mxu0 %v4037
          %5427 = vmatprep.subr.mxu0 %v4162
          %5428 = vmatpush2.msra.mxu0 %v4161
          %5429 = vmatprep.subr.mxu0 %v4158
          %5430 = vmatpush2.msra.mxu0 %v4157
          %5431 = vmatprep.subr.mxu0 %v4154
          %5432 = vmatpush2.msra.mxu0 %v4153
          %5433 = vmatprep.subr.mxu0 %v4150
          %5434 = vmatpush2.msra.mxu0 %v4149
          %5435 = vmatprep.subr.mxu0 %v4146
          %5436 = vmatpush2.msra.mxu0 %v4145
          %5437 = vmatprep.subr.mxu0 %v4142
          %5438 = vmatpush2.msra.mxu0 %v4141
          %5439 = vmatprep.subr.mxu0 %v4138
          %5440 = vmatpush2.msra.mxu0 %v4137
          %5441 = vmatprep.subr.mxu0 %v4134
          %5442 = vmatpush2.msra.mxu0 %v4133
          %5443 = vmatprep.subr.mxu0 %v4130
          %5444 = vmatpush2.msra.mxu0 %v4129
          %5445 = vmatprep.subr.mxu0 %v4126
          %5446 = vmatpush2.msra.mxu0 %v4125
          %5447 = vmatprep.subr.mxu0 %v4122
          %5448 = vmatpush2.msra.mxu0 %v4121
          %5449 = vmatprep.subr.mxu0 %v4118
          %5450 = vmatpush2.msra.mxu0 %v4117
          %5451 = vmatprep.subr.mxu0 %v4114
          %5452 = vmatpush2.msra.mxu0 %v4113
          %5453 = vmatprep.subr.mxu0 %v4110
          %5454 = vmatpush2.msra.mxu0 %v4109
          %5455 = vmatprep.subr.mxu0 %v4106
          %5456 = vmatpush2.msra.mxu0 %v4105
          %5457 = vmatprep.subr.mxu0 %v4102
          %5458 = vmatpush2.msra.mxu0 %v4101
          %5459 = vmatprep.mubr.f32.mxu0 %v4383
          %5460 = vmatmul.mubr.f32.gmra.mxu0 %v4375
          %v5461 = vpop.f32.mrf.mxu0
          %v5462 = vadd.f32 %v5391, %v5461
          %v5463 = vpop.f32.mrf.mxu0
          %v5464 = vadd.f32 %v5393, %v5463
          %5465 = vdwg.mxu0
          %5466 = vmatprep.subr.mxu0 %v4226
          %5467 = vmatpush1.msra.mxu0 %v4225
          %5468 = vmatprep.subr.mxu0 %v4222
          %5469 = vmatpush1.msra.mxu0 %v4221
          %5470 = vmatprep.subr.mxu0 %v4218
          %5471 = vmatpush1.msra.mxu0 %v4217
          %5472 = vmatprep.subr.mxu0 %v4214
          %5473 = vmatpush1.msra.mxu0 %v4213
          %5474 = vmatprep.subr.mxu0 %v4210
          %5475 = vmatpush1.msra.mxu0 %v4209
          %5476 = vmatprep.subr.mxu0 %v4206
          %5477 = vmatpush1.msra.mxu0 %v4205
          %5478 = vmatprep.subr.mxu0 %v4202
          %5479 = vmatpush1.msra.mxu0 %v4201
          %5480 = vmatprep.subr.mxu0 %v4198
          %5481 = vmatpush1.msra.mxu0 %v4197
          %5482 = vmatprep.subr.mxu0 %v4194
          %5483 = vmatpush1.msra.mxu0 %v4193
          %5484 = vmatprep.subr.mxu0 %v4190
          %5485 = vmatpush1.msra.mxu0 %v4189
          %5486 = vmatprep.subr.mxu0 %v4186
          %5487 = vmatpush1.msra.mxu0 %v4185
          %5488 = vmatprep.subr.mxu0 %v4182
          %5489 = vmatpush1.msra.mxu0 %v4181
          %5490 = vmatprep.subr.mxu0 %v4178
          %5491 = vmatpush1.msra.mxu0 %v4177
          %5492 = vmatprep.subr.mxu0 %v4174
          %5493 = vmatpush1.msra.mxu0 %v4173
          %5494 = vmatprep.subr.mxu0 %v4170
          %5495 = vmatpush1.msra.mxu0 %v4169
          %5496 = vmatprep.subr.mxu0 %v4166
          %5497 = vmatpush1.msra.mxu0 %v4165
          %5498 = vmatprep.subr.mxu0 %v4290
          %5499 = vmatpush2.msra.mxu0 %v4289
          %5500 = vmatprep.subr.mxu0 %v4286
          %5501 = vmatpush2.msra.mxu0 %v4285
          %5502 = vmatprep.subr.mxu0 %v4282
          %5503 = vmatpush2.msra.mxu0 %v4281
          %5504 = vmatprep.subr.mxu0 %v4278
          %5505 = vmatpush2.msra.mxu0 %v4277
          %5506 = vmatprep.subr.mxu0 %v4274
          %5507 = vmatpush2.msra.mxu0 %v4273
          %5508 = vmatprep.subr.mxu0 %v4270
          %5509 = vmatpush2.msra.mxu0 %v4269
          %5510 = vmatprep.subr.mxu0 %v4266
          %5511 = vmatpush2.msra.mxu0 %v4265
          %5512 = vmatprep.subr.mxu0 %v4262
          %5513 = vmatpush2.msra.mxu0 %v4261
          %5514 = vmatprep.subr.mxu0 %v4258
          %5515 = vmatpush2.msra.mxu0 %v4257
          %5516 = vmatprep.subr.mxu0 %v4254
          %5517 = vmatpush2.msra.mxu0 %v4253
          %5518 = vmatprep.subr.mxu0 %v4250
          %5519 = vmatpush2.msra.mxu0 %v4249
          %5520 = vmatprep.subr.mxu0 %v4246
          %5521 = vmatpush2.msra.mxu0 %v4245
          %5522 = vmatprep.subr.mxu0 %v4242
          %5523 = vmatpush2.msra.mxu0 %v4241
          %5524 = vmatprep.subr.mxu0 %v4238
          %5525 = vmatpush2.msra.mxu0 %v4237
          %5526 = vmatprep.subr.mxu0 %v4234
          %5527 = vmatpush2.msra.mxu0 %v4233
          %5528 = vmatprep.subr.mxu0 %v4230
          %5529 = vmatpush2.msra.mxu0 %v4229
          %5530 = vmatprep.mubr.f32.mxu0 %v4384
          %5531 = vmatmul.mubr.f32.gmra.mxu0 %v4382
          %v5532 = vpop.f32.mrf.mxu0
          %v5533 = vadd.f32 %v5462, %v5532
          %v5534 = vpop.f32.mrf.mxu0
          %v5535 = vadd.f32 %v5464, %v5534
          %5536 = vdwg.mxu0
          %v5537 = vld [vmem:[#allocation12] sm:$0xff]
          %v5538 = vld [vmem:[#allocation12 + $0x8] sm:$0xff]
          %v5539 = vld [vmem:[#allocation12 + $0x10] sm:$0xff]
          %v5540 = vld [vmem:[#allocation12 + $0x18] sm:$0xff]
          %v5541 = vld [vmem:[#allocation12 + $0x20] sm:$0xff]
          %v5542 = vld [vmem:[#allocation12 + $0x28] sm:$0xff]
          %v5543 = vld [vmem:[#allocation12 + $0x30] sm:$0xff]
          %v5544 = vld [vmem:[#allocation12 + $0x38] sm:$0xff]
          %v5545 = vld [vmem:[#allocation12 + $0x40] sm:$0xff]
          %v5546 = vld [vmem:[#allocation12 + $0x48] sm:$0xff]
          %v5547 = vld [vmem:[#allocation12 + $0x50] sm:$0xff]
          %v5548 = vld [vmem:[#allocation12 + $0x58] sm:$0xff]
          %v5549 = vld [vmem:[#allocation12 + $0x60] sm:$0xff]
          %v5550 = vld [vmem:[#allocation12 + $0x68] sm:$0xff]
          %v5551 = vld [vmem:[#allocation12 + $0x70] sm:$0xff]
          %v5552 = vld [vmem:[#allocation12 + $0x78] sm:$0xff]
          %v5553 = vld [vmem:[#allocation12 + $0x80] sm:$0xff]
          %v5554 = vld [vmem:[#allocation12 + $0x88] sm:$0xff]
          %v5555 = vld [vmem:[#allocation12 + $0x90] sm:$0xff]
          %v5556 = vld [vmem:[#allocation12 + $0x98] sm:$0xff]
          %v5557 = vld [vmem:[#allocation12 + $0xa0] sm:$0xff]
          %v5558 = vld [vmem:[#allocation12 + $0xa8] sm:$0xff]
          %v5559 = vld [vmem:[#allocation12 + $0xb0] sm:$0xff]
          %v5560 = vld [vmem:[#allocation12 + $0xb8] sm:$0xff]
          %v5561 = vld [vmem:[#allocation12 + $0xc0] sm:$0xff]
          %v5562 = vld [vmem:[#allocation12 + $0xc8] sm:$0xff]
          %v5563 = vld [vmem:[#allocation12 + $0xd0] sm:$0xff]
          %v5564 = vld [vmem:[#allocation12 + $0xd8] sm:$0xff]
          %v5565 = vld [vmem:[#allocation12 + $0xe0] sm:$0xff]
          %v5566 = vld [vmem:[#allocation12 + $0xe8] sm:$0xff]
          %v5567 = vld [vmem:[#allocation12 + $0xf0] sm:$0xff]
          %v5568 = vld [vmem:[#allocation12 + $0xf8] sm:$0xff]
          %v5569 = vld [vmem:[#allocation12 + $0x100] sm:$0xff]
          %v5570 = vld [vmem:[#allocation12 + $0x108] sm:$0xff]
          %v5571 = vld [vmem:[#allocation12 + $0x110] sm:$0xff]
          %v5572 = vld [vmem:[#allocation12 + $0x118] sm:$0xff]
          %v5573 = vld [vmem:[#allocation12 + $0x120] sm:$0xff]
          %v5574 = vld [vmem:[#allocation12 + $0x128] sm:$0xff]
          %v5575 = vld [vmem:[#allocation12 + $0x130] sm:$0xff]
          %v5576 = vld [vmem:[#allocation12 + $0x138] sm:$0xff]
          %v5577 = vld [vmem:[#allocation12 + $0x140] sm:$0xff]
          %v5578 = vld [vmem:[#allocation12 + $0x148] sm:$0xff]
          %v5579 = vld [vmem:[#allocation12 + $0x150] sm:$0xff]
          %v5580 = vld [vmem:[#allocation12 + $0x158] sm:$0xff]
          %v5581 = vld [vmem:[#allocation12 + $0x160] sm:$0xff]
          %v5582 = vld [vmem:[#allocation12 + $0x168] sm:$0xff]
          %v5583 = vld [vmem:[#allocation12 + $0x170] sm:$0xff]
          %v5584 = vld [vmem:[#allocation12 + $0x178] sm:$0xff]
          %v5585 = vld [vmem:[#allocation12 + $0x180] sm:$0xff]
          %v5586 = vld [vmem:[#allocation12 + $0x188] sm:$0xff]
          %v5587 = vld [vmem:[#allocation12 + $0x190] sm:$0xff]
          %v5588 = vld [vmem:[#allocation12 + $0x198] sm:$0xff]
          %v5589 = vld [vmem:[#allocation12 + $0x1a0] sm:$0xff]
          %v5590 = vld [vmem:[#allocation12 + $0x1a8] sm:$0xff]
          %v5591 = vld [vmem:[#allocation12 + $0x1b0] sm:$0xff]
          %v5592 = vld [vmem:[#allocation12 + $0x1b8] sm:$0xff]
          %v5593 = vld [vmem:[#allocation12 + $0x1c0] sm:$0xff]
          %v5594 = vld [vmem:[#allocation12 + $0x1c8] sm:$0xff]
          %v5595 = vld [vmem:[#allocation12 + $0x1d0] sm:$0xff]
          %v5596 = vld [vmem:[#allocation12 + $0x1d8] sm:$0xff]
          %v5597 = vld [vmem:[#allocation12 + $0x1e0] sm:$0xff]
          %v5598 = vld [vmem:[#allocation12 + $0x1e8] sm:$0xff]
          %v5599 = vld [vmem:[#allocation12 + $0x1f0] sm:$0xff]
          %v5600 = vld [vmem:[#allocation12 + $0x1f8] sm:$0xff]
          %v5601 = vld [vmem:[#allocation12 + $0x200] sm:$0xff]
          %v5602 = vld [vmem:[#allocation12 + $0x208] sm:$0xff]
          %v5603 = vld [vmem:[#allocation12 + $0x210] sm:$0xff]
          %v5604 = vld [vmem:[#allocation12 + $0x218] sm:$0xff]
          %v5605 = vld [vmem:[#allocation12 + $0x220] sm:$0xff]
          %v5606 = vld [vmem:[#allocation12 + $0x228] sm:$0xff]
          %v5607 = vld [vmem:[#allocation12 + $0x230] sm:$0xff]
          %v5608 = vld [vmem:[#allocation12 + $0x238] sm:$0xff]
          %v5609 = vld [vmem:[#allocation12 + $0x240] sm:$0xff]
          %v5610 = vld [vmem:[#allocation12 + $0x248] sm:$0xff]
          %v5611 = vld [vmem:[#allocation12 + $0x250] sm:$0xff]
          %v5612 = vld [vmem:[#allocation12 + $0x258] sm:$0xff]
          %v5613 = vld [vmem:[#allocation12 + $0x260] sm:$0xff]
          %v5614 = vld [vmem:[#allocation12 + $0x268] sm:$0xff]
          %v5615 = vld [vmem:[#allocation12 + $0x270] sm:$0xff]
          %v5616 = vld [vmem:[#allocation12 + $0x278] sm:$0xff]
          %v5617 = vld [vmem:[#allocation12 + $0x280] sm:$0xff]
          %v5618 = vld [vmem:[#allocation12 + $0x288] sm:$0xff]
          %v5619 = vld [vmem:[#allocation12 + $0x290] sm:$0xff]
          %v5620 = vld [vmem:[#allocation12 + $0x298] sm:$0xff]
          %v5621 = vld [vmem:[#allocation12 + $0x2a0] sm:$0xff]
          %v5622 = vld [vmem:[#allocation12 + $0x2a8] sm:$0xff]
          %v5623 = vld [vmem:[#allocation12 + $0x2b0] sm:$0xff]
          %v5624 = vld [vmem:[#allocation12 + $0x2b8] sm:$0xff]
          %v5625 = vld [vmem:[#allocation12 + $0x2c0] sm:$0xff]
          %v5626 = vld [vmem:[#allocation12 + $0x2c8] sm:$0xff]
          %v5627 = vld [vmem:[#allocation12 + $0x2d0] sm:$0xff]
          %v5628 = vld [vmem:[#allocation12 + $0x2d8] sm:$0xff]
          %v5629 = vld [vmem:[#allocation12 + $0x2e0] sm:$0xff]
          %v5630 = vld [vmem:[#allocation12 + $0x2e8] sm:$0xff]
          %v5631 = vld [vmem:[#allocation12 + $0x2f0] sm:$0xff]
          %v5632 = vld [vmem:[#allocation12 + $0x2f8] sm:$0xff]
          %v5633 = vld [vmem:[#allocation12 + $0x300] sm:$0xff]
          %v5634 = vld [vmem:[#allocation12 + $0x308] sm:$0xff]
          %v5635 = vld [vmem:[#allocation12 + $0x310] sm:$0xff]
          %v5636 = vld [vmem:[#allocation12 + $0x318] sm:$0xff]
          %v5637 = vld [vmem:[#allocation12 + $0x320] sm:$0xff]
          %v5638 = vld [vmem:[#allocation12 + $0x328] sm:$0xff]
          %v5639 = vld [vmem:[#allocation12 + $0x330] sm:$0xff]
          %v5640 = vld [vmem:[#allocation12 + $0x338] sm:$0xff]
          %v5641 = vld [vmem:[#allocation12 + $0x340] sm:$0xff]
          %v5642 = vld [vmem:[#allocation12 + $0x348] sm:$0xff]
          %v5643 = vld [vmem:[#allocation12 + $0x350] sm:$0xff]
          %v5644 = vld [vmem:[#allocation12 + $0x358] sm:$0xff]
          %v5645 = vld [vmem:[#allocation12 + $0x360] sm:$0xff]
          %v5646 = vld [vmem:[#allocation12 + $0x368] sm:$0xff]
          %v5647 = vld [vmem:[#allocation12 + $0x370] sm:$0xff]
          %v5648 = vld [vmem:[#allocation12 + $0x378] sm:$0xff]
          %v5649 = vld [vmem:[#allocation12 + $0x380] sm:$0xff]
          %v5650 = vld [vmem:[#allocation12 + $0x388] sm:$0xff]
          %v5651 = vld [vmem:[#allocation12 + $0x390] sm:$0xff]
          %v5652 = vld [vmem:[#allocation12 + $0x398] sm:$0xff]
          %v5653 = vld [vmem:[#allocation12 + $0x3a0] sm:$0xff]
          %v5654 = vld [vmem:[#allocation12 + $0x3a8] sm:$0xff]
          %v5655 = vld [vmem:[#allocation12 + $0x3b0] sm:$0xff]
          %v5656 = vld [vmem:[#allocation12 + $0x3b8] sm:$0xff]
          %v5657 = vld [vmem:[#allocation12 + $0x3c0] sm:$0xff]
          %v5658 = vld [vmem:[#allocation12 + $0x3c8] sm:$0xff]
          %v5659 = vld [vmem:[#allocation12 + $0x3d0] sm:$0xff]
          %v5660 = vld [vmem:[#allocation12 + $0x3d8] sm:$0xff]
          %v5661 = vld [vmem:[#allocation12 + $0x3e0] sm:$0xff]
          %v5662 = vld [vmem:[#allocation12 + $0x3e8] sm:$0xff]
          %v5663 = vld [vmem:[#allocation12 + $0x3f0] sm:$0xff]
          %v5664 = vld [vmem:[#allocation12 + $0x3f8] sm:$0xff]
          %v5665 = vld [vmem:[#allocation12 + $0x400] sm:$0xff]
          %v5666 = vld [vmem:[#allocation12 + $0x408] sm:$0xff]
          %v5667 = vld [vmem:[#allocation12 + $0x410] sm:$0xff]
          %v5668 = vld [vmem:[#allocation12 + $0x418] sm:$0xff]
          %v5669 = vld [vmem:[#allocation12 + $0x420] sm:$0xff]
          %v5670 = vld [vmem:[#allocation12 + $0x428] sm:$0xff]
          %v5671 = vld [vmem:[#allocation12 + $0x430] sm:$0xff]
          %v5672 = vld [vmem:[#allocation12 + $0x438] sm:$0xff]
          %v5673 = vld [vmem:[#allocation12 + $0x440] sm:$0xff]
          %v5674 = vld [vmem:[#allocation12 + $0x448] sm:$0xff]
          %v5675 = vld [vmem:[#allocation12 + $0x450] sm:$0xff]
          %v5676 = vld [vmem:[#allocation12 + $0x458] sm:$0xff]
          %v5677 = vld [vmem:[#allocation12 + $0x460] sm:$0xff]
          %v5678 = vld [vmem:[#allocation12 + $0x468] sm:$0xff]
          %v5679 = vld [vmem:[#allocation12 + $0x470] sm:$0xff]
          %v5680 = vld [vmem:[#allocation12 + $0x478] sm:$0xff]
          %v5681 = vld [vmem:[#allocation12 + $0x480] sm:$0xff]
          %v5682 = vld [vmem:[#allocation12 + $0x488] sm:$0xff]
          %v5683 = vld [vmem:[#allocation12 + $0x490] sm:$0xff]
          %v5684 = vld [vmem:[#allocation12 + $0x498] sm:$0xff]
          %v5685 = vld [vmem:[#allocation12 + $0x4a0] sm:$0xff]
          %v5686 = vld [vmem:[#allocation12 + $0x4a8] sm:$0xff]
          %v5687 = vld [vmem:[#allocation12 + $0x4b0] sm:$0xff]
          %v5688 = vld [vmem:[#allocation12 + $0x4b8] sm:$0xff]
          %v5689 = vld [vmem:[#allocation12 + $0x4c0] sm:$0xff]
          %v5690 = vld [vmem:[#allocation12 + $0x4c8] sm:$0xff]
          %v5691 = vld [vmem:[#allocation12 + $0x4d0] sm:$0xff]
          %v5692 = vld [vmem:[#allocation12 + $0x4d8] sm:$0xff]
          %v5693 = vld [vmem:[#allocation12 + $0x4e0] sm:$0xff]
          %v5694 = vld [vmem:[#allocation12 + $0x4e8] sm:$0xff]
          %v5695 = vld [vmem:[#allocation12 + $0x4f0] sm:$0xff]
          %v5696 = vld [vmem:[#allocation12 + $0x4f8] sm:$0xff]
          %v5697 = vld [vmem:[#allocation12 + $0x500] sm:$0xff]
          %v5698 = vld [vmem:[#allocation12 + $0x508] sm:$0xff]
          %v5699 = vld [vmem:[#allocation12 + $0x510] sm:$0xff]
          %v5700 = vld [vmem:[#allocation12 + $0x518] sm:$0xff]
          %v5701 = vld [vmem:[#allocation12 + $0x520] sm:$0xff]
          %v5702 = vld [vmem:[#allocation12 + $0x528] sm:$0xff]
          %v5703 = vld [vmem:[#allocation12 + $0x530] sm:$0xff]
          %v5704 = vld [vmem:[#allocation12 + $0x538] sm:$0xff]
          %v5705 = vld [vmem:[#allocation12 + $0x540] sm:$0xff]
          %v5706 = vld [vmem:[#allocation12 + $0x548] sm:$0xff]
          %v5707 = vld [vmem:[#allocation12 + $0x550] sm:$0xff]
          %v5708 = vld [vmem:[#allocation12 + $0x558] sm:$0xff]
          %v5709 = vld [vmem:[#allocation12 + $0x560] sm:$0xff]
          %v5710 = vld [vmem:[#allocation12 + $0x568] sm:$0xff]
          %v5711 = vld [vmem:[#allocation12 + $0x570] sm:$0xff]
          %v5712 = vld [vmem:[#allocation12 + $0x578] sm:$0xff]
          %v5713 = vld [vmem:[#allocation12 + $0x580] sm:$0xff]
          %v5714 = vld [vmem:[#allocation12 + $0x588] sm:$0xff]
          %v5715 = vld [vmem:[#allocation12 + $0x590] sm:$0xff]
          %v5716 = vld [vmem:[#allocation12 + $0x598] sm:$0xff]
          %v5717 = vld [vmem:[#allocation12 + $0x5a0] sm:$0xff]
          %v5718 = vld [vmem:[#allocation12 + $0x5a8] sm:$0xff]
          %v5719 = vld [vmem:[#allocation12 + $0x5b0] sm:$0xff]
          %v5720 = vld [vmem:[#allocation12 + $0x5b8] sm:$0xff]
          %v5721 = vld [vmem:[#allocation12 + $0x5c0] sm:$0xff]
          %v5722 = vld [vmem:[#allocation12 + $0x5c8] sm:$0xff]
          %v5723 = vld [vmem:[#allocation12 + $0x5d0] sm:$0xff]
          %v5724 = vld [vmem:[#allocation12 + $0x5d8] sm:$0xff]
          %v5725 = vld [vmem:[#allocation12 + $0x5e0] sm:$0xff]
          %v5726 = vld [vmem:[#allocation12 + $0x5e8] sm:$0xff]
          %v5727 = vld [vmem:[#allocation12 + $0x5f0] sm:$0xff]
          %v5728 = vld [vmem:[#allocation12 + $0x5f8] sm:$0xff]
          %v5729 = vunpack.c.l.bf16 %v5537
          %v5730 = vunpack.c.h.bf16 %v5537
          %v5731 = vunpack.c.l.bf16 %v5538
          %v5732 = vunpack.c.h.bf16 %v5538
          %v5733 = vunpack.c.l.bf16 %v5539
          %v5734 = vunpack.c.h.bf16 %v5539
          %v5735 = vunpack.c.l.bf16 %v5540
          %v5736 = vunpack.c.h.bf16 %v5540
          %v5737 = vunpack.c.l.bf16 %v5541
          %v5738 = vunpack.c.h.bf16 %v5541
          %v5739 = vunpack.c.l.bf16 %v5542
          %v5740 = vunpack.c.h.bf16 %v5542
          %v5741 = vunpack.c.l.bf16 %v5543
          %v5742 = vunpack.c.h.bf16 %v5543
          %v5743 = vunpack.c.l.bf16 %v5544
          %v5744 = vunpack.c.h.bf16 %v5544
          %v5745 = vunpack.c.l.bf16 %v5545
          %v5746 = vunpack.c.h.bf16 %v5545
          %v5747 = vunpack.c.l.bf16 %v5546
          %v5748 = vunpack.c.h.bf16 %v5546
          %v5749 = vunpack.c.l.bf16 %v5547
          %v5750 = vunpack.c.h.bf16 %v5547
          %v5751 = vunpack.c.l.bf16 %v5548
          %v5752 = vunpack.c.h.bf16 %v5548
          %v5753 = vunpack.c.l.bf16 %v5549
          %v5754 = vunpack.c.h.bf16 %v5549
          %v5755 = vunpack.c.l.bf16 %v5550
          %v5756 = vunpack.c.h.bf16 %v5550
          %v5757 = vunpack.c.l.bf16 %v5551
          %v5758 = vunpack.c.h.bf16 %v5551
          %v5759 = vunpack.c.l.bf16 %v5552
          %v5760 = vunpack.c.h.bf16 %v5552
          %v5761 = vunpack.c.l.bf16 %v5553
          %v5762 = vunpack.c.h.bf16 %v5553
          %v5763 = vunpack.c.l.bf16 %v5554
          %v5764 = vunpack.c.h.bf16 %v5554
          %v5765 = vunpack.c.l.bf16 %v5555
          %v5766 = vunpack.c.h.bf16 %v5555
          %v5767 = vunpack.c.l.bf16 %v5556
          %v5768 = vunpack.c.h.bf16 %v5556
          %v5769 = vunpack.c.l.bf16 %v5557
          %v5770 = vunpack.c.h.bf16 %v5557
          %v5771 = vunpack.c.l.bf16 %v5558
          %v5772 = vunpack.c.h.bf16 %v5558
          %v5773 = vunpack.c.l.bf16 %v5559
          %v5774 = vunpack.c.h.bf16 %v5559
          %v5775 = vunpack.c.l.bf16 %v5560
          %v5776 = vunpack.c.h.bf16 %v5560
          %v5777 = vunpack.c.l.bf16 %v5561
          %v5778 = vunpack.c.h.bf16 %v5561
          %v5779 = vunpack.c.l.bf16 %v5562
          %v5780 = vunpack.c.h.bf16 %v5562
          %v5781 = vunpack.c.l.bf16 %v5563
          %v5782 = vunpack.c.h.bf16 %v5563
          %v5783 = vunpack.c.l.bf16 %v5564
          %v5784 = vunpack.c.h.bf16 %v5564
          %v5785 = vunpack.c.l.bf16 %v5565
          %v5786 = vunpack.c.h.bf16 %v5565
          %v5787 = vunpack.c.l.bf16 %v5566
          %v5788 = vunpack.c.h.bf16 %v5566
          %v5789 = vunpack.c.l.bf16 %v5567
          %v5790 = vunpack.c.h.bf16 %v5567
          %v5791 = vunpack.c.l.bf16 %v5568
          %v5792 = vunpack.c.h.bf16 %v5568
          %v5793 = vunpack.c.l.bf16 %v5569
          %v5794 = vunpack.c.h.bf16 %v5569
          %v5795 = vunpack.c.l.bf16 %v5570
          %v5796 = vunpack.c.h.bf16 %v5570
          %v5797 = vunpack.c.l.bf16 %v5571
          %v5798 = vunpack.c.h.bf16 %v5571
          %v5799 = vunpack.c.l.bf16 %v5572
          %v5800 = vunpack.c.h.bf16 %v5572
          %v5801 = vunpack.c.l.bf16 %v5573
          %v5802 = vunpack.c.h.bf16 %v5573
          %v5803 = vunpack.c.l.bf16 %v5574
          %v5804 = vunpack.c.h.bf16 %v5574
          %v5805 = vunpack.c.l.bf16 %v5575
          %v5806 = vunpack.c.h.bf16 %v5575
          %v5807 = vunpack.c.l.bf16 %v5576
          %v5808 = vunpack.c.h.bf16 %v5576
          %v5809 = vunpack.c.l.bf16 %v5577
          %v5810 = vunpack.c.h.bf16 %v5577
          %v5811 = vunpack.c.l.bf16 %v5578
          %v5812 = vunpack.c.h.bf16 %v5578
          %v5813 = vunpack.c.l.bf16 %v5579
          %v5814 = vunpack.c.h.bf16 %v5579
          %v5815 = vunpack.c.l.bf16 %v5580
          %v5816 = vunpack.c.h.bf16 %v5580
          %v5817 = vunpack.c.l.bf16 %v5581
          %v5818 = vunpack.c.h.bf16 %v5581
          %v5819 = vunpack.c.l.bf16 %v5582
          %v5820 = vunpack.c.h.bf16 %v5582
          %v5821 = vunpack.c.l.bf16 %v5583
          %v5822 = vunpack.c.h.bf16 %v5583
          %v5823 = vunpack.c.l.bf16 %v5584
          %v5824 = vunpack.c.h.bf16 %v5584
          %v5825 = vunpack.c.l.bf16 %v5585
          %v5826 = vunpack.c.h.bf16 %v5585
          %v5827 = vunpack.c.l.bf16 %v5586
          %v5828 = vunpack.c.h.bf16 %v5586
          %v5829 = vunpack.c.l.bf16 %v5587
          %v5830 = vunpack.c.h.bf16 %v5587
          %v5831 = vunpack.c.l.bf16 %v5588
          %v5832 = vunpack.c.h.bf16 %v5588
          %v5833 = vunpack.c.l.bf16 %v5589
          %v5834 = vunpack.c.h.bf16 %v5589
          %v5835 = vunpack.c.l.bf16 %v5590
          %v5836 = vunpack.c.h.bf16 %v5590
          %v5837 = vunpack.c.l.bf16 %v5591
          %v5838 = vunpack.c.h.bf16 %v5591
          %v5839 = vunpack.c.l.bf16 %v5592
          %v5840 = vunpack.c.h.bf16 %v5592
          %v5841 = vunpack.c.l.bf16 %v5593
          %v5842 = vunpack.c.h.bf16 %v5593
          %v5843 = vunpack.c.l.bf16 %v5594
          %v5844 = vunpack.c.h.bf16 %v5594
          %v5845 = vunpack.c.l.bf16 %v5595
          %v5846 = vunpack.c.h.bf16 %v5595
          %v5847 = vunpack.c.l.bf16 %v5596
          %v5848 = vunpack.c.h.bf16 %v5596
          %v5849 = vunpack.c.l.bf16 %v5597
          %v5850 = vunpack.c.h.bf16 %v5597
          %v5851 = vunpack.c.l.bf16 %v5598
          %v5852 = vunpack.c.h.bf16 %v5598
          %v5853 = vunpack.c.l.bf16 %v5599
          %v5854 = vunpack.c.h.bf16 %v5599
          %v5855 = vunpack.c.l.bf16 %v5600
          %v5856 = vunpack.c.h.bf16 %v5600
          %v5857 = vunpack.c.l.bf16 %v5601
          %v5858 = vunpack.c.h.bf16 %v5601
          %v5859 = vunpack.c.l.bf16 %v5602
          %v5860 = vunpack.c.h.bf16 %v5602
          %v5861 = vunpack.c.l.bf16 %v5603
          %v5862 = vunpack.c.h.bf16 %v5603
          %v5863 = vunpack.c.l.bf16 %v5604
          %v5864 = vunpack.c.h.bf16 %v5604
          %v5865 = vunpack.c.l.bf16 %v5605
          %v5866 = vunpack.c.h.bf16 %v5605
          %v5867 = vunpack.c.l.bf16 %v5606
          %v5868 = vunpack.c.h.bf16 %v5606
          %v5869 = vunpack.c.l.bf16 %v5607
          %v5870 = vunpack.c.h.bf16 %v5607
          %v5871 = vunpack.c.l.bf16 %v5608
          %v5872 = vunpack.c.h.bf16 %v5608
          %v5873 = vunpack.c.l.bf16 %v5609
          %v5874 = vunpack.c.h.bf16 %v5609
          %v5875 = vunpack.c.l.bf16 %v5610
          %v5876 = vunpack.c.h.bf16 %v5610
          %v5877 = vunpack.c.l.bf16 %v5611
          %v5878 = vunpack.c.h.bf16 %v5611
          %v5879 = vunpack.c.l.bf16 %v5612
          %v5880 = vunpack.c.h.bf16 %v5612
          %v5881 = vunpack.c.l.bf16 %v5613
          %v5882 = vunpack.c.h.bf16 %v5613
          %v5883 = vunpack.c.l.bf16 %v5614
          %v5884 = vunpack.c.h.bf16 %v5614
          %v5885 = vunpack.c.l.bf16 %v5615
          %v5886 = vunpack.c.h.bf16 %v5615
          %v5887 = vunpack.c.l.bf16 %v5616
          %v5888 = vunpack.c.h.bf16 %v5616
          %v5889 = vunpack.c.l.bf16 %v5617
          %v5890 = vunpack.c.h.bf16 %v5617
          %v5891 = vunpack.c.l.bf16 %v5618
          %v5892 = vunpack.c.h.bf16 %v5618
          %v5893 = vunpack.c.l.bf16 %v5619
          %v5894 = vunpack.c.h.bf16 %v5619
          %v5895 = vunpack.c.l.bf16 %v5620
          %v5896 = vunpack.c.h.bf16 %v5620
          %v5897 = vunpack.c.l.bf16 %v5621
          %v5898 = vunpack.c.h.bf16 %v5621
          %v5899 = vunpack.c.l.bf16 %v5622
          %v5900 = vunpack.c.h.bf16 %v5622
          %v5901 = vunpack.c.l.bf16 %v5623
          %v5902 = vunpack.c.h.bf16 %v5623
          %v5903 = vunpack.c.l.bf16 %v5624
          %v5904 = vunpack.c.h.bf16 %v5624
          %v5905 = vunpack.c.l.bf16 %v5625
          %v5906 = vunpack.c.h.bf16 %v5625
          %v5907 = vunpack.c.l.bf16 %v5626
          %v5908 = vunpack.c.h.bf16 %v5626
          %v5909 = vunpack.c.l.bf16 %v5627
          %v5910 = vunpack.c.h.bf16 %v5627
          %v5911 = vunpack.c.l.bf16 %v5628
          %v5912 = vunpack.c.h.bf16 %v5628
          %v5913 = vunpack.c.l.bf16 %v5629
          %v5914 = vunpack.c.h.bf16 %v5629
          %v5915 = vunpack.c.l.bf16 %v5630
          %v5916 = vunpack.c.h.bf16 %v5630
          %v5917 = vunpack.c.l.bf16 %v5631
          %v5918 = vunpack.c.h.bf16 %v5631
          %v5919 = vunpack.c.l.bf16 %v5632
          %v5920 = vunpack.c.h.bf16 %v5632
          %v5921 = vunpack.c.l.bf16 %v5633
          %v5922 = vunpack.c.h.bf16 %v5633
          %v5923 = vunpack.c.l.bf16 %v5634
          %v5924 = vunpack.c.h.bf16 %v5634
          %v5925 = vunpack.c.l.bf16 %v5635
          %v5926 = vunpack.c.h.bf16 %v5635
          %v5927 = vunpack.c.l.bf16 %v5636
          %v5928 = vunpack.c.h.bf16 %v5636
          %v5929 = vunpack.c.l.bf16 %v5637
          %v5930 = vunpack.c.h.bf16 %v5637
          %v5931 = vunpack.c.l.bf16 %v5638
          %v5932 = vunpack.c.h.bf16 %v5638
          %v5933 = vunpack.c.l.bf16 %v5639
          %v5934 = vunpack.c.h.bf16 %v5639
          %v5935 = vunpack.c.l.bf16 %v5640
          %v5936 = vunpack.c.h.bf16 %v5640
          %v5937 = vunpack.c.l.bf16 %v5641
          %v5938 = vunpack.c.h.bf16 %v5641
          %v5939 = vunpack.c.l.bf16 %v5642
          %v5940 = vunpack.c.h.bf16 %v5642
          %v5941 = vunpack.c.l.bf16 %v5643
          %v5942 = vunpack.c.h.bf16 %v5643
          %v5943 = vunpack.c.l.bf16 %v5644
          %v5944 = vunpack.c.h.bf16 %v5644
          %v5945 = vunpack.c.l.bf16 %v5645
          %v5946 = vunpack.c.h.bf16 %v5645
          %v5947 = vunpack.c.l.bf16 %v5646
          %v5948 = vunpack.c.h.bf16 %v5646
          %v5949 = vunpack.c.l.bf16 %v5647
          %v5950 = vunpack.c.h.bf16 %v5647
          %v5951 = vunpack.c.l.bf16 %v5648
          %v5952 = vunpack.c.h.bf16 %v5648
          %v5953 = vunpack.c.l.bf16 %v5649
          %v5954 = vunpack.c.h.bf16 %v5649
          %v5955 = vunpack.c.l.bf16 %v5650
          %v5956 = vunpack.c.h.bf16 %v5650
          %v5957 = vunpack.c.l.bf16 %v5651
          %v5958 = vunpack.c.h.bf16 %v5651
          %v5959 = vunpack.c.l.bf16 %v5652
          %v5960 = vunpack.c.h.bf16 %v5652
          %v5961 = vunpack.c.l.bf16 %v5653
          %v5962 = vunpack.c.h.bf16 %v5653
          %v5963 = vunpack.c.l.bf16 %v5654
          %v5964 = vunpack.c.h.bf16 %v5654
          %v5965 = vunpack.c.l.bf16 %v5655
          %v5966 = vunpack.c.h.bf16 %v5655
          %v5967 = vunpack.c.l.bf16 %v5656
          %v5968 = vunpack.c.h.bf16 %v5656
          %v5969 = vunpack.c.l.bf16 %v5657
          %v5970 = vunpack.c.h.bf16 %v5657
          %v5971 = vunpack.c.l.bf16 %v5658
          %v5972 = vunpack.c.h.bf16 %v5658
          %v5973 = vunpack.c.l.bf16 %v5659
          %v5974 = vunpack.c.h.bf16 %v5659
          %v5975 = vunpack.c.l.bf16 %v5660
          %v5976 = vunpack.c.h.bf16 %v5660
          %v5977 = vunpack.c.l.bf16 %v5661
          %v5978 = vunpack.c.h.bf16 %v5661
          %v5979 = vunpack.c.l.bf16 %v5662
          %v5980 = vunpack.c.h.bf16 %v5662
          %v5981 = vunpack.c.l.bf16 %v5663
          %v5982 = vunpack.c.h.bf16 %v5663
          %v5983 = vunpack.c.l.bf16 %v5664
          %v5984 = vunpack.c.h.bf16 %v5664
          %v5985 = vunpack.c.l.bf16 %v5665
          %v5986 = vunpack.c.h.bf16 %v5665
          %v5987 = vunpack.c.l.bf16 %v5666
          %v5988 = vunpack.c.h.bf16 %v5666
          %v5989 = vunpack.c.l.bf16 %v5667
          %v5990 = vunpack.c.h.bf16 %v5667
          %v5991 = vunpack.c.l.bf16 %v5668
          %v5992 = vunpack.c.h.bf16 %v5668
          %v5993 = vunpack.c.l.bf16 %v5669
          %v5994 = vunpack.c.h.bf16 %v5669
          %v5995 = vunpack.c.l.bf16 %v5670
          %v5996 = vunpack.c.h.bf16 %v5670
          %v5997 = vunpack.c.l.bf16 %v5671
          %v5998 = vunpack.c.h.bf16 %v5671
          %v5999 = vunpack.c.l.bf16 %v5672
          %v6000 = vunpack.c.h.bf16 %v5672
          %v6001 = vunpack.c.l.bf16 %v5673
          %v6002 = vunpack.c.h.bf16 %v5673
          %v6003 = vunpack.c.l.bf16 %v5674
          %v6004 = vunpack.c.h.bf16 %v5674
          %v6005 = vunpack.c.l.bf16 %v5675
          %v6006 = vunpack.c.h.bf16 %v5675
          %v6007 = vunpack.c.l.bf16 %v5676
          %v6008 = vunpack.c.h.bf16 %v5676
          %v6009 = vunpack.c.l.bf16 %v5677
          %v6010 = vunpack.c.h.bf16 %v5677
          %v6011 = vunpack.c.l.bf16 %v5678
          %v6012 = vunpack.c.h.bf16 %v5678
          %v6013 = vunpack.c.l.bf16 %v5679
          %v6014 = vunpack.c.h.bf16 %v5679
          %v6015 = vunpack.c.l.bf16 %v5680
          %v6016 = vunpack.c.h.bf16 %v5680
          %v6017 = vunpack.c.l.bf16 %v5681
          %v6018 = vunpack.c.h.bf16 %v5681
          %v6019 = vunpack.c.l.bf16 %v5682
          %v6020 = vunpack.c.h.bf16 %v5682
          %v6021 = vunpack.c.l.bf16 %v5683
          %v6022 = vunpack.c.h.bf16 %v5683
          %v6023 = vunpack.c.l.bf16 %v5684
          %v6024 = vunpack.c.h.bf16 %v5684
          %v6025 = vunpack.c.l.bf16 %v5685
          %v6026 = vunpack.c.h.bf16 %v5685
          %v6027 = vunpack.c.l.bf16 %v5686
          %v6028 = vunpack.c.h.bf16 %v5686
          %v6029 = vunpack.c.l.bf16 %v5687
          %v6030 = vunpack.c.h.bf16 %v5687
          %v6031 = vunpack.c.l.bf16 %v5688
          %v6032 = vunpack.c.h.bf16 %v5688
          %v6033 = vunpack.c.l.bf16 %v5689
          %v6034 = vunpack.c.h.bf16 %v5689
          %v6035 = vunpack.c.l.bf16 %v5690
          %v6036 = vunpack.c.h.bf16 %v5690
          %v6037 = vunpack.c.l.bf16 %v5691
          %v6038 = vunpack.c.h.bf16 %v5691
          %v6039 = vunpack.c.l.bf16 %v5692
          %v6040 = vunpack.c.h.bf16 %v5692
          %v6041 = vunpack.c.l.bf16 %v5693
          %v6042 = vunpack.c.h.bf16 %v5693
          %v6043 = vunpack.c.l.bf16 %v5694
          %v6044 = vunpack.c.h.bf16 %v5694
          %v6045 = vunpack.c.l.bf16 %v5695
          %v6046 = vunpack.c.h.bf16 %v5695
          %v6047 = vunpack.c.l.bf16 %v5696
          %v6048 = vunpack.c.h.bf16 %v5696
          %v6049 = vunpack.c.l.bf16 %v5697
          %v6050 = vunpack.c.h.bf16 %v5697
          %v6051 = vunpack.c.l.bf16 %v5698
          %v6052 = vunpack.c.h.bf16 %v5698
          %v6053 = vunpack.c.l.bf16 %v5699
          %v6054 = vunpack.c.h.bf16 %v5699
          %v6055 = vunpack.c.l.bf16 %v5700
          %v6056 = vunpack.c.h.bf16 %v5700
          %v6057 = vunpack.c.l.bf16 %v5701
          %v6058 = vunpack.c.h.bf16 %v5701
          %v6059 = vunpack.c.l.bf16 %v5702
          %v6060 = vunpack.c.h.bf16 %v5702
          %v6061 = vunpack.c.l.bf16 %v5703
          %v6062 = vunpack.c.h.bf16 %v5703
          %v6063 = vunpack.c.l.bf16 %v5704
          %v6064 = vunpack.c.h.bf16 %v5704
          %v6065 = vunpack.c.l.bf16 %v5705
          %v6066 = vunpack.c.h.bf16 %v5705
          %v6067 = vunpack.c.l.bf16 %v5706
          %v6068 = vunpack.c.h.bf16 %v5706
          %v6069 = vunpack.c.l.bf16 %v5707
          %v6070 = vunpack.c.h.bf16 %v5707
          %v6071 = vunpack.c.l.bf16 %v5708
          %v6072 = vunpack.c.h.bf16 %v5708
          %v6073 = vunpack.c.l.bf16 %v5709
          %v6074 = vunpack.c.h.bf16 %v5709
          %v6075 = vunpack.c.l.bf16 %v5710
          %v6076 = vunpack.c.h.bf16 %v5710
          %v6077 = vunpack.c.l.bf16 %v5711
          %v6078 = vunpack.c.h.bf16 %v5711
          %v6079 = vunpack.c.l.bf16 %v5712
          %v6080 = vunpack.c.h.bf16 %v5712
          %v6081 = vunpack.c.l.bf16 %v5713
          %v6082 = vunpack.c.h.bf16 %v5713
          %v6083 = vunpack.c.l.bf16 %v5714
          %v6084 = vunpack.c.h.bf16 %v5714
          %v6085 = vunpack.c.l.bf16 %v5715
          %v6086 = vunpack.c.h.bf16 %v5715
          %v6087 = vunpack.c.l.bf16 %v5716
          %v6088 = vunpack.c.h.bf16 %v5716
          %v6089 = vunpack.c.l.bf16 %v5717
          %v6090 = vunpack.c.h.bf16 %v5717
          %v6091 = vunpack.c.l.bf16 %v5718
          %v6092 = vunpack.c.h.bf16 %v5718
          %v6093 = vunpack.c.l.bf16 %v5719
          %v6094 = vunpack.c.h.bf16 %v5719
          %v6095 = vunpack.c.l.bf16 %v5720
          %v6096 = vunpack.c.h.bf16 %v5720
          %v6097 = vunpack.c.l.bf16 %v5721
          %v6098 = vunpack.c.h.bf16 %v5721
          %v6099 = vunpack.c.l.bf16 %v5722
          %v6100 = vunpack.c.h.bf16 %v5722
          %v6101 = vunpack.c.l.bf16 %v5723
          %v6102 = vunpack.c.h.bf16 %v5723
          %v6103 = vunpack.c.l.bf16 %v5724
          %v6104 = vunpack.c.h.bf16 %v5724
          %v6105 = vunpack.c.l.bf16 %v5725
          %v6106 = vunpack.c.h.bf16 %v5725
          %v6107 = vunpack.c.l.bf16 %v5726
          %v6108 = vunpack.c.h.bf16 %v5726
          %v6109 = vunpack.c.l.bf16 %v5727
          %v6110 = vunpack.c.h.bf16 %v5727
          %v6111 = vunpack.c.l.bf16 %v5728
          %v6112 = vunpack.c.h.bf16 %v5728
          %v6113 = vld [vmem:[#allocation14] sm:$0xf]
          %v6115 = vlaneseq
          %v6116 = vshrl.u32 %v6115, 7
          %v6117 = vsub.s32 0, %v6116
          %v6118 = vrot.slane %v6113, %v6117
          %v6119 = vlaneseq
          %v6120 = vshrl.u32 %v6119, 7
          %v6121 = vsub.s32 1, %v6120
          %v6122 = vrot.slane %v6113, %v6121
          %v6123 = vlaneseq
          %v6124 = vshrl.u32 %v6123, 7
          %v6125 = vsub.s32 2, %v6124
          %v6126 = vrot.slane %v6113, %v6125
          %v6127 = vlaneseq
          %v6128 = vshrl.u32 %v6127, 7
          %v6129 = vsub.s32 3, %v6128
          %v6130 = vrot.slane %v6113, %v6129
          %v6137 = vcombine.high %v2753, %v2753
          %v6139 = vunpack.c.l.s4 1983009808
          %v6140 = vunpack.c.0.s8 %v6139
          %v6141 = vlaneseq
          %v6142 = vshrl.u32 %v6141, 7
          %v6143 = vsub.s32 %v6140, %v6142
          %v6144 = vrot.slane %v2753, %v6143
          %v6146 = vunpack.c.l.s4 1983009808
          %v6147 = vunpack.c.0.s8 %v6146
          %v6148 = vlaneseq
          %v6149 = vshrl.u32 %v6148, 7
          %v6150 = vsub.s32 %v6147, %v6149
          %v6151 = vrot.slane %v6137, %v6150
          %v6152 = vcombine.high %v6144, %v6144
          %v6153 = vcombine.high %v6151, %v6151
          %v6155 = vunpack.c.l.s4 1983009808
          %v6156 = vunpack.c.0.s8 %v6155
          %v6157 = vlaneseq
          %v6158 = vshrl.u32 %v6157, 7
          %v6159 = vsub.s32 %v6156, %v6158
          %v6160 = vrot.slane %v2754, %v6159
          %v6161 = vcombine.high %v6160, %v6160
          %6168 = vmatprep.subr.mxu0 %v5790
          %6169 = vmatpush1.msra.mxu0 %v5789
          %6170 = vmatprep.subr.mxu0 %v5786
          %6171 = vmatpush1.msra.mxu0 %v5785
          %6172 = vmatprep.subr.mxu0 %v5782
          %6173 = vmatpush1.msra.mxu0 %v5781
          %6174 = vmatprep.subr.mxu0 %v5778
          %6175 = vmatpush1.msra.mxu0 %v5777
          %6176 = vmatprep.subr.mxu0 %v5774
          %6177 = vmatpush1.msra.mxu0 %v5773
          %6178 = vmatprep.subr.mxu0 %v5770
          %6179 = vmatpush1.msra.mxu0 %v5769
          %6180 = vmatprep.subr.mxu0 %v5766
          %6181 = vmatpush1.msra.mxu0 %v5765
          %6182 = vmatprep.subr.mxu0 %v5762
          %6183 = vmatpush1.msra.mxu0 %v5761
          %6184 = vmatprep.subr.mxu0 %v5758
          %6185 = vmatpush1.msra.mxu0 %v5757
          %6186 = vmatprep.subr.mxu0 %v5754
          %6187 = vmatpush1.msra.mxu0 %v5753
          %6188 = vmatprep.subr.mxu0 %v5750
          %6189 = vmatpush1.msra.mxu0 %v5749
          %6190 = vmatprep.subr.mxu0 %v5746
          %6191 = vmatpush1.msra.mxu0 %v5745
          %6192 = vmatprep.subr.mxu0 %v5742
          %6193 = vmatpush1.msra.mxu0 %v5741
          %6194 = vmatprep.subr.mxu0 %v5738
          %6195 = vmatpush1.msra.mxu0 %v5737
          %6196 = vmatprep.subr.mxu0 %v5734
          %6197 = vmatpush1.msra.mxu0 %v5733
          %6198 = vmatprep.subr.mxu0 %v5730
          %6199 = vmatpush1.msra.mxu0 %v5729
          %6200 = vmatprep.subr.mxu0 %v5854
          %6201 = vmatpush2.msra.mxu0 %v5853
          %6202 = vmatprep.subr.mxu0 %v5850
          %6203 = vmatpush2.msra.mxu0 %v5849
          %6204 = vmatprep.subr.mxu0 %v5846
          %6205 = vmatpush2.msra.mxu0 %v5845
          %6206 = vmatprep.subr.mxu0 %v5842
          %6207 = vmatpush2.msra.mxu0 %v5841
          %6208 = vmatprep.subr.mxu0 %v5838
          %6209 = vmatpush2.msra.mxu0 %v5837
          %6210 = vmatprep.subr.mxu0 %v5834
          %6211 = vmatpush2.msra.mxu0 %v5833
          %6212 = vmatprep.subr.mxu0 %v5830
          %6213 = vmatpush2.msra.mxu0 %v5829
          %6214 = vmatprep.subr.mxu0 %v5826
          %6215 = vmatpush2.msra.mxu0 %v5825
          %6216 = vmatprep.subr.mxu0 %v5822
          %6217 = vmatpush2.msra.mxu0 %v5821
          %6218 = vmatprep.subr.mxu0 %v5818
          %6219 = vmatpush2.msra.mxu0 %v5817
          %6220 = vmatprep.subr.mxu0 %v5814
          %6221 = vmatpush2.msra.mxu0 %v5813
          %6222 = vmatprep.subr.mxu0 %v5810
          %6223 = vmatpush2.msra.mxu0 %v5809
          %6224 = vmatprep.subr.mxu0 %v5806
          %6225 = vmatpush2.msra.mxu0 %v5805
          %6226 = vmatprep.subr.mxu0 %v5802
          %6227 = vmatpush2.msra.mxu0 %v5801
          %6228 = vmatprep.subr.mxu0 %v5798
          %6229 = vmatpush2.msra.mxu0 %v5797
          %6230 = vmatprep.subr.mxu0 %v5794
          %6231 = vmatpush2.msra.mxu0 %v5793
          %6232 = vmatprep.mubr.f32.mxu0 %v6152
          %6233 = vmatmul.mubr.f32.gmra.mxu0 %v6144
          %v6234 = vpop.f32.mrf.mxu0
          %v6235 = vadd.f32 %v6118, %v6234
          %v6236 = vpop.f32.mrf.mxu0
          %v6237 = vadd.f32 %v6122, %v6236
          %6238 = vdwg.mxu0
          %6239 = vmatprep.subr.mxu0 %v5918
          %6240 = vmatpush1.msra.mxu0 %v5917
          %6241 = vmatprep.subr.mxu0 %v5914
          %6242 = vmatpush1.msra.mxu0 %v5913
          %6243 = vmatprep.subr.mxu0 %v5910
          %6244 = vmatpush1.msra.mxu0 %v5909
          %6245 = vmatprep.subr.mxu0 %v5906
          %6246 = vmatpush1.msra.mxu0 %v5905
          %6247 = vmatprep.subr.mxu0 %v5902
          %6248 = vmatpush1.msra.mxu0 %v5901
          %6249 = vmatprep.subr.mxu0 %v5898
          %6250 = vmatpush1.msra.mxu0 %v5897
          %6251 = vmatprep.subr.mxu0 %v5894
          %6252 = vmatpush1.msra.mxu0 %v5893
          %6253 = vmatprep.subr.mxu0 %v5890
          %6254 = vmatpush1.msra.mxu0 %v5889
          %6255 = vmatprep.subr.mxu0 %v5886
          %6256 = vmatpush1.msra.mxu0 %v5885
          %6257 = vmatprep.subr.mxu0 %v5882
          %6258 = vmatpush1.msra.mxu0 %v5881
          %6259 = vmatprep.subr.mxu0 %v5878
          %6260 = vmatpush1.msra.mxu0 %v5877
          %6261 = vmatprep.subr.mxu0 %v5874
          %6262 = vmatpush1.msra.mxu0 %v5873
          %6263 = vmatprep.subr.mxu0 %v5870
          %6264 = vmatpush1.msra.mxu0 %v5869
          %6265 = vmatprep.subr.mxu0 %v5866
          %6266 = vmatpush1.msra.mxu0 %v5865
          %6267 = vmatprep.subr.mxu0 %v5862
          %6268 = vmatpush1.msra.mxu0 %v5861
          %6269 = vmatprep.subr.mxu0 %v5858
          %6270 = vmatpush1.msra.mxu0 %v5857
          %6271 = vmatprep.subr.mxu0 %v5982
          %6272 = vmatpush2.msra.mxu0 %v5981
          %6273 = vmatprep.subr.mxu0 %v5978
          %6274 = vmatpush2.msra.mxu0 %v5977
          %6275 = vmatprep.subr.mxu0 %v5974
          %6276 = vmatpush2.msra.mxu0 %v5973
          %6277 = vmatprep.subr.mxu0 %v5970
          %6278 = vmatpush2.msra.mxu0 %v5969
          %6279 = vmatprep.subr.mxu0 %v5966
          %6280 = vmatpush2.msra.mxu0 %v5965
          %6281 = vmatprep.subr.mxu0 %v5962
          %6282 = vmatpush2.msra.mxu0 %v5961
          %6283 = vmatprep.subr.mxu0 %v5958
          %6284 = vmatpush2.msra.mxu0 %v5957
          %6285 = vmatprep.subr.mxu0 %v5954
          %6286 = vmatpush2.msra.mxu0 %v5953
          %6287 = vmatprep.subr.mxu0 %v5950
          %6288 = vmatpush2.msra.mxu0 %v5949
          %6289 = vmatprep.subr.mxu0 %v5946
          %6290 = vmatpush2.msra.mxu0 %v5945
          %6291 = vmatprep.subr.mxu0 %v5942
          %6292 = vmatpush2.msra.mxu0 %v5941
          %6293 = vmatprep.subr.mxu0 %v5938
          %6294 = vmatpush2.msra.mxu0 %v5937
          %6295 = vmatprep.subr.mxu0 %v5934
          %6296 = vmatpush2.msra.mxu0 %v5933
          %6297 = vmatprep.subr.mxu0 %v5930
          %6298 = vmatpush2.msra.mxu0 %v5929
          %6299 = vmatprep.subr.mxu0 %v5926
          %6300 = vmatpush2.msra.mxu0 %v5925
          %6301 = vmatprep.subr.mxu0 %v5922
          %6302 = vmatpush2.msra.mxu0 %v5921
          %6303 = vmatprep.mubr.f32.mxu0 %v6153
          %6304 = vmatmul.mubr.f32.gmra.mxu0 %v6151
          %v6305 = vpop.f32.mrf.mxu0
          %v6306 = vadd.f32 %v6235, %v6305
          %v6307 = vpop.f32.mrf.mxu0
          %v6308 = vadd.f32 %v6237, %v6307
          %6309 = vdwg.mxu0
          %6310 = vmatprep.subr.mxu0 %v6046
          %6311 = vmatpush1.msra.mxu0 %v6045
          %6312 = vmatprep.subr.mxu0 %v6042
          %6313 = vmatpush1.msra.mxu0 %v6041
          %6314 = vmatprep.subr.mxu0 %v6038
          %6315 = vmatpush1.msra.mxu0 %v6037
          %6316 = vmatprep.subr.mxu0 %v6034
          %6317 = vmatpush1.msra.mxu0 %v6033
          %6318 = vmatprep.subr.mxu0 %v6030
          %6319 = vmatpush1.msra.mxu0 %v6029
          %6320 = vmatprep.subr.mxu0 %v6026
          %6321 = vmatpush1.msra.mxu0 %v6025
          %6322 = vmatprep.subr.mxu0 %v6022
          %6323 = vmatpush1.msra.mxu0 %v6021
          %6324 = vmatprep.subr.mxu0 %v6018
          %6325 = vmatpush1.msra.mxu0 %v6017
          %6326 = vmatprep.subr.mxu0 %v6014
          %6327 = vmatpush1.msra.mxu0 %v6013
          %6328 = vmatprep.subr.mxu0 %v6010
          %6329 = vmatpush1.msra.mxu0 %v6009
          %6330 = vmatprep.subr.mxu0 %v6006
          %6331 = vmatpush1.msra.mxu0 %v6005
          %6332 = vmatprep.subr.mxu0 %v6002
          %6333 = vmatpush1.msra.mxu0 %v6001
          %6334 = vmatprep.subr.mxu0 %v5998
          %6335 = vmatpush1.msra.mxu0 %v5997
          %6336 = vmatprep.subr.mxu0 %v5994
          %6337 = vmatpush1.msra.mxu0 %v5993
          %6338 = vmatprep.subr.mxu0 %v5990
          %6339 = vmatpush1.msra.mxu0 %v5989
          %6340 = vmatprep.subr.mxu0 %v5986
          %6341 = vmatpush1.msra.mxu0 %v5985
          %6342 = vmatprep.subr.mxu0 %v6110
          %6343 = vmatpush2.msra.mxu0 %v6109
          %6344 = vmatprep.subr.mxu0 %v6106
          %6345 = vmatpush2.msra.mxu0 %v6105
          %6346 = vmatprep.subr.mxu0 %v6102
          %6347 = vmatpush2.msra.mxu0 %v6101
          %6348 = vmatprep.subr.mxu0 %v6098
          %6349 = vmatpush2.msra.mxu0 %v6097
          %6350 = vmatprep.subr.mxu0 %v6094
          %6351 = vmatpush2.msra.mxu0 %v6093
          %6352 = vmatprep.subr.mxu0 %v6090
          %6353 = vmatpush2.msra.mxu0 %v6089
          %6354 = vmatprep.subr.mxu0 %v6086
          %6355 = vmatpush2.msra.mxu0 %v6085
          %6356 = vmatprep.subr.mxu0 %v6082
          %6357 = vmatpush2.msra.mxu0 %v6081
          %6358 = vmatprep.subr.mxu0 %v6078
          %6359 = vmatpush2.msra.mxu0 %v6077
          %6360 = vmatprep.subr.mxu0 %v6074
          %6361 = vmatpush2.msra.mxu0 %v6073
          %6362 = vmatprep.subr.mxu0 %v6070
          %6363 = vmatpush2.msra.mxu0 %v6069
          %6364 = vmatprep.subr.mxu0 %v6066
          %6365 = vmatpush2.msra.mxu0 %v6065
          %6366 = vmatprep.subr.mxu0 %v6062
          %6367 = vmatpush2.msra.mxu0 %v6061
          %6368 = vmatprep.subr.mxu0 %v6058
          %6369 = vmatpush2.msra.mxu0 %v6057
          %6370 = vmatprep.subr.mxu0 %v6054
          %6371 = vmatpush2.msra.mxu0 %v6053
          %6372 = vmatprep.subr.mxu0 %v6050
          %6373 = vmatpush2.msra.mxu0 %v6049
          %6374 = vmatprep.mubr.f32.mxu0 %v6161
          %6375 = vmatmul.mubr.f32.gmra.mxu0 %v6160
          %v6376 = vpop.f32.mrf.mxu0
          %v6377 = vadd.f32 %v6306, %v6376
          %v6378 = vpop.f32.mrf.mxu0
          %v6379 = vadd.f32 %v6308, %v6378
          %6380 = vdwg.mxu0
          %6381 = vmatprep.subr.mxu0 %v5792
          %6382 = vmatpush1.msra.mxu0 %v5791
          %6383 = vmatprep.subr.mxu0 %v5788
          %6384 = vmatpush1.msra.mxu0 %v5787
          %6385 = vmatprep.subr.mxu0 %v5784
          %6386 = vmatpush1.msra.mxu0 %v5783
          %6387 = vmatprep.subr.mxu0 %v5780
          %6388 = vmatpush1.msra.mxu0 %v5779
          %6389 = vmatprep.subr.mxu0 %v5776
          %6390 = vmatpush1.msra.mxu0 %v5775
          %6391 = vmatprep.subr.mxu0 %v5772
          %6392 = vmatpush1.msra.mxu0 %v5771
          %6393 = vmatprep.subr.mxu0 %v5768
          %6394 = vmatpush1.msra.mxu0 %v5767
          %6395 = vmatprep.subr.mxu0 %v5764
          %6396 = vmatpush1.msra.mxu0 %v5763
          %6397 = vmatprep.subr.mxu0 %v5760
          %6398 = vmatpush1.msra.mxu0 %v5759
          %6399 = vmatprep.subr.mxu0 %v5756
          %6400 = vmatpush1.msra.mxu0 %v5755
          %6401 = vmatprep.subr.mxu0 %v5752
          %6402 = vmatpush1.msra.mxu0 %v5751
          %6403 = vmatprep.subr.mxu0 %v5748
          %6404 = vmatpush1.msra.mxu0 %v5747
          %6405 = vmatprep.subr.mxu0 %v5744
          %6406 = vmatpush1.msra.mxu0 %v5743
          %6407 = vmatprep.subr.mxu0 %v5740
          %6408 = vmatpush1.msra.mxu0 %v5739
          %6409 = vmatprep.subr.mxu0 %v5736
          %6410 = vmatpush1.msra.mxu0 %v5735
          %6411 = vmatprep.subr.mxu0 %v5732
          %6412 = vmatpush1.msra.mxu0 %v5731
          %6413 = vmatprep.subr.mxu0 %v5856
          %6414 = vmatpush2.msra.mxu0 %v5855
          %6415 = vmatprep.subr.mxu0 %v5852
          %6416 = vmatpush2.msra.mxu0 %v5851
          %6417 = vmatprep.subr.mxu0 %v5848
          %6418 = vmatpush2.msra.mxu0 %v5847
          %6419 = vmatprep.subr.mxu0 %v5844
          %6420 = vmatpush2.msra.mxu0 %v5843
          %6421 = vmatprep.subr.mxu0 %v5840
          %6422 = vmatpush2.msra.mxu0 %v5839
          %6423 = vmatprep.subr.mxu0 %v5836
          %6424 = vmatpush2.msra.mxu0 %v5835
          %6425 = vmatprep.subr.mxu0 %v5832
          %6426 = vmatpush2.msra.mxu0 %v5831
          %6427 = vmatprep.subr.mxu0 %v5828
          %6428 = vmatpush2.msra.mxu0 %v5827
          %6429 = vmatprep.subr.mxu0 %v5824
          %6430 = vmatpush2.msra.mxu0 %v5823
          %6431 = vmatprep.subr.mxu0 %v5820
          %6432 = vmatpush2.msra.mxu0 %v5819
          %6433 = vmatprep.subr.mxu0 %v5816
          %6434 = vmatpush2.msra.mxu0 %v5815
          %6435 = vmatprep.subr.mxu0 %v5812
          %6436 = vmatpush2.msra.mxu0 %v5811
          %6437 = vmatprep.subr.mxu0 %v5808
          %6438 = vmatpush2.msra.mxu0 %v5807
          %6439 = vmatprep.subr.mxu0 %v5804
          %6440 = vmatpush2.msra.mxu0 %v5803
          %6441 = vmatprep.subr.mxu0 %v5800
          %6442 = vmatpush2.msra.mxu0 %v5799
          %6443 = vmatprep.subr.mxu0 %v5796
          %6444 = vmatpush2.msra.mxu0 %v5795
          %6445 = vmatprep.mubr.f32.mxu0 %v6152
          %6446 = vmatmul.mubr.f32.gmra.mxu0 %v6144
          %v6447 = vpop.f32.mrf.mxu0
          %v6448 = vadd.f32 %v6126, %v6447
          %v6449 = vpop.f32.mrf.mxu0
          %v6450 = vadd.f32 %v6130, %v6449
          %6451 = vdwg.mxu0
          %6452 = vmatprep.subr.mxu0 %v5920
          %6453 = vmatpush1.msra.mxu0 %v5919
          %6454 = vmatprep.subr.mxu0 %v5916
          %6455 = vmatpush1.msra.mxu0 %v5915
          %6456 = vmatprep.subr.mxu0 %v5912
          %6457 = vmatpush1.msra.mxu0 %v5911
          %6458 = vmatprep.subr.mxu0 %v5908
          %6459 = vmatpush1.msra.mxu0 %v5907
          %6460 = vmatprep.subr.mxu0 %v5904
          %6461 = vmatpush1.msra.mxu0 %v5903
          %6462 = vmatprep.subr.mxu0 %v5900
          %6463 = vmatpush1.msra.mxu0 %v5899
          %6464 = vmatprep.subr.mxu0 %v5896
          %6465 = vmatpush1.msra.mxu0 %v5895
          %6466 = vmatprep.subr.mxu0 %v5892
          %6467 = vmatpush1.msra.mxu0 %v5891
          %6468 = vmatprep.subr.mxu0 %v5888
          %6469 = vmatpush1.msra.mxu0 %v5887
          %6470 = vmatprep.subr.mxu0 %v5884
          %6471 = vmatpush1.msra.mxu0 %v5883
          %6472 = vmatprep.subr.mxu0 %v5880
          %6473 = vmatpush1.msra.mxu0 %v5879
          %6474 = vmatprep.subr.mxu0 %v5876
          %6475 = vmatpush1.msra.mxu0 %v5875
          %6476 = vmatprep.subr.mxu0 %v5872
          %6477 = vmatpush1.msra.mxu0 %v5871
          %6478 = vmatprep.subr.mxu0 %v5868
          %6479 = vmatpush1.msra.mxu0 %v5867
          %6480 = vmatprep.subr.mxu0 %v5864
          %6481 = vmatpush1.msra.mxu0 %v5863
          %6482 = vmatprep.subr.mxu0 %v5860
          %6483 = vmatpush1.msra.mxu0 %v5859
          %6484 = vmatprep.subr.mxu0 %v5984
          %6485 = vmatpush2.msra.mxu0 %v5983
          %6486 = vmatprep.subr.mxu0 %v5980
          %6487 = vmatpush2.msra.mxu0 %v5979
          %6488 = vmatprep.subr.mxu0 %v5976
          %6489 = vmatpush2.msra.mxu0 %v5975
          %6490 = vmatprep.subr.mxu0 %v5972
          %6491 = vmatpush2.msra.mxu0 %v5971
          %6492 = vmatprep.subr.mxu0 %v5968
          %6493 = vmatpush2.msra.mxu0 %v5967
          %6494 = vmatprep.subr.mxu0 %v5964
          %6495 = vmatpush2.msra.mxu0 %v5963
          %6496 = vmatprep.subr.mxu0 %v5960
          %6497 = vmatpush2.msra.mxu0 %v5959
          %6498 = vmatprep.subr.mxu0 %v5956
          %6499 = vmatpush2.msra.mxu0 %v5955
          %6500 = vmatprep.subr.mxu0 %v5952
          %6501 = vmatpush2.msra.mxu0 %v5951
          %6502 = vmatprep.subr.mxu0 %v5948
          %6503 = vmatpush2.msra.mxu0 %v5947
          %6504 = vmatprep.subr.mxu0 %v5944
          %6505 = vmatpush2.msra.mxu0 %v5943
          %6506 = vmatprep.subr.mxu0 %v5940
          %6507 = vmatpush2.msra.mxu0 %v5939
          %6508 = vmatprep.subr.mxu0 %v5936
          %6509 = vmatpush2.msra.mxu0 %v5935
          %6510 = vmatprep.subr.mxu0 %v5932
          %6511 = vmatpush2.msra.mxu0 %v5931
          %6512 = vmatprep.subr.mxu0 %v5928
          %6513 = vmatpush2.msra.mxu0 %v5927
          %6514 = vmatprep.subr.mxu0 %v5924
          %6515 = vmatpush2.msra.mxu0 %v5923
          %6516 = vmatprep.mubr.f32.mxu0 %v6153
          %6517 = vmatmul.mubr.f32.gmra.mxu0 %v6151
          %v6518 = vpop.f32.mrf.mxu0
          %v6519 = vadd.f32 %v6448, %v6518
          %v6520 = vpop.f32.mrf.mxu0
          %v6521 = vadd.f32 %v6450, %v6520
          %6522 = vdwg.mxu0
          %6523 = vmatprep.subr.mxu0 %v6048
          %6524 = vmatpush1.msra.mxu0 %v6047
          %6525 = vmatprep.subr.mxu0 %v6044
          %6526 = vmatpush1.msra.mxu0 %v6043
          %6527 = vmatprep.subr.mxu0 %v6040
          %6528 = vmatpush1.msra.mxu0 %v6039
          %6529 = vmatprep.subr.mxu0 %v6036
          %6530 = vmatpush1.msra.mxu0 %v6035
          %6531 = vmatprep.subr.mxu0 %v6032
          %6532 = vmatpush1.msra.mxu0 %v6031
          %6533 = vmatprep.subr.mxu0 %v6028
          %6534 = vmatpush1.msra.mxu0 %v6027
          %6535 = vmatprep.subr.mxu0 %v6024
          %6536 = vmatpush1.msra.mxu0 %v6023
          %6537 = vmatprep.subr.mxu0 %v6020
          %6538 = vmatpush1.msra.mxu0 %v6019
          %6539 = vmatprep.subr.mxu0 %v6016
          %6540 = vmatpush1.msra.mxu0 %v6015
          %6541 = vmatprep.subr.mxu0 %v6012
          %6542 = vmatpush1.msra.mxu0 %v6011
          %6543 = vmatprep.subr.mxu0 %v6008
          %6544 = vmatpush1.msra.mxu0 %v6007
          %6545 = vmatprep.subr.mxu0 %v6004
          %6546 = vmatpush1.msra.mxu0 %v6003
          %6547 = vmatprep.subr.mxu0 %v6000
          %6548 = vmatpush1.msra.mxu0 %v5999
          %6549 = vmatprep.subr.mxu0 %v5996
          %6550 = vmatpush1.msra.mxu0 %v5995
          %6551 = vmatprep.subr.mxu0 %v5992
          %6552 = vmatpush1.msra.mxu0 %v5991
          %6553 = vmatprep.subr.mxu0 %v5988
          %6554 = vmatpush1.msra.mxu0 %v5987
          %6555 = vmatprep.subr.mxu0 %v6112
          %6556 = vmatpush2.msra.mxu0 %v6111
          %6557 = vmatprep.subr.mxu0 %v6108
          %6558 = vmatpush2.msra.mxu0 %v6107
          %6559 = vmatprep.subr.mxu0 %v6104
          %6560 = vmatpush2.msra.mxu0 %v6103
          %6561 = vmatprep.subr.mxu0 %v6100
          %6562 = vmatpush2.msra.mxu0 %v6099
          %6563 = vmatprep.subr.mxu0 %v6096
          %6564 = vmatpush2.msra.mxu0 %v6095
          %6565 = vmatprep.subr.mxu0 %v6092
          %6566 = vmatpush2.msra.mxu0 %v6091
          %6567 = vmatprep.subr.mxu0 %v6088
          %6568 = vmatpush2.msra.mxu0 %v6087
          %6569 = vmatprep.subr.mxu0 %v6084
          %6570 = vmatpush2.msra.mxu0 %v6083
          %6571 = vmatprep.subr.mxu0 %v6080
          %6572 = vmatpush2.msra.mxu0 %v6079
          %6573 = vmatprep.subr.mxu0 %v6076
          %6574 = vmatpush2.msra.mxu0 %v6075
          %6575 = vmatprep.subr.mxu0 %v6072
          %6576 = vmatpush2.msra.mxu0 %v6071
          %6577 = vmatprep.subr.mxu0 %v6068
          %6578 = vmatpush2.msra.mxu0 %v6067
          %6579 = vmatprep.subr.mxu0 %v6064
          %6580 = vmatpush2.msra.mxu0 %v6063
          %6581 = vmatprep.subr.mxu0 %v6060
          %6582 = vmatpush2.msra.mxu0 %v6059
          %6583 = vmatprep.subr.mxu0 %v6056
          %6584 = vmatpush2.msra.mxu0 %v6055
          %6585 = vmatprep.subr.mxu0 %v6052
          %6586 = vmatpush2.msra.mxu0 %v6051
          %6587 = vmatprep.mubr.f32.mxu0 %v6161
          %6588 = vmatmul.mubr.f32.gmra.mxu0 %v6160
          %v6589 = vpop.f32.mrf.mxu0
          %v6590 = vadd.f32 %v6519, %v6589
          %v6591 = vpop.f32.mrf.mxu0
          %v6592 = vadd.f32 %v6521, %v6591
          %6593 = vdwg.mxu0
          %v6594 = vmax.f32 %v4965, 0.0
          %v6595 = vmax.f32 %v4967, 0.0
          %v6596 = vmax.f32 %v5533, 0.0
          %v6597 = vmax.f32 %v5535, 0.0
          %v6598 = vmax.f32 %v6377, 0.0
          %v6599 = vmax.f32 %v6379, 0.0
          %v6600 = vmax.f32 %v6590, 0.0
          %v6601 = vmax.f32 %v6592, 0.0
          %v6602 = vld [vmem:[#allocation15] sm:$0xff]
          %v6603 = vld [vmem:[#allocation15 + $0x8] sm:$0xff]
          %v6604 = vld [vmem:[#allocation15 + $0x10] sm:$0xff]
          %v6605 = vld [vmem:[#allocation15 + $0x18] sm:$0xff]
          %v6606 = vld [vmem:[#allocation15 + $0x20] sm:$0xff]
          %v6607 = vld [vmem:[#allocation15 + $0x28] sm:$0xff]
          %v6608 = vld [vmem:[#allocation15 + $0x30] sm:$0xff]
          %v6609 = vld [vmem:[#allocation15 + $0x38] sm:$0xff]
          %v6610 = vld [vmem:[#allocation15 + $0x40] sm:$0xff]
          %v6611 = vld [vmem:[#allocation15 + $0x48] sm:$0xff]
          %v6612 = vld [vmem:[#allocation15 + $0x50] sm:$0xff]
          %v6613 = vld [vmem:[#allocation15 + $0x58] sm:$0xff]
          %v6614 = vld [vmem:[#allocation15 + $0x60] sm:$0xff]
          %v6615 = vld [vmem:[#allocation15 + $0x68] sm:$0xff]
          %v6616 = vld [vmem:[#allocation15 + $0x70] sm:$0xff]
          %v6617 = vld [vmem:[#allocation15 + $0x78] sm:$0xff]
          %v6618 = vld [vmem:[#allocation15 + $0x80] sm:$0xff]
          %v6619 = vld [vmem:[#allocation15 + $0x88] sm:$0xff]
          %v6620 = vld [vmem:[#allocation15 + $0x90] sm:$0xff]
          %v6621 = vld [vmem:[#allocation15 + $0x98] sm:$0xff]
          %v6622 = vld [vmem:[#allocation15 + $0xa0] sm:$0xff]
          %v6623 = vld [vmem:[#allocation15 + $0xa8] sm:$0xff]
          %v6624 = vld [vmem:[#allocation15 + $0xb0] sm:$0xff]
          %v6625 = vld [vmem:[#allocation15 + $0xb8] sm:$0xff]
          %v6626 = vld [vmem:[#allocation15 + $0xc0] sm:$0xff]
          %v6627 = vld [vmem:[#allocation15 + $0xc8] sm:$0xff]
          %v6628 = vld [vmem:[#allocation15 + $0xd0] sm:$0xff]
          %v6629 = vld [vmem:[#allocation15 + $0xd8] sm:$0xff]
          %v6630 = vld [vmem:[#allocation15 + $0xe0] sm:$0xff]
          %v6631 = vld [vmem:[#allocation15 + $0xe8] sm:$0xff]
          %v6632 = vld [vmem:[#allocation15 + $0xf0] sm:$0xff]
          %v6633 = vld [vmem:[#allocation15 + $0xf8] sm:$0xff]
          %v6634 = vld [vmem:[#allocation15 + $0x100] sm:$0xff]
          %v6635 = vld [vmem:[#allocation15 + $0x108] sm:$0xff]
          %v6636 = vld [vmem:[#allocation15 + $0x110] sm:$0xff]
          %v6637 = vld [vmem:[#allocation15 + $0x118] sm:$0xff]
          %v6638 = vld [vmem:[#allocation15 + $0x120] sm:$0xff]
          %v6639 = vld [vmem:[#allocation15 + $0x128] sm:$0xff]
          %v6640 = vld [vmem:[#allocation15 + $0x130] sm:$0xff]
          %v6641 = vld [vmem:[#allocation15 + $0x138] sm:$0xff]
          %v6642 = vld [vmem:[#allocation15 + $0x140] sm:$0xff]
          %v6643 = vld [vmem:[#allocation15 + $0x148] sm:$0xff]
          %v6644 = vld [vmem:[#allocation15 + $0x150] sm:$0xff]
          %v6645 = vld [vmem:[#allocation15 + $0x158] sm:$0xff]
          %v6646 = vld [vmem:[#allocation15 + $0x160] sm:$0xff]
          %v6647 = vld [vmem:[#allocation15 + $0x168] sm:$0xff]
          %v6648 = vld [vmem:[#allocation15 + $0x170] sm:$0xff]
          %v6649 = vld [vmem:[#allocation15 + $0x178] sm:$0xff]
          %v6650 = vld [vmem:[#allocation15 + $0x180] sm:$0xff]
          %v6651 = vld [vmem:[#allocation15 + $0x188] sm:$0xff]
          %v6652 = vld [vmem:[#allocation15 + $0x190] sm:$0xff]
          %v6653 = vld [vmem:[#allocation15 + $0x198] sm:$0xff]
          %v6654 = vld [vmem:[#allocation15 + $0x1a0] sm:$0xff]
          %v6655 = vld [vmem:[#allocation15 + $0x1a8] sm:$0xff]
          %v6656 = vld [vmem:[#allocation15 + $0x1b0] sm:$0xff]
          %v6657 = vld [vmem:[#allocation15 + $0x1b8] sm:$0xff]
          %v6658 = vld [vmem:[#allocation15 + $0x1c0] sm:$0xff]
          %v6659 = vld [vmem:[#allocation15 + $0x1c8] sm:$0xff]
          %v6660 = vld [vmem:[#allocation15 + $0x1d0] sm:$0xff]
          %v6661 = vld [vmem:[#allocation15 + $0x1d8] sm:$0xff]
          %v6662 = vld [vmem:[#allocation15 + $0x1e0] sm:$0xff]
          %v6663 = vld [vmem:[#allocation15 + $0x1e8] sm:$0xff]
          %v6664 = vld [vmem:[#allocation15 + $0x1f0] sm:$0xff]
          %v6665 = vld [vmem:[#allocation15 + $0x1f8] sm:$0xff]
          %v6666 = vunpack.c.l.bf16 %v6602
          %v6667 = vunpack.c.h.bf16 %v6602
          %v6668 = vunpack.c.l.bf16 %v6603
          %v6669 = vunpack.c.h.bf16 %v6603
          %v6670 = vunpack.c.l.bf16 %v6604
          %v6671 = vunpack.c.h.bf16 %v6604
          %v6672 = vunpack.c.l.bf16 %v6605
          %v6673 = vunpack.c.h.bf16 %v6605
          %v6674 = vunpack.c.l.bf16 %v6606
          %v6675 = vunpack.c.h.bf16 %v6606
          %v6676 = vunpack.c.l.bf16 %v6607
          %v6677 = vunpack.c.h.bf16 %v6607
          %v6678 = vunpack.c.l.bf16 %v6608
          %v6679 = vunpack.c.h.bf16 %v6608
          %v6680 = vunpack.c.l.bf16 %v6609
          %v6681 = vunpack.c.h.bf16 %v6609
          %v6682 = vunpack.c.l.bf16 %v6610
          %v6683 = vunpack.c.h.bf16 %v6610
          %v6684 = vunpack.c.l.bf16 %v6611
          %v6685 = vunpack.c.h.bf16 %v6611
          %v6686 = vunpack.c.l.bf16 %v6612
          %v6687 = vunpack.c.h.bf16 %v6612
          %v6688 = vunpack.c.l.bf16 %v6613
          %v6689 = vunpack.c.h.bf16 %v6613
          %v6690 = vunpack.c.l.bf16 %v6614
          %v6691 = vunpack.c.h.bf16 %v6614
          %v6692 = vunpack.c.l.bf16 %v6615
          %v6693 = vunpack.c.h.bf16 %v6615
          %v6694 = vunpack.c.l.bf16 %v6616
          %v6695 = vunpack.c.h.bf16 %v6616
          %v6696 = vunpack.c.l.bf16 %v6617
          %v6697 = vunpack.c.h.bf16 %v6617
          %v6698 = vunpack.c.l.bf16 %v6618
          %v6699 = vunpack.c.h.bf16 %v6618
          %v6700 = vunpack.c.l.bf16 %v6619
          %v6701 = vunpack.c.h.bf16 %v6619
          %v6702 = vunpack.c.l.bf16 %v6620
          %v6703 = vunpack.c.h.bf16 %v6620
          %v6704 = vunpack.c.l.bf16 %v6621
          %v6705 = vunpack.c.h.bf16 %v6621
          %v6706 = vunpack.c.l.bf16 %v6622
          %v6707 = vunpack.c.h.bf16 %v6622
          %v6708 = vunpack.c.l.bf16 %v6623
          %v6709 = vunpack.c.h.bf16 %v6623
          %v6710 = vunpack.c.l.bf16 %v6624
          %v6711 = vunpack.c.h.bf16 %v6624
          %v6712 = vunpack.c.l.bf16 %v6625
          %v6713 = vunpack.c.h.bf16 %v6625
          %v6714 = vunpack.c.l.bf16 %v6626
          %v6715 = vunpack.c.h.bf16 %v6626
          %v6716 = vunpack.c.l.bf16 %v6627
          %v6717 = vunpack.c.h.bf16 %v6627
          %v6718 = vunpack.c.l.bf16 %v6628
          %v6719 = vunpack.c.h.bf16 %v6628
          %v6720 = vunpack.c.l.bf16 %v6629
          %v6721 = vunpack.c.h.bf16 %v6629
          %v6722 = vunpack.c.l.bf16 %v6630
          %v6723 = vunpack.c.h.bf16 %v6630
          %v6724 = vunpack.c.l.bf16 %v6631
          %v6725 = vunpack.c.h.bf16 %v6631
          %v6726 = vunpack.c.l.bf16 %v6632
          %v6727 = vunpack.c.h.bf16 %v6632
          %v6728 = vunpack.c.l.bf16 %v6633
          %v6729 = vunpack.c.h.bf16 %v6633
          %v6730 = vunpack.c.l.bf16 %v6634
          %v6731 = vunpack.c.h.bf16 %v6634
          %v6732 = vunpack.c.l.bf16 %v6635
          %v6733 = vunpack.c.h.bf16 %v6635
          %v6734 = vunpack.c.l.bf16 %v6636
          %v6735 = vunpack.c.h.bf16 %v6636
          %v6736 = vunpack.c.l.bf16 %v6637
          %v6737 = vunpack.c.h.bf16 %v6637
          %v6738 = vunpack.c.l.bf16 %v6638
          %v6739 = vunpack.c.h.bf16 %v6638
          %v6740 = vunpack.c.l.bf16 %v6639
          %v6741 = vunpack.c.h.bf16 %v6639
          %v6742 = vunpack.c.l.bf16 %v6640
          %v6743 = vunpack.c.h.bf16 %v6640
          %v6744 = vunpack.c.l.bf16 %v6641
          %v6745 = vunpack.c.h.bf16 %v6641
          %v6746 = vunpack.c.l.bf16 %v6642
          %v6747 = vunpack.c.h.bf16 %v6642
          %v6748 = vunpack.c.l.bf16 %v6643
          %v6749 = vunpack.c.h.bf16 %v6643
          %v6750 = vunpack.c.l.bf16 %v6644
          %v6751 = vunpack.c.h.bf16 %v6644
          %v6752 = vunpack.c.l.bf16 %v6645
          %v6753 = vunpack.c.h.bf16 %v6645
          %v6754 = vunpack.c.l.bf16 %v6646
          %v6755 = vunpack.c.h.bf16 %v6646
          %v6756 = vunpack.c.l.bf16 %v6647
          %v6757 = vunpack.c.h.bf16 %v6647
          %v6758 = vunpack.c.l.bf16 %v6648
          %v6759 = vunpack.c.h.bf16 %v6648
          %v6760 = vunpack.c.l.bf16 %v6649
          %v6761 = vunpack.c.h.bf16 %v6649
          %v6762 = vunpack.c.l.bf16 %v6650
          %v6763 = vunpack.c.h.bf16 %v6650
          %v6764 = vunpack.c.l.bf16 %v6651
          %v6765 = vunpack.c.h.bf16 %v6651
          %v6766 = vunpack.c.l.bf16 %v6652
          %v6767 = vunpack.c.h.bf16 %v6652
          %v6768 = vunpack.c.l.bf16 %v6653
          %v6769 = vunpack.c.h.bf16 %v6653
          %v6770 = vunpack.c.l.bf16 %v6654
          %v6771 = vunpack.c.h.bf16 %v6654
          %v6772 = vunpack.c.l.bf16 %v6655
          %v6773 = vunpack.c.h.bf16 %v6655
          %v6774 = vunpack.c.l.bf16 %v6656
          %v6775 = vunpack.c.h.bf16 %v6656
          %v6776 = vunpack.c.l.bf16 %v6657
          %v6777 = vunpack.c.h.bf16 %v6657
          %v6778 = vunpack.c.l.bf16 %v6658
          %v6779 = vunpack.c.h.bf16 %v6658
          %v6780 = vunpack.c.l.bf16 %v6659
          %v6781 = vunpack.c.h.bf16 %v6659
          %v6782 = vunpack.c.l.bf16 %v6660
          %v6783 = vunpack.c.h.bf16 %v6660
          %v6784 = vunpack.c.l.bf16 %v6661
          %v6785 = vunpack.c.h.bf16 %v6661
          %v6786 = vunpack.c.l.bf16 %v6662
          %v6787 = vunpack.c.h.bf16 %v6662
          %v6788 = vunpack.c.l.bf16 %v6663
          %v6789 = vunpack.c.h.bf16 %v6663
          %v6790 = vunpack.c.l.bf16 %v6664
          %v6791 = vunpack.c.h.bf16 %v6664
          %v6792 = vunpack.c.l.bf16 %v6665
          %v6793 = vunpack.c.h.bf16 %v6665
          %v6794 = vld [vmem:[#allocation15 + $0x200] sm:$0xff]
          %v6795 = vld [vmem:[#allocation15 + $0x208] sm:$0xff]
          %v6796 = vld [vmem:[#allocation15 + $0x210] sm:$0xff]
          %v6797 = vld [vmem:[#allocation15 + $0x218] sm:$0xff]
          %v6798 = vld [vmem:[#allocation15 + $0x220] sm:$0xff]
          %v6799 = vld [vmem:[#allocation15 + $0x228] sm:$0xff]
          %v6800 = vld [vmem:[#allocation15 + $0x230] sm:$0xff]
          %v6801 = vld [vmem:[#allocation15 + $0x238] sm:$0xff]
          %v6802 = vld [vmem:[#allocation15 + $0x240] sm:$0xff]
          %v6803 = vld [vmem:[#allocation15 + $0x248] sm:$0xff]
          %v6804 = vld [vmem:[#allocation15 + $0x250] sm:$0xff]
          %v6805 = vld [vmem:[#allocation15 + $0x258] sm:$0xff]
          %v6806 = vld [vmem:[#allocation15 + $0x260] sm:$0xff]
          %v6807 = vld [vmem:[#allocation15 + $0x268] sm:$0xff]
          %v6808 = vld [vmem:[#allocation15 + $0x270] sm:$0xff]
          %v6809 = vld [vmem:[#allocation15 + $0x278] sm:$0xff]
          %v6810 = vld [vmem:[#allocation15 + $0x280] sm:$0xff]
          %v6811 = vld [vmem:[#allocation15 + $0x288] sm:$0xff]
          %v6812 = vld [vmem:[#allocation15 + $0x290] sm:$0xff]
          %v6813 = vld [vmem:[#allocation15 + $0x298] sm:$0xff]
          %v6814 = vld [vmem:[#allocation15 + $0x2a0] sm:$0xff]
          %v6815 = vld [vmem:[#allocation15 + $0x2a8] sm:$0xff]
          %v6816 = vld [vmem:[#allocation15 + $0x2b0] sm:$0xff]
          %v6817 = vld [vmem:[#allocation15 + $0x2b8] sm:$0xff]
          %v6818 = vld [vmem:[#allocation15 + $0x2c0] sm:$0xff]
          %v6819 = vld [vmem:[#allocation15 + $0x2c8] sm:$0xff]
          %v6820 = vld [vmem:[#allocation15 + $0x2d0] sm:$0xff]
          %v6821 = vld [vmem:[#allocation15 + $0x2d8] sm:$0xff]
          %v6822 = vld [vmem:[#allocation15 + $0x2e0] sm:$0xff]
          %v6823 = vld [vmem:[#allocation15 + $0x2e8] sm:$0xff]
          %v6824 = vld [vmem:[#allocation15 + $0x2f0] sm:$0xff]
          %v6825 = vld [vmem:[#allocation15 + $0x2f8] sm:$0xff]
          %v6826 = vld [vmem:[#allocation15 + $0x300] sm:$0xff]
          %v6827 = vld [vmem:[#allocation15 + $0x308] sm:$0xff]
          %v6828 = vld [vmem:[#allocation15 + $0x310] sm:$0xff]
          %v6829 = vld [vmem:[#allocation15 + $0x318] sm:$0xff]
          %v6830 = vld [vmem:[#allocation15 + $0x320] sm:$0xff]
          %v6831 = vld [vmem:[#allocation15 + $0x328] sm:$0xff]
          %v6832 = vld [vmem:[#allocation15 + $0x330] sm:$0xff]
          %v6833 = vld [vmem:[#allocation15 + $0x338] sm:$0xff]
          %v6834 = vld [vmem:[#allocation15 + $0x340] sm:$0xff]
          %v6835 = vld [vmem:[#allocation15 + $0x348] sm:$0xff]
          %v6836 = vld [vmem:[#allocation15 + $0x350] sm:$0xff]
          %v6837 = vld [vmem:[#allocation15 + $0x358] sm:$0xff]
          %v6838 = vld [vmem:[#allocation15 + $0x360] sm:$0xff]
          %v6839 = vld [vmem:[#allocation15 + $0x368] sm:$0xff]
          %v6840 = vld [vmem:[#allocation15 + $0x370] sm:$0xff]
          %v6841 = vld [vmem:[#allocation15 + $0x378] sm:$0xff]
          %v6842 = vld [vmem:[#allocation15 + $0x380] sm:$0xff]
          %v6843 = vld [vmem:[#allocation15 + $0x388] sm:$0xff]
          %v6844 = vld [vmem:[#allocation15 + $0x390] sm:$0xff]
          %v6845 = vld [vmem:[#allocation15 + $0x398] sm:$0xff]
          %v6846 = vld [vmem:[#allocation15 + $0x3a0] sm:$0xff]
          %v6847 = vld [vmem:[#allocation15 + $0x3a8] sm:$0xff]
          %v6848 = vld [vmem:[#allocation15 + $0x3b0] sm:$0xff]
          %v6849 = vld [vmem:[#allocation15 + $0x3b8] sm:$0xff]
          %v6850 = vld [vmem:[#allocation15 + $0x3c0] sm:$0xff]
          %v6851 = vld [vmem:[#allocation15 + $0x3c8] sm:$0xff]
          %v6852 = vld [vmem:[#allocation15 + $0x3d0] sm:$0xff]
          %v6853 = vld [vmem:[#allocation15 + $0x3d8] sm:$0xff]
          %v6854 = vld [vmem:[#allocation15 + $0x3e0] sm:$0xff]
          %v6855 = vld [vmem:[#allocation15 + $0x3e8] sm:$0xff]
          %v6856 = vld [vmem:[#allocation15 + $0x3f0] sm:$0xff]
          %v6857 = vld [vmem:[#allocation15 + $0x3f8] sm:$0xff]
          %v6858 = vunpack.c.l.bf16 %v6794
          %v6859 = vunpack.c.h.bf16 %v6794
          %v6860 = vunpack.c.l.bf16 %v6795
          %v6861 = vunpack.c.h.bf16 %v6795
          %v6862 = vunpack.c.l.bf16 %v6796
          %v6863 = vunpack.c.h.bf16 %v6796
          %v6864 = vunpack.c.l.bf16 %v6797
          %v6865 = vunpack.c.h.bf16 %v6797
          %v6866 = vunpack.c.l.bf16 %v6798
          %v6867 = vunpack.c.h.bf16 %v6798
          %v6868 = vunpack.c.l.bf16 %v6799
          %v6869 = vunpack.c.h.bf16 %v6799
          %v6870 = vunpack.c.l.bf16 %v6800
          %v6871 = vunpack.c.h.bf16 %v6800
          %v6872 = vunpack.c.l.bf16 %v6801
          %v6873 = vunpack.c.h.bf16 %v6801
          %v6874 = vunpack.c.l.bf16 %v6802
          %v6875 = vunpack.c.h.bf16 %v6802
          %v6876 = vunpack.c.l.bf16 %v6803
          %v6877 = vunpack.c.h.bf16 %v6803
          %v6878 = vunpack.c.l.bf16 %v6804
          %v6879 = vunpack.c.h.bf16 %v6804
          %v6880 = vunpack.c.l.bf16 %v6805
          %v6881 = vunpack.c.h.bf16 %v6805
          %v6882 = vunpack.c.l.bf16 %v6806
          %v6883 = vunpack.c.h.bf16 %v6806
          %v6884 = vunpack.c.l.bf16 %v6807
          %v6885 = vunpack.c.h.bf16 %v6807
          %v6886 = vunpack.c.l.bf16 %v6808
          %v6887 = vunpack.c.h.bf16 %v6808
          %v6888 = vunpack.c.l.bf16 %v6809
          %v6889 = vunpack.c.h.bf16 %v6809
          %v6890 = vunpack.c.l.bf16 %v6810
          %v6891 = vunpack.c.h.bf16 %v6810
          %v6892 = vunpack.c.l.bf16 %v6811
          %v6893 = vunpack.c.h.bf16 %v6811
          %v6894 = vunpack.c.l.bf16 %v6812
          %v6895 = vunpack.c.h.bf16 %v6812
          %v6896 = vunpack.c.l.bf16 %v6813
          %v6897 = vunpack.c.h.bf16 %v6813
          %v6898 = vunpack.c.l.bf16 %v6814
          %v6899 = vunpack.c.h.bf16 %v6814
          %v6900 = vunpack.c.l.bf16 %v6815
          %v6901 = vunpack.c.h.bf16 %v6815
          %v6902 = vunpack.c.l.bf16 %v6816
          %v6903 = vunpack.c.h.bf16 %v6816
          %v6904 = vunpack.c.l.bf16 %v6817
          %v6905 = vunpack.c.h.bf16 %v6817
          %v6906 = vunpack.c.l.bf16 %v6818
          %v6907 = vunpack.c.h.bf16 %v6818
          %v6908 = vunpack.c.l.bf16 %v6819
          %v6909 = vunpack.c.h.bf16 %v6819
          %v6910 = vunpack.c.l.bf16 %v6820
          %v6911 = vunpack.c.h.bf16 %v6820
          %v6912 = vunpack.c.l.bf16 %v6821
          %v6913 = vunpack.c.h.bf16 %v6821
          %v6914 = vunpack.c.l.bf16 %v6822
          %v6915 = vunpack.c.h.bf16 %v6822
          %v6916 = vunpack.c.l.bf16 %v6823
          %v6917 = vunpack.c.h.bf16 %v6823
          %v6918 = vunpack.c.l.bf16 %v6824
          %v6919 = vunpack.c.h.bf16 %v6824
          %v6920 = vunpack.c.l.bf16 %v6825
          %v6921 = vunpack.c.h.bf16 %v6825
          %v6922 = vunpack.c.l.bf16 %v6826
          %v6923 = vunpack.c.h.bf16 %v6826
          %v6924 = vunpack.c.l.bf16 %v6827
          %v6925 = vunpack.c.h.bf16 %v6827
          %v6926 = vunpack.c.l.bf16 %v6828
          %v6927 = vunpack.c.h.bf16 %v6828
          %v6928 = vunpack.c.l.bf16 %v6829
          %v6929 = vunpack.c.h.bf16 %v6829
          %v6930 = vunpack.c.l.bf16 %v6830
          %v6931 = vunpack.c.h.bf16 %v6830
          %v6932 = vunpack.c.l.bf16 %v6831
          %v6933 = vunpack.c.h.bf16 %v6831
          %v6934 = vunpack.c.l.bf16 %v6832
          %v6935 = vunpack.c.h.bf16 %v6832
          %v6936 = vunpack.c.l.bf16 %v6833
          %v6937 = vunpack.c.h.bf16 %v6833
          %v6938 = vunpack.c.l.bf16 %v6834
          %v6939 = vunpack.c.h.bf16 %v6834
          %v6940 = vunpack.c.l.bf16 %v6835
          %v6941 = vunpack.c.h.bf16 %v6835
          %v6942 = vunpack.c.l.bf16 %v6836
          %v6943 = vunpack.c.h.bf16 %v6836
          %v6944 = vunpack.c.l.bf16 %v6837
          %v6945 = vunpack.c.h.bf16 %v6837
          %v6946 = vunpack.c.l.bf16 %v6838
          %v6947 = vunpack.c.h.bf16 %v6838
          %v6948 = vunpack.c.l.bf16 %v6839
          %v6949 = vunpack.c.h.bf16 %v6839
          %v6950 = vunpack.c.l.bf16 %v6840
          %v6951 = vunpack.c.h.bf16 %v6840
          %v6952 = vunpack.c.l.bf16 %v6841
          %v6953 = vunpack.c.h.bf16 %v6841
          %v6954 = vunpack.c.l.bf16 %v6842
          %v6955 = vunpack.c.h.bf16 %v6842
          %v6956 = vunpack.c.l.bf16 %v6843
          %v6957 = vunpack.c.h.bf16 %v6843
          %v6958 = vunpack.c.l.bf16 %v6844
          %v6959 = vunpack.c.h.bf16 %v6844
          %v6960 = vunpack.c.l.bf16 %v6845
          %v6961 = vunpack.c.h.bf16 %v6845
          %v6962 = vunpack.c.l.bf16 %v6846
          %v6963 = vunpack.c.h.bf16 %v6846
          %v6964 = vunpack.c.l.bf16 %v6847
          %v6965 = vunpack.c.h.bf16 %v6847
          %v6966 = vunpack.c.l.bf16 %v6848
          %v6967 = vunpack.c.h.bf16 %v6848
          %v6968 = vunpack.c.l.bf16 %v6849
          %v6969 = vunpack.c.h.bf16 %v6849
          %v6970 = vunpack.c.l.bf16 %v6850
          %v6971 = vunpack.c.h.bf16 %v6850
          %v6972 = vunpack.c.l.bf16 %v6851
          %v6973 = vunpack.c.h.bf16 %v6851
          %v6974 = vunpack.c.l.bf16 %v6852
          %v6975 = vunpack.c.h.bf16 %v6852
          %v6976 = vunpack.c.l.bf16 %v6853
          %v6977 = vunpack.c.h.bf16 %v6853
          %v6978 = vunpack.c.l.bf16 %v6854
          %v6979 = vunpack.c.h.bf16 %v6854
          %v6980 = vunpack.c.l.bf16 %v6855
          %v6981 = vunpack.c.h.bf16 %v6855
          %v6982 = vunpack.c.l.bf16 %v6856
          %v6983 = vunpack.c.h.bf16 %v6856
          %v6984 = vunpack.c.l.bf16 %v6857
          %v6985 = vunpack.c.h.bf16 %v6857
          %6986 = vmatprep.subr.mxu0 %v6889
          %6987 = vmatpush1.msra.mxu0 %v6888
          %6988 = vmatprep.subr.mxu0 %v6887
          %6989 = vmatpush1.msra.mxu0 %v6886
          %6990 = vmatprep.subr.mxu0 %v6885
          %6991 = vmatpush1.msra.mxu0 %v6884
          %6992 = vmatprep.subr.mxu0 %v6883
          %6993 = vmatpush1.msra.mxu0 %v6882
          %6994 = vmatprep.subr.mxu0 %v6881
          %6995 = vmatpush1.msra.mxu0 %v6880
          %6996 = vmatprep.subr.mxu0 %v6879
          %6997 = vmatpush1.msra.mxu0 %v6878
          %6998 = vmatprep.subr.mxu0 %v6877
          %6999 = vmatpush1.msra.mxu0 %v6876
          %7000 = vmatprep.subr.mxu0 %v6875
          %7001 = vmatpush1.msra.mxu0 %v6874
          %7002 = vmatprep.subr.mxu0 %v6873
          %7003 = vmatpush1.msra.mxu0 %v6872
          %7004 = vmatprep.subr.mxu0 %v6871
          %7005 = vmatpush1.msra.mxu0 %v6870
          %7006 = vmatprep.subr.mxu0 %v6869
          %7007 = vmatpush1.msra.mxu0 %v6868
          %7008 = vmatprep.subr.mxu0 %v6867
          %7009 = vmatpush1.msra.mxu0 %v6866
          %7010 = vmatprep.subr.mxu0 %v6865
          %7011 = vmatpush1.msra.mxu0 %v6864
          %7012 = vmatprep.subr.mxu0 %v6863
          %7013 = vmatpush1.msra.mxu0 %v6862
          %7014 = vmatprep.subr.mxu0 %v6861
          %7015 = vmatpush1.msra.mxu0 %v6860
          %7016 = vmatprep.subr.mxu0 %v6859
          %7017 = vmatpush1.msra.mxu0 %v6858
          %7018 = vmatprep.subr.mxu0 %v6921
          %7019 = vmatpush2.msra.mxu0 %v6920
          %7020 = vmatprep.subr.mxu0 %v6919
          %7021 = vmatpush2.msra.mxu0 %v6918
          %7022 = vmatprep.subr.mxu0 %v6917
          %7023 = vmatpush2.msra.mxu0 %v6916
          %7024 = vmatprep.subr.mxu0 %v6915
          %7025 = vmatpush2.msra.mxu0 %v6914
          %7026 = vmatprep.subr.mxu0 %v6913
          %7027 = vmatpush2.msra.mxu0 %v6912
          %7028 = vmatprep.subr.mxu0 %v6911
          %7029 = vmatpush2.msra.mxu0 %v6910
          %7030 = vmatprep.subr.mxu0 %v6909
          %7031 = vmatpush2.msra.mxu0 %v6908
          %7032 = vmatprep.subr.mxu0 %v6907
          %7033 = vmatpush2.msra.mxu0 %v6906
          %7034 = vmatprep.subr.mxu0 %v6905
          %7035 = vmatpush2.msra.mxu0 %v6904
          %7036 = vmatprep.subr.mxu0 %v6903
          %7037 = vmatpush2.msra.mxu0 %v6902
          %7038 = vmatprep.subr.mxu0 %v6901
          %7039 = vmatpush2.msra.mxu0 %v6900
          %7040 = vmatprep.subr.mxu0 %v6899
          %7041 = vmatpush2.msra.mxu0 %v6898
          %7042 = vmatprep.subr.mxu0 %v6897
          %7043 = vmatpush2.msra.mxu0 %v6896
          %7044 = vmatprep.subr.mxu0 %v6895
          %7045 = vmatpush2.msra.mxu0 %v6894
          %7046 = vmatprep.subr.mxu0 %v6893
          %7047 = vmatpush2.msra.mxu0 %v6892
          %7048 = vmatprep.subr.mxu0 %v6891
          %7049 = vmatpush2.msra.mxu0 %v6890
          %7050 = vmatprep.mubr.f32.mxu0 %v6599
          %7051 = vmatmul.mubr.f32.gmra.mxu0 %v6598
          %v7052 = vpop.f32.mrf.mxu0
          %v7053 = vadd.f32 0.0, %v7052
          %v7054 = vpop.f32.mrf.mxu0
          %v7055 = vadd.f32 0.0, %v7054
          %7056 = vdwg.mxu0
          %7057 = vmatprep.subr.mxu0 %v6953
          %7058 = vmatpush1.msra.mxu0 %v6952
          %7059 = vmatprep.subr.mxu0 %v6951
          %7060 = vmatpush1.msra.mxu0 %v6950
          %7061 = vmatprep.subr.mxu0 %v6949
          %7062 = vmatpush1.msra.mxu0 %v6948
          %7063 = vmatprep.subr.mxu0 %v6947
          %7064 = vmatpush1.msra.mxu0 %v6946
          %7065 = vmatprep.subr.mxu0 %v6945
          %7066 = vmatpush1.msra.mxu0 %v6944
          %7067 = vmatprep.subr.mxu0 %v6943
          %7068 = vmatpush1.msra.mxu0 %v6942
          %7069 = vmatprep.subr.mxu0 %v6941
          %7070 = vmatpush1.msra.mxu0 %v6940
          %7071 = vmatprep.subr.mxu0 %v6939
          %7072 = vmatpush1.msra.mxu0 %v6938
          %7073 = vmatprep.subr.mxu0 %v6937
          %7074 = vmatpush1.msra.mxu0 %v6936
          %7075 = vmatprep.subr.mxu0 %v6935
          %7076 = vmatpush1.msra.mxu0 %v6934
          %7077 = vmatprep.subr.mxu0 %v6933
          %7078 = vmatpush1.msra.mxu0 %v6932
          %7079 = vmatprep.subr.mxu0 %v6931
          %7080 = vmatpush1.msra.mxu0 %v6930
          %7081 = vmatprep.subr.mxu0 %v6929
          %7082 = vmatpush1.msra.mxu0 %v6928
          %7083 = vmatprep.subr.mxu0 %v6927
          %7084 = vmatpush1.msra.mxu0 %v6926
          %7085 = vmatprep.subr.mxu0 %v6925
          %7086 = vmatpush1.msra.mxu0 %v6924
          %7087 = vmatprep.subr.mxu0 %v6923
          %7088 = vmatpush1.msra.mxu0 %v6922
          %7089 = vmatprep.subr.mxu0 %v6985
          %7090 = vmatpush2.msra.mxu0 %v6984
          %7091 = vmatprep.subr.mxu0 %v6983
          %7092 = vmatpush2.msra.mxu0 %v6982
          %7093 = vmatprep.subr.mxu0 %v6981
          %7094 = vmatpush2.msra.mxu0 %v6980
          %7095 = vmatprep.subr.mxu0 %v6979
          %7096 = vmatpush2.msra.mxu0 %v6978
          %7097 = vmatprep.subr.mxu0 %v6977
          %7098 = vmatpush2.msra.mxu0 %v6976
          %7099 = vmatprep.subr.mxu0 %v6975
          %7100 = vmatpush2.msra.mxu0 %v6974
          %7101 = vmatprep.subr.mxu0 %v6973
          %7102 = vmatpush2.msra.mxu0 %v6972
          %7103 = vmatprep.subr.mxu0 %v6971
          %7104 = vmatpush2.msra.mxu0 %v6970
          %7105 = vmatprep.subr.mxu0 %v6969
          %7106 = vmatpush2.msra.mxu0 %v6968
          %7107 = vmatprep.subr.mxu0 %v6967
          %7108 = vmatpush2.msra.mxu0 %v6966
          %7109 = vmatprep.subr.mxu0 %v6965
          %7110 = vmatpush2.msra.mxu0 %v6964
          %7111 = vmatprep.subr.mxu0 %v6963
          %7112 = vmatpush2.msra.mxu0 %v6962
          %7113 = vmatprep.subr.mxu0 %v6961
          %7114 = vmatpush2.msra.mxu0 %v6960
          %7115 = vmatprep.subr.mxu0 %v6959
          %7116 = vmatpush2.msra.mxu0 %v6958
          %7117 = vmatprep.subr.mxu0 %v6957
          %7118 = vmatpush2.msra.mxu0 %v6956
          %7119 = vmatprep.subr.mxu0 %v6955
          %7120 = vmatpush2.msra.mxu0 %v6954
          %7121 = vmatprep.mubr.f32.mxu0 %v6601
          %7122 = vmatmul.mubr.f32.gmra.mxu0 %v6600
          %v7123 = vpop.f32.mrf.mxu0
          %v7124 = vadd.f32 %v7053, %v7123
          %v7125 = vpop.f32.mrf.mxu0
          %v7126 = vadd.f32 %v7055, %v7125
          %7127 = vdwg.mxu0
          %7128 = vmatprep.subr.mxu0 %v6697
          %7129 = vmatpush1.msra.mxu0 %v6696
          %7130 = vmatprep.subr.mxu0 %v6695
          %7131 = vmatpush1.msra.mxu0 %v6694
          %7132 = vmatprep.subr.mxu0 %v6693
          %7133 = vmatpush1.msra.mxu0 %v6692
          %7134 = vmatprep.subr.mxu0 %v6691
          %7135 = vmatpush1.msra.mxu0 %v6690
          %7136 = vmatprep.subr.mxu0 %v6689
          %7137 = vmatpush1.msra.mxu0 %v6688
          %7138 = vmatprep.subr.mxu0 %v6687
          %7139 = vmatpush1.msra.mxu0 %v6686
          %7140 = vmatprep.subr.mxu0 %v6685
          %7141 = vmatpush1.msra.mxu0 %v6684
          %7142 = vmatprep.subr.mxu0 %v6683
          %7143 = vmatpush1.msra.mxu0 %v6682
          %7144 = vmatprep.subr.mxu0 %v6681
          %7145 = vmatpush1.msra.mxu0 %v6680
          %7146 = vmatprep.subr.mxu0 %v6679
          %7147 = vmatpush1.msra.mxu0 %v6678
          %7148 = vmatprep.subr.mxu0 %v6677
          %7149 = vmatpush1.msra.mxu0 %v6676
          %7150 = vmatprep.subr.mxu0 %v6675
          %7151 = vmatpush1.msra.mxu0 %v6674
          %7152 = vmatprep.subr.mxu0 %v6673
          %7153 = vmatpush1.msra.mxu0 %v6672
          %7154 = vmatprep.subr.mxu0 %v6671
          %7155 = vmatpush1.msra.mxu0 %v6670
          %7156 = vmatprep.subr.mxu0 %v6669
          %7157 = vmatpush1.msra.mxu0 %v6668
          %7158 = vmatprep.subr.mxu0 %v6667
          %7159 = vmatpush1.msra.mxu0 %v6666
          %7160 = vmatprep.subr.mxu0 %v6729
          %7161 = vmatpush2.msra.mxu0 %v6728
          %7162 = vmatprep.subr.mxu0 %v6727
          %7163 = vmatpush2.msra.mxu0 %v6726
          %7164 = vmatprep.subr.mxu0 %v6725
          %7165 = vmatpush2.msra.mxu0 %v6724
          %7166 = vmatprep.subr.mxu0 %v6723
          %7167 = vmatpush2.msra.mxu0 %v6722
          %7168 = vmatprep.subr.mxu0 %v6721
          %7169 = vmatpush2.msra.mxu0 %v6720
          %7170 = vmatprep.subr.mxu0 %v6719
          %7171 = vmatpush2.msra.mxu0 %v6718
          %7172 = vmatprep.subr.mxu0 %v6717
          %7173 = vmatpush2.msra.mxu0 %v6716
          %7174 = vmatprep.subr.mxu0 %v6715
          %7175 = vmatpush2.msra.mxu0 %v6714
          %7176 = vmatprep.subr.mxu0 %v6713
          %7177 = vmatpush2.msra.mxu0 %v6712
          %7178 = vmatprep.subr.mxu0 %v6711
          %7179 = vmatpush2.msra.mxu0 %v6710
          %7180 = vmatprep.subr.mxu0 %v6709
          %7181 = vmatpush2.msra.mxu0 %v6708
          %7182 = vmatprep.subr.mxu0 %v6707
          %7183 = vmatpush2.msra.mxu0 %v6706
          %7184 = vmatprep.subr.mxu0 %v6705
          %7185 = vmatpush2.msra.mxu0 %v6704
          %7186 = vmatprep.subr.mxu0 %v6703
          %7187 = vmatpush2.msra.mxu0 %v6702
          %7188 = vmatprep.subr.mxu0 %v6701
          %7189 = vmatpush2.msra.mxu0 %v6700
          %7190 = vmatprep.subr.mxu0 %v6699
          %7191 = vmatpush2.msra.mxu0 %v6698
          %7192 = vmatprep.mubr.f32.mxu0 %v6595
          %7193 = vmatmul.mubr.f32.gmra.mxu0 %v6594
          %v7194 = vpop.f32.mrf.mxu0
          %v7195 = vadd.f32 %v7124, %v7194
          %v7196 = vpop.f32.mrf.mxu0
          %v7197 = vadd.f32 %v7126, %v7196
          %7198 = vdwg.mxu0
          %7199 = vmatprep.subr.mxu0 %v6761
          %7200 = vmatpush1.msra.mxu0 %v6760
          %7201 = vmatprep.subr.mxu0 %v6759
          %7202 = vmatpush1.msra.mxu0 %v6758
          %7203 = vmatprep.subr.mxu0 %v6757
          %7204 = vmatpush1.msra.mxu0 %v6756
          %7205 = vmatprep.subr.mxu0 %v6755
          %7206 = vmatpush1.msra.mxu0 %v6754
          %7207 = vmatprep.subr.mxu0 %v6753
          %7208 = vmatpush1.msra.mxu0 %v6752
          %7209 = vmatprep.subr.mxu0 %v6751
          %7210 = vmatpush1.msra.mxu0 %v6750
          %7211 = vmatprep.subr.mxu0 %v6749
          %7212 = vmatpush1.msra.mxu0 %v6748
          %7213 = vmatprep.subr.mxu0 %v6747
          %7214 = vmatpush1.msra.mxu0 %v6746
          %7215 = vmatprep.subr.mxu0 %v6745
          %7216 = vmatpush1.msra.mxu0 %v6744
          %7217 = vmatprep.subr.mxu0 %v6743
          %7218 = vmatpush1.msra.mxu0 %v6742
          %7219 = vmatprep.subr.mxu0 %v6741
          %7220 = vmatpush1.msra.mxu0 %v6740
          %7221 = vmatprep.subr.mxu0 %v6739
          %7222 = vmatpush1.msra.mxu0 %v6738
          %7223 = vmatprep.subr.mxu0 %v6737
          %7224 = vmatpush1.msra.mxu0 %v6736
          %7225 = vmatprep.subr.mxu0 %v6735
          %7226 = vmatpush1.msra.mxu0 %v6734
          %7227 = vmatprep.subr.mxu0 %v6733
          %7228 = vmatpush1.msra.mxu0 %v6732
          %7229 = vmatprep.subr.mxu0 %v6731
          %7230 = vmatpush1.msra.mxu0 %v6730
          %7231 = vmatprep.subr.mxu0 %v6793
          %7232 = vmatpush2.msra.mxu0 %v6792
          %7233 = vmatprep.subr.mxu0 %v6791
          %7234 = vmatpush2.msra.mxu0 %v6790
          %7235 = vmatprep.subr.mxu0 %v6789
          %7236 = vmatpush2.msra.mxu0 %v6788
          %7237 = vmatprep.subr.mxu0 %v6787
          %7238 = vmatpush2.msra.mxu0 %v6786
          %7239 = vmatprep.subr.mxu0 %v6785
          %7240 = vmatpush2.msra.mxu0 %v6784
          %7241 = vmatprep.subr.mxu0 %v6783
          %7242 = vmatpush2.msra.mxu0 %v6782
          %7243 = vmatprep.subr.mxu0 %v6781
          %7244 = vmatpush2.msra.mxu0 %v6780
          %7245 = vmatprep.subr.mxu0 %v6779
          %7246 = vmatpush2.msra.mxu0 %v6778
          %7247 = vmatprep.subr.mxu0 %v6777
          %7248 = vmatpush2.msra.mxu0 %v6776
          %7249 = vmatprep.subr.mxu0 %v6775
          %7250 = vmatpush2.msra.mxu0 %v6774
          %7251 = vmatprep.subr.mxu0 %v6773
          %7252 = vmatpush2.msra.mxu0 %v6772
          %7253 = vmatprep.subr.mxu0 %v6771
          %7254 = vmatpush2.msra.mxu0 %v6770
          %7255 = vmatprep.subr.mxu0 %v6769
          %7256 = vmatpush2.msra.mxu0 %v6768
          %7257 = vmatprep.subr.mxu0 %v6767
          %7258 = vmatpush2.msra.mxu0 %v6766
          %7259 = vmatprep.subr.mxu0 %v6765
          %7260 = vmatpush2.msra.mxu0 %v6764
          %7261 = vmatprep.subr.mxu0 %v6763
          %7262 = vmatpush2.msra.mxu0 %v6762
          %7263 = vmatprep.mubr.f32.mxu0 %v6597
          %7264 = vmatmul.mubr.f32.gmra.mxu0 %v6596
          %v7265 = vpop.f32.mrf.mxu0
          %v7266 = vadd.f32 %v7195, %v7265
          %v7267 = vpop.f32.mrf.mxu0
          %v7268 = vadd.f32 %v7197, %v7267
          %7269 = vdwg.mxu0
          %v7270 = vld [vmem:[#allocation17] sm:$0x3]
          %v7272 = vlaneseq
          %v7273 = vshrl.u32 %v7272, 7
          %v7274 = vsub.s32 0, %v7273
          %v7275 = vrot.slane %v7270, %v7274
          %v7276 = vlaneseq
          %v7277 = vshrl.u32 %v7276, 7
          %v7278 = vsub.s32 1, %v7277
          %v7279 = vrot.slane %v7270, %v7278
          %v7282 = vadd.f32 %v7266, %v7275
          %v7283 = vadd.f32 %v7268, %v7279
          %v7284 = vmax.f32 %v7282, 0.0
          %v7285 = vmax.f32 %v7283, 0.0
          %v7286 = vld [vmem:[#allocation18] sm:$0xf]
          %v7287 = vld [vmem:[#allocation18 + $0x4] sm:$0xf]
          %v7288 = vld [vmem:[#allocation18 + $0x8] sm:$0xf]
          %v7289 = vld [vmem:[#allocation18 + $0xc] sm:$0xf]
          %v7290 = vld [vmem:[#allocation18 + $0x10] sm:$0xf]
          %v7291 = vld [vmem:[#allocation18 + $0x14] sm:$0xf]
          %v7292 = vld [vmem:[#allocation18 + $0x18] sm:$0xf]
          %v7293 = vld [vmem:[#allocation18 + $0x1c] sm:$0xf]
          %v7294 = vld [vmem:[#allocation18 + $0x20] sm:$0xf]
          %v7295 = vld [vmem:[#allocation18 + $0x24] sm:$0xf]
          %v7296 = vld [vmem:[#allocation18 + $0x28] sm:$0xf]
          %v7297 = vld [vmem:[#allocation18 + $0x2c] sm:$0xf]
          %v7298 = vld [vmem:[#allocation18 + $0x30] sm:$0xf]
          %v7299 = vld [vmem:[#allocation18 + $0x34] sm:$0xf]
          %v7300 = vld [vmem:[#allocation18 + $0x38] sm:$0xf]
          %v7301 = vld [vmem:[#allocation18 + $0x3c] sm:$0xf]
          %v7302 = vld [vmem:[#allocation18 + $0x40] sm:$0xf]
          %v7303 = vld [vmem:[#allocation18 + $0x44] sm:$0xf]
          %v7304 = vld [vmem:[#allocation18 + $0x48] sm:$0xf]
          %v7305 = vld [vmem:[#allocation18 + $0x4c] sm:$0xf]
          %v7306 = vld [vmem:[#allocation18 + $0x50] sm:$0xf]
          %v7307 = vld [vmem:[#allocation18 + $0x54] sm:$0xf]
          %v7308 = vld [vmem:[#allocation18 + $0x58] sm:$0xf]
          %v7309 = vld [vmem:[#allocation18 + $0x5c] sm:$0xf]
          %v7310 = vld [vmem:[#allocation18 + $0x60] sm:$0xf]
          %v7311 = vld [vmem:[#allocation18 + $0x64] sm:$0xf]
          %v7312 = vld [vmem:[#allocation18 + $0x68] sm:$0xf]
          %v7313 = vld [vmem:[#allocation18 + $0x6c] sm:$0xf]
          %v7314 = vld [vmem:[#allocation18 + $0x70] sm:$0xf]
          %v7315 = vld [vmem:[#allocation18 + $0x74] sm:$0xf]
          %v7316 = vld [vmem:[#allocation18 + $0x78] sm:$0xf]
          %v7317 = vld [vmem:[#allocation18 + $0x7c] sm:$0xf]
          %v7318 = vunpack.c.l.bf16 %v7286
          %v7319 = vunpack.c.l.bf16 %v7287
          %v7320 = vunpack.c.l.bf16 %v7288
          %v7321 = vunpack.c.l.bf16 %v7289
          %v7322 = vunpack.c.l.bf16 %v7290
          %v7323 = vunpack.c.l.bf16 %v7291
          %v7324 = vunpack.c.l.bf16 %v7292
          %v7325 = vunpack.c.l.bf16 %v7293
          %v7326 = vunpack.c.l.bf16 %v7294
          %v7327 = vunpack.c.l.bf16 %v7295
          %v7328 = vunpack.c.l.bf16 %v7296
          %v7329 = vunpack.c.l.bf16 %v7297
          %v7330 = vunpack.c.l.bf16 %v7298
          %v7331 = vunpack.c.l.bf16 %v7299
          %v7332 = vunpack.c.l.bf16 %v7300
          %v7333 = vunpack.c.l.bf16 %v7301
          %v7334 = vunpack.c.l.bf16 %v7302
          %v7335 = vunpack.c.l.bf16 %v7303
          %v7336 = vunpack.c.l.bf16 %v7304
          %v7337 = vunpack.c.l.bf16 %v7305
          %v7338 = vunpack.c.l.bf16 %v7306
          %v7339 = vunpack.c.l.bf16 %v7307
          %v7340 = vunpack.c.l.bf16 %v7308
          %v7341 = vunpack.c.l.bf16 %v7309
          %v7342 = vunpack.c.l.bf16 %v7310
          %v7343 = vunpack.c.l.bf16 %v7311
          %v7344 = vunpack.c.l.bf16 %v7312
          %v7345 = vunpack.c.l.bf16 %v7313
          %v7346 = vunpack.c.l.bf16 %v7314
          %v7347 = vunpack.c.l.bf16 %v7315
          %v7348 = vunpack.c.l.bf16 %v7316
          %v7349 = vunpack.c.l.bf16 %v7317
          %v7350 = vld [vmem:[#allocation20] sm:$0x1]
          %v7352 = vlaneseq
          %v7353 = vshrl.u32 %v7352, 7
          %v7354 = vsub.s32 0, %v7353
          %v7355 = vrot.slane %v7350, %v7354
          %7357 = vmatprep.subr.mxu0 0.0
          %7358 = vmatpush1.msra.mxu0 %v7333
          %7359 = vmatprep.subr.mxu0 0.0
          %7360 = vmatpush1.msra.mxu0 %v7332
          %7361 = vmatprep.subr.mxu0 0.0
          %7362 = vmatpush1.msra.mxu0 %v7331
          %7363 = vmatprep.subr.mxu0 0.0
          %7364 = vmatpush1.msra.mxu0 %v7330
          %7365 = vmatprep.subr.mxu0 0.0
          %7366 = vmatpush1.msra.mxu0 %v7329
          %7367 = vmatprep.subr.mxu0 0.0
          %7368 = vmatpush1.msra.mxu0 %v7328
          %7369 = vmatprep.subr.mxu0 0.0
          %7370 = vmatpush1.msra.mxu0 %v7327
          %7371 = vmatprep.subr.mxu0 0.0
          %7372 = vmatpush1.msra.mxu0 %v7326
          %7373 = vmatprep.subr.mxu0 0.0
          %7374 = vmatpush1.msra.mxu0 %v7325
          %7375 = vmatprep.subr.mxu0 0.0
          %7376 = vmatpush1.msra.mxu0 %v7324
          %7377 = vmatprep.subr.mxu0 0.0
          %7378 = vmatpush1.msra.mxu0 %v7323
          %7379 = vmatprep.subr.mxu0 0.0
          %7380 = vmatpush1.msra.mxu0 %v7322
          %7381 = vmatprep.subr.mxu0 0.0
          %7382 = vmatpush1.msra.mxu0 %v7321
          %7383 = vmatprep.subr.mxu0 0.0
          %7384 = vmatpush1.msra.mxu0 %v7320
          %7385 = vmatprep.subr.mxu0 0.0
          %7386 = vmatpush1.msra.mxu0 %v7319
          %7387 = vmatprep.subr.mxu0 0.0
          %7388 = vmatpush1.msra.mxu0 %v7318
          %7389 = vmatprep.subr.mxu0 0.0
          %7390 = vmatpush2.msra.mxu0 %v7349
          %7391 = vmatprep.subr.mxu0 0.0
          %7392 = vmatpush2.msra.mxu0 %v7348
          %7393 = vmatprep.subr.mxu0 0.0
          %7394 = vmatpush2.msra.mxu0 %v7347
          %7395 = vmatprep.subr.mxu0 0.0
          %7396 = vmatpush2.msra.mxu0 %v7346
          %7397 = vmatprep.subr.mxu0 0.0
          %7398 = vmatpush2.msra.mxu0 %v7345
          %7399 = vmatprep.subr.mxu0 0.0
          %7400 = vmatpush2.msra.mxu0 %v7344
          %7401 = vmatprep.subr.mxu0 0.0
          %7402 = vmatpush2.msra.mxu0 %v7343
          %7403 = vmatprep.subr.mxu0 0.0
          %7404 = vmatpush2.msra.mxu0 %v7342
          %7405 = vmatprep.subr.mxu0 0.0
          %7406 = vmatpush2.msra.mxu0 %v7341
          %7407 = vmatprep.subr.mxu0 0.0
          %7408 = vmatpush2.msra.mxu0 %v7340
          %7409 = vmatprep.subr.mxu0 0.0
          %7410 = vmatpush2.msra.mxu0 %v7339
          %7411 = vmatprep.subr.mxu0 0.0
          %7412 = vmatpush2.msra.mxu0 %v7338
          %7413 = vmatprep.subr.mxu0 0.0
          %7414 = vmatpush2.msra.mxu0 %v7337
          %7415 = vmatprep.subr.mxu0 0.0
          %7416 = vmatpush2.msra.mxu0 %v7336
          %7417 = vmatprep.subr.mxu0 0.0
          %7418 = vmatpush2.msra.mxu0 %v7335
          %7419 = vmatprep.subr.mxu0 0.0
          %7420 = vmatpush2.msra.mxu0 %v7334
          %7421 = vmatprep.mubr.f32.mxu0 %v7285
          %7422 = vmatmul.mubr.f32.gmra.mxu0 %v7284
          %v7423 = vpop.f32.mrf.mxu0
          %v7424 = vadd.f32 %v7355, %v7423
          %v7425 = vpop.f32.mrf.mxu0
          %7426 = vdwg.mxu0
          %7427 = vst [vmem:[#allocation21] sm:$0x3] %v7424
        $region116: #{tpu_custom_call.1} parent=63 // pred_fallthru
          _
        // Predicated region
        $region117: #{tpu_custom_call.1} parent=63 // pred_check
          %p7428 = pneg %p287
        $region118: #{tpu_custom_call.1} parent=63 // pred_check_branch
          %7430 = sbr.rel (%p7428) target = $region120
        $region119: #{tpu_custom_call.1} parent=63 // pred_region
          %s7432 = ssub.s32 32, 32
          %7433 = vsyncadd [#allocation5], %s7432
          %s7435 = sshll.u32 [#allocation21], 4
          %s7436 = int_to_ptr.vmem [resolvable:$true] %s7435
          %7438 = dma.vmem_to_hbm [thread:$0]  %s7436, 32, %s11, [#allocation5]
        $region120: #{tpu_custom_call.1} parent=63 // pred_fallthru
          _
        // Predicated region
        $region121: #{tpu_custom_call.1} parent=63 // pred_check
          %p7439 = pneg %p287
        $region122: #{tpu_custom_call.1} parent=63 // pred_check_branch
          %7441 = sbr.rel (%p7439) target = $region124
        $region123: #{tpu_custom_call.1} parent=63 // pred_region
          %7442 = dma.done [#allocation5], 32
        $region124: #{tpu_custom_call.1} parent=63 // pred_fallthru
          _
      $region64: #{tpu_custom_call.1} parent=5 // pred_fallthru
        _
      %p7443 = scmp.le.s32.totalorder 2, %s28
      // Predicated region
      $region125: #{tpu_custom_call.1} parent=5 // pred_check
        %p7444 = pneg %p7443
      $region126: #{tpu_custom_call.1} parent=5 // pred_check_branch
        %7446 = sbr.rel (%p7444) target = $region128
      $region127: #{tpu_custom_call.1} parent=5 // pred_region
        %s7447 = ssub.s32 %s28, 2
      $region128: #{tpu_custom_call.1} parent=5 // pred_fallthru
        _
    $region6: #{tpu_custom_call.1} parent=1 // loop_footer
      %s32 = sadd.s32 1, %s28
    $region7: #{tpu_custom_call.1} parent=1 // loop_footer_branch
      %27 = sbr.rel target = $region3
    $region8: #{tpu_custom_call.1} parent=1 // loop_exit
      _
    %7448 = vsyncpa [#allocation4], 1
    %s7449 = scalar_lea.sflag [#allocation4], 1
    %7450 = vsyncpa %s7449, 1
    %7451 = vsyncpa [#allocation7], 1
    %s7452 = scalar_lea.sflag [#allocation7], 1
    %7453 = vsyncpa %s7452, 1
    %7454 = vsyncpa [#allocation10], 1
    %7455 = vsyncpa [#allocation13], 1
    %7456 = vsyncpa [#allocation16], 1
    %7457 = vsyncpa [#allocation19], 1
    %7458 = vsyncpa [#allocation5], 1
    %s7459 = scalar_lea.sflag [#allocation5], 1
    %7460 = vsyncpa %s7459, 1

</llo_original>
